<compile_context>
chip_gen: v7x
topology: tpu7x:2x2x1
jax: 0.10.0
libtpu: 0.0.40
codegen_flags: <defaults>
</compile_context>

<pallas_src>
import functools

import jax
import jax.numpy as jnp
from jax.experimental import pallas as pl
from jax.experimental.pallas import tpu as pltpu

EPS = 1e-5            # nn.BatchNorm2d default eps
LANE = 128            # channel dims are zero-padded to the TPU lane width
ROW_PAD = 8           # spare rows appended to each flat activation (>= 2 for the 3x3 halo)
assert ROW_PAD >= 2


def _round_up(x, m):
    return (x + m - 1) // m * m


def _vmem_limit_bytes():
    """Generation-aware VMEM budget (leave headroom for compiler scratch)."""
    try:
        cap = pltpu.get_tpu_info().vmem_capacity_bytes
        frac = 0.75 if cap >= (100 << 20) else 0.625   # ~96 MiB v5e/v6e, ~40 MiB v7x
        return int(cap * frac)
    except Exception:
        return 64 * 1024 * 1024


def _pick_band_rows(h_out, W, ci, co, vmem_limit, itemsize, *, even=False, force=None):
    """Pick the band height (output spatial rows per grid step) dividing h_out."""
    if force is None:
        # Rough VMEM model: resident input image (double-buffered) + weights +
        # band-sized acc / shifted copies / outputs.
        fixed = 2 * ((h_out + 2) * W + ROW_PAD) * ci * itemsize + 2 * 9 * ci * co * itemsize
        per_row = W * (co * 4 + 4 * ci * itemsize + 2 * co * itemsize + co * 4)
        target = max(1, (vmem_limit - fixed) // per_row) if vmem_limit > fixed else 1
    else:
        target = max(1, int(force))
    best = None
    for d in range(1, h_out + 1):
        if h_out % d == 0 and d <= target and not (even and d % 2):
            best = d
    return best if best is not None else h_out       # single band always works


# ---------------------------------------------------------------------------
# In-kernel helpers
# ---------------------------------------------------------------------------
def _conv_band(x, w_ref, *, W, m_band):
    """3x3 valid conv over one flat-spatial band.  x: (rows_in, Ci) in matmul
    dtype; w_ref: (3, 3*Ci, Co).  Returns an f32 (m_band, Co) accumulator."""
    span = m_band + 2 * W
    # Hoist the sublane-misaligned dx shifts out of the dy loop (2 relayouts/band).
    shifted = [x[dx:dx + span, :] for dx in range(3)]
    co = w_ref.shape[2]
    acc = jnp.zeros((m_band, co), jnp.float32)
    for dy in range(3):
        off = dy * W                                   # sublane-aligned (W % 8 == 0)
        xcat = jnp.concatenate([s[off:off + m_band, :] for s in shifted], axis=1)
        acc = acc + jnp.dot(xcat, w_ref[dy], preferred_element_type=jnp.float32)
    return acc


def _band_stats(acc, *, W, w_valid):
    """Per-band [sum, sum_sq] over valid pixels (wide-layout wrap cols masked).
    The where() also scrubs any junk living in the invalid columns."""
    m_band = acc.shape[0]
    col = jax.lax.broadcasted_iota(jnp.int32, (m_band, 1), 0) % W
    a = jnp.where(col < w_valid, acc, 0.0)
    s = jnp.sum(a, axis=0, keepdims=True)
    ss = jnp.sum(a * a, axis=0, keepdims=True)
    return jnp.concatenate([s, ss], axis=0)            # (2, Co)


# ---------------------------------------------------------------------------
# Pallas kernels
# ---------------------------------------------------------------------------
def _conv1_band_kernel(x_ref, w_ref, z_ref, stats_ref, *, W, bh, w_valid, tail):
    """conv1 over one row band of one image; emits pre-BN output + BN1 partials."""
    m_band = bh * W
    rows_in = (bh + 2) * W + tail
    row0 = pl.program_id(1) * m_band
    x = x_ref[pl.ds(row0, rows_in), :]                 # already in matmul dtype
    acc = _conv_band(x, w_ref, W=W, m_band=m_band)
    z_ref[...] = acc.astype(z_ref.dtype)
    stats_ref[...] = _band_stats(acc, W=W, w_valid=w_valid)


def _conv2_band_kernel(x_ref, scale_ref, shift_ref, w_ref,
                       pmax_ref, pmin_ref, stats_ref, *, W, bh, w_valid, wp, tail):
    """BN1+ReLU -> conv2 -> 2x2 max/min pool of the raw output + BN2 partials."""
    m_band = bh * W
    rows_in = (bh + 2) * W + tail
    row0 = pl.program_id(1) * m_band
    # Fused BN1 affine + ReLU in f32, then a single cast to the matmul dtype.
    xr = x_ref[pl.ds(row0, rows_in), :].astype(jnp.float32)
    x = jnp.maximum(xr * scale_ref[...] + shift_ref[...], 0.0).astype(w_ref.dtype)
    acc = _conv_band(x, w_ref, W=W, m_band=m_band)
    stats_ref[...] = _band_stats(acc, W=W, w_valid=w_valid)

    # 2x2 / stride-2 max & min pooling of the *raw* conv output, valid cols only.
    # BN2+ReLU is applied sign-aware by the finalize kernel, so full z2 never
    # round-trips through HBM.  (Any junk in the invalid columns / halo tail is
    # excluded by the :2*wp slice and the valid-mask in the stats.)
    co = acc.shape[1]
    hp_b = bh // 2
    a = acc.reshape(bh, W, co)[:, :2 * wp, :]
    a = a.reshape(bh, wp, 2, co)
    wmax = jnp.max(a, axis=2)[:2 * hp_b]
    wmin = jnp.min(a, axis=2)[:2 * hp_b]
    pmax_ref[...] = jnp.max(wmax.reshape(hp_b, 2, wp, co), axis=1)
    pmin_ref[...] = jnp.min(wmin.reshape(hp_b, 2, wp, co), axis=1)


def _finalize_kernel(pmax_ref, pmin_ref, scale_ref, shift_ref, o_ref):
    """BN2 + ReLU on pooled pair: maxpool(relu(s*z+t)) == relu(max(s*max, s*min)+t)."""
    s = scale_ref[...]                                  # (1, Co), broadcasts
    t = shift_ref[...]
    o_ref[...] = jnp.maximum(jnp.maximum(pmax_ref[...] * s, pmin_ref[...] * s) + t, 0.0)


# ---------------------------------------------------------------------------
# pallas_call wrappers
# ---------------------------------------------------------------------------
def _conv1_call(xf, w, *, bh, h_out, W, w_valid, vmem_limit):
    n, rows_total, ci = xf.shape
    co = w.shape[2]
    nb = h_out // bh
    m_band = bh * W
    kernel = functools.partial(_conv1_band_kernel, W=W, bh=bh, w_valid=w_valid, tail=ROW_PAD)
    # NOTE: the trailing ROW_PAD rows of z1 are never written.  They are only
    # ever read through the last band's halo and provably reach only invalid
    # (wrap-around) output columns, which are masked from stats and pooling.
    return pl.pallas_call(
        kernel,
        out_shape=(
            jax.ShapeDtypeStruct((n, h_out * W + ROW_PAD, co), xf.dtype),
            jax.ShapeDtypeStruct((n, nb, 2, co), jnp.float32),
        ),
        grid=(n, nb),
        in_specs=[
            pl.BlockSpec((None, rows_total, ci), lambda i, j: (i, 0, 0)),   # resident per image
            pl.BlockSpec((3, 3 * ci, co), lambda i, j: (0, 0, 0)),          # weights resident
        ],
        out_specs=(
            pl.BlockSpec((None, m_band, co), lambda i, j: (i, j, 0)),
            pl.BlockSpec((None, None, 2, co), lambda i, j: (i, j, 0, 0)),
        ),
        compiler_params=pltpu.CompilerParams(
            dimension_semantics=("parallel", "parallel"),
            vmem_limit_bytes=vmem_limit),
    )(xf, w)


def _conv2_call(z1, scale1, shift1, w, *, bh, h_out, W, w_valid, hp, wp, vmem_limit):
    n, rows_total, ci = z1.shape
    co = w.shape[2]
    nb = h_out // bh
    hp_b = bh // 2
    kernel = functools.partial(_conv2_band_kernel, W=W, bh=bh, w_valid=w_valid,
                               wp=wp, tail=ROW_PAD)
    return pl.pallas_call(
        kernel,
        out_shape=(
            jax.ShapeDtypeStruct((n, hp, wp, co), jnp.float32),   # pooled max of raw conv2
            jax.ShapeDtypeStruct((n, hp, wp, co), jnp.float32),   # pooled min of raw conv2
            jax.ShapeDtypeStruct((n, nb, 2, co), jnp.float32),    # BN2 partial stats
        ),
        grid=(n, nb),
        in_specs=[
            pl.BlockSpec((None, rows_total, ci), lambda i, j: (i, 0, 0)),
            pl.BlockSpec((1, ci), lambda i, j: (0, 0)),
            pl.BlockSpec((1, ci), lambda i, j: (0, 0)),
            pl.BlockSpec((3, 3 * ci, co), lambda i, j: (0, 0, 0)),
        ],
        out_specs=(
            pl.BlockSpec((None, hp_b, wp, co), lambda i, j: (i, j, 0, 0)),
            pl.BlockSpec((None, hp_b, wp, co), lambda i, j: (i, j, 0, 0)),
            pl.BlockSpec((None, None, 2, co), lambda i, j: (i, j, 0, 0)),
        ),
        compiler_params=pltpu.CompilerParams(
            dimension_semantics=("parallel", "parallel"),
            vmem_limit_bytes=vmem_limit),
    )(z1, scale1, shift1, w)


def _finalize_call(pmax, pmin, scale, shift, *, vmem_limit):
    n, hp, wp, co = pmax.shape
    return pl.pallas_call(
        _finalize_kernel,
        out_shape=jax.ShapeDtypeStruct((n, hp, wp, co), jnp.float32),
        grid=(n,),
        in_specs=[
            pl.BlockSpec((None, hp, wp, co), lambda i: (i, 0, 0, 0)),
            pl.BlockSpec((None, hp, wp, co), lambda i: (i, 0, 0, 0)),
            pl.BlockSpec((1, co), lambda i: (0, 0)),
            pl.BlockSpec((1, co), lambda i: (0, 0)),
        ],
        out_specs=pl.BlockSpec((None, hp, wp, co), lambda i: (i, 0, 0, 0)),
        compiler_params=pltpu.CompilerParams(
            dimension_semantics=("parallel",),
            vmem_limit_bytes=vmem_limit),
    )(pmax, pmin, scale, shift)


# ---------------------------------------------------------------------------
# Glue: parameter packing, BN finalize, full forward
# ---------------------------------------------------------------------------
def _pack_weight(w_oihw, ci_pad, co_pad, dtype):
    """(O, I, 3, 3) -> (3 [dy], 3*ci_pad [dx-major K], co_pad)."""
    co, ci = w_oihw.shape[0], w_oihw.shape[1]
    w = jnp.transpose(w_oihw, (2, 3, 1, 0)).astype(jnp.float32)      # (ky, kx, ci, co)
    w = jnp.pad(w, ((0, 0), (0, 0), (0, ci_pad - ci), (0, co_pad - co)))
    return w.reshape(3, 3 * ci_pad, co_pad).astype(dtype)


def _bn_affine(stats, count, gamma, beta, c_pad):
    """Fold batch statistics + (gamma, beta) into a per-channel scale/shift."""
    s = jnp.sum(stats, axis=(0, 1))                                   # (2, c_pad)
    mean = s[0] / count
    # One-pass variance (E[x^2]-E[x]^2) in f32, clamped at 0.
    # TODO(synk): switch to a shifted/Welford accumulation if activations ever
    #             have large means (catastrophic cancellation risk).
    var = jnp.maximum(s[1] / count - mean * mean, 0.0)
    g = jnp.pad(gamma.astype(jnp.float32), (0, c_pad - gamma.shape[0]))
    b = jnp.pad(beta.astype(jnp.float32), (0, c_pad - beta.shape[0]))
    scale = g * jax.lax.rsqrt(var + EPS)
    shift = b - mean * scale
    return scale.reshape(1, c_pad), shift.reshape(1, c_pad)


def encoder_block_forward(x_nchw, params, *, compute_dtype=jnp.bfloat16, band_rows=None):
    """Forward pass of _EncoderBlock (training-mode BN, dropout=False)."""
    w1, b1, g1, be1, w2, b2, g2, be2 = params
    del b1, b2      # conv bias is exactly cancelled by training-mode BN mean subtraction
    n, cin, H, W = x_nchw.shape
    cout = w1.shape[0]
    assert W % 8 == 0, "wide-conv layout requires W % 8 == 0"
    assert H >= 6 and W >= 6, "need >=1 output pixel after two 3x3 convs + 2x2 pool"

    ci = _round_up(cin, LANE)
    co = _round_up(cout, LANE)
    itemsize = jnp.dtype(compute_dtype).itemsize

    h1, wv1 = H - 2, W - 2
    h2, wv2 = H - 4, W - 4
    hp, wp = h2 // 2, wv2 // 2

    vmem_limit = _vmem_limit_bytes()
    bh1 = _pick_band_rows(h1, W, ci, co, vmem_limit, itemsize, even=False, force=band_rows)
    bh2 = _pick_band_rows(h2, W, co, co, vmem_limit, itemsize, even=True, force=band_rows)

    # NCHW -> lane-padded flat NHWC ("wide" layout: row = h*W + w) in the matmul
    # dtype, plus ROW_PAD spare zero rows covering the 3x3 halo of the last band.
    x = jnp.transpose(x_nchw, (0, 2, 3, 1)).astype(compute_dtype)
    x = jnp.pad(x, ((0, 0), (0, 0), (0, 0), (0, ci - cin)))
    xf = jnp.pad(x.reshape(n, H * W, ci), ((0, 0), (0, ROW_PAD), (0, 0)))

    w1m = _pack_weight(w1, ci, co, compute_dtype)
    w2m = _pack_weight(w2, co, co, compute_dtype)

    # conv1 (+ per-(image, band) BN1 partial stats)
    z1, st1 = _conv1_call(xf, w1m, bh=bh1, h_out=h1, W=W, w_valid=wv1,
                          vmem_limit=vmem_limit)
    scale1, shift1 = _bn_affine(st1, n * h1 * wv1, g1, be1, co)

    # BN1+ReLU fused into conv2; conv2 emits 2x2-pooled max/min of its raw
    # output (+ BN2 partial stats) so full z2 never touches HBM.
    pmax, pmin, st2 = _conv2_call(z1, scale1, shift1, w2m, bh=bh2, h_out=h2, W=W,
                                  w_valid=wv2, hp=hp, wp=wp, vmem_limit=vmem_limit)
    scale2, shift2 = _bn_affine(st2, n * h2 * wv2, g2, be2, co)

    # BN2 + ReLU applied sign-aware to the pooled pair, then strip channel pad.
    y = _finalize_call(pmax, pmin, scale2, shift2, vmem_limit=vmem_limit)
    return jnp.transpose(y[..., :cout], (0, 3, 1, 2))                # NHWC -> NCHW


# ---------------------------------------------------------------------------
# Parameter init + pure-JAX reference (PyTorch semantics, incl. conv bias)
# ---------------------------------------------------------------------------
def init_params(key, in_channels, out_channels):
    ks = jax.random.split(key, 8)
    w1 = 0.1 * jax.random.normal(ks[0], (out_channels, in_channels, 3, 3), jnp.float32)
    b1 = 0.1 * jax.random.normal(ks[1], (out_channels,), jnp.float32)
    g1 = 1.0 + 0.1 * jax.random.normal(ks[2], (out_channels,), jnp.float32)
    be1 = 0.1 * jax.random.normal(ks[3], (out_channels,), jnp.float32)
    w2 = 0.1 * jax.random.normal(ks[4], (out_channels, out_channels, 3, 3), jnp.float32)
    b2 = 0.1 * jax.random.normal(ks[5], (out_channels,), jnp.float32)
    g2 = 1.0 + 0.1 * jax.random.normal(ks[6], (out_channels,), jnp.float32)
    be2 = 0.1 * jax.random.normal(ks[7], (out_channels,), jnp.float32)
    return (w1, b1, g1, be1, w2, b2, g2, be2)


def ref_forward(x_nchw, params):
    w1, b1, g1, be1, w2, b2, g2, be2 = params

    def conv(x, w, b):
        y = jax.lax.conv_general_dilated(
            x, w, (1, 1), 'VALID', dimension_numbers=('NCHW', 'OIHW', 'NCHW'))
        return y + b[None, :, None, None]

    def bn(x, g, be):
        mean = jnp.mean(x, axis=(0, 2, 3), keepdims=True)
        var = jnp.mean(jnp.square(x - mean), axis=(0, 2, 3), keepdims=True)
        return (x - mean) * jax.lax.rsqrt(var + EPS) * g[None, :, None, None] \
               + be[None, :, None, None]

    y = jax.nn.relu(bn(conv(x_nchw, w1, b1), g1, be1))
    y = jax.nn.relu(bn(conv(y, w2, b2), g2, be2))
    y = jax.lax.reduce_window(y, -jnp.inf, jax.lax.max,
                              (1, 1, 2, 2), (1, 1, 2, 2), 'VALID')
    return y


if __name__ == "__main__":
    key = jax.random.PRNGKey(0)
    kx, kp = jax.random.split(key)

    in_channels, out_channels = 4, 8
    x = jax.random.normal(kx, (2, in_channels, 16, 16), jnp.float32)
    params = init_params(kp, in_channels, out_channels)
    ref = ref_forward(x, params)

    # 1) Shipped fast path: bf16 MXU operands / intermediates, auto band size.
    fwd_bf16 = jax.jit(functools.partial(encoder_block_forward,
                                         compute_dtype=jnp.bfloat16))
    out = jax.block_until_ready(fwd_bf16(x, params))
    assert out.shape == (2, out_channels, 6, 6), out.shape
    err_bf16 = float(jnp.max(jnp.abs(out - ref)))
    if not bool(jnp.allclose(out, ref, atol=5e-2, rtol=5e-2)):
        raise SystemExit(f"bf16 path mismatch vs reference, max abs err = {err_bf16}")

    # 2) f32 path with forced multi-band tiling: validates the banded indexing
    #    and BN bookkeeping at tight tolerance.
    fwd_f32 = jax.jit(functools.partial(encoder_block_forward,
                                        compute_dtype=jnp.float32, band_rows=4))
    out32 = jax.block_until_ready(fwd_f32(x, params))
    err_f32 = float(jnp.max(jnp.abs(out32 - ref)))
    if not bool(jnp.allclose(out32, ref, atol=5e-3, rtol=5e-3)):
        raise SystemExit(f"f32 banded path mismatch vs reference, max abs err = {err_f32}")

    print("KERNEL_OK")
</pallas_src>

<mosaic_0001>
module attributes {stable_mosaic.version = 11 : i64} {
  func.func @_conv1_band_kernel(%arg0: i32, %arg1: i32, %arg2: memref<1x264x128xbf16, #tpu.memory_space<vmem>>, %arg3: memref<3x384x128xbf16, #tpu.memory_space<vmem>>, %arg4: memref<1x224x128xbf16, #tpu.memory_space<vmem>>, %arg5: memref<1x1x2x128xf32, #tpu.memory_space<vmem>>) attributes {dimension_semantics = [#tpu.dimension_semantics<parallel>, #tpu.dimension_semantics<parallel>], iteration_bounds = array<i64: 2, 1>, scalar_prefetch = 0 : i64, scratch_operands = 0 : i64, tpu.core_type = #tpu.core_type<tc>, window_params = [{transform_indices = @transform_0, window_bounds = array<i64: 1, 264, 128>}, {pipeline_mode = #tpu.pipeline_mode<synchronous>, transform_indices = @transform_1, window_bounds = array<i64: 3, 384, 128>}, {transform_indices = @transform_2, window_bounds = array<i64: 1, 224, 128>}, {transform_indices = @transform_3, window_bounds = array<i64: 1, 1, 2, 128>}]} {
    %c224_i32 = arith.constant 224 : i32
    %0 = arith.muli %arg1, %c224_i32 : i32
    %c0 = arith.constant 0 : index
    %1 = arith.index_cast %0 : i32 to index
    %c0_0 = arith.constant 0 : index
    %2 = vector.load %arg2[%c0, %1, %c0_0] : memref<1x264x128xbf16, #tpu.memory_space<vmem>>, vector<1x264x128xbf16>
    %3 = vector.shape_cast %2 : vector<1x264x128xbf16> to vector<264x128xbf16>
    %4 = vector.extract_strided_slice %3 {offsets = [0, 0], sizes = [256, 128], strides = [1, 1]} : vector<264x128xbf16> to vector<256x128xbf16>
    %5 = vector.extract_strided_slice %3 {offsets = [1, 0], sizes = [256, 128], strides = [1, 1]} : vector<264x128xbf16> to vector<256x128xbf16>
    %6 = vector.extract_strided_slice %3 {offsets = [2, 0], sizes = [256, 128], strides = [1, 1]} : vector<264x128xbf16> to vector<256x128xbf16>
    %cst = arith.constant 0.000000e+00 : f32
    %7 = vector.broadcast %cst : f32 to vector<224x128xf32>
    %8 = vector.extract_strided_slice %4 {offsets = [0, 0], sizes = [224, 128], strides = [1, 1]} : vector<256x128xbf16> to vector<224x128xbf16>
    %9 = vector.extract_strided_slice %5 {offsets = [0, 0], sizes = [224, 128], strides = [1, 1]} : vector<256x128xbf16> to vector<224x128xbf16>
    %10 = vector.extract_strided_slice %6 {offsets = [0, 0], sizes = [224, 128], strides = [1, 1]} : vector<256x128xbf16> to vector<224x128xbf16>
    %11 = tpu.concatenate %8, %9, %10 in 1 : vector<224x128xbf16>, vector<224x128xbf16>, vector<224x128xbf16> -> vector<224x384xbf16>
    %c0_1 = arith.constant 0 : index
    %c0_2 = arith.constant 0 : index
    %c0_3 = arith.constant 0 : index
    %12 = vector.load %arg3[%c0_1, %c0_2, %c0_3] : memref<3x384x128xbf16, #tpu.memory_space<vmem>>, vector<1x384x128xbf16>
    %13 = vector.shape_cast %12 : vector<1x384x128xbf16> to vector<384x128xbf16>
    %cst_4 = arith.constant dense<0.000000e+00> : vector<224x128xf32>
    %14 = tpu.matmul %11, %13, %cst_4 {dimension_numbers = #tpu.dot_dimension_numbers<[1], [0], [0], [1], [0, 0, 1, 1], [], []>} : vector<224x384xbf16>, vector<384x128xbf16>, vector<224x128xf32> -> vector<224x128xf32>
    %15 = arith.addf %7, %14 : vector<224x128xf32>
    %16 = vector.extract_strided_slice %4 {offsets = [16, 0], sizes = [224, 128], strides = [1, 1]} : vector<256x128xbf16> to vector<224x128xbf16>
    %17 = vector.extract_strided_slice %5 {offsets = [16, 0], sizes = [224, 128], strides = [1, 1]} : vector<256x128xbf16> to vector<224x128xbf16>
    %18 = vector.extract_strided_slice %6 {offsets = [16, 0], sizes = [224, 128], strides = [1, 1]} : vector<256x128xbf16> to vector<224x128xbf16>
    %19 = tpu.concatenate %16, %17, %18 in 1 : vector<224x128xbf16>, vector<224x128xbf16>, vector<224x128xbf16> -> vector<224x384xbf16>
    %c1 = arith.constant 1 : index
    %c0_5 = arith.constant 0 : index
    %c0_6 = arith.constant 0 : index
    %20 = vector.load %arg3[%c1, %c0_5, %c0_6] : memref<3x384x128xbf16, #tpu.memory_space<vmem>>, vector<1x384x128xbf16>
    %21 = vector.shape_cast %20 : vector<1x384x128xbf16> to vector<384x128xbf16>
    %cst_7 = arith.constant dense<0.000000e+00> : vector<224x128xf32>
    %22 = tpu.matmul %19, %21, %cst_7 {dimension_numbers = #tpu.dot_dimension_numbers<[1], [0], [0], [1], [0, 0, 1, 1], [], []>} : vector<224x384xbf16>, vector<384x128xbf16>, vector<224x128xf32> -> vector<224x128xf32>
    %23 = arith.addf %15, %22 : vector<224x128xf32>
    %24 = vector.extract_strided_slice %4 {offsets = [32, 0], sizes = [224, 128], strides = [1, 1]} : vector<256x128xbf16> to vector<224x128xbf16>
    %25 = vector.extract_strided_slice %5 {offsets = [32, 0], sizes = [224, 128], strides = [1, 1]} : vector<256x128xbf16> to vector<224x128xbf16>
    %26 = vector.extract_strided_slice %6 {offsets = [32, 0], sizes = [224, 128], strides = [1, 1]} : vector<256x128xbf16> to vector<224x128xbf16>
    %27 = tpu.concatenate %24, %25, %26 in 1 : vector<224x128xbf16>, vector<224x128xbf16>, vector<224x128xbf16> -> vector<224x384xbf16>
    %c2 = arith.constant 2 : index
    %c0_8 = arith.constant 0 : index
    %c0_9 = arith.constant 0 : index
    %28 = vector.load %arg3[%c2, %c0_8, %c0_9] : memref<3x384x128xbf16, #tpu.memory_space<vmem>>, vector<1x384x128xbf16>
    %29 = vector.shape_cast %28 : vector<1x384x128xbf16> to vector<384x128xbf16>
    %cst_10 = arith.constant dense<0.000000e+00> : vector<224x128xf32>
    %30 = tpu.matmul %27, %29, %cst_10 {dimension_numbers = #tpu.dot_dimension_numbers<[1], [0], [0], [1], [0, 0, 1, 1], [], []>} : vector<224x384xbf16>, vector<384x128xbf16>, vector<224x128xf32> -> vector<224x128xf32>
    %31 = arith.addf %23, %30 : vector<224x128xf32>
    %32 = arith.truncf %31 : vector<224x128xf32> to vector<224x128xbf16>
    %c0_11 = arith.constant 0 : index
    %c0_12 = arith.constant 0 : index
    %c0_13 = arith.constant 0 : index
    %33 = vector.load %arg4[%c0_11, %c0_12, %c0_13] : memref<1x224x128xbf16, #tpu.memory_space<vmem>>, vector<1x224x128xbf16>
    %34 = vector.shape_cast %33 : vector<1x224x128xbf16> to vector<224x128xbf16>
    %35 = vector.shape_cast %32 : vector<224x128xbf16> to vector<1x224x128xbf16>
    tpu.vector_store %arg4[%c0_11, %c0_12, %c0_13], %35 {strides = array<i32>} : memref<1x224x128xbf16, #tpu.memory_space<vmem>>, vector<1x224x128xbf16>,
    %36 = tpu.iota {dimensions = array<i32: 0>} : vector<224x1xi32>
    %c16_i32 = arith.constant 16 : i32
    %c0_i32 = arith.constant 0 : i32
    %37 = arith.cmpi eq, %c16_i32, %c0_i32 : i32
    %c1_i32 = arith.constant 1 : i32
    %38 = arith.select %37, %c1_i32, %c16_i32 : i32
    %39 = vector.broadcast %38 : i32 to vector<224x1xi32>
    %40 = arith.remsi %36, %39 : vector<224x1xi32>
    %c0_i32_14 = arith.constant 0 : i32
    %41 = vector.broadcast %c0_i32_14 : i32 to vector<224x1xi32>
    %42 = arith.cmpi ne, %40, %41 : vector<224x1xi32>
    %c0_i32_15 = arith.constant 0 : i32
    %43 = vector.broadcast %c0_i32_15 : i32 to vector<224x1xi32>
    %44 = arith.cmpi slt, %40, %43 : vector<224x1xi32>
    %c0_i32_16 = arith.constant 0 : i32
    %45 = arith.cmpi slt, %38, %c0_i32_16 : i32
    %46 = vector.broadcast %45 : i1 to vector<224x1xi1>
    %47 = vector.broadcast %46 : vector<224x1xi1> to vector<224x1xi1>
    %48 = arith.xori %44, %47 : vector<224x1xi1>
    %49 = arith.andi %48, %42 : vector<224x1xi1>
    %50 = vector.broadcast %38 : i32 to vector<224x1xi32>
    %51 = arith.addi %40, %50 : vector<224x1xi32>
    %52 = arith.select %49, %51, %40 : vector<224x1xi1>, vector<224x1xi32>
    %c14_i32 = arith.constant 14 : i32
    %53 = vector.broadcast %c14_i32 : i32 to vector<224x1xi32>
    %54 = arith.cmpi slt, %52, %53 : vector<224x1xi32>
    %cst_17 = arith.constant 0.000000e+00 : f32
    %55 = vector.shape_cast %54 : vector<224x1xi1> to vector<224x1xi1>
    %56 = vector.broadcast %55 : vector<224x1xi1> to vector<224x128xi1>
    %57 = vector.broadcast %cst_17 : f32 to vector<224x128xf32>
    %58 = arith.select %56, %31, %57 : vector<224x128xi1>, vector<224x128xf32>
    %cst_18 = arith.constant dense<0.000000e+00> : vector<128xf32>
    %59 = vector.multi_reduction <add>, %58, %cst_18 [0] : vector<224x128xf32> to vector<128xf32>
    %60 = vector.shape_cast %59 : vector<128xf32> to vector<1x128xf32>
    %61 = arith.mulf %58, %58 : vector<224x128xf32>
    %cst_19 = arith.constant dense<0.000000e+00> : vector<128xf32>
    %62 = vector.multi_reduction <add>, %61, %cst_19 [0] : vector<224x128xf32> to vector<128xf32>
    %63 = vector.shape_cast %62 : vector<128xf32> to vector<1x128xf32>
    %64 = tpu.concatenate %60, %63 in 0 : vector<1x128xf32>, vector<1x128xf32> -> vector<2x128xf32>
    %c0_20 = arith.constant 0 : index
    %c0_21 = arith.constant 0 : index
    %c0_22 = arith.constant 0 : index
    %c0_23 = arith.constant 0 : index
    %65 = vector.load %arg5[%c0_20, %c0_21, %c0_22, %c0_23] : memref<1x1x2x128xf32, #tpu.memory_space<vmem>>, vector<1x1x2x128xf32>
    %66 = vector.shape_cast %65 : vector<1x1x2x128xf32> to vector<2x128xf32>
    %67 = vector.shape_cast %64 : vector<2x128xf32> to vector<1x1x2x128xf32>
    tpu.vector_store %arg5[%c0_20, %c0_21, %c0_22, %c0_23], %67 {strides = array<i32>} : memref<1x1x2x128xf32, #tpu.memory_space<vmem>>, vector<1x1x2x128xf32>,
    return
  }
  func.func @transform_0(%arg0: i32, %arg1: i32) -> (i32, i32, i32) {
    %c0_i32 = arith.constant 0 : i32
    %c0_i32_0 = arith.constant 0 : i32
    %c0_i32_1 = arith.constant 0 : i32
    return %arg0, %c0_i32, %c0_i32_0 : i32, i32, i32
  }
  func.func @transform_1(%arg0: i32, %arg1: i32) -> (i32, i32, i32) {
    %c0_i32 = arith.constant 0 : i32
    %c0_i32_0 = arith.constant 0 : i32
    %c0_i32_1 = arith.constant 0 : i32
    %c0_i32_2 = arith.constant 0 : i32
    return %c0_i32, %c0_i32_0, %c0_i32_1 : i32, i32, i32
  }
  func.func @transform_2(%arg0: i32, %arg1: i32) -> (i32, i32, i32) {
    %c0_i32 = arith.constant 0 : i32
    %c0_i32_0 = arith.constant 0 : i32
    return %arg0, %arg1, %c0_i32 : i32, i32, i32
  }
  func.func @transform_3(%arg0: i32, %arg1: i32) -> (i32, i32, i32, i32) {
    %c0_i32 = arith.constant 0 : i32
    %c0_i32_0 = arith.constant 0 : i32
    %c0_i32_1 = arith.constant 0 : i32
    return %arg0, %arg1, %c0_i32, %c0_i32_0 : i32, i32, i32, i32
  }
}

module attributes {stable_mosaic.version = 11 : i64} {
  func.func @_finalize_kernel(%arg0: i32, %arg1: memref<1x6x6x128xf32, #tpu.memory_space<vmem>>, %arg2: memref<1x6x6x128xf32, #tpu.memory_space<vmem>>, %arg3: memref<1x128xf32, #tpu.memory_space<vmem>>, %arg4: memref<1x128xf32, #tpu.memory_space<vmem>>, %arg5: memref<1x6x6x128xf32, #tpu.memory_space<vmem>>) attributes {dimension_semantics = [#tpu.dimension_semantics<parallel>], iteration_bounds = array<i64: 2>, scalar_prefetch = 0 : i64, scratch_operands = 0 : i64, tpu.core_type = #tpu.core_type<tc>, window_params = [{transform_indices = @transform_0, window_bounds = array<i64: 1, 6, 6, 128>}, {transform_indices = @transform_1, window_bounds = array<i64: 1, 6, 6, 128>}, {pipeline_mode = #tpu.pipeline_mode<synchronous>, transform_indices = @transform_2, window_bounds = array<i64: 1, 128>}, {pipeline_mode = #tpu.pipeline_mode<synchronous>, transform_indices = @transform_3, window_bounds = array<i64: 1, 128>}, {transform_indices = @transform_4, window_bounds = array<i64: 1, 6, 6, 128>}]} {
    %c0 = arith.constant 0 : index
    %c0_0 = arith.constant 0 : index
    %0 = vector.load %arg3[%c0, %c0_0] : memref<1x128xf32, #tpu.memory_space<vmem>>, vector<1x128xf32>
    %c0_1 = arith.constant 0 : index
    %c0_2 = arith.constant 0 : index
    %1 = vector.load %arg4[%c0_1, %c0_2] : memref<1x128xf32, #tpu.memory_space<vmem>>, vector<1x128xf32>
    %c0_3 = arith.constant 0 : index
    %c0_4 = arith.constant 0 : index
    %c0_5 = arith.constant 0 : index
    %c0_6 = arith.constant 0 : index
    %2 = vector.load %arg1[%c0_3, %c0_4, %c0_5, %c0_6] : memref<1x6x6x128xf32, #tpu.memory_space<vmem>>, vector<1x6x6x128xf32>
    %3 = vector.shape_cast %2 : vector<1x6x6x128xf32> to vector<6x6x128xf32>
    %4 = vector.shape_cast %0 : vector<1x128xf32> to vector<1x1x128xf32>
    %5 = vector.broadcast %4 : vector<1x1x128xf32> to vector<6x6x128xf32>
    %6 = arith.mulf %3, %5 : vector<6x6x128xf32>
    %c0_7 = arith.constant 0 : index
    %c0_8 = arith.constant 0 : index
    %c0_9 = arith.constant 0 : index
    %c0_10 = arith.constant 0 : index
    %7 = vector.load %arg2[%c0_7, %c0_8, %c0_9, %c0_10] : memref<1x6x6x128xf32, #tpu.memory_space<vmem>>, vector<1x6x6x128xf32>
    %8 = vector.shape_cast %7 : vector<1x6x6x128xf32> to vector<6x6x128xf32>
    %9 = vector.shape_cast %0 : vector<1x128xf32> to vector<1x1x128xf32>
    %10 = vector.broadcast %9 : vector<1x1x128xf32> to vector<6x6x128xf32>
    %11 = arith.mulf %8, %10 : vector<6x6x128xf32>
    %12 = arith.maximumf %6, %11 : vector<6x6x128xf32>
    %13 = vector.shape_cast %1 : vector<1x128xf32> to vector<1x1x128xf32>
    %14 = vector.broadcast %13 : vector<1x1x128xf32> to vector<6x6x128xf32>
    %15 = arith.addf %12, %14 : vector<6x6x128xf32>
    %cst = arith.constant 0.000000e+00 : f32
    %16 = vector.broadcast %cst : f32 to vector<6x6x128xf32>
    %17 = arith.maximumf %15, %16 : vector<6x6x128xf32>
    %c0_11 = arith.constant 0 : index
    %c0_12 = arith.constant 0 : index
    %c0_13 = arith.constant 0 : index
    %c0_14 = arith.constant 0 : index
    %18 = vector.load %arg5[%c0_11, %c0_12, %c0_13, %c0_14] : memref<1x6x6x128xf32, #tpu.memory_space<vmem>>, vector<1x6x6x128xf32>
    %19 = vector.shape_cast %18 : vector<1x6x6x128xf32> to vector<6x6x128xf32>
    %20 = vector.shape_cast %17 : vector<6x6x128xf32> to vector<1x6x6x128xf32>
    tpu.vector_store %arg5[%c0_11, %c0_12, %c0_13, %c0_14], %20 {strides = array<i32>} : memref<1x6x6x128xf32, #tpu.memory_space<vmem>>, vector<1x6x6x128xf32>,
    return
  }
  func.func @transform_0(%arg0: i32) -> (i32, i32, i32, i32) {
    %c0_i32 = arith.constant 0 : i32
    %c0_i32_0 = arith.constant 0 : i32
    %c0_i32_1 = arith.constant 0 : i32
    %c0_i32_2 = arith.constant 0 : i32
    return %arg0, %c0_i32, %c0_i32_0, %c0_i32_1 : i32, i32, i32, i32
  }
  func.func @transform_1(%arg0: i32) -> (i32, i32, i32, i32) {
    %c0_i32 = arith.constant 0 : i32
    %c0_i32_0 = arith.constant 0 : i32
    %c0_i32_1 = arith.constant 0 : i32
    %c0_i32_2 = arith.constant 0 : i32
    return %arg0, %c0_i32, %c0_i32_0, %c0_i32_1 : i32, i32, i32, i32
  }
  func.func @transform_2(%arg0: i32) -> (i32, i32) {
    %c0_i32 = arith.constant 0 : i32
    %c0_i32_0 = arith.constant 0 : i32
    %c0_i32_1 = arith.constant 0 : i32
    return %c0_i32, %c0_i32_0 : i32, i32
  }
  func.func @transform_3(%arg0: i32) -> (i32, i32) {
    %c0_i32 = arith.constant 0 : i32
    %c0_i32_0 = arith.constant 0 : i32
    %c0_i32_1 = arith.constant 0 : i32
    return %c0_i32, %c0_i32_0 : i32, i32
  }
  func.func @transform_4(%arg0: i32) -> (i32, i32, i32, i32) {
    %c0_i32 = arith.constant 0 : i32
    %c0_i32_0 = arith.constant 0 : i32
    %c0_i32_1 = arith.constant 0 : i32
    %c0_i32_2 = arith.constant 0 : i32
    return %arg0, %c0_i32, %c0_i32_0, %c0_i32_1 : i32, i32, i32, i32
  }
}

module attributes {stable_mosaic.version = 11 : i64} {
  func.func @_conv2_band_kernel(%arg0: i32, %arg1: i32, %arg2: memref<1x232x128xbf16, #tpu.memory_space<vmem>>, %arg3: memref<1x128xf32, #tpu.memory_space<vmem>>, %arg4: memref<1x128xf32, #tpu.memory_space<vmem>>, %arg5: memref<3x384x128xbf16, #tpu.memory_space<vmem>>, %arg6: memref<1x6x6x128xf32, #tpu.memory_space<vmem>>, %arg7: memref<1x6x6x128xf32, #tpu.memory_space<vmem>>, %arg8: memref<1x1x2x128xf32, #tpu.memory_space<vmem>>) attributes {dimension_semantics = [#tpu.dimension_semantics<parallel>, #tpu.dimension_semantics<parallel>], iteration_bounds = array<i64: 2, 1>, scalar_prefetch = 0 : i64, scratch_operands = 0 : i64, tpu.core_type = #tpu.core_type<tc>, window_params = [{transform_indices = @transform_0, window_bounds = array<i64: 1, 232, 128>}, {pipeline_mode = #tpu.pipeline_mode<synchronous>, transform_indices = @transform_1, window_bounds = array<i64: 1, 128>}, {pipeline_mode = #tpu.pipeline_mode<synchronous>, transform_indices = @transform_2, window_bounds = array<i64: 1, 128>}, {pipeline_mode = #tpu.pipeline_mode<synchronous>, transform_indices = @transform_3, window_bounds = array<i64: 3, 384, 128>}, {transform_indices = @transform_4, window_bounds = array<i64: 1, 6, 6, 128>}, {transform_indices = @transform_5, window_bounds = array<i64: 1, 6, 6, 128>}, {transform_indices = @transform_6, window_bounds = array<i64: 1, 1, 2, 128>}]} {
    %c192_i32 = arith.constant 192 : i32
    %0 = arith.muli %arg1, %c192_i32 : i32
    %c0 = arith.constant 0 : index
    %1 = arith.index_cast %0 : i32 to index
    %c0_0 = arith.constant 0 : index
    %2 = vector.load %arg2[%c0, %1, %c0_0] : memref<1x232x128xbf16, #tpu.memory_space<vmem>>, vector<1x232x128xbf16>
    %3 = vector.shape_cast %2 : vector<1x232x128xbf16> to vector<232x128xbf16>
    %4 = arith.extf %3 : vector<232x128xbf16> to vector<232x128xf32>
    %c0_1 = arith.constant 0 : index
    %c0_2 = arith.constant 0 : index
    %5 = vector.load %arg3[%c0_1, %c0_2] : memref<1x128xf32, #tpu.memory_space<vmem>>, vector<1x128xf32>
    %6 = vector.broadcast %5 : vector<1x128xf32> to vector<232x128xf32>
    %7 = arith.mulf %4, %6 : vector<232x128xf32>
    %c0_3 = arith.constant 0 : index
    %c0_4 = arith.constant 0 : index
    %8 = vector.load %arg4[%c0_3, %c0_4] : memref<1x128xf32, #tpu.memory_space<vmem>>, vector<1x128xf32>
    %9 = vector.broadcast %8 : vector<1x128xf32> to vector<232x128xf32>
    %10 = arith.addf %7, %9 : vector<232x128xf32>
    %cst = arith.constant 0.000000e+00 : f32
    %11 = vector.broadcast %cst : f32 to vector<232x128xf32>
    %12 = arith.maximumf %10, %11 : vector<232x128xf32>
    %13 = arith.truncf %12 : vector<232x128xf32> to vector<232x128xbf16>
    %14 = vector.extract_strided_slice %13 {offsets = [0, 0], sizes = [224, 128], strides = [1, 1]} : vector<232x128xbf16> to vector<224x128xbf16>
    %15 = vector.extract_strided_slice %13 {offsets = [1, 0], sizes = [224, 128], strides = [1, 1]} : vector<232x128xbf16> to vector<224x128xbf16>
    %16 = vector.extract_strided_slice %13 {offsets = [2, 0], sizes = [224, 128], strides = [1, 1]} : vector<232x128xbf16> to vector<224x128xbf16>
    %cst_5 = arith.constant 0.000000e+00 : f32
    %17 = vector.broadcast %cst_5 : f32 to vector<192x128xf32>
    %18 = vector.extract_strided_slice %14 {offsets = [0, 0], sizes = [192, 128], strides = [1, 1]} : vector<224x128xbf16> to vector<192x128xbf16>
    %19 = vector.extract_strided_slice %15 {offsets = [0, 0], sizes = [192, 128], strides = [1, 1]} : vector<224x128xbf16> to vector<192x128xbf16>
    %20 = vector.extract_strided_slice %16 {offsets = [0, 0], sizes = [192, 128], strides = [1, 1]} : vector<224x128xbf16> to vector<192x128xbf16>
    %21 = tpu.concatenate %18, %19, %20 in 1 : vector<192x128xbf16>, vector<192x128xbf16>, vector<192x128xbf16> -> vector<192x384xbf16>
    %c0_6 = arith.constant 0 : index
    %c0_7 = arith.constant 0 : index
    %c0_8 = arith.constant 0 : index
    %22 = vector.load %arg5[%c0_6, %c0_7, %c0_8] : memref<3x384x128xbf16, #tpu.memory_space<vmem>>, vector<1x384x128xbf16>
    %23 = vector.shape_cast %22 : vector<1x384x128xbf16> to vector<384x128xbf16>
    %cst_9 = arith.constant dense<0.000000e+00> : vector<192x128xf32>
    %24 = tpu.matmul %21, %23, %cst_9 {dimension_numbers = #tpu.dot_dimension_numbers<[1], [0], [0], [1], [0, 0, 1, 1], [], []>} : vector<192x384xbf16>, vector<384x128xbf16>, vector<192x128xf32> -> vector<192x128xf32>
    %25 = arith.addf %17, %24 : vector<192x128xf32>
    %26 = vector.extract_strided_slice %14 {offsets = [16, 0], sizes = [192, 128], strides = [1, 1]} : vector<224x128xbf16> to vector<192x128xbf16>
    %27 = vector.extract_strided_slice %15 {offsets = [16, 0], sizes = [192, 128], strides = [1, 1]} : vector<224x128xbf16> to vector<192x128xbf16>
    %28 = vector.extract_strided_slice %16 {offsets = [16, 0], sizes = [192, 128], strides = [1, 1]} : vector<224x128xbf16> to vector<192x128xbf16>
    %29 = tpu.concatenate %26, %27, %28 in 1 : vector<192x128xbf16>, vector<192x128xbf16>, vector<192x128xbf16> -> vector<192x384xbf16>
    %c1 = arith.constant 1 : index
    %c0_10 = arith.constant 0 : index
    %c0_11 = arith.constant 0 : index
    %30 = vector.load %arg5[%c1, %c0_10, %c0_11] : memref<3x384x128xbf16, #tpu.memory_space<vmem>>, vector<1x384x128xbf16>
    %31 = vector.shape_cast %30 : vector<1x384x128xbf16> to vector<384x128xbf16>
    %cst_12 = arith.constant dense<0.000000e+00> : vector<192x128xf32>
    %32 = tpu.matmul %29, %31, %cst_12 {dimension_numbers = #tpu.dot_dimension_numbers<[1], [0], [0], [1], [0, 0, 1, 1], [], []>} : vector<192x384xbf16>, vector<384x128xbf16>, vector<192x128xf32> -> vector<192x128xf32>
    %33 = arith.addf %25, %32 : vector<192x128xf32>
    %34 = vector.extract_strided_slice %14 {offsets = [32, 0], sizes = [192, 128], strides = [1, 1]} : vector<224x128xbf16> to vector<192x128xbf16>
    %35 = vector.extract_strided_slice %15 {offsets = [32, 0], sizes = [192, 128], strides = [1, 1]} : vector<224x128xbf16> to vector<192x128xbf16>
    %36 = vector.extract_strided_slice %16 {offsets = [32, 0], sizes = [192, 128], strides = [1, 1]} : vector<224x128xbf16> to vector<192x128xbf16>
    %37 = tpu.concatenate %34, %35, %36 in 1 : vector<192x128xbf16>, vector<192x128xbf16>, vector<192x128xbf16> -> vector<192x384xbf16>
    %c2 = arith.constant 2 : index
    %c0_13 = arith.constant 0 : index
    %c0_14 = arith.constant 0 : index
    %38 = vector.load %arg5[%c2, %c0_13, %c0_14] : memref<3x384x128xbf16, #tpu.memory_space<vmem>>, vector<1x384x128xbf16>
    %39 = vector.shape_cast %38 : vector<1x384x128xbf16> to vector<384x128xbf16>
    %cst_15 = arith.constant dense<0.000000e+00> : vector<192x128xf32>
    %40 = tpu.matmul %37, %39, %cst_15 {dimension_numbers = #tpu.dot_dimension_numbers<[1], [0], [0], [1], [0, 0, 1, 1], [], []>} : vector<192x384xbf16>, vector<384x128xbf16>, vector<192x128xf32> -> vector<192x128xf32>
    %41 = arith.addf %33, %40 : vector<192x128xf32>
    %42 = tpu.iota {dimensions = array<i32: 0>} : vector<192x1xi32>
    %c16_i32 = arith.constant 16 : i32
    %c0_i32 = arith.constant 0 : i32
    %43 = arith.cmpi eq, %c16_i32, %c0_i32 : i32
    %c1_i32 = arith.constant 1 : i32
    %44 = arith.select %43, %c1_i32, %c16_i32 : i32
    %45 = vector.broadcast %44 : i32 to vector<192x1xi32>
    %46 = arith.remsi %42, %45 : vector<192x1xi32>
    %c0_i32_16 = arith.constant 0 : i32
    %47 = vector.broadcast %c0_i32_16 : i32 to vector<192x1xi32>
    %48 = arith.cmpi ne, %46, %47 : vector<192x1xi32>
    %c0_i32_17 = arith.constant 0 : i32
    %49 = vector.broadcast %c0_i32_17 : i32 to vector<192x1xi32>
    %50 = arith.cmpi slt, %46, %49 : vector<192x1xi32>
    %c0_i32_18 = arith.constant 0 : i32
    %51 = arith.cmpi slt, %44, %c0_i32_18 : i32
    %52 = vector.broadcast %51 : i1 to vector<192x1xi1>
    %53 = vector.broadcast %52 : vector<192x1xi1> to vector<192x1xi1>
    %54 = arith.xori %50, %53 : vector<192x1xi1>
    %55 = arith.andi %54, %48 : vector<192x1xi1>
    %56 = vector.broadcast %44 : i32 to vector<192x1xi32>
    %57 = arith.addi %46, %56 : vector<192x1xi32>
    %58 = arith.select %55, %57, %46 : vector<192x1xi1>, vector<192x1xi32>
    %c12_i32 = arith.constant 12 : i32
    %59 = vector.broadcast %c12_i32 : i32 to vector<192x1xi32>
    %60 = arith.cmpi slt, %58, %59 : vector<192x1xi32>
    %cst_19 = arith.constant 0.000000e+00 : f32
    %61 = vector.shape_cast %60 : vector<192x1xi1> to vector<192x1xi1>
    %62 = vector.broadcast %61 : vector<192x1xi1> to vector<192x128xi1>
    %63 = vector.broadcast %cst_19 : f32 to vector<192x128xf32>
    %64 = arith.select %62, %41, %63 : vector<192x128xi1>, vector<192x128xf32>
    %cst_20 = arith.constant dense<0.000000e+00> : vector<128xf32>
    %65 = vector.multi_reduction <add>, %64, %cst_20 [0] : vector<192x128xf32> to vector<128xf32>
    %66 = vector.shape_cast %65 : vector<128xf32> to vector<1x128xf32>
    %67 = arith.mulf %64, %64 : vector<192x128xf32>
    %cst_21 = arith.constant dense<0.000000e+00> : vector<128xf32>
    %68 = vector.multi_reduction <add>, %67, %cst_21 [0] : vector<192x128xf32> to vector<128xf32>
    %69 = vector.shape_cast %68 : vector<128xf32> to vector<1x128xf32>
    %70 = tpu.concatenate %66, %69 in 0 : vector<1x128xf32>, vector<1x128xf32> -> vector<2x128xf32>
    %c0_22 = arith.constant 0 : index
    %c0_23 = arith.constant 0 : index
    %c0_24 = arith.constant 0 : index
    %c0_25 = arith.constant 0 : index
    %71 = vector.load %arg8[%c0_22, %c0_23, %c0_24, %c0_25] : memref<1x1x2x128xf32, #tpu.memory_space<vmem>>, vector<1x1x2x128xf32>
    %72 = vector.shape_cast %71 : vector<1x1x2x128xf32> to vector<2x128xf32>
    %73 = vector.shape_cast %70 : vector<2x128xf32> to vector<1x1x2x128xf32>
    tpu.vector_store %arg8[%c0_22, %c0_23, %c0_24, %c0_25], %73 {strides = array<i32>} : memref<1x1x2x128xf32, #tpu.memory_space<vmem>>, vector<1x1x2x128xf32>,
    %74 = vector.shape_cast %41 : vector<192x128xf32> to vector<12x16x128xf32>
    %75 = vector.extract_strided_slice %74 {offsets = [0, 0, 0], sizes = [12, 12, 128], strides = [1, 1, 1]} : vector<12x16x128xf32> to vector<12x12x128xf32>
    %76 = vector.shape_cast %75 : vector<12x12x128xf32> to vector<12x6x2x128xf32>
    %cst_26 = arith.constant dense<0xFF800000> : vector<12x6x128xf32>
    %77 = vector.multi_reduction <maximumf>, %76, %cst_26 [2] : vector<12x6x2x128xf32> to vector<12x6x128xf32>
    %cst_27 = arith.constant dense<0x7F800000> : vector<12x6x128xf32>
    %78 = vector.multi_reduction <minimumf>, %76, %cst_27 [2] : vector<12x6x2x128xf32> to vector<12x6x128xf32>
    %79 = vector.shape_cast %77 : vector<12x6x128xf32> to vector<6x2x6x128xf32>
    %cst_28 = arith.constant dense<0xFF800000> : vector<6x6x128xf32>
    %80 = vector.multi_reduction <maximumf>, %79, %cst_28 [1] : vector<6x2x6x128xf32> to vector<6x6x128xf32>
    %c0_29 = arith.constant 0 : index
    %c0_30 = arith.constant 0 : index
    %c0_31 = arith.constant 0 : index
    %c0_32 = arith.constant 0 : index
    %81 = vector.load %arg6[%c0_29, %c0_30, %c0_31, %c0_32] : memref<1x6x6x128xf32, #tpu.memory_space<vmem>>, vector<1x6x6x128xf32>
    %82 = vector.shape_cast %81 : vector<1x6x6x128xf32> to vector<6x6x128xf32>
    %83 = vector.shape_cast %80 : vector<6x6x128xf32> to vector<1x6x6x128xf32>
    tpu.vector_store %arg6[%c0_29, %c0_30, %c0_31, %c0_32], %83 {strides = array<i32>} : memref<1x6x6x128xf32, #tpu.memory_space<vmem>>, vector<1x6x6x128xf32>,
    %84 = vector.shape_cast %78 : vector<12x6x128xf32> to vector<6x2x6x128xf32>
    %cst_33 = arith.constant dense<0x7F800000> : vector<6x6x128xf32>
    %85 = vector.multi_reduction <minimumf>, %84, %cst_33 [1] : vector<6x2x6x128xf32> to vector<6x6x128xf32>
    %c0_34 = arith.constant 0 : index
    %c0_35 = arith.constant 0 : index
    %c0_36 = arith.constant 0 : index
    %c0_37 = arith.constant 0 : index
    %86 = vector.load %arg7[%c0_34, %c0_35, %c0_36, %c0_37] : memref<1x6x6x128xf32, #tpu.memory_space<vmem>>, vector<1x6x6x128xf32>
    %87 = vector.shape_cast %86 : vector<1x6x6x128xf32> to vector<6x6x128xf32>
    %88 = vector.shape_cast %85 : vector<6x6x128xf32> to vector<1x6x6x128xf32>
    tpu.vector_store %arg7[%c0_34, %c0_35, %c0_36, %c0_37], %88 {strides = array<i32>} : memref<1x6x6x128xf32, #tpu.memory_space<vmem>>, vector<1x6x6x128xf32>,
    return
  }
  func.func @transform_0(%arg0: i32, %arg1: i32) -> (i32, i32, i32) {
    %c0_i32 = arith.constant 0 : i32
    %c0_i32_0 = arith.constant 0 : i32
    %c0_i32_1 = arith.constant 0 : i32
    return %arg0, %c0_i32, %c0_i32_0 : i32, i32, i32
  }
  func.func @transform_1(%arg0: i32, %arg1: i32) -> (i32, i32) {
    %c0_i32 = arith.constant 0 : i32
    %c0_i32_0 = arith.constant 0 : i32
    %c0_i32_1 = arith.constant 0 : i32
    return %c0_i32, %c0_i32_0 : i32, i32
  }
  func.func @transform_2(%arg0: i32, %arg1: i32) -> (i32, i32) {
    %c0_i32 = arith.constant 0 : i32
    %c0_i32_0 = arith.constant 0 : i32
    %c0_i32_1 = arith.constant 0 : i32
    return %c0_i32, %c0_i32_0 : i32, i32
  }
  func.func @transform_3(%arg0: i32, %arg1: i32) -> (i32, i32, i32) {
    %c0_i32 = arith.constant 0 : i32
    %c0_i32_0 = arith.constant 0 : i32
    %c0_i32_1 = arith.constant 0 : i32
    %c0_i32_2 = arith.constant 0 : i32
    return %c0_i32, %c0_i32_0, %c0_i32_1 : i32, i32, i32
  }
  func.func @transform_4(%arg0: i32, %arg1: i32) -> (i32, i32, i32, i32) {
    %c0_i32 = arith.constant 0 : i32
    %c0_i32_0 = arith.constant 0 : i32
    %c0_i32_1 = arith.constant 0 : i32
    return %arg0, %arg1, %c0_i32, %c0_i32_0 : i32, i32, i32, i32
  }
  func.func @transform_5(%arg0: i32, %arg1: i32) -> (i32, i32, i32, i32) {
    %c0_i32 = arith.constant 0 : i32
    %c0_i32_0 = arith.constant 0 : i32
    %c0_i32_1 = arith.constant 0 : i32
    return %arg0, %arg1, %c0_i32, %c0_i32_0 : i32, i32, i32, i32
  }
  func.func @transform_6(%arg0: i32, %arg1: i32) -> (i32, i32, i32, i32) {
    %c0_i32 = arith.constant 0 : i32
    %c0_i32_0 = arith.constant 0 : i32
    %c0_i32_1 = arith.constant 0 : i32
    return %arg0, %arg1, %c0_i32, %c0_i32_0 : i32, i32, i32, i32
  }
}

</mosaic_0001>

<llo_original>
// kernel: encoder_block_forward.5
$region0: #{encoder_block_forward.5}
  #allocation0 [shape = 'u32[]', space=smem, size = 0x4, offset = 0x4, fixed_abs, tag = 'smem constant byte address 0x4 - core index']
  #allocation1 [shape = 'u32[144,128]{1,0:T(1,128)}', space=vmem, size = 0x12000, scoped, tag = 'internal scratch']
  %s0 = inlined_call_operand.hbm [shape: f32[2,6,6,128], index: 0, kind: input, shape index: {}]
  %s1 = inlined_call_operand.hbm [shape: f32[2,6,6,128], index: 1, kind: input, shape index: {}]
  %s2 = inlined_call_operand.hbm [shape: f32[1,128], index: 2, kind: input, shape index: {}]
  %s3 = inlined_call_operand.hbm [shape: f32[1,128], index: 3, kind: input, shape index: {}]
  %s4 = inlined_call_operand.hbm [shape: f32[2,6,6,128], index: 4, kind: output, shape index: {}]
  %s5 = sld [smem:[#allocation0]]
  $region65: #{encoder_block_forward.5} parent=0
    _
  %s7 = ssub.s32 1, %s5
  %s8 = scalar_select 0, %s7, %s5
  $region1: #{encoder_block_forward.5} parent=0
    #allocation2 [shape = 'u8[49152]{0}', space=vmem, size = 0xc000, scoped, tag = 'input window, operand 0']
    #allocation3 [shape = 's32[2]{0}', space=sflag, size = 0x8, scoped, tag = 'scoped memory for encoder_block_forward.5']
    #allocation4 [shape = 's32[2]{0}', space=sflag, size = 0x8, scoped, tag = 'scoped memory for encoder_block_forward.5']
    #allocation5 [shape = 'u8[49152]{0}', space=vmem, size = 0xc000, scoped, tag = 'input window, operand 1']
    #allocation6 [shape = 's32[2]{0}', space=sflag, size = 0x8, scoped, tag = 'scoped memory for encoder_block_forward.5']
    #allocation7 [shape = 'u8[512]{0}', space=vmem, size = 0x400, scoped, tag = 'input window, operand 2, single buffered']
    #allocation8 [shape = 'u8[512]{0}', space=vmem, size = 0x400, scoped, tag = 'input window, operand 3, single buffered']
    #allocation9 [shape = 's32[1]{0}', space=sflag, size = 0x4, scoped, tag = 'scoped memory for encoder_block_forward.5']
    #allocation10 [shape = 'u8[49152]{0}', space=vmem, size = 0xc000, scoped, tag = 'output window, operand 0']
    %9 = vsyncpa [#allocation3], 0
    %s10 = scalar_lea.sflag [#allocation3], 1
    %11 = vsyncpa %s10, 0
    %12 = vsyncpa [#allocation6], 0
    %s13 = scalar_lea.sflag [#allocation6], 1
    %14 = vsyncpa %s13, 0
    %15 = vsyncpa [#allocation9], 0
    %16 = vsyncpa [#allocation4], 0
    %s17 = scalar_lea.sflag [#allocation4], 1
    %18 = vsyncpa %s17, 0
    loop: start=0, step=1, limit=4
    $region2: #{encoder_block_forward.5} parent=1 // loop_pre_header
      _
    $region3: #{encoder_block_forward.5} parent=1 // loop_header
      %s20 = sphi 0, %s24
      %p21 = scmp.ge.s32.totalorder %s20, 4
      %s30 = sphi 0, %s32
      %s33 = sphi 0, %s30
      %s34 = sphi 0, %s33
      %s50 = sphi 0, %s34
      %s56 = sphi 0, %s58
      %s59 = sphi 0, %s56
      %s60 = sphi 0, %s59
      %s76 = sphi 0, %s60
      %s80 = sphi 0, %s80
      %s82 = sphi 0, %s80
      %s83 = sphi 0, %s82
      %s97 = sphi 0, %s83
      %s101 = sphi 0, %s101
      %s103 = sphi 0, %s101
      %s104 = sphi 0, %s103
      %s118 = sphi 0, %s104
      %s124 = sphi 0, %s126
      %s127 = sphi 0, %s124
      %s128 = sphi 0, %s127
      %s144 = sphi 0, %s128
    $region4: #{encoder_block_forward.5} parent=1 // loop_header_branch
      %23 = sbr.rel (%p21) target = $region8
    $region5: #{encoder_block_forward.5} parent=1 // loop_body
      %s25 = ssub.s32 %s20, 1
      %s26 = ssub.s32 %s20, 2
      %s27 = sadd.s32 %s20, 1
      %s28 = ssub.s32 %s20, %s27
      %p29 = scmp.eq.s32.totalorder %s28, 0
      %s31 = sadd.s32 %s30, 1
      %s32 = scalar_select %p29, %s30, %s31
      %p35 = pneg %p29
      %p36 = scmp.eq.s32.totalorder %s20, 1
      %p37 = por %p35, %p36
      %p38 = scmp.ne.s32.totalorder %s30, %s33
      %p39 = scmp.eq.s32.totalorder %s20, 0
      %p40 = por %p38, %p39
      %p41 = scmp.ne.s32.totalorder %s30, %s33
      %p42 = scmp.eq.s32.totalorder %s25, 1
      %p43 = por %p41, %p42
      %p44 = scmp.ne.s32.totalorder %s33, %s34
      %p45 = scmp.eq.s32.totalorder %s25, 0
      %p46 = por %p44, %p45
      %p47 = scmp.ne.s32.totalorder %s33, %s34
      %p48 = scmp.eq.s32.totalorder %s26, 1
      %p49 = por %p47, %p48
      %p51 = scmp.ne.s32.totalorder %s34, %s50
      %p52 = scmp.eq.s32.totalorder %s26, 0
      %p53 = por %p51, %p52
      %s54 = ssub.s32 %s20, %s27
      %p55 = scmp.eq.s32.totalorder %s54, 0
      %s57 = sadd.s32 %s56, 1
      %s58 = scalar_select %p55, %s56, %s57
      %p61 = pneg %p55
      %p62 = scmp.eq.s32.totalorder %s20, 1
      %p63 = por %p61, %p62
      %p64 = scmp.ne.s32.totalorder %s56, %s59
      %p65 = scmp.eq.s32.totalorder %s20, 0
      %p66 = por %p64, %p65
      %p67 = scmp.ne.s32.totalorder %s56, %s59
      %p68 = scmp.eq.s32.totalorder %s25, 1
      %p69 = por %p67, %p68
      %p70 = scmp.ne.s32.totalorder %s59, %s60
      %p71 = scmp.eq.s32.totalorder %s25, 0
      %p72 = por %p70, %p71
      %p73 = scmp.ne.s32.totalorder %s59, %s60
      %p74 = scmp.eq.s32.totalorder %s26, 1
      %p75 = por %p73, %p74
      %p77 = scmp.ne.s32.totalorder %s60, %s76
      %p78 = scmp.eq.s32.totalorder %s26, 0
      %p79 = por %p77, %p78
      %s81 = sadd.s32 %s80, 1
      %p84 = scmp.eq.s32.totalorder %s20, 1
      %p85 = scmp.ne.s32.totalorder %s80, %s82
      %p86 = scmp.eq.s32.totalorder %s20, 0
      %p87 = por %p85, %p86
      %p88 = scmp.ne.s32.totalorder %s80, %s82
      %p89 = scmp.eq.s32.totalorder %s25, 1
      %p90 = por %p88, %p89
      %p91 = scmp.ne.s32.totalorder %s82, %s83
      %p92 = scmp.eq.s32.totalorder %s25, 0
      %p93 = por %p91, %p92
      %p94 = scmp.ne.s32.totalorder %s82, %s83
      %p95 = scmp.eq.s32.totalorder %s26, 1
      %p96 = por %p94, %p95
      %p98 = scmp.ne.s32.totalorder %s83, %s97
      %p99 = scmp.eq.s32.totalorder %s26, 0
      %p100 = por %p98, %p99
      %s102 = sadd.s32 %s101, 1
      %p105 = scmp.eq.s32.totalorder %s20, 1
      %p106 = scmp.ne.s32.totalorder %s101, %s103
      %p107 = scmp.eq.s32.totalorder %s20, 0
      %p108 = por %p106, %p107
      %p109 = scmp.ne.s32.totalorder %s101, %s103
      %p110 = scmp.eq.s32.totalorder %s25, 1
      %p111 = por %p109, %p110
      %p112 = scmp.ne.s32.totalorder %s103, %s104
      %p113 = scmp.eq.s32.totalorder %s25, 0
      %p114 = por %p112, %p113
      %p115 = scmp.ne.s32.totalorder %s103, %s104
      %p116 = scmp.eq.s32.totalorder %s26, 1
      %p117 = por %p115, %p116
      %p119 = scmp.ne.s32.totalorder %s104, %s118
      %p120 = scmp.eq.s32.totalorder %s26, 0
      %p121 = por %p119, %p120
      %s122 = ssub.s32 %s20, %s27
      %p123 = scmp.eq.s32.totalorder %s122, 0
      %s125 = sadd.s32 %s124, 1
      %s126 = scalar_select %p123, %s124, %s125
      %p129 = pneg %p123
      %p130 = scmp.eq.s32.totalorder %s20, 1
      %p131 = por %p129, %p130
      %p132 = scmp.ne.s32.totalorder %s124, %s127
      %p133 = scmp.eq.s32.totalorder %s20, 0
      %p134 = por %p132, %p133
      %p135 = scmp.ne.s32.totalorder %s124, %s127
      %p136 = scmp.eq.s32.totalorder %s25, 1
      %p137 = por %p135, %p136
      %p138 = scmp.ne.s32.totalorder %s127, %s128
      %p139 = scmp.eq.s32.totalorder %s25, 0
      %p140 = por %p138, %p139
      %p141 = scmp.ne.s32.totalorder %s127, %s128
      %p142 = scmp.eq.s32.totalorder %s26, 1
      %p143 = por %p141, %p142
      %p145 = scmp.ne.s32.totalorder %s128, %s144
      %p146 = scmp.eq.s32.totalorder %s26, 0
      %p147 = por %p145, %p146
      %p148 = scmp.le.s32.totalorder 1, %s20
      %p149 = scmp.lt.s32.totalorder %s20, 3
      %p150 = pnand %p148, %p149
      %p151 = pneg %p150
      // Predicated region
      $region9: #{encoder_block_forward.5} parent=5 // pred_check
        _
      $region10: #{encoder_block_forward.5} parent=5 // pred_check_branch
        %153 = sbr.rel (%p150) target = $region12
      $region11: #{encoder_block_forward.5} parent=5 // pred_region
        %s154 = ssub.s32 %s20, 1
        // Predicated region
        $region13: #{encoder_block_forward.5} parent=11 // pred_check
          %p155 = pneg %p93
        $region14: #{encoder_block_forward.5} parent=11 // pred_check_branch
          %157 = sbr.rel (%p155) target = $region16
        $region15: #{encoder_block_forward.5} parent=11 // pred_region
          %s159 = ssub.s32 16, 16
          %160 = vsyncadd [#allocation6], %s159
          %s162 = sshll.u32 [#allocation7], 4
          %s163 = int_to_ptr.vmem [resolvable:$true] %s162
          %165 = dma.hbm_to_vmem [thread:$0]  %s2, 16, %s163, [#allocation6]
        $region16: #{encoder_block_forward.5} parent=11 // pred_fallthru
          _
        // Predicated region
        $region17: #{encoder_block_forward.5} parent=11 // pred_check
          %p166 = pneg %p114
        $region18: #{encoder_block_forward.5} parent=11 // pred_check_branch
          %168 = sbr.rel (%p166) target = $region20
        $region19: #{encoder_block_forward.5} parent=11 // pred_region
          %s170 = ssub.s32 16, 16
          %171 = vsyncadd [#allocation9], %s170
          %s173 = sshll.u32 [#allocation8], 4
          %s174 = int_to_ptr.vmem [resolvable:$true] %s173
          %176 = dma.hbm_to_vmem [thread:$0]  %s3, 16, %s174, [#allocation9]
        $region20: #{encoder_block_forward.5} parent=11 // pred_fallthru
          _
      $region12: #{encoder_block_forward.5} parent=5 // pred_fallthru
        _
      %p177 = scmp.lt.s32.totalorder %s20, 2
      // Predicated region
      $region21: #{encoder_block_forward.5} parent=5 // pred_check
        %p178 = pneg %p177
      $region22: #{encoder_block_forward.5} parent=5 // pred_check_branch
        %180 = sbr.rel (%p178) target = $region24
      $region23: #{encoder_block_forward.5} parent=5 // pred_region
        // Predicated region
        $region25: #{encoder_block_forward.5} parent=23 // pred_check
          %p181 = pneg %p40
        $region26: #{encoder_block_forward.5} parent=23 // pred_check_branch
          %183 = sbr.rel (%p181) target = $region28
        $region27: #{encoder_block_forward.5} parent=23 // pred_region
          %s184 = sand.u32 %s30, 1
          %s185 = scalar_lea.sflag [#allocation3], %s184
          %s186 = sand.u32 %s30, 1
          %s187 = smul.addr %s186, 48
          %s188 = scalar_lea.vmem [#allocation2], %s187
          %s190 = ssub.s32 768, 768
          %191 = vsyncadd %s185, %s190
          %s192 = smul.addr %s20, 6
          %s193 = smul.addr %s192, 128
          %s194 = scalar_lea.hbm %s0, %s193
          %s195 = sshll.u32 %s188, 4
          %s196 = int_to_ptr.vmem [resolvable:$true] %s195
          %201 = dma.hbm_to_vmem [thread:$0]  %s194, 768, %s196, %s185, 128, 128, 8
        $region28: #{encoder_block_forward.5} parent=23 // pred_fallthru
          _
        // Predicated region
        $region29: #{encoder_block_forward.5} parent=23 // pred_check
          %p202 = pneg %p66
        $region30: #{encoder_block_forward.5} parent=23 // pred_check_branch
          %204 = sbr.rel (%p202) target = $region32
        $region31: #{encoder_block_forward.5} parent=23 // pred_region
          %s205 = sand.u32 %s20, 1
          %s206 = scalar_lea.sflag [#allocation6], %s205
          %s207 = sand.u32 %s56, 1
          %s208 = smul.addr %s207, 48
          %s209 = scalar_lea.vmem [#allocation5], %s208
          %s211 = ssub.s32 768, 768
          %212 = vsyncadd %s206, %s211
          %s213 = smul.addr %s20, 6
          %s214 = smul.addr %s213, 128
          %s215 = scalar_lea.hbm %s1, %s214
          %s216 = sshll.u32 %s209, 4
          %s217 = int_to_ptr.vmem [resolvable:$true] %s216
          %222 = dma.hbm_to_vmem [thread:$0]  %s215, 768, %s217, %s206, 128, 128, 8
        $region32: #{encoder_block_forward.5} parent=23 // pred_fallthru
          _
      $region24: #{encoder_block_forward.5} parent=5 // pred_fallthru
        _
      %p223 = scmp.le.s32.totalorder 1, %s20
      %p224 = scmp.lt.s32.totalorder %s20, 3
      %p225 = pnand %p223, %p224
      %p226 = pneg %p225
      // Predicated region
      $region33: #{encoder_block_forward.5} parent=5 // pred_check
        _
      $region34: #{encoder_block_forward.5} parent=5 // pred_check_branch
        %228 = sbr.rel (%p225) target = $region36
      $region35: #{encoder_block_forward.5} parent=5 // pred_region
        %s229 = ssub.s32 %s20, 1
        %s230 = sand.u32 %s33, 1
        %s231 = scalar_lea.sflag [#allocation3], %s230
        %s232 = sand.u32 %s33, 1
        %s233 = smul.addr %s232, 48
        %s234 = scalar_lea.vmem [#allocation2], %s233
        // Predicated region
        $region37: #{encoder_block_forward.5} parent=35 // pred_check
          %p235 = pneg %p46
        $region38: #{encoder_block_forward.5} parent=35 // pred_check_branch
          %237 = sbr.rel (%p235) target = $region40
        $region39: #{encoder_block_forward.5} parent=35 // pred_region
          %238 = dma.done %s231, 768
        $region40: #{encoder_block_forward.5} parent=35 // pred_fallthru
          _
        %s239 = sand.u32 %s25, 1
        %s240 = scalar_lea.sflag [#allocation6], %s239
        %s241 = sand.u32 %s59, 1
        %s242 = smul.addr %s241, 48
        %s243 = scalar_lea.vmem [#allocation5], %s242
        // Predicated region
        $region41: #{encoder_block_forward.5} parent=35 // pred_check
          %p244 = pneg %p72
        $region42: #{encoder_block_forward.5} parent=35 // pred_check_branch
          %246 = sbr.rel (%p244) target = $region44
        $region43: #{encoder_block_forward.5} parent=35 // pred_region
          %247 = dma.done %s240, 768
        $region44: #{encoder_block_forward.5} parent=35 // pred_fallthru
          _
        // Predicated region
        $region45: #{encoder_block_forward.5} parent=35 // pred_check
          %p248 = pneg %p93
        $region46: #{encoder_block_forward.5} parent=35 // pred_check_branch
          %250 = sbr.rel (%p248) target = $region48
        $region47: #{encoder_block_forward.5} parent=35 // pred_region
          %251 = dma.done [#allocation6], 16
        $region48: #{encoder_block_forward.5} parent=35 // pred_fallthru
          _
        // Predicated region
        $region49: #{encoder_block_forward.5} parent=35 // pred_check
          %p252 = pneg %p114
        $region50: #{encoder_block_forward.5} parent=35 // pred_check_branch
          %254 = sbr.rel (%p252) target = $region52
        $region51: #{encoder_block_forward.5} parent=35 // pred_region
          %255 = dma.done [#allocation9], 16
        $region52: #{encoder_block_forward.5} parent=35 // pred_fallthru
          _
        %s256 = sand.u32 %s33, 1
        %s257 = scalar_lea.sflag [#allocation3], %s256
        %s258 = sand.u32 %s33, 1
        %s259 = smul.addr %s258, 48
        %s260 = scalar_lea.vmem [#allocation2], %s259
        %p261 = pneg %p46
        %p262 = pneg %p43
        %s263 = sand.u32 %s25, 1
        %s264 = scalar_lea.sflag [#allocation6], %s263
        %s265 = sand.u32 %s59, 1
        %s266 = smul.addr %s265, 48
        %s267 = scalar_lea.vmem [#allocation5], %s266
        %p268 = pneg %p72
        %p269 = pneg %p69
        %p270 = pneg %p93
        %p271 = pneg %p90
        %p272 = pneg %p114
        %p273 = pneg %p111
        %p274 = pneg %p140
        %p275 = pneg %p137
        %s276 = sand.u32 %s127, 1
        %s277 = scalar_lea.sflag [#allocation4], %s276
        %s278 = sand.u32 %s127, 1
        %s279 = smul.addr %s278, 48
        %s280 = scalar_lea.vmem [#allocation10], %s279
        %v281 = vld [vmem:[#allocation7] sm:$0x1]
        %v282 = vld [vmem:[#allocation8] sm:$0x1]
        %v283 = vld [vmem:[%s234] sm:$0x3f]
        %v284 = vld [vmem:[%s234 + $0x8] sm:$0x3f]
        %v285 = vld [vmem:[%s234 + $0x10] sm:$0x3f]
        %v286 = vld [vmem:[%s234 + $0x18] sm:$0x3f]
        %v287 = vld [vmem:[%s234 + $0x20] sm:$0x3f]
        %v288 = vld [vmem:[%s234 + $0x28] sm:$0x3f]
        %v290 = vlaneseq
        %v291 = vshrl.u32 %v290, 7
        %v292 = vsub.s32 0, %v291
        %v293 = vrot.slane %v281, %v292
        %v295 = vmul.f32 %v283, %v293
        %v296 = vmul.f32 %v284, %v293
        %v297 = vmul.f32 %v285, %v293
        %v298 = vmul.f32 %v286, %v293
        %v299 = vmul.f32 %v287, %v293
        %v300 = vmul.f32 %v288, %v293
        %v301 = vld [vmem:[%s243] sm:$0x3f]
        %v302 = vld [vmem:[%s243 + $0x8] sm:$0x3f]
        %v303 = vld [vmem:[%s243 + $0x10] sm:$0x3f]
        %v304 = vld [vmem:[%s243 + $0x18] sm:$0x3f]
        %v305 = vld [vmem:[%s243 + $0x20] sm:$0x3f]
        %v306 = vld [vmem:[%s243 + $0x28] sm:$0x3f]
        %v307 = vmul.f32 %v301, %v293
        %v308 = vmul.f32 %v302, %v293
        %v309 = vmul.f32 %v303, %v293
        %v310 = vmul.f32 %v304, %v293
        %v311 = vmul.f32 %v305, %v293
        %v312 = vmul.f32 %v306, %v293
        %v313 = vmax.f32 %v295, %v307
        %v314 = vmax.f32 %v296, %v308
        %v315 = vmax.f32 %v297, %v309
        %v316 = vmax.f32 %v298, %v310
        %v317 = vmax.f32 %v299, %v311
        %v318 = vmax.f32 %v300, %v312
        %v320 = vlaneseq
        %v321 = vshrl.u32 %v320, 7
        %v322 = vsub.s32 0, %v321
        %v323 = vrot.slane %v282, %v322
        %v325 = vadd.f32 %v313, %v323
        %v326 = vadd.f32 %v314, %v323
        %v327 = vadd.f32 %v315, %v323
        %v328 = vadd.f32 %v316, %v323
        %v329 = vadd.f32 %v317, %v323
        %v330 = vadd.f32 %v318, %v323
        %v331 = vmax.f32 %v325, 0.0
        %v332 = vmax.f32 %v326, 0.0
        %v333 = vmax.f32 %v327, 0.0
        %v334 = vmax.f32 %v328, 0.0
        %v335 = vmax.f32 %v329, 0.0
        %v336 = vmax.f32 %v330, 0.0
        %337 = vst [vmem:[%s280] sm:$0x3f] %v331
        %338 = vst [vmem:[%s280 + $0x8] sm:$0x3f] %v332
        %339 = vst [vmem:[%s280 + $0x10] sm:$0x3f] %v333
        %340 = vst [vmem:[%s280 + $0x18] sm:$0x3f] %v334
        %341 = vst [vmem:[%s280 + $0x20] sm:$0x3f] %v335
        %342 = vst [vmem:[%s280 + $0x28] sm:$0x3f] %v336
        %s343 = sand.u32 %s127, 1
        %s344 = scalar_lea.sflag [#allocation4], %s343
        %s345 = sand.u32 %s127, 1
        %s346 = smul.addr %s345, 48
        %s347 = scalar_lea.vmem [#allocation10], %s346
        // Predicated region
        $region53: #{encoder_block_forward.5} parent=35 // pred_check
          %p348 = pneg %p137
        $region54: #{encoder_block_forward.5} parent=35 // pred_check_branch
          %350 = sbr.rel (%p348) target = $region56
        $region55: #{encoder_block_forward.5} parent=35 // pred_region
          %s352 = ssub.s32 768, 768
          %353 = vsyncadd %s344, %s352
          %s354 = smul.addr %s25, 6
          %s355 = smul.addr %s354, 128
          %s356 = scalar_lea.hbm %s4, %s355
          %s357 = sshll.u32 %s347, 4
          %s358 = int_to_ptr.vmem [resolvable:$true] %s357
          %363 = dma.vmem_to_hbm [thread:$0]  %s358, 768, %s356, %s344, 128, 128, 8
        $region56: #{encoder_block_forward.5} parent=35 // pred_fallthru
          _
      $region36: #{encoder_block_forward.5} parent=5 // pred_fallthru
        _
      %p364 = scmp.le.s32.totalorder 2, %s20
      // Predicated region
      $region57: #{encoder_block_forward.5} parent=5 // pred_check
        %p365 = pneg %p364
      $region58: #{encoder_block_forward.5} parent=5 // pred_check_branch
        %367 = sbr.rel (%p365) target = $region60
      $region59: #{encoder_block_forward.5} parent=5 // pred_region
        %s368 = ssub.s32 %s20, 2
        // Predicated region
        $region61: #{encoder_block_forward.5} parent=59 // pred_check
          %p369 = pneg %p143
        $region62: #{encoder_block_forward.5} parent=59 // pred_check_branch
          %371 = sbr.rel (%p369) target = $region64
        $region63: #{encoder_block_forward.5} parent=59 // pred_region
          %s372 = sand.u32 %s128, 1
          %s373 = scalar_lea.sflag [#allocation4], %s372
          %s374 = sand.u32 %s128, 1
          %s375 = smul.addr %s374, 48
          %s376 = scalar_lea.vmem [#allocation10], %s375
          %377 = dma.done %s373, 768
        $region64: #{encoder_block_forward.5} parent=59 // pred_fallthru
          _
      $region60: #{encoder_block_forward.5} parent=5 // pred_fallthru
        _
    $region6: #{encoder_block_forward.5} parent=1 // loop_footer
      %s24 = sadd.s32 1, %s20
    $region7: #{encoder_block_forward.5} parent=1 // loop_footer_branch
      %19 = sbr.rel target = $region3
    $region8: #{encoder_block_forward.5} parent=1 // loop_exit
      _
    %378 = vsyncpa [#allocation3], 1
    %s379 = scalar_lea.sflag [#allocation3], 1
    %380 = vsyncpa %s379, 1
    %381 = vsyncpa [#allocation6], 1
    %s382 = scalar_lea.sflag [#allocation6], 1
    %383 = vsyncpa %s382, 1
    %384 = vsyncpa [#allocation9], 1
    %385 = vsyncpa [#allocation4], 1
    %s386 = scalar_lea.sflag [#allocation4], 1
    %387 = vsyncpa %s386, 1

// kernel: encoder_block_forward.3
$region0: #{encoder_block_forward.3}
  #allocation0 [shape = 'u32[]', space=smem, size = 0x4, offset = 0x4, fixed_abs, tag = 'smem constant byte address 0x4 - core index']
  #allocation1 [shape = 'u32[144,128]{1,0:T(1,128)}', space=vmem, size = 0x12000, scoped, tag = 'internal scratch']
  %s0 = inlined_call_operand.hbm [shape: bf16[2,264,128], index: 0, kind: input, shape index: {}]
  %s1 = inlined_call_operand.hbm [shape: bf16[3,384,128], index: 1, kind: input, shape index: {}]
  %s2 = inlined_call_operand.hbm [shape: bf16[2,232,128], index: 2, kind: output, shape index: {0}]
  %s3 = inlined_call_operand.hbm [shape: f32[2,1,2,128], index: 3, kind: output, shape index: {1}]
  %4 = xla_tuple %s2, %s3
  %s5 = sld [smem:[#allocation0]]
  $region57: #{encoder_block_forward.3} parent=0
    _
  %s7 = ssub.s32 1, %s5
  %s8 = scalar_select 0, %s7, %s5
  $region1: #{encoder_block_forward.3} parent=0
    #allocation2 [shape = 'u8[135168]{0}', space=vmem, size = 0x21000, scoped, tag = 'input window, operand 0']
    #allocation3 [shape = 's32[2]{0}', space=sflag, size = 0x8, scoped, tag = 'scoped memory for encoder_block_forward.3']
    #allocation4 [shape = 's32[2]{0}', space=sflag, size = 0x8, scoped, tag = 'scoped memory for encoder_block_forward.3']
    #allocation5 [shape = 'u8[294912]{0}', space=vmem, size = 0x48000, scoped, tag = 'input window, operand 1, single buffered']
    #allocation6 [shape = 's32[1]{0}', space=sflag, size = 0x4, scoped, tag = 'scoped memory for encoder_block_forward.3']
    #allocation7 [shape = 'u8[114688]{0}', space=vmem, size = 0x1c000, scoped, tag = 'output window, operand 0']
    #allocation8 [shape = 'u8[2048]{0}', space=vmem, size = 0x800, scoped, tag = 'output window, operand 1']
    #allocation9 [shape = 's32[2]{0}', space=sflag, size = 0x8, scoped, tag = 'scoped memory for encoder_block_forward.3']
    %9 = vsyncpa [#allocation3], 0
    %s10 = scalar_lea.sflag [#allocation3], 1
    %11 = vsyncpa %s10, 0
    %12 = vsyncpa [#allocation6], 0
    %13 = vsyncpa [#allocation4], 0
    %s14 = scalar_lea.sflag [#allocation4], 1
    %15 = vsyncpa %s14, 0
    %16 = vsyncpa [#allocation9], 0
    %s17 = scalar_lea.sflag [#allocation9], 1
    %18 = vsyncpa %s17, 0
    loop: start=0, step=1, limit=4
    $region2: #{encoder_block_forward.3} parent=1 // loop_pre_header
      _
    $region3: #{encoder_block_forward.3} parent=1 // loop_header
      %s20 = sphi 0, %s24
      %p21 = scmp.ge.s32.totalorder %s20, 4
      %s27 = sphi 0, %s39
      %s28 = sphi 0, %s35
      %s29 = sphi 0, %s27
      %s30 = sphi 0, %s28
      %s31 = sphi 0, %s29
      %s32 = sphi 0, %s30
      %s42 = sphi 0, %s44
      %s45 = sphi 0, %s42
      %s46 = sphi 0, %s45
      %s62 = sphi 0, %s46
      %s66 = sphi 0, %s66
      %s68 = sphi 0, %s66
      %s69 = sphi 0, %s68
      %s83 = sphi 0, %s69
      %s91 = sphi 0, %s93
      %s94 = sphi 0, %s91
      %s95 = sphi 0, %s94
      %s111 = sphi 0, %s95
      %s119 = sphi 0, %s121
      %s122 = sphi 0, %s119
      %s123 = sphi 0, %s122
      %s139 = sphi 0, %s123
    $region4: #{encoder_block_forward.3} parent=1 // loop_header_branch
      %23 = sbr.rel (%p21) target = $region8
    $region5: #{encoder_block_forward.3} parent=1 // loop_body
      %s25 = ssub.s32 %s20, 1
      %s26 = ssub.s32 %s20, 2
      %s33 = sadd.s32 1, %s28
      %p34 = scmp.ge.s32.totalorder %s33, 1
      %s35 = scalar_select %p34, 0, %s33
      %s36 = sadd.s32 1, %s27
      %s37 = scalar_select %p34, %s36, %s27
      %p38 = scmp.ge.s32.totalorder %s37, 2
      %s39 = scalar_select %p38, 0, %s37
      %s40 = ssub.s32 %s27, %s39
      %p41 = scmp.eq.s32.totalorder %s40, 0
      %s43 = sadd.s32 %s42, 1
      %s44 = scalar_select %p41, %s42, %s43
      %p47 = pneg %p41
      %p48 = scmp.eq.s32.totalorder %s20, 1
      %p49 = por %p47, %p48
      %p50 = scmp.ne.s32.totalorder %s42, %s45
      %p51 = scmp.eq.s32.totalorder %s20, 0
      %p52 = por %p50, %p51
      %p53 = scmp.ne.s32.totalorder %s42, %s45
      %p54 = scmp.eq.s32.totalorder %s25, 1
      %p55 = por %p53, %p54
      %p56 = scmp.ne.s32.totalorder %s45, %s46
      %p57 = scmp.eq.s32.totalorder %s25, 0
      %p58 = por %p56, %p57
      %p59 = scmp.ne.s32.totalorder %s45, %s46
      %p60 = scmp.eq.s32.totalorder %s26, 1
      %p61 = por %p59, %p60
      %p63 = scmp.ne.s32.totalorder %s46, %s62
      %p64 = scmp.eq.s32.totalorder %s26, 0
      %p65 = por %p63, %p64
      %s67 = sadd.s32 %s66, 1
      %p70 = scmp.eq.s32.totalorder %s20, 1
      %p71 = scmp.ne.s32.totalorder %s66, %s68
      %p72 = scmp.eq.s32.totalorder %s20, 0
      %p73 = por %p71, %p72
      %p74 = scmp.ne.s32.totalorder %s66, %s68
      %p75 = scmp.eq.s32.totalorder %s25, 1
      %p76 = por %p74, %p75
      %p77 = scmp.ne.s32.totalorder %s68, %s69
      %p78 = scmp.eq.s32.totalorder %s25, 0
      %p79 = por %p77, %p78
      %p80 = scmp.ne.s32.totalorder %s68, %s69
      %p81 = scmp.eq.s32.totalorder %s26, 1
      %p82 = por %p80, %p81
      %p84 = scmp.ne.s32.totalorder %s69, %s83
      %p85 = scmp.eq.s32.totalorder %s26, 0
      %p86 = por %p84, %p85
      %s87 = ssub.s32 %s27, %s39
      %s88 = ssub.s32 %s28, %s35
      %s89 = sor.u32 %s87, %s88
      %p90 = scmp.eq.s32.totalorder %s89, 0
      %s92 = sadd.s32 %s91, 1
      %s93 = scalar_select %p90, %s91, %s92
      %p96 = pneg %p90
      %p97 = scmp.eq.s32.totalorder %s20, 1
      %p98 = por %p96, %p97
      %p99 = scmp.ne.s32.totalorder %s91, %s94
      %p100 = scmp.eq.s32.totalorder %s20, 0
      %p101 = por %p99, %p100
      %p102 = scmp.ne.s32.totalorder %s91, %s94
      %p103 = scmp.eq.s32.totalorder %s25, 1
      %p104 = por %p102, %p103
      %p105 = scmp.ne.s32.totalorder %s94, %s95
      %p106 = scmp.eq.s32.totalorder %s25, 0
      %p107 = por %p105, %p106
      %p108 = scmp.ne.s32.totalorder %s94, %s95
      %p109 = scmp.eq.s32.totalorder %s26, 1
      %p110 = por %p108, %p109
      %p112 = scmp.ne.s32.totalorder %s95, %s111
      %p113 = scmp.eq.s32.totalorder %s26, 0
      %p114 = por %p112, %p113
      %s115 = ssub.s32 %s27, %s39
      %s116 = ssub.s32 %s28, %s35
      %s117 = sor.u32 %s115, %s116
      %p118 = scmp.eq.s32.totalorder %s117, 0
      %s120 = sadd.s32 %s119, 1
      %s121 = scalar_select %p118, %s119, %s120
      %p124 = pneg %p118
      %p125 = scmp.eq.s32.totalorder %s20, 1
      %p126 = por %p124, %p125
      %p127 = scmp.ne.s32.totalorder %s119, %s122
      %p128 = scmp.eq.s32.totalorder %s20, 0
      %p129 = por %p127, %p128
      %p130 = scmp.ne.s32.totalorder %s119, %s122
      %p131 = scmp.eq.s32.totalorder %s25, 1
      %p132 = por %p130, %p131
      %p133 = scmp.ne.s32.totalorder %s122, %s123
      %p134 = scmp.eq.s32.totalorder %s25, 0
      %p135 = por %p133, %p134
      %p136 = scmp.ne.s32.totalorder %s122, %s123
      %p137 = scmp.eq.s32.totalorder %s26, 1
      %p138 = por %p136, %p137
      %p140 = scmp.ne.s32.totalorder %s123, %s139
      %p141 = scmp.eq.s32.totalorder %s26, 0
      %p142 = por %p140, %p141
      %p143 = scmp.le.s32.totalorder 1, %s20
      %p144 = scmp.lt.s32.totalorder %s20, 3
      %p145 = pnand %p143, %p144
      %p146 = pneg %p145
      // Predicated region
      $region9: #{encoder_block_forward.3} parent=5 // pred_check
        _
      $region10: #{encoder_block_forward.3} parent=5 // pred_check_branch
        %148 = sbr.rel (%p145) target = $region12
      $region11: #{encoder_block_forward.3} parent=5 // pred_region
        %s149 = ssub.s32 %s20, 1
        // Predicated region
        $region13: #{encoder_block_forward.3} parent=11 // pred_check
          %p150 = pneg %p79
        $region14: #{encoder_block_forward.3} parent=11 // pred_check_branch
          %152 = sbr.rel (%p150) target = $region16
        $region15: #{encoder_block_forward.3} parent=11 // pred_region
          %s154 = ssub.s32 9216, 9216
          %155 = vsyncadd [#allocation6], %s154
          %s156 = sshll.u32 [#allocation5], 4
          %s157 = int_to_ptr.vmem [resolvable:$true] %s156
          %162 = dma.hbm_to_vmem [thread:$0]  %s1, 9216, %s157, [#allocation6], 64, 64, 4
        $region16: #{encoder_block_forward.3} parent=11 // pred_fallthru
          _
      $region12: #{encoder_block_forward.3} parent=5 // pred_fallthru
        _
      %p163 = scmp.lt.s32.totalorder %s20, 2
      // Predicated region
      $region17: #{encoder_block_forward.3} parent=5 // pred_check
        %p164 = pneg %p163
      $region18: #{encoder_block_forward.3} parent=5 // pred_check_branch
        %166 = sbr.rel (%p164) target = $region20
      $region19: #{encoder_block_forward.3} parent=5 // pred_region
        // Predicated region
        $region21: #{encoder_block_forward.3} parent=19 // pred_check
          %p167 = pneg %p52
        $region22: #{encoder_block_forward.3} parent=19 // pred_check_branch
          %169 = sbr.rel (%p167) target = $region24
        $region23: #{encoder_block_forward.3} parent=19 // pred_region
          %s170 = sand.u32 %s42, 1
          %s171 = scalar_lea.sflag [#allocation3], %s170
          %s172 = sand.u32 %s42, 1
          %s173 = smul.addr %s172, 132
          %s174 = scalar_lea.vmem [#allocation2], %s173
          %s176 = ssub.s32 2112, 2112
          %177 = vsyncadd %s171, %s176
          %s178 = smul.addr %s27, 33
          %s179 = smul.addr %s178, 64
          %s180 = scalar_lea.hbm %s0, %s179
          %s181 = sshll.u32 %s174, 4
          %s182 = int_to_ptr.vmem [resolvable:$true] %s181
          %187 = dma.hbm_to_vmem [thread:$0]  %s180, 2112, %s182, %s171, 64, 64, 4
        $region24: #{encoder_block_forward.3} parent=19 // pred_fallthru
          _
      $region20: #{encoder_block_forward.3} parent=5 // pred_fallthru
        _
      %p188 = scmp.le.s32.totalorder 1, %s20
      %p189 = scmp.lt.s32.totalorder %s20, 3
      %p190 = pnand %p188, %p189
      %p191 = pneg %p190
      // Predicated region
      $region25: #{encoder_block_forward.3} parent=5 // pred_check
        _
      $region26: #{encoder_block_forward.3} parent=5 // pred_check_branch
        %193 = sbr.rel (%p190) target = $region28
      $region27: #{encoder_block_forward.3} parent=5 // pred_region
        %s194 = ssub.s32 %s20, 1
        %s195 = sand.u32 %s45, 1
        %s196 = scalar_lea.sflag [#allocation3], %s195
        %s197 = sand.u32 %s45, 1
        %s198 = smul.addr %s197, 132
        %s199 = scalar_lea.vmem [#allocation2], %s198
        // Predicated region
        $region29: #{encoder_block_forward.3} parent=27 // pred_check
          %p200 = pneg %p58
        $region30: #{encoder_block_forward.3} parent=27 // pred_check_branch
          %202 = sbr.rel (%p200) target = $region32
        $region31: #{encoder_block_forward.3} parent=27 // pred_region
          %203 = dma.done %s196, 2112
        $region32: #{encoder_block_forward.3} parent=27 // pred_fallthru
          _
        // Predicated region
        $region33: #{encoder_block_forward.3} parent=27 // pred_check
          %p204 = pneg %p79
        $region34: #{encoder_block_forward.3} parent=27 // pred_check_branch
          %206 = sbr.rel (%p204) target = $region36
        $region35: #{encoder_block_forward.3} parent=27 // pred_region
          %207 = dma.done [#allocation6], 9216
        $region36: #{encoder_block_forward.3} parent=27 // pred_fallthru
          _
        %s208 = sand.u32 %s45, 1
        %s209 = scalar_lea.sflag [#allocation3], %s208
        %s210 = sand.u32 %s45, 1
        %s211 = smul.addr %s210, 132
        %s212 = scalar_lea.vmem [#allocation2], %s211
        %p213 = pneg %p58
        %p214 = pneg %p55
        %p215 = pneg %p79
        %p216 = pneg %p76
        %p217 = pneg %p107
        %p218 = pneg %p104
        %s219 = sand.u32 %s94, 1
        %s220 = scalar_lea.sflag [#allocation4], %s219
        %s221 = sand.u32 %s94, 1
        %s222 = smul.addr %s221, 112
        %s223 = scalar_lea.vmem [#allocation7], %s222
        %p224 = pneg %p135
        %p225 = pneg %p132
        %s226 = sand.u32 %s122, 1
        %s227 = scalar_lea.sflag [#allocation9], %s226
        %s228 = sand.u32 %s122, 1
        %s229 = smul.addr %s228, 2
        %s230 = scalar_lea.vmem [#allocation8], %s229
        %s231 = smul.u32 28, %s30
        %s232 = ssub.s32 29, %s231
        %p233 = scmp.lt.s32.totalorder %s232, 28
        %s234 = scalar_select %p233, %s232, 28
        %s235 = smul.u32 64, %s234
        %s237 = smul.u32 %s30, 224
        %s238 = sshra.s32 %s237, 3
        %s239 = sand.u32 %s237, 7
        %s240 = smul.addr %s238, 4
        %s241 = scalar_lea.vmem %s199, %s240 [#allocation2]
        %v242 = vld [vmem:[%s241] sm:$0xf]
        %v243 = vld [vmem:[%s241 + $0x4] sm:$0xf]
        %v244 = vld [vmem:[%s241 + $0x8] sm:$0xf]
        %v245 = vld [vmem:[%s241 + $0xc] sm:$0xf]
        %v246 = vld [vmem:[%s241 + $0x10] sm:$0xf]
        %v247 = vld [vmem:[%s241 + $0x14] sm:$0xf]
        %v248 = vld [vmem:[%s241 + $0x18] sm:$0xf]
        %v249 = vld [vmem:[%s241 + $0x1c] sm:$0xf]
        %v250 = vld [vmem:[%s241 + $0x20] sm:$0xf]
        %v251 = vld [vmem:[%s241 + $0x24] sm:$0xf]
        %v252 = vld [vmem:[%s241 + $0x28] sm:$0xf]
        %v253 = vld [vmem:[%s241 + $0x2c] sm:$0xf]
        %v254 = vld [vmem:[%s241 + $0x30] sm:$0xf]
        %v255 = vld [vmem:[%s241 + $0x34] sm:$0xf]
        %v256 = vld [vmem:[%s241 + $0x38] sm:$0xf]
        %v257 = vld [vmem:[%s241 + $0x3c] sm:$0xf]
        %v258 = vld [vmem:[%s241 + $0x40] sm:$0xf]
        %v259 = vld [vmem:[%s241 + $0x44] sm:$0xf]
        %v260 = vld [vmem:[%s241 + $0x48] sm:$0xf]
        %v261 = vld [vmem:[%s241 + $0x4c] sm:$0xf]
        %v262 = vld [vmem:[%s241 + $0x50] sm:$0xf]
        %v263 = vld [vmem:[%s241 + $0x54] sm:$0xf]
        %v264 = vld [vmem:[%s241 + $0x58] sm:$0xf]
        %v265 = vld [vmem:[%s241 + $0x5c] sm:$0xf]
        %v266 = vld [vmem:[%s241 + $0x60] sm:$0xf]
        %v267 = vld [vmem:[%s241 + $0x64] sm:$0xf]
        %v268 = vld [vmem:[%s241 + $0x68] sm:$0xf]
        %v269 = vld [vmem:[%s241 + $0x6c] sm:$0xf]
        %v270 = vld [vmem:[%s241 + $0x70] sm:$0xf]
        %v271 = vld [vmem:[%s241 + $0x74] sm:$0xf]
        %v272 = vld [vmem:[%s241 + $0x78] sm:$0xf]
        %v273 = vld [vmem:[%s241 + $0x7c] sm:$0xf]
        %v274 = vld [vmem:[%s241 + $0x80] sm:$0xf]
        %v303 = vunpack.c.l.b16 %v242
        %v304 = vunpack.c.l.b16 %v243
        %v305 = vunpack.c.l.b16 %v244
        %v306 = vunpack.c.l.b16 %v245
        %v307 = vunpack.c.l.b16 %v246
        %v308 = vunpack.c.l.b16 %v247
        %v309 = vunpack.c.l.b16 %v248
        %v310 = vunpack.c.l.b16 %v249
        %v311 = vunpack.c.l.b16 %v250
        %v312 = vunpack.c.l.b16 %v251
        %v313 = vunpack.c.l.b16 %v252
        %v314 = vunpack.c.l.b16 %v253
        %v315 = vunpack.c.l.b16 %v254
        %v316 = vunpack.c.l.b16 %v255
        %v317 = vunpack.c.l.b16 %v256
        %v318 = vunpack.c.l.b16 %v257
        %v319 = vunpack.c.l.b16 %v258
        %v320 = vunpack.c.l.b16 %v259
        %v321 = vunpack.c.l.b16 %v260
        %v322 = vunpack.c.l.b16 %v261
        %v323 = vunpack.c.l.b16 %v262
        %v324 = vunpack.c.l.b16 %v263
        %v325 = vunpack.c.l.b16 %v264
        %v326 = vunpack.c.l.b16 %v265
        %v327 = vunpack.c.l.b16 %v266
        %v328 = vunpack.c.l.b16 %v267
        %v329 = vunpack.c.l.b16 %v268
        %v330 = vunpack.c.l.b16 %v269
        %v331 = vpack.c.b16 %v304, %v303
        %v332 = vpack.c.b16 %v306, %v305
        %v333 = vpack.c.b16 %v308, %v307
        %v334 = vpack.c.b16 %v310, %v309
        %v335 = vpack.c.b16 %v312, %v311
        %v336 = vpack.c.b16 %v314, %v313
        %v337 = vpack.c.b16 %v316, %v315
        %v338 = vpack.c.b16 %v318, %v317
        %v339 = vpack.c.b16 %v320, %v319
        %v340 = vpack.c.b16 %v322, %v321
        %v341 = vpack.c.b16 %v324, %v323
        %v342 = vpack.c.b16 %v326, %v325
        %v343 = vpack.c.b16 %v328, %v327
        %v344 = vpack.c.b16 %v330, %v329
        %v360 = vunpack.c.l.b16 %v270
        %v361 = vpack.c.b16 %v360, %v360
        %vm362 = vsmask.f32 7424
        %v364 = vshrl.u32 %v331, 16
        %v366 = vshll.u32 %v331, 16
        %v368 = vrot.slane %v366, 1
        %v369 = vor.u32 %v364, %v368
        %v371 = vshll.u32 %v332, 16
        %v373 = vrot.slane %v371, 1
        %v374 = vsel %vm362, %v369, %v373
        %v375 = vshrl.u32 %v332, 16
        %v377 = vor.u32 %v375, %v373
        %v379 = vshll.u32 %v333, 16
        %v381 = vrot.slane %v379, 1
        %v382 = vsel %vm362, %v377, %v381
        %v383 = vshrl.u32 %v333, 16
        %v385 = vor.u32 %v383, %v381
        %v387 = vshll.u32 %v334, 16
        %v389 = vrot.slane %v387, 1
        %v390 = vsel %vm362, %v385, %v389
        %v391 = vshrl.u32 %v334, 16
        %v393 = vor.u32 %v391, %v389
        %v395 = vshll.u32 %v335, 16
        %v397 = vrot.slane %v395, 1
        %v398 = vsel %vm362, %v393, %v397
        %v399 = vshrl.u32 %v335, 16
        %v401 = vor.u32 %v399, %v397
        %v403 = vshll.u32 %v336, 16
        %v405 = vrot.slane %v403, 1
        %v406 = vsel %vm362, %v401, %v405
        %v407 = vshrl.u32 %v336, 16
        %v409 = vor.u32 %v407, %v405
        %v411 = vshll.u32 %v337, 16
        %v413 = vrot.slane %v411, 1
        %v414 = vsel %vm362, %v409, %v413
        %v415 = vshrl.u32 %v337, 16
        %v417 = vor.u32 %v415, %v413
        %v419 = vshll.u32 %v338, 16
        %v421 = vrot.slane %v419, 1
        %v422 = vsel %vm362, %v417, %v421
        %v423 = vshrl.u32 %v338, 16
        %v425 = vor.u32 %v423, %v421
        %v427 = vshll.u32 %v339, 16
        %v429 = vrot.slane %v427, 1
        %v430 = vsel %vm362, %v425, %v429
        %v431 = vshrl.u32 %v339, 16
        %v433 = vor.u32 %v431, %v429
        %v435 = vshll.u32 %v340, 16
        %v437 = vrot.slane %v435, 1
        %v438 = vsel %vm362, %v433, %v437
        %v439 = vshrl.u32 %v340, 16
        %v441 = vor.u32 %v439, %v437
        %v443 = vshll.u32 %v341, 16
        %v445 = vrot.slane %v443, 1
        %v446 = vsel %vm362, %v441, %v445
        %v447 = vshrl.u32 %v341, 16
        %v449 = vor.u32 %v447, %v445
        %v451 = vshll.u32 %v342, 16
        %v453 = vrot.slane %v451, 1
        %v454 = vsel %vm362, %v449, %v453
        %v455 = vshrl.u32 %v342, 16
        %v457 = vor.u32 %v455, %v453
        %v459 = vshll.u32 %v343, 16
        %v461 = vrot.slane %v459, 1
        %v462 = vsel %vm362, %v457, %v461
        %v463 = vshrl.u32 %v343, 16
        %v465 = vor.u32 %v463, %v461
        %v467 = vshll.u32 %v344, 16
        %v469 = vrot.slane %v467, 1
        %v470 = vsel %vm362, %v465, %v469
        %v471 = vshrl.u32 %v344, 16
        %v473 = vor.u32 %v471, %v469
        %v475 = vshll.u32 %v361, 16
        %v477 = vrot.slane %v475, 1
        %v478 = vsel %vm362, %v473, %v477
        %vm493 = vcmask 1046528
        %v494 = vrot.slane %v331, 1
        %v495 = vrot.slane %v332, 1
        %v496 = vsel %vm493, %v494, %v495
        %v497 = vrot.slane %v333, 1
        %v498 = vsel %vm493, %v495, %v497
        %v499 = vrot.slane %v334, 1
        %v500 = vsel %vm493, %v497, %v499
        %v501 = vrot.slane %v335, 1
        %v502 = vsel %vm493, %v499, %v501
        %v503 = vrot.slane %v336, 1
        %v504 = vsel %vm493, %v501, %v503
        %v505 = vrot.slane %v337, 1
        %v506 = vsel %vm493, %v503, %v505
        %v507 = vrot.slane %v338, 1
        %v508 = vsel %vm493, %v505, %v507
        %v509 = vrot.slane %v339, 1
        %v510 = vsel %vm493, %v507, %v509
        %v511 = vrot.slane %v340, 1
        %v512 = vsel %vm493, %v509, %v511
        %v513 = vrot.slane %v341, 1
        %v514 = vsel %vm493, %v511, %v513
        %v515 = vrot.slane %v342, 1
        %v516 = vsel %vm493, %v513, %v515
        %v517 = vrot.slane %v343, 1
        %v518 = vsel %vm493, %v515, %v517
        %v519 = vrot.slane %v344, 1
        %v520 = vsel %vm493, %v517, %v519
        %v521 = vrot.slane %v361, 1
        %v522 = vsel %vm493, %v519, %v521
        %v537 = vld [vmem:[#allocation5] sm:$0xf]
        %v538 = vld [vmem:[#allocation5 + $0x4] sm:$0xf]
        %v539 = vld [vmem:[#allocation5 + $0x8] sm:$0xf]
        %v540 = vld [vmem:[#allocation5 + $0xc] sm:$0xf]
        %v541 = vld [vmem:[#allocation5 + $0x10] sm:$0xf]
        %v542 = vld [vmem:[#allocation5 + $0x14] sm:$0xf]
        %v543 = vld [vmem:[#allocation5 + $0x18] sm:$0xf]
        %v544 = vld [vmem:[#allocation5 + $0x1c] sm:$0xf]
        %v545 = vld [vmem:[#allocation5 + $0x20] sm:$0xf]
        %v546 = vld [vmem:[#allocation5 + $0x24] sm:$0xf]
        %v547 = vld [vmem:[#allocation5 + $0x28] sm:$0xf]
        %v548 = vld [vmem:[#allocation5 + $0x2c] sm:$0xf]
        %v549 = vld [vmem:[#allocation5 + $0x30] sm:$0xf]
        %v550 = vld [vmem:[#allocation5 + $0x34] sm:$0xf]
        %v551 = vld [vmem:[#allocation5 + $0x38] sm:$0xf]
        %v552 = vld [vmem:[#allocation5 + $0x3c] sm:$0xf]
        %v553 = vld [vmem:[#allocation5 + $0x40] sm:$0xf]
        %v554 = vld [vmem:[#allocation5 + $0x44] sm:$0xf]
        %v555 = vld [vmem:[#allocation5 + $0x48] sm:$0xf]
        %v556 = vld [vmem:[#allocation5 + $0x4c] sm:$0xf]
        %v557 = vld [vmem:[#allocation5 + $0x50] sm:$0xf]
        %v558 = vld [vmem:[#allocation5 + $0x54] sm:$0xf]
        %v559 = vld [vmem:[#allocation5 + $0x58] sm:$0xf]
        %v560 = vld [vmem:[#allocation5 + $0x5c] sm:$0xf]
        %v561 = vld [vmem:[#allocation5 + $0x60] sm:$0xf]
        %v562 = vld [vmem:[#allocation5 + $0x64] sm:$0xf]
        %v563 = vld [vmem:[#allocation5 + $0x68] sm:$0xf]
        %v564 = vld [vmem:[#allocation5 + $0x6c] sm:$0xf]
        %v565 = vld [vmem:[#allocation5 + $0x70] sm:$0xf]
        %v566 = vld [vmem:[#allocation5 + $0x74] sm:$0xf]
        %v567 = vld [vmem:[#allocation5 + $0x78] sm:$0xf]
        %v568 = vld [vmem:[#allocation5 + $0x7c] sm:$0xf]
        %v569 = vld [vmem:[#allocation5 + $0x80] sm:$0xf]
        %v570 = vld [vmem:[#allocation5 + $0x84] sm:$0xf]
        %v571 = vld [vmem:[#allocation5 + $0x88] sm:$0xf]
        %v572 = vld [vmem:[#allocation5 + $0x8c] sm:$0xf]
        %v573 = vld [vmem:[#allocation5 + $0x90] sm:$0xf]
        %v574 = vld [vmem:[#allocation5 + $0x94] sm:$0xf]
        %v575 = vld [vmem:[#allocation5 + $0x98] sm:$0xf]
        %v576 = vld [vmem:[#allocation5 + $0x9c] sm:$0xf]
        %v577 = vld [vmem:[#allocation5 + $0xa0] sm:$0xf]
        %v578 = vld [vmem:[#allocation5 + $0xa4] sm:$0xf]
        %v579 = vld [vmem:[#allocation5 + $0xa8] sm:$0xf]
        %v580 = vld [vmem:[#allocation5 + $0xac] sm:$0xf]
        %v581 = vld [vmem:[#allocation5 + $0xb0] sm:$0xf]
        %v582 = vld [vmem:[#allocation5 + $0xb4] sm:$0xf]
        %v583 = vld [vmem:[#allocation5 + $0xb8] sm:$0xf]
        %v584 = vld [vmem:[#allocation5 + $0xbc] sm:$0xf]
        %v586 = vunpack.c.l.b16 %v271
        %v587 = vpack.c.b16 %v586, %v360
        %v590 = vunpack.c.l.b16 %v272
        %v591 = vpack.c.b16 %v590, %v590
        %v593 = vshll.u32 %v587, 16
        %v595 = vrot.slane %v593, 1
        %v596 = vsel %vm362, %v473, %v595
        %v597 = vshrl.u32 %v587, 16
        %v599 = vor.u32 %v597, %v595
        %v601 = vshll.u32 %v591, 16
        %v603 = vrot.slane %v601, 1
        %v604 = vsel %vm362, %v599, %v603
        %v607 = vrot.slane %v587, 1
        %v608 = vsel %vm493, %v519, %v607
        %v609 = vrot.slane %v591, 1
        %v610 = vsel %vm493, %v607, %v609
        %s613 = scalar_lea.vmem [#allocation5], 192
        %v614 = vld [vmem:[%s613] sm:$0xf]
        %v615 = vld [vmem:[%s613 + $0x4] sm:$0xf]
        %v616 = vld [vmem:[%s613 + $0x8] sm:$0xf]
        %v617 = vld [vmem:[%s613 + $0xc] sm:$0xf]
        %v618 = vld [vmem:[%s613 + $0x10] sm:$0xf]
        %v619 = vld [vmem:[%s613 + $0x14] sm:$0xf]
        %v620 = vld [vmem:[%s613 + $0x18] sm:$0xf]
        %v621 = vld [vmem:[%s613 + $0x1c] sm:$0xf]
        %v622 = vld [vmem:[%s613 + $0x20] sm:$0xf]
        %v623 = vld [vmem:[%s613 + $0x24] sm:$0xf]
        %v624 = vld [vmem:[%s613 + $0x28] sm:$0xf]
        %v625 = vld [vmem:[%s613 + $0x2c] sm:$0xf]
        %v626 = vld [vmem:[%s613 + $0x30] sm:$0xf]
        %v627 = vld [vmem:[%s613 + $0x34] sm:$0xf]
        %v628 = vld [vmem:[%s613 + $0x38] sm:$0xf]
        %v629 = vld [vmem:[%s613 + $0x3c] sm:$0xf]
        %v630 = vld [vmem:[%s613 + $0x40] sm:$0xf]
        %v631 = vld [vmem:[%s613 + $0x44] sm:$0xf]
        %v632 = vld [vmem:[%s613 + $0x48] sm:$0xf]
        %v633 = vld [vmem:[%s613 + $0x4c] sm:$0xf]
        %v634 = vld [vmem:[%s613 + $0x50] sm:$0xf]
        %v635 = vld [vmem:[%s613 + $0x54] sm:$0xf]
        %v636 = vld [vmem:[%s613 + $0x58] sm:$0xf]
        %v637 = vld [vmem:[%s613 + $0x5c] sm:$0xf]
        %v638 = vld [vmem:[%s613 + $0x60] sm:$0xf]
        %v639 = vld [vmem:[%s613 + $0x64] sm:$0xf]
        %v640 = vld [vmem:[%s613 + $0x68] sm:$0xf]
        %v641 = vld [vmem:[%s613 + $0x6c] sm:$0xf]
        %v642 = vld [vmem:[%s613 + $0x70] sm:$0xf]
        %v643 = vld [vmem:[%s613 + $0x74] sm:$0xf]
        %v644 = vld [vmem:[%s613 + $0x78] sm:$0xf]
        %v645 = vld [vmem:[%s613 + $0x7c] sm:$0xf]
        %v646 = vld [vmem:[%s613 + $0x80] sm:$0xf]
        %v647 = vld [vmem:[%s613 + $0x84] sm:$0xf]
        %v648 = vld [vmem:[%s613 + $0x88] sm:$0xf]
        %v649 = vld [vmem:[%s613 + $0x8c] sm:$0xf]
        %v650 = vld [vmem:[%s613 + $0x90] sm:$0xf]
        %v651 = vld [vmem:[%s613 + $0x94] sm:$0xf]
        %v652 = vld [vmem:[%s613 + $0x98] sm:$0xf]
        %v653 = vld [vmem:[%s613 + $0x9c] sm:$0xf]
        %v654 = vld [vmem:[%s613 + $0xa0] sm:$0xf]
        %v655 = vld [vmem:[%s613 + $0xa4] sm:$0xf]
        %v656 = vld [vmem:[%s613 + $0xa8] sm:$0xf]
        %v657 = vld [vmem:[%s613 + $0xac] sm:$0xf]
        %v658 = vld [vmem:[%s613 + $0xb0] sm:$0xf]
        %v659 = vld [vmem:[%s613 + $0xb4] sm:$0xf]
        %v660 = vld [vmem:[%s613 + $0xb8] sm:$0xf]
        %v661 = vld [vmem:[%s613 + $0xbc] sm:$0xf]
        %v710 = vunpack.c.l.b16 %v614
        %v711 = vunpack.c.l.b16 %v615
        %v712 = vunpack.c.l.b16 %v616
        %v713 = vunpack.c.l.b16 %v617
        %v714 = vunpack.c.l.b16 %v618
        %v715 = vunpack.c.l.b16 %v619
        %v716 = vunpack.c.l.b16 %v620
        %v717 = vunpack.c.l.b16 %v621
        %v718 = vunpack.c.l.b16 %v622
        %v719 = vunpack.c.l.b16 %v623
        %v720 = vunpack.c.l.b16 %v624
        %v721 = vunpack.c.l.b16 %v625
        %v722 = vunpack.c.l.b16 %v626
        %v723 = vunpack.c.l.b16 %v627
        %v724 = vunpack.c.l.b16 %v628
        %v725 = vunpack.c.l.b16 %v629
        %v726 = vunpack.c.l.b16 %v630
        %v727 = vunpack.c.l.b16 %v631
        %v728 = vunpack.c.l.b16 %v632
        %v729 = vunpack.c.l.b16 %v633
        %v730 = vunpack.c.l.b16 %v634
        %v731 = vunpack.c.l.b16 %v635
        %v732 = vunpack.c.l.b16 %v636
        %v733 = vunpack.c.l.b16 %v637
        %v734 = vunpack.c.l.b16 %v638
        %v735 = vunpack.c.l.b16 %v639
        %v736 = vunpack.c.l.b16 %v640
        %v737 = vunpack.c.l.b16 %v641
        %v738 = vunpack.c.l.b16 %v642
        %v739 = vunpack.c.l.b16 %v643
        %v740 = vunpack.c.l.b16 %v644
        %v741 = vunpack.c.l.b16 %v645
        %v742 = vunpack.c.l.b16 %v646
        %v743 = vunpack.c.l.b16 %v647
        %v744 = vunpack.c.l.b16 %v648
        %v745 = vunpack.c.l.b16 %v649
        %v746 = vunpack.c.l.b16 %v650
        %v747 = vunpack.c.l.b16 %v651
        %v748 = vunpack.c.l.b16 %v652
        %v749 = vunpack.c.l.b16 %v653
        %v750 = vunpack.c.l.b16 %v654
        %v751 = vunpack.c.l.b16 %v655
        %v752 = vunpack.c.l.b16 %v656
        %v753 = vunpack.c.l.b16 %v657
        %v754 = vunpack.c.l.b16 %v658
        %v755 = vunpack.c.l.b16 %v659
        %v756 = vunpack.c.l.b16 %v660
        %v757 = vunpack.c.l.b16 %v661
        %v758 = vpack.c.b16 %v711, %v710
        %v759 = vpack.c.b16 %v713, %v712
        %v760 = vpack.c.b16 %v715, %v714
        %v761 = vpack.c.b16 %v717, %v716
        %v762 = vpack.c.b16 %v719, %v718
        %v763 = vpack.c.b16 %v721, %v720
        %v764 = vpack.c.b16 %v723, %v722
        %v765 = vpack.c.b16 %v725, %v724
        %v766 = vpack.c.b16 %v727, %v726
        %v767 = vpack.c.b16 %v729, %v728
        %v768 = vpack.c.b16 %v731, %v730
        %v769 = vpack.c.b16 %v733, %v732
        %v770 = vpack.c.b16 %v735, %v734
        %v771 = vpack.c.b16 %v737, %v736
        %v772 = vpack.c.b16 %v739, %v738
        %v773 = vpack.c.b16 %v741, %v740
        %v774 = vpack.c.b16 %v743, %v742
        %v775 = vpack.c.b16 %v745, %v744
        %v776 = vpack.c.b16 %v747, %v746
        %v777 = vpack.c.b16 %v749, %v748
        %v778 = vpack.c.b16 %v751, %v750
        %v779 = vpack.c.b16 %v753, %v752
        %v780 = vpack.c.b16 %v755, %v754
        %v781 = vpack.c.b16 %v757, %v756
        %806 = vmatprep.subr.bf16.mxu0 0
        %807 = vmatpush1.bf16.msra.mxu0 %v758
        %808 = vmatprep.subr.bf16.mxu0 0
        %809 = vmatpush1.bf16.msra.mxu0 %v759
        %810 = vmatprep.subr.bf16.mxu0 0
        %811 = vmatpush1.bf16.msra.mxu0 %v760
        %812 = vmatprep.subr.bf16.mxu0 0
        %813 = vmatpush1.bf16.msra.mxu0 %v761
        %814 = vmatprep.subr.bf16.mxu0 0
        %815 = vmatpush1.bf16.msra.mxu0 %v762
        %816 = vmatprep.subr.bf16.mxu0 0
        %817 = vmatpush1.bf16.msra.mxu0 %v763
        %818 = vmatprep.subr.bf16.mxu0 0
        %819 = vmatpush1.bf16.msra.mxu0 %v764
        %820 = vmatprep.subr.bf16.mxu0 0
        %821 = vmatpush1.bf16.msra.mxu0 %v765
        %822 = vmatprep.subr.bf16.mxu0 0
        %823 = vmatpush1.bf16.msra.mxu0 %v766
        %824 = vmatprep.subr.bf16.mxu0 0
        %825 = vmatpush1.bf16.msra.mxu0 %v767
        %826 = vmatprep.subr.bf16.mxu0 0
        %827 = vmatpush1.bf16.msra.mxu0 %v768
        %828 = vmatprep.subr.bf16.mxu0 0
        %829 = vmatpush1.bf16.msra.mxu0 %v769
        %830 = vmatprep.subr.bf16.mxu0 0
        %831 = vmatpush1.bf16.msra.mxu0 %v770
        %832 = vmatprep.subr.bf16.mxu0 0
        %833 = vmatpush1.bf16.msra.mxu0 %v771
        %834 = vmatprep.subr.bf16.mxu0 0
        %835 = vmatpush1.bf16.msra.mxu0 %v772
        %836 = vmatprep.subr.bf16.mxu0 0
        %837 = vmatpush1.bf16.msra.mxu0 %v773
        %838 = vmatprep.mubr.bf16.mxu0 %v382
        %839 = vmatmul.mubr.bf16.gmra.mrb[0].mxu0 %v332
        %v840 = vpop.f32.mrb[0].mxu0
        %v841 = vadd.f32 0.0, %v840
        %v842 = vpop.f32.mrb[0].mxu0
        %v843 = vpop.f32.mrb[0].mxu0
        %v844 = vadd.f32 0.0, %v843
        %v845 = vpop.f32.mrb[0].mxu0
        %846 = vmatprep.mubr.bf16.mxu0 %v390
        %847 = vmatmul.mubr.bf16.gmra.mrb[0].mxu0 %v333
        %v848 = vpop.f32.mrb[0].mxu0
        %v849 = vadd.f32 0.0, %v848
        %v850 = vpop.f32.mrb[0].mxu0
        %v851 = vpop.f32.mrb[0].mxu0
        %v852 = vadd.f32 0.0, %v851
        %v853 = vpop.f32.mrb[0].mxu0
        %854 = vmatprep.mubr.bf16.mxu0 %v398
        %855 = vmatmul.mubr.bf16.gmra.mrb[0].mxu0 %v334
        %v856 = vpop.f32.mrb[0].mxu0
        %v857 = vadd.f32 0.0, %v856
        %v858 = vpop.f32.mrb[0].mxu0
        %v859 = vpop.f32.mrb[0].mxu0
        %v860 = vadd.f32 0.0, %v859
        %v861 = vpop.f32.mrb[0].mxu0
        %862 = vmatprep.mubr.bf16.mxu0 %v406
        %863 = vmatmul.mubr.bf16.gmra.mrb[0].mxu0 %v335
        %v864 = vpop.f32.mrb[0].mxu0
        %v865 = vadd.f32 0.0, %v864
        %v866 = vpop.f32.mrb[0].mxu0
        %v867 = vpop.f32.mrb[0].mxu0
        %v868 = vadd.f32 0.0, %v867
        %v869 = vpop.f32.mrb[0].mxu0
        %870 = vmatprep.mubr.bf16.mxu0 %v414
        %871 = vmatmul.mubr.bf16.gmra.mrb[0].mxu0 %v336
        %v872 = vpop.f32.mrb[0].mxu0
        %v873 = vadd.f32 0.0, %v872
        %v874 = vpop.f32.mrb[0].mxu0
        %v875 = vpop.f32.mrb[0].mxu0
        %v876 = vadd.f32 0.0, %v875
        %v877 = vpop.f32.mrb[0].mxu0
        %878 = vmatprep.mubr.bf16.mxu0 %v422
        %879 = vmatmul.mubr.bf16.gmra.mrb[0].mxu0 %v337
        %v880 = vpop.f32.mrb[0].mxu0
        %v881 = vadd.f32 0.0, %v880
        %v882 = vpop.f32.mrb[0].mxu0
        %v883 = vpop.f32.mrb[0].mxu0
        %v884 = vadd.f32 0.0, %v883
        %v885 = vpop.f32.mrb[0].mxu0
        %886 = vmatprep.mubr.bf16.mxu0 %v430
        %887 = vmatmul.mubr.bf16.gmra.mrb[0].mxu0 %v338
        %v888 = vpop.f32.mrb[0].mxu0
        %v889 = vadd.f32 0.0, %v888
        %v890 = vpop.f32.mrb[0].mxu0
        %v891 = vpop.f32.mrb[0].mxu0
        %v892 = vadd.f32 0.0, %v891
        %v893 = vpop.f32.mrb[0].mxu0
        %894 = vmatprep.mubr.bf16.mxu0 %v438
        %895 = vmatmul.mubr.bf16.gmra.mrb[0].mxu0 %v339
        %v896 = vpop.f32.mrb[0].mxu0
        %v897 = vadd.f32 0.0, %v896
        %v898 = vpop.f32.mrb[0].mxu0
        %v899 = vpop.f32.mrb[0].mxu0
        %v900 = vadd.f32 0.0, %v899
        %v901 = vpop.f32.mrb[0].mxu0
        %902 = vmatprep.mubr.bf16.mxu0 %v446
        %903 = vmatmul.mubr.bf16.gmra.mrb[0].mxu0 %v340
        %v904 = vpop.f32.mrb[0].mxu0
        %v905 = vadd.f32 0.0, %v904
        %v906 = vpop.f32.mrb[0].mxu0
        %v907 = vpop.f32.mrb[0].mxu0
        %v908 = vadd.f32 0.0, %v907
        %v909 = vpop.f32.mrb[0].mxu0
        %910 = vmatprep.mubr.bf16.mxu0 %v454
        %911 = vmatmul.mubr.bf16.gmra.mrb[0].mxu0 %v341
        %v912 = vpop.f32.mrb[0].mxu0
        %v913 = vadd.f32 0.0, %v912
        %v914 = vpop.f32.mrb[0].mxu0
        %v915 = vpop.f32.mrb[0].mxu0
        %v916 = vadd.f32 0.0, %v915
        %v917 = vpop.f32.mrb[0].mxu0
        %918 = vmatprep.mubr.bf16.mxu0 %v462
        %919 = vmatmul.mubr.bf16.gmra.mrb[0].mxu0 %v342
        %v920 = vpop.f32.mrb[0].mxu0
        %v921 = vadd.f32 0.0, %v920
        %v922 = vpop.f32.mrb[0].mxu0
        %v923 = vpop.f32.mrb[0].mxu0
        %v924 = vadd.f32 0.0, %v923
        %v925 = vpop.f32.mrb[0].mxu0
        %926 = vmatprep.mubr.bf16.mxu0 %v470
        %927 = vmatmul.mubr.bf16.gmra.mrb[0].mxu0 %v343
        %v928 = vpop.f32.mrb[0].mxu0
        %v929 = vadd.f32 0.0, %v928
        %v930 = vpop.f32.mrb[0].mxu0
        %v931 = vpop.f32.mrb[0].mxu0
        %v932 = vadd.f32 0.0, %v931
        %v933 = vpop.f32.mrb[0].mxu0
        %934 = vmatprep.mubr.bf16.mxu0 %v596
        %935 = vmatmul.mubr.bf16.gmra.mrb[0].mxu0 %v344
        %v936 = vpop.f32.mrb[0].mxu0
        %v937 = vadd.f32 0.0, %v936
        %v938 = vpop.f32.mrb[0].mxu0
        %v939 = vpop.f32.mrb[0].mxu0
        %v940 = vadd.f32 0.0, %v939
        %v941 = vpop.f32.mrb[0].mxu0
        %942 = vmatprep.mubr.bf16.mxu0 %v604
        %943 = vmatmul.mubr.bf16.gmra.mrb[0].mxu0 %v587
        %v944 = vpop.f32.mrb[0].mxu0
        %v945 = vadd.f32 0.0, %v944
        %v946 = vpop.f32.mrb[0].mxu0
        %v947 = vpop.f32.mrb[0].mxu0
        %v948 = vadd.f32 0.0, %v947
        %v949 = vpop.f32.mrb[0].mxu0
        %950 = vdwg.mxu0
        %951 = vmatprep.subr.bf16.mxu0 0
        %952 = vmatpush1.bf16.msra.mxu0 %v774
        %953 = vmatprep.subr.bf16.mxu0 0
        %954 = vmatpush1.bf16.msra.mxu0 %v775
        %955 = vmatprep.subr.bf16.mxu0 0
        %956 = vmatpush1.bf16.msra.mxu0 %v776
        %957 = vmatprep.subr.bf16.mxu0 0
        %958 = vmatpush1.bf16.msra.mxu0 %v777
        %959 = vmatprep.subr.bf16.mxu0 0
        %960 = vmatpush1.bf16.msra.mxu0 %v778
        %961 = vmatprep.subr.bf16.mxu0 0
        %962 = vmatpush1.bf16.msra.mxu0 %v779
        %963 = vmatprep.subr.bf16.mxu0 0
        %964 = vmatpush1.bf16.msra.mxu0 %v780
        %965 = vmatprep.subr.bf16.mxu0 0
        %966 = vmatpush1.bf16.msra.mxu0 %v781
        %967 = vmatprep.subr.bf16.mxu0 0
        %968 = vmatpush1.bf16.msra.mxu0 0
        %969 = vmatprep.subr.bf16.mxu0 0
        %970 = vmatpush1.bf16.msra.mxu0 0
        %971 = vmatprep.subr.bf16.mxu0 0
        %972 = vmatpush1.bf16.msra.mxu0 0
        %973 = vmatprep.subr.bf16.mxu0 0
        %974 = vmatpush1.bf16.msra.mxu0 0
        %975 = vmatprep.subr.bf16.mxu0 0
        %976 = vmatpush1.bf16.msra.mxu0 0
        %977 = vmatprep.subr.bf16.mxu0 0
        %978 = vmatpush1.bf16.msra.mxu0 0
        %979 = vmatprep.subr.bf16.mxu0 0
        %980 = vmatpush1.bf16.msra.mxu0 0
        %981 = vmatprep.subr.bf16.mxu0 0
        %982 = vmatpush1.bf16.msra.mxu0 0
        %983 = vmatprep.mubr.bf16.mxu0 0
        %984 = vmatmul.mubr.bf16.gmra.mrb[0].mxu0 %v498
        %v985 = vpop.f32.mrb[0].mxu0
        %v986 = vadd.f32 %v841, %v985
        %v987 = vpop.f32.mrb[0].mxu0
        %v988 = vpop.f32.mrb[0].mxu0
        %v989 = vadd.f32 %v844, %v988
        %v990 = vpop.f32.mrb[0].mxu0
        %991 = vmatprep.mubr.bf16.mxu0 0
        %992 = vmatmul.mubr.bf16.gmra.mrb[0].mxu0 %v500
        %v993 = vpop.f32.mrb[0].mxu0
        %v994 = vadd.f32 %v849, %v993
        %v995 = vpop.f32.mrb[0].mxu0
        %v996 = vpop.f32.mrb[0].mxu0
        %v997 = vadd.f32 %v852, %v996
        %v998 = vpop.f32.mrb[0].mxu0
        %999 = vmatprep.mubr.bf16.mxu0 0
        %1000 = vmatmul.mubr.bf16.gmra.mrb[0].mxu0 %v502
        %v1001 = vpop.f32.mrb[0].mxu0
        %v1002 = vadd.f32 %v857, %v1001
        %v1003 = vpop.f32.mrb[0].mxu0
        %v1004 = vpop.f32.mrb[0].mxu0
        %v1005 = vadd.f32 %v860, %v1004
        %v1006 = vpop.f32.mrb[0].mxu0
        %1007 = vmatprep.mubr.bf16.mxu0 0
        %1008 = vmatmul.mubr.bf16.gmra.mrb[0].mxu0 %v504
        %v1009 = vpop.f32.mrb[0].mxu0
        %v1010 = vadd.f32 %v865, %v1009
        %v1011 = vpop.f32.mrb[0].mxu0
        %v1012 = vpop.f32.mrb[0].mxu0
        %v1013 = vadd.f32 %v868, %v1012
        %v1014 = vpop.f32.mrb[0].mxu0
        %1015 = vmatprep.mubr.bf16.mxu0 0
        %1016 = vmatmul.mubr.bf16.gmra.mrb[0].mxu0 %v506
        %v1017 = vpop.f32.mrb[0].mxu0
        %v1018 = vadd.f32 %v873, %v1017
        %v1019 = vpop.f32.mrb[0].mxu0
        %v1020 = vpop.f32.mrb[0].mxu0
        %v1021 = vadd.f32 %v876, %v1020
        %v1022 = vpop.f32.mrb[0].mxu0
        %1023 = vmatprep.mubr.bf16.mxu0 0
        %1024 = vmatmul.mubr.bf16.gmra.mrb[0].mxu0 %v508
        %v1025 = vpop.f32.mrb[0].mxu0
        %v1026 = vadd.f32 %v881, %v1025
        %v1027 = vpop.f32.mrb[0].mxu0
        %v1028 = vpop.f32.mrb[0].mxu0
        %v1029 = vadd.f32 %v884, %v1028
        %v1030 = vpop.f32.mrb[0].mxu0
        %1031 = vmatprep.mubr.bf16.mxu0 0
        %1032 = vmatmul.mubr.bf16.gmra.mrb[0].mxu0 %v510
        %v1033 = vpop.f32.mrb[0].mxu0
        %v1034 = vadd.f32 %v889, %v1033
        %v1035 = vpop.f32.mrb[0].mxu0
        %v1036 = vpop.f32.mrb[0].mxu0
        %v1037 = vadd.f32 %v892, %v1036
        %v1038 = vpop.f32.mrb[0].mxu0
        %1039 = vmatprep.mubr.bf16.mxu0 0
        %1040 = vmatmul.mubr.bf16.gmra.mrb[0].mxu0 %v512
        %v1041 = vpop.f32.mrb[0].mxu0
        %v1042 = vadd.f32 %v897, %v1041
        %v1043 = vpop.f32.mrb[0].mxu0
        %v1044 = vpop.f32.mrb[0].mxu0
        %v1045 = vadd.f32 %v900, %v1044
        %v1046 = vpop.f32.mrb[0].mxu0
        %1047 = vmatprep.mubr.bf16.mxu0 0
        %1048 = vmatmul.mubr.bf16.gmra.mrb[0].mxu0 %v514
        %v1049 = vpop.f32.mrb[0].mxu0
        %v1050 = vadd.f32 %v905, %v1049
        %v1051 = vpop.f32.mrb[0].mxu0
        %v1052 = vpop.f32.mrb[0].mxu0
        %v1053 = vadd.f32 %v908, %v1052
        %v1054 = vpop.f32.mrb[0].mxu0
        %1055 = vmatprep.mubr.bf16.mxu0 0
        %1056 = vmatmul.mubr.bf16.gmra.mrb[0].mxu0 %v516
        %v1057 = vpop.f32.mrb[0].mxu0
        %v1058 = vadd.f32 %v913, %v1057
        %v1059 = vpop.f32.mrb[0].mxu0
        %v1060 = vpop.f32.mrb[0].mxu0
        %v1061 = vadd.f32 %v916, %v1060
        %v1062 = vpop.f32.mrb[0].mxu0
        %1063 = vmatprep.mubr.bf16.mxu0 0
        %1064 = vmatmul.mubr.bf16.gmra.mrb[0].mxu0 %v518
        %v1065 = vpop.f32.mrb[0].mxu0
        %v1066 = vadd.f32 %v921, %v1065
        %v1067 = vpop.f32.mrb[0].mxu0
        %v1068 = vpop.f32.mrb[0].mxu0
        %v1069 = vadd.f32 %v924, %v1068
        %v1070 = vpop.f32.mrb[0].mxu0
        %1071 = vmatprep.mubr.bf16.mxu0 0
        %1072 = vmatmul.mubr.bf16.gmra.mrb[0].mxu0 %v520
        %v1073 = vpop.f32.mrb[0].mxu0
        %v1074 = vadd.f32 %v929, %v1073
        %v1075 = vpop.f32.mrb[0].mxu0
        %v1076 = vpop.f32.mrb[0].mxu0
        %v1077 = vadd.f32 %v932, %v1076
        %v1078 = vpop.f32.mrb[0].mxu0
        %1079 = vmatprep.mubr.bf16.mxu0 0
        %1080 = vmatmul.mubr.bf16.gmra.mrb[0].mxu0 %v608
        %v1081 = vpop.f32.mrb[0].mxu0
        %v1082 = vadd.f32 %v937, %v1081
        %v1083 = vpop.f32.mrb[0].mxu0
        %v1084 = vpop.f32.mrb[0].mxu0
        %v1085 = vadd.f32 %v940, %v1084
        %v1086 = vpop.f32.mrb[0].mxu0
        %1087 = vmatprep.mubr.bf16.mxu0 0
        %1088 = vmatmul.mubr.bf16.gmra.mrb[0].mxu0 %v610
        %v1089 = vpop.f32.mrb[0].mxu0
        %v1090 = vadd.f32 %v945, %v1089
        %v1091 = vpop.f32.mrb[0].mxu0
        %v1092 = vpop.f32.mrb[0].mxu0
        %v1093 = vadd.f32 %v948, %v1092
        %v1094 = vpop.f32.mrb[0].mxu0
        %1095 = vdwg.mxu0
        %v1144 = vunpack.c.l.b16 %v537
        %v1145 = vunpack.c.l.b16 %v538
        %v1146 = vunpack.c.l.b16 %v539
        %v1147 = vunpack.c.l.b16 %v540
        %v1148 = vunpack.c.l.b16 %v541
        %v1149 = vunpack.c.l.b16 %v542
        %v1150 = vunpack.c.l.b16 %v543
        %v1151 = vunpack.c.l.b16 %v544
        %v1152 = vunpack.c.l.b16 %v545
        %v1153 = vunpack.c.l.b16 %v546
        %v1154 = vunpack.c.l.b16 %v547
        %v1155 = vunpack.c.l.b16 %v548
        %v1156 = vunpack.c.l.b16 %v549
        %v1157 = vunpack.c.l.b16 %v550
        %v1158 = vunpack.c.l.b16 %v551
        %v1159 = vunpack.c.l.b16 %v552
        %v1160 = vunpack.c.l.b16 %v553
        %v1161 = vunpack.c.l.b16 %v554
        %v1162 = vunpack.c.l.b16 %v555
        %v1163 = vunpack.c.l.b16 %v556
        %v1164 = vunpack.c.l.b16 %v557
        %v1165 = vunpack.c.l.b16 %v558
        %v1166 = vunpack.c.l.b16 %v559
        %v1167 = vunpack.c.l.b16 %v560
        %v1168 = vunpack.c.l.b16 %v561
        %v1169 = vunpack.c.l.b16 %v562
        %v1170 = vunpack.c.l.b16 %v563
        %v1171 = vunpack.c.l.b16 %v564
        %v1172 = vunpack.c.l.b16 %v565
        %v1173 = vunpack.c.l.b16 %v566
        %v1174 = vunpack.c.l.b16 %v567
        %v1175 = vunpack.c.l.b16 %v568
        %v1176 = vunpack.c.l.b16 %v569
        %v1177 = vunpack.c.l.b16 %v570
        %v1178 = vunpack.c.l.b16 %v571
        %v1179 = vunpack.c.l.b16 %v572
        %v1180 = vunpack.c.l.b16 %v573
        %v1181 = vunpack.c.l.b16 %v574
        %v1182 = vunpack.c.l.b16 %v575
        %v1183 = vunpack.c.l.b16 %v576
        %v1184 = vunpack.c.l.b16 %v577
        %v1185 = vunpack.c.l.b16 %v578
        %v1186 = vunpack.c.l.b16 %v579
        %v1187 = vunpack.c.l.b16 %v580
        %v1188 = vunpack.c.l.b16 %v581
        %v1189 = vunpack.c.l.b16 %v582
        %v1190 = vunpack.c.l.b16 %v583
        %v1191 = vunpack.c.l.b16 %v584
        %v1192 = vpack.c.b16 %v1145, %v1144
        %v1193 = vpack.c.b16 %v1147, %v1146
        %v1194 = vpack.c.b16 %v1149, %v1148
        %v1195 = vpack.c.b16 %v1151, %v1150
        %v1196 = vpack.c.b16 %v1153, %v1152
        %v1197 = vpack.c.b16 %v1155, %v1154
        %v1198 = vpack.c.b16 %v1157, %v1156
        %v1199 = vpack.c.b16 %v1159, %v1158
        %v1200 = vpack.c.b16 %v1161, %v1160
        %v1201 = vpack.c.b16 %v1163, %v1162
        %v1202 = vpack.c.b16 %v1165, %v1164
        %v1203 = vpack.c.b16 %v1167, %v1166
        %v1204 = vpack.c.b16 %v1169, %v1168
        %v1205 = vpack.c.b16 %v1171, %v1170
        %v1206 = vpack.c.b16 %v1173, %v1172
        %v1207 = vpack.c.b16 %v1175, %v1174
        %v1208 = vpack.c.b16 %v1177, %v1176
        %v1209 = vpack.c.b16 %v1179, %v1178
        %v1210 = vpack.c.b16 %v1181, %v1180
        %v1211 = vpack.c.b16 %v1183, %v1182
        %v1212 = vpack.c.b16 %v1185, %v1184
        %v1213 = vpack.c.b16 %v1187, %v1186
        %v1214 = vpack.c.b16 %v1189, %v1188
        %v1215 = vpack.c.b16 %v1191, %v1190
        %1240 = vmatprep.subr.bf16.mxu0 0
        %1241 = vmatpush1.bf16.msra.mxu0 %v1192
        %1242 = vmatprep.subr.bf16.mxu0 0
        %1243 = vmatpush1.bf16.msra.mxu0 %v1193
        %1244 = vmatprep.subr.bf16.mxu0 0
        %1245 = vmatpush1.bf16.msra.mxu0 %v1194
        %1246 = vmatprep.subr.bf16.mxu0 0
        %1247 = vmatpush1.bf16.msra.mxu0 %v1195
        %1248 = vmatprep.subr.bf16.mxu0 0
        %1249 = vmatpush1.bf16.msra.mxu0 %v1196
        %1250 = vmatprep.subr.bf16.mxu0 0
        %1251 = vmatpush1.bf16.msra.mxu0 %v1197
        %1252 = vmatprep.subr.bf16.mxu0 0
        %1253 = vmatpush1.bf16.msra.mxu0 %v1198
        %1254 = vmatprep.subr.bf16.mxu0 0
        %1255 = vmatpush1.bf16.msra.mxu0 %v1199
        %1256 = vmatprep.subr.bf16.mxu0 0
        %1257 = vmatpush1.bf16.msra.mxu0 %v1200
        %1258 = vmatprep.subr.bf16.mxu0 0
        %1259 = vmatpush1.bf16.msra.mxu0 %v1201
        %1260 = vmatprep.subr.bf16.mxu0 0
        %1261 = vmatpush1.bf16.msra.mxu0 %v1202
        %1262 = vmatprep.subr.bf16.mxu0 0
        %1263 = vmatpush1.bf16.msra.mxu0 %v1203
        %1264 = vmatprep.subr.bf16.mxu0 0
        %1265 = vmatpush1.bf16.msra.mxu0 %v1204
        %1266 = vmatprep.subr.bf16.mxu0 0
        %1267 = vmatpush1.bf16.msra.mxu0 %v1205
        %1268 = vmatprep.subr.bf16.mxu0 0
        %1269 = vmatpush1.bf16.msra.mxu0 %v1206
        %1270 = vmatprep.subr.bf16.mxu0 0
        %1271 = vmatpush1.bf16.msra.mxu0 %v1207
        %1272 = vmatprep.mubr.bf16.mxu0 %v374
        %1273 = vmatmul.mubr.bf16.gmra.mrb[0].mxu0 %v331
        %v1274 = vpop.f32.mrb[0].mxu0
        %v1275 = vadd.f32 %v986, %v1274
        %v1276 = vpop.f32.mrb[0].mxu0
        %v1277 = vpop.f32.mrb[0].mxu0
        %v1278 = vadd.f32 %v989, %v1277
        %v1279 = vpop.f32.mrb[0].mxu0
        %1280 = vmatprep.mubr.bf16.mxu0 %v382
        %1281 = vmatmul.mubr.bf16.gmra.mrb[0].mxu0 %v332
        %v1282 = vpop.f32.mrb[0].mxu0
        %v1283 = vadd.f32 %v994, %v1282
        %v1284 = vpop.f32.mrb[0].mxu0
        %v1285 = vpop.f32.mrb[0].mxu0
        %v1286 = vadd.f32 %v997, %v1285
        %v1287 = vpop.f32.mrb[0].mxu0
        %1288 = vmatprep.mubr.bf16.mxu0 %v390
        %1289 = vmatmul.mubr.bf16.gmra.mrb[0].mxu0 %v333
        %v1290 = vpop.f32.mrb[0].mxu0
        %v1291 = vadd.f32 %v1002, %v1290
        %v1292 = vpop.f32.mrb[0].mxu0
        %v1293 = vpop.f32.mrb[0].mxu0
        %v1294 = vadd.f32 %v1005, %v1293
        %v1295 = vpop.f32.mrb[0].mxu0
        %1296 = vmatprep.mubr.bf16.mxu0 %v398
        %1297 = vmatmul.mubr.bf16.gmra.mrb[0].mxu0 %v334
        %v1298 = vpop.f32.mrb[0].mxu0
        %v1299 = vadd.f32 %v1010, %v1298
        %v1300 = vpop.f32.mrb[0].mxu0
        %v1301 = vpop.f32.mrb[0].mxu0
        %v1302 = vadd.f32 %v1013, %v1301
        %v1303 = vpop.f32.mrb[0].mxu0
        %1304 = vmatprep.mubr.bf16.mxu0 %v406
        %1305 = vmatmul.mubr.bf16.gmra.mrb[0].mxu0 %v335
        %v1306 = vpop.f32.mrb[0].mxu0
        %v1307 = vadd.f32 %v1018, %v1306
        %v1308 = vpop.f32.mrb[0].mxu0
        %v1309 = vpop.f32.mrb[0].mxu0
        %v1310 = vadd.f32 %v1021, %v1309
        %v1311 = vpop.f32.mrb[0].mxu0
        %1312 = vmatprep.mubr.bf16.mxu0 %v414
        %1313 = vmatmul.mubr.bf16.gmra.mrb[0].mxu0 %v336
        %v1314 = vpop.f32.mrb[0].mxu0
        %v1315 = vadd.f32 %v1026, %v1314
        %v1316 = vpop.f32.mrb[0].mxu0
        %v1317 = vpop.f32.mrb[0].mxu0
        %v1318 = vadd.f32 %v1029, %v1317
        %v1319 = vpop.f32.mrb[0].mxu0
        %1320 = vmatprep.mubr.bf16.mxu0 %v422
        %1321 = vmatmul.mubr.bf16.gmra.mrb[0].mxu0 %v337
        %v1322 = vpop.f32.mrb[0].mxu0
        %v1323 = vadd.f32 %v1034, %v1322
        %v1324 = vpop.f32.mrb[0].mxu0
        %v1325 = vpop.f32.mrb[0].mxu0
        %v1326 = vadd.f32 %v1037, %v1325
        %v1327 = vpop.f32.mrb[0].mxu0
        %1328 = vmatprep.mubr.bf16.mxu0 %v430
        %1329 = vmatmul.mubr.bf16.gmra.mrb[0].mxu0 %v338
        %v1330 = vpop.f32.mrb[0].mxu0
        %v1331 = vadd.f32 %v1042, %v1330
        %v1332 = vpop.f32.mrb[0].mxu0
        %v1333 = vpop.f32.mrb[0].mxu0
        %v1334 = vadd.f32 %v1045, %v1333
        %v1335 = vpop.f32.mrb[0].mxu0
        %1336 = vmatprep.mubr.bf16.mxu0 %v438
        %1337 = vmatmul.mubr.bf16.gmra.mrb[0].mxu0 %v339
        %v1338 = vpop.f32.mrb[0].mxu0
        %v1339 = vadd.f32 %v1050, %v1338
        %v1340 = vpop.f32.mrb[0].mxu0
        %v1341 = vpop.f32.mrb[0].mxu0
        %v1342 = vadd.f32 %v1053, %v1341
        %v1343 = vpop.f32.mrb[0].mxu0
        %1344 = vmatprep.mubr.bf16.mxu0 %v446
        %1345 = vmatmul.mubr.bf16.gmra.mrb[0].mxu0 %v340
        %v1346 = vpop.f32.mrb[0].mxu0
        %v1347 = vadd.f32 %v1058, %v1346
        %v1348 = vpop.f32.mrb[0].mxu0
        %v1349 = vpop.f32.mrb[0].mxu0
        %v1350 = vadd.f32 %v1061, %v1349
        %v1351 = vpop.f32.mrb[0].mxu0
        %1352 = vmatprep.mubr.bf16.mxu0 %v454
        %1353 = vmatmul.mubr.bf16.gmra.mrb[0].mxu0 %v341
        %v1354 = vpop.f32.mrb[0].mxu0
        %v1355 = vadd.f32 %v1066, %v1354
        %v1356 = vpop.f32.mrb[0].mxu0
        %v1357 = vpop.f32.mrb[0].mxu0
        %v1358 = vadd.f32 %v1069, %v1357
        %v1359 = vpop.f32.mrb[0].mxu0
        %1360 = vmatprep.mubr.bf16.mxu0 %v462
        %1361 = vmatmul.mubr.bf16.gmra.mrb[0].mxu0 %v342
        %v1362 = vpop.f32.mrb[0].mxu0
        %v1363 = vadd.f32 %v1074, %v1362
        %v1364 = vpop.f32.mrb[0].mxu0
        %v1365 = vpop.f32.mrb[0].mxu0
        %v1366 = vadd.f32 %v1077, %v1365
        %v1367 = vpop.f32.mrb[0].mxu0
        %1368 = vmatprep.mubr.bf16.mxu0 %v470
        %1369 = vmatmul.mubr.bf16.gmra.mrb[0].mxu0 %v343
        %v1370 = vpop.f32.mrb[0].mxu0
        %v1371 = vadd.f32 %v1082, %v1370
        %v1372 = vpop.f32.mrb[0].mxu0
        %v1373 = vpop.f32.mrb[0].mxu0
        %v1374 = vadd.f32 %v1085, %v1373
        %v1375 = vpop.f32.mrb[0].mxu0
        %1376 = vmatprep.mubr.bf16.mxu0 %v478
        %1377 = vmatmul.mubr.bf16.gmra.mrb[0].mxu0 %v344
        %v1378 = vpop.f32.mrb[0].mxu0
        %v1379 = vadd.f32 %v1090, %v1378
        %v1380 = vpop.f32.mrb[0].mxu0
        %v1381 = vpop.f32.mrb[0].mxu0
        %v1382 = vadd.f32 %v1093, %v1381
        %v1383 = vpop.f32.mrb[0].mxu0
        %1384 = vdwg.mxu0
        %1385 = vmatprep.subr.bf16.mxu0 0
        %1386 = vmatpush1.bf16.msra.mxu0 %v1208
        %1387 = vmatprep.subr.bf16.mxu0 0
        %1388 = vmatpush1.bf16.msra.mxu0 %v1209
        %1389 = vmatprep.subr.bf16.mxu0 0
        %1390 = vmatpush1.bf16.msra.mxu0 %v1210
        %1391 = vmatprep.subr.bf16.mxu0 0
        %1392 = vmatpush1.bf16.msra.mxu0 %v1211
        %1393 = vmatprep.subr.bf16.mxu0 0
        %1394 = vmatpush1.bf16.msra.mxu0 %v1212
        %1395 = vmatprep.subr.bf16.mxu0 0
        %1396 = vmatpush1.bf16.msra.mxu0 %v1213
        %1397 = vmatprep.subr.bf16.mxu0 0
        %1398 = vmatpush1.bf16.msra.mxu0 %v1214
        %1399 = vmatprep.subr.bf16.mxu0 0
        %1400 = vmatpush1.bf16.msra.mxu0 %v1215
        %1401 = vmatprep.subr.bf16.mxu0 0
        %1402 = vmatpush1.bf16.msra.mxu0 0
        %1403 = vmatprep.subr.bf16.mxu0 0
        %1404 = vmatpush1.bf16.msra.mxu0 0
        %1405 = vmatprep.subr.bf16.mxu0 0
        %1406 = vmatpush1.bf16.msra.mxu0 0
        %1407 = vmatprep.subr.bf16.mxu0 0
        %1408 = vmatpush1.bf16.msra.mxu0 0
        %1409 = vmatprep.subr.bf16.mxu0 0
        %1410 = vmatpush1.bf16.msra.mxu0 0
        %1411 = vmatprep.subr.bf16.mxu0 0
        %1412 = vmatpush1.bf16.msra.mxu0 0
        %1413 = vmatprep.subr.bf16.mxu0 0
        %1414 = vmatpush1.bf16.msra.mxu0 0
        %1415 = vmatprep.subr.bf16.mxu0 0
        %1416 = vmatpush1.bf16.msra.mxu0 0
        %1417 = vmatprep.mubr.bf16.mxu0 0
        %1418 = vmatmul.mubr.bf16.gmra.mrb[0].mxu0 %v496
        %v1419 = vpop.f32.mrb[0].mxu0
        %v1420 = vadd.f32 %v1275, %v1419
        %v1421 = vpop.f32.mrb[0].mxu0
        %v1422 = vpop.f32.mrb[0].mxu0
        %v1423 = vadd.f32 %v1278, %v1422
        %v1424 = vpop.f32.mrb[0].mxu0
        %1425 = vmatprep.mubr.bf16.mxu0 0
        %1426 = vmatmul.mubr.bf16.gmra.mrb[0].mxu0 %v498
        %v1427 = vpop.f32.mrb[0].mxu0
        %v1428 = vadd.f32 %v1283, %v1427
        %v1429 = vpop.f32.mrb[0].mxu0
        %v1430 = vpop.f32.mrb[0].mxu0
        %v1431 = vadd.f32 %v1286, %v1430
        %v1432 = vpop.f32.mrb[0].mxu0
        %1433 = vmatprep.mubr.bf16.mxu0 0
        %1434 = vmatmul.mubr.bf16.gmra.mrb[0].mxu0 %v500
        %v1435 = vpop.f32.mrb[0].mxu0
        %v1436 = vadd.f32 %v1291, %v1435
        %v1437 = vpop.f32.mrb[0].mxu0
        %v1438 = vpop.f32.mrb[0].mxu0
        %v1439 = vadd.f32 %v1294, %v1438
        %v1440 = vpop.f32.mrb[0].mxu0
        %1441 = vmatprep.mubr.bf16.mxu0 0
        %1442 = vmatmul.mubr.bf16.gmra.mrb[0].mxu0 %v502
        %v1443 = vpop.f32.mrb[0].mxu0
        %v1444 = vadd.f32 %v1299, %v1443
        %v1445 = vpop.f32.mrb[0].mxu0
        %v1446 = vpop.f32.mrb[0].mxu0
        %v1447 = vadd.f32 %v1302, %v1446
        %v1448 = vpop.f32.mrb[0].mxu0
        %1449 = vmatprep.mubr.bf16.mxu0 0
        %1450 = vmatmul.mubr.bf16.gmra.mrb[0].mxu0 %v504
        %v1451 = vpop.f32.mrb[0].mxu0
        %v1452 = vadd.f32 %v1307, %v1451
        %v1453 = vpop.f32.mrb[0].mxu0
        %v1454 = vpop.f32.mrb[0].mxu0
        %v1455 = vadd.f32 %v1310, %v1454
        %v1456 = vpop.f32.mrb[0].mxu0
        %1457 = vmatprep.mubr.bf16.mxu0 0
        %1458 = vmatmul.mubr.bf16.gmra.mrb[0].mxu0 %v506
        %v1459 = vpop.f32.mrb[0].mxu0
        %v1460 = vadd.f32 %v1315, %v1459
        %v1461 = vpop.f32.mrb[0].mxu0
        %v1462 = vpop.f32.mrb[0].mxu0
        %v1463 = vadd.f32 %v1318, %v1462
        %v1464 = vpop.f32.mrb[0].mxu0
        %1465 = vmatprep.mubr.bf16.mxu0 0
        %1466 = vmatmul.mubr.bf16.gmra.mrb[0].mxu0 %v508
        %v1467 = vpop.f32.mrb[0].mxu0
        %v1468 = vadd.f32 %v1323, %v1467
        %v1469 = vpop.f32.mrb[0].mxu0
        %v1470 = vpop.f32.mrb[0].mxu0
        %v1471 = vadd.f32 %v1326, %v1470
        %v1472 = vpop.f32.mrb[0].mxu0
        %1473 = vmatprep.mubr.bf16.mxu0 0
        %1474 = vmatmul.mubr.bf16.gmra.mrb[0].mxu0 %v510
        %v1475 = vpop.f32.mrb[0].mxu0
        %v1476 = vadd.f32 %v1331, %v1475
        %v1477 = vpop.f32.mrb[0].mxu0
        %v1478 = vpop.f32.mrb[0].mxu0
        %v1479 = vadd.f32 %v1334, %v1478
        %v1480 = vpop.f32.mrb[0].mxu0
        %1481 = vmatprep.mubr.bf16.mxu0 0
        %1482 = vmatmul.mubr.bf16.gmra.mrb[0].mxu0 %v512
        %v1483 = vpop.f32.mrb[0].mxu0
        %v1484 = vadd.f32 %v1339, %v1483
        %v1485 = vpop.f32.mrb[0].mxu0
        %v1486 = vpop.f32.mrb[0].mxu0
        %v1487 = vadd.f32 %v1342, %v1486
        %v1488 = vpop.f32.mrb[0].mxu0
        %1489 = vmatprep.mubr.bf16.mxu0 0
        %1490 = vmatmul.mubr.bf16.gmra.mrb[0].mxu0 %v514
        %v1491 = vpop.f32.mrb[0].mxu0
        %v1492 = vadd.f32 %v1347, %v1491
        %v1493 = vpop.f32.mrb[0].mxu0
        %v1494 = vpop.f32.mrb[0].mxu0
        %v1495 = vadd.f32 %v1350, %v1494
        %v1496 = vpop.f32.mrb[0].mxu0
        %1497 = vmatprep.mubr.bf16.mxu0 0
        %1498 = vmatmul.mubr.bf16.gmra.mrb[0].mxu0 %v516
        %v1499 = vpop.f32.mrb[0].mxu0
        %v1500 = vadd.f32 %v1355, %v1499
        %v1501 = vpop.f32.mrb[0].mxu0
        %v1502 = vpop.f32.mrb[0].mxu0
        %v1503 = vadd.f32 %v1358, %v1502
        %v1504 = vpop.f32.mrb[0].mxu0
        %1505 = vmatprep.mubr.bf16.mxu0 0
        %1506 = vmatmul.mubr.bf16.gmra.mrb[0].mxu0 %v518
        %v1507 = vpop.f32.mrb[0].mxu0
        %v1508 = vadd.f32 %v1363, %v1507
        %v1509 = vpop.f32.mrb[0].mxu0
        %v1510 = vpop.f32.mrb[0].mxu0
        %v1511 = vadd.f32 %v1366, %v1510
        %v1512 = vpop.f32.mrb[0].mxu0
        %1513 = vmatprep.mubr.bf16.mxu0 0
        %1514 = vmatmul.mubr.bf16.gmra.mrb[0].mxu0 %v520
        %v1515 = vpop.f32.mrb[0].mxu0
        %v1516 = vadd.f32 %v1371, %v1515
        %v1517 = vpop.f32.mrb[0].mxu0
        %v1518 = vpop.f32.mrb[0].mxu0
        %v1519 = vadd.f32 %v1374, %v1518
        %v1520 = vpop.f32.mrb[0].mxu0
        %1521 = vmatprep.mubr.bf16.mxu0 0
        %1522 = vmatmul.mubr.bf16.gmra.mrb[0].mxu0 %v522
        %v1523 = vpop.f32.mrb[0].mxu0
        %v1524 = vadd.f32 %v1379, %v1523
        %v1525 = vpop.f32.mrb[0].mxu0
        %v1526 = vpop.f32.mrb[0].mxu0
        %v1527 = vadd.f32 %v1382, %v1526
        %v1528 = vpop.f32.mrb[0].mxu0
        %1529 = vdwg.mxu0
        %v1531 = vunpack.c.l.b16 %v273
        %v1532 = vpack.c.b16 %v1531, %v590
        %v1535 = vunpack.c.l.b16 %v274
        %v1536 = vpack.c.b16 %v1535, %v1535
        %v1538 = vshll.u32 %v1532, 16
        %v1540 = vrot.slane %v1538, 1
        %v1541 = vsel %vm362, %v599, %v1540
        %v1542 = vshrl.u32 %v1532, 16
        %v1544 = vor.u32 %v1542, %v1540
        %v1546 = vshll.u32 %v1536, 16
        %v1548 = vrot.slane %v1546, 1
        %v1549 = vsel %vm362, %v1544, %v1548
        %v1552 = vrot.slane %v1532, 1
        %v1553 = vsel %vm493, %v607, %v1552
        %v1554 = vrot.slane %v1536, 1
        %v1555 = vsel %vm493, %v1552, %v1554
        %s1558 = scalar_lea.vmem [#allocation5], 384
        %v1559 = vld [vmem:[%s1558] sm:$0xf]
        %v1560 = vld [vmem:[%s1558 + $0x4] sm:$0xf]
        %v1561 = vld [vmem:[%s1558 + $0x8] sm:$0xf]
        %v1562 = vld [vmem:[%s1558 + $0xc] sm:$0xf]
        %v1563 = vld [vmem:[%s1558 + $0x10] sm:$0xf]
        %v1564 = vld [vmem:[%s1558 + $0x14] sm:$0xf]
        %v1565 = vld [vmem:[%s1558 + $0x18] sm:$0xf]
        %v1566 = vld [vmem:[%s1558 + $0x1c] sm:$0xf]
        %v1567 = vld [vmem:[%s1558 + $0x20] sm:$0xf]
        %v1568 = vld [vmem:[%s1558 + $0x24] sm:$0xf]
        %v1569 = vld [vmem:[%s1558 + $0x28] sm:$0xf]
        %v1570 = vld [vmem:[%s1558 + $0x2c] sm:$0xf]
        %v1571 = vld [vmem:[%s1558 + $0x30] sm:$0xf]
        %v1572 = vld [vmem:[%s1558 + $0x34] sm:$0xf]
        %v1573 = vld [vmem:[%s1558 + $0x38] sm:$0xf]
        %v1574 = vld [vmem:[%s1558 + $0x3c] sm:$0xf]
        %v1575 = vld [vmem:[%s1558 + $0x40] sm:$0xf]
        %v1576 = vld [vmem:[%s1558 + $0x44] sm:$0xf]
        %v1577 = vld [vmem:[%s1558 + $0x48] sm:$0xf]
        %v1578 = vld [vmem:[%s1558 + $0x4c] sm:$0xf]
        %v1579 = vld [vmem:[%s1558 + $0x50] sm:$0xf]
        %v1580 = vld [vmem:[%s1558 + $0x54] sm:$0xf]
        %v1581 = vld [vmem:[%s1558 + $0x58] sm:$0xf]
        %v1582 = vld [vmem:[%s1558 + $0x5c] sm:$0xf]
        %v1583 = vld [vmem:[%s1558 + $0x60] sm:$0xf]
        %v1584 = vld [vmem:[%s1558 + $0x64] sm:$0xf]
        %v1585 = vld [vmem:[%s1558 + $0x68] sm:$0xf]
        %v1586 = vld [vmem:[%s1558 + $0x6c] sm:$0xf]
        %v1587 = vld [vmem:[%s1558 + $0x70] sm:$0xf]
        %v1588 = vld [vmem:[%s1558 + $0x74] sm:$0xf]
        %v1589 = vld [vmem:[%s1558 + $0x78] sm:$0xf]
        %v1590 = vld [vmem:[%s1558 + $0x7c] sm:$0xf]
        %v1591 = vld [vmem:[%s1558 + $0x80] sm:$0xf]
        %v1592 = vld [vmem:[%s1558 + $0x84] sm:$0xf]
        %v1593 = vld [vmem:[%s1558 + $0x88] sm:$0xf]
        %v1594 = vld [vmem:[%s1558 + $0x8c] sm:$0xf]
        %v1595 = vld [vmem:[%s1558 + $0x90] sm:$0xf]
        %v1596 = vld [vmem:[%s1558 + $0x94] sm:$0xf]
        %v1597 = vld [vmem:[%s1558 + $0x98] sm:$0xf]
        %v1598 = vld [vmem:[%s1558 + $0x9c] sm:$0xf]
        %v1599 = vld [vmem:[%s1558 + $0xa0] sm:$0xf]
        %v1600 = vld [vmem:[%s1558 + $0xa4] sm:$0xf]
        %v1601 = vld [vmem:[%s1558 + $0xa8] sm:$0xf]
        %v1602 = vld [vmem:[%s1558 + $0xac] sm:$0xf]
        %v1603 = vld [vmem:[%s1558 + $0xb0] sm:$0xf]
        %v1604 = vld [vmem:[%s1558 + $0xb4] sm:$0xf]
        %v1605 = vld [vmem:[%s1558 + $0xb8] sm:$0xf]
        %v1606 = vld [vmem:[%s1558 + $0xbc] sm:$0xf]
        %v1655 = vunpack.c.l.b16 %v1559
        %v1656 = vunpack.c.l.b16 %v1560
        %v1657 = vunpack.c.l.b16 %v1561
        %v1658 = vunpack.c.l.b16 %v1562
        %v1659 = vunpack.c.l.b16 %v1563
        %v1660 = vunpack.c.l.b16 %v1564
        %v1661 = vunpack.c.l.b16 %v1565
        %v1662 = vunpack.c.l.b16 %v1566
        %v1663 = vunpack.c.l.b16 %v1567
        %v1664 = vunpack.c.l.b16 %v1568
        %v1665 = vunpack.c.l.b16 %v1569
        %v1666 = vunpack.c.l.b16 %v1570
        %v1667 = vunpack.c.l.b16 %v1571
        %v1668 = vunpack.c.l.b16 %v1572
        %v1669 = vunpack.c.l.b16 %v1573
        %v1670 = vunpack.c.l.b16 %v1574
        %v1671 = vunpack.c.l.b16 %v1575
        %v1672 = vunpack.c.l.b16 %v1576
        %v1673 = vunpack.c.l.b16 %v1577
        %v1674 = vunpack.c.l.b16 %v1578
        %v1675 = vunpack.c.l.b16 %v1579
        %v1676 = vunpack.c.l.b16 %v1580
        %v1677 = vunpack.c.l.b16 %v1581
        %v1678 = vunpack.c.l.b16 %v1582
        %v1679 = vunpack.c.l.b16 %v1583
        %v1680 = vunpack.c.l.b16 %v1584
        %v1681 = vunpack.c.l.b16 %v1585
        %v1682 = vunpack.c.l.b16 %v1586
        %v1683 = vunpack.c.l.b16 %v1587
        %v1684 = vunpack.c.l.b16 %v1588
        %v1685 = vunpack.c.l.b16 %v1589
        %v1686 = vunpack.c.l.b16 %v1590
        %v1687 = vunpack.c.l.b16 %v1591
        %v1688 = vunpack.c.l.b16 %v1592
        %v1689 = vunpack.c.l.b16 %v1593
        %v1690 = vunpack.c.l.b16 %v1594
        %v1691 = vunpack.c.l.b16 %v1595
        %v1692 = vunpack.c.l.b16 %v1596
        %v1693 = vunpack.c.l.b16 %v1597
        %v1694 = vunpack.c.l.b16 %v1598
        %v1695 = vunpack.c.l.b16 %v1599
        %v1696 = vunpack.c.l.b16 %v1600
        %v1697 = vunpack.c.l.b16 %v1601
        %v1698 = vunpack.c.l.b16 %v1602
        %v1699 = vunpack.c.l.b16 %v1603
        %v1700 = vunpack.c.l.b16 %v1604
        %v1701 = vunpack.c.l.b16 %v1605
        %v1702 = vunpack.c.l.b16 %v1606
        %v1703 = vpack.c.b16 %v1656, %v1655
        %v1704 = vpack.c.b16 %v1658, %v1657
        %v1705 = vpack.c.b16 %v1660, %v1659
        %v1706 = vpack.c.b16 %v1662, %v1661
        %v1707 = vpack.c.b16 %v1664, %v1663
        %v1708 = vpack.c.b16 %v1666, %v1665
        %v1709 = vpack.c.b16 %v1668, %v1667
        %v1710 = vpack.c.b16 %v1670, %v1669
        %v1711 = vpack.c.b16 %v1672, %v1671
        %v1712 = vpack.c.b16 %v1674, %v1673
        %v1713 = vpack.c.b16 %v1676, %v1675
        %v1714 = vpack.c.b16 %v1678, %v1677
        %v1715 = vpack.c.b16 %v1680, %v1679
        %v1716 = vpack.c.b16 %v1682, %v1681
        %v1717 = vpack.c.b16 %v1684, %v1683
        %v1718 = vpack.c.b16 %v1686, %v1685
        %v1719 = vpack.c.b16 %v1688, %v1687
        %v1720 = vpack.c.b16 %v1690, %v1689
        %v1721 = vpack.c.b16 %v1692, %v1691
        %v1722 = vpack.c.b16 %v1694, %v1693
        %v1723 = vpack.c.b16 %v1696, %v1695
        %v1724 = vpack.c.b16 %v1698, %v1697
        %v1725 = vpack.c.b16 %v1700, %v1699
        %v1726 = vpack.c.b16 %v1702, %v1701
        %1751 = vmatprep.subr.bf16.mxu0 0
        %1752 = vmatpush1.bf16.msra.mxu0 %v1703
        %1753 = vmatprep.subr.bf16.mxu0 0
        %1754 = vmatpush1.bf16.msra.mxu0 %v1704
        %1755 = vmatprep.subr.bf16.mxu0 0
        %1756 = vmatpush1.bf16.msra.mxu0 %v1705
        %1757 = vmatprep.subr.bf16.mxu0 0
        %1758 = vmatpush1.bf16.msra.mxu0 %v1706
        %1759 = vmatprep.subr.bf16.mxu0 0
        %1760 = vmatpush1.bf16.msra.mxu0 %v1707
        %1761 = vmatprep.subr.bf16.mxu0 0
        %1762 = vmatpush1.bf16.msra.mxu0 %v1708
        %1763 = vmatprep.subr.bf16.mxu0 0
        %1764 = vmatpush1.bf16.msra.mxu0 %v1709
        %1765 = vmatprep.subr.bf16.mxu0 0
        %1766 = vmatpush1.bf16.msra.mxu0 %v1710
        %1767 = vmatprep.subr.bf16.mxu0 0
        %1768 = vmatpush1.bf16.msra.mxu0 %v1711
        %1769 = vmatprep.subr.bf16.mxu0 0
        %1770 = vmatpush1.bf16.msra.mxu0 %v1712
        %1771 = vmatprep.subr.bf16.mxu0 0
        %1772 = vmatpush1.bf16.msra.mxu0 %v1713
        %1773 = vmatprep.subr.bf16.mxu0 0
        %1774 = vmatpush1.bf16.msra.mxu0 %v1714
        %1775 = vmatprep.subr.bf16.mxu0 0
        %1776 = vmatpush1.bf16.msra.mxu0 %v1715
        %1777 = vmatprep.subr.bf16.mxu0 0
        %1778 = vmatpush1.bf16.msra.mxu0 %v1716
        %1779 = vmatprep.subr.bf16.mxu0 0
        %1780 = vmatpush1.bf16.msra.mxu0 %v1717
        %1781 = vmatprep.subr.bf16.mxu0 0
        %1782 = vmatpush1.bf16.msra.mxu0 %v1718
        %1783 = vmatprep.mubr.bf16.mxu0 %v390
        %1784 = vmatmul.mubr.bf16.gmra.mrb[0].mxu0 %v333
        %v1785 = vpop.f32.mrb[0].mxu0
        %v1786 = vadd.f32 0.0, %v1785
        %v1787 = vpop.f32.mrb[0].mxu0
        %v1788 = vpop.f32.mrb[0].mxu0
        %v1789 = vadd.f32 0.0, %v1788
        %v1790 = vpop.f32.mrb[0].mxu0
        %1791 = vmatprep.mubr.bf16.mxu0 %v398
        %1792 = vmatmul.mubr.bf16.gmra.mrb[0].mxu0 %v334
        %v1793 = vpop.f32.mrb[0].mxu0
        %v1794 = vadd.f32 0.0, %v1793
        %v1795 = vpop.f32.mrb[0].mxu0
        %v1796 = vpop.f32.mrb[0].mxu0
        %v1797 = vadd.f32 0.0, %v1796
        %v1798 = vpop.f32.mrb[0].mxu0
        %1799 = vmatprep.mubr.bf16.mxu0 %v406
        %1800 = vmatmul.mubr.bf16.gmra.mrb[0].mxu0 %v335
        %v1801 = vpop.f32.mrb[0].mxu0
        %v1802 = vadd.f32 0.0, %v1801
        %v1803 = vpop.f32.mrb[0].mxu0
        %v1804 = vpop.f32.mrb[0].mxu0
        %v1805 = vadd.f32 0.0, %v1804
        %v1806 = vpop.f32.mrb[0].mxu0
        %1807 = vmatprep.mubr.bf16.mxu0 %v414
        %1808 = vmatmul.mubr.bf16.gmra.mrb[0].mxu0 %v336
        %v1809 = vpop.f32.mrb[0].mxu0
        %v1810 = vadd.f32 0.0, %v1809
        %v1811 = vpop.f32.mrb[0].mxu0
        %v1812 = vpop.f32.mrb[0].mxu0
        %v1813 = vadd.f32 0.0, %v1812
        %v1814 = vpop.f32.mrb[0].mxu0
        %1815 = vmatprep.mubr.bf16.mxu0 %v422
        %1816 = vmatmul.mubr.bf16.gmra.mrb[0].mxu0 %v337
        %v1817 = vpop.f32.mrb[0].mxu0
        %v1818 = vadd.f32 0.0, %v1817
        %v1819 = vpop.f32.mrb[0].mxu0
        %v1820 = vpop.f32.mrb[0].mxu0
        %v1821 = vadd.f32 0.0, %v1820
        %v1822 = vpop.f32.mrb[0].mxu0
        %1823 = vmatprep.mubr.bf16.mxu0 %v430
        %1824 = vmatmul.mubr.bf16.gmra.mrb[0].mxu0 %v338
        %v1825 = vpop.f32.mrb[0].mxu0
        %v1826 = vadd.f32 0.0, %v1825
        %v1827 = vpop.f32.mrb[0].mxu0
        %v1828 = vpop.f32.mrb[0].mxu0
        %v1829 = vadd.f32 0.0, %v1828
        %v1830 = vpop.f32.mrb[0].mxu0
        %1831 = vmatprep.mubr.bf16.mxu0 %v438
        %1832 = vmatmul.mubr.bf16.gmra.mrb[0].mxu0 %v339
        %v1833 = vpop.f32.mrb[0].mxu0
        %v1834 = vadd.f32 0.0, %v1833
        %v1835 = vpop.f32.mrb[0].mxu0
        %v1836 = vpop.f32.mrb[0].mxu0
        %v1837 = vadd.f32 0.0, %v1836
        %v1838 = vpop.f32.mrb[0].mxu0
        %1839 = vmatprep.mubr.bf16.mxu0 %v446
        %1840 = vmatmul.mubr.bf16.gmra.mrb[0].mxu0 %v340
        %v1841 = vpop.f32.mrb[0].mxu0
        %v1842 = vadd.f32 0.0, %v1841
        %v1843 = vpop.f32.mrb[0].mxu0
        %v1844 = vpop.f32.mrb[0].mxu0
        %v1845 = vadd.f32 0.0, %v1844
        %v1846 = vpop.f32.mrb[0].mxu0
        %1847 = vmatprep.mubr.bf16.mxu0 %v454
        %1848 = vmatmul.mubr.bf16.gmra.mrb[0].mxu0 %v341
        %v1849 = vpop.f32.mrb[0].mxu0
        %v1850 = vadd.f32 0.0, %v1849
        %v1851 = vpop.f32.mrb[0].mxu0
        %v1852 = vpop.f32.mrb[0].mxu0
        %v1853 = vadd.f32 0.0, %v1852
        %v1854 = vpop.f32.mrb[0].mxu0
        %1855 = vmatprep.mubr.bf16.mxu0 %v462
        %1856 = vmatmul.mubr.bf16.gmra.mrb[0].mxu0 %v342
        %v1857 = vpop.f32.mrb[0].mxu0
        %v1858 = vadd.f32 0.0, %v1857
        %v1859 = vpop.f32.mrb[0].mxu0
        %v1860 = vpop.f32.mrb[0].mxu0
        %v1861 = vadd.f32 0.0, %v1860
        %v1862 = vpop.f32.mrb[0].mxu0
        %1863 = vmatprep.mubr.bf16.mxu0 %v470
        %1864 = vmatmul.mubr.bf16.gmra.mrb[0].mxu0 %v343
        %v1865 = vpop.f32.mrb[0].mxu0
        %v1866 = vadd.f32 0.0, %v1865
        %v1867 = vpop.f32.mrb[0].mxu0
        %v1868 = vpop.f32.mrb[0].mxu0
        %v1869 = vadd.f32 0.0, %v1868
        %v1870 = vpop.f32.mrb[0].mxu0
        %1871 = vmatprep.mubr.bf16.mxu0 %v596
        %1872 = vmatmul.mubr.bf16.gmra.mrb[0].mxu0 %v344
        %v1873 = vpop.f32.mrb[0].mxu0
        %v1874 = vadd.f32 0.0, %v1873
        %v1875 = vpop.f32.mrb[0].mxu0
        %v1876 = vpop.f32.mrb[0].mxu0
        %v1877 = vadd.f32 0.0, %v1876
        %v1878 = vpop.f32.mrb[0].mxu0
        %1879 = vmatprep.mubr.bf16.mxu0 %v1541
        %1880 = vmatmul.mubr.bf16.gmra.mrb[0].mxu0 %v587
        %v1881 = vpop.f32.mrb[0].mxu0
        %v1882 = vadd.f32 0.0, %v1881
        %v1883 = vpop.f32.mrb[0].mxu0
        %v1884 = vpop.f32.mrb[0].mxu0
        %v1885 = vadd.f32 0.0, %v1884
        %v1886 = vpop.f32.mrb[0].mxu0
        %1887 = vmatprep.mubr.bf16.mxu0 %v1549
        %1888 = vmatmul.mubr.bf16.gmra.mrb[0].mxu0 %v1532
        %v1889 = vpop.f32.mrb[0].mxu0
        %v1890 = vadd.f32 0.0, %v1889
        %v1891 = vpop.f32.mrb[0].mxu0
        %v1892 = vpop.f32.mrb[0].mxu0
        %v1893 = vadd.f32 0.0, %v1892
        %v1894 = vpop.f32.mrb[0].mxu0
        %1895 = vdwg.mxu0
        %1896 = vmatprep.subr.bf16.mxu0 0
        %1897 = vmatpush1.bf16.msra.mxu0 %v1719
        %1898 = vmatprep.subr.bf16.mxu0 0
        %1899 = vmatpush1.bf16.msra.mxu0 %v1720
        %1900 = vmatprep.subr.bf16.mxu0 0
        %1901 = vmatpush1.bf16.msra.mxu0 %v1721
        %1902 = vmatprep.subr.bf16.mxu0 0
        %1903 = vmatpush1.bf16.msra.mxu0 %v1722
        %1904 = vmatprep.subr.bf16.mxu0 0
        %1905 = vmatpush1.bf16.msra.mxu0 %v1723
        %1906 = vmatprep.subr.bf16.mxu0 0
        %1907 = vmatpush1.bf16.msra.mxu0 %v1724
        %1908 = vmatprep.subr.bf16.mxu0 0
        %1909 = vmatpush1.bf16.msra.mxu0 %v1725
        %1910 = vmatprep.subr.bf16.mxu0 0
        %1911 = vmatpush1.bf16.msra.mxu0 %v1726
        %1912 = vmatprep.subr.bf16.mxu0 0
        %1913 = vmatpush1.bf16.msra.mxu0 0
        %1914 = vmatprep.subr.bf16.mxu0 0
        %1915 = vmatpush1.bf16.msra.mxu0 0
        %1916 = vmatprep.subr.bf16.mxu0 0
        %1917 = vmatpush1.bf16.msra.mxu0 0
        %1918 = vmatprep.subr.bf16.mxu0 0
        %1919 = vmatpush1.bf16.msra.mxu0 0
        %1920 = vmatprep.subr.bf16.mxu0 0
        %1921 = vmatpush1.bf16.msra.mxu0 0
        %1922 = vmatprep.subr.bf16.mxu0 0
        %1923 = vmatpush1.bf16.msra.mxu0 0
        %1924 = vmatprep.subr.bf16.mxu0 0
        %1925 = vmatpush1.bf16.msra.mxu0 0
        %1926 = vmatprep.subr.bf16.mxu0 0
        %1927 = vmatpush1.bf16.msra.mxu0 0
        %1928 = vmatprep.mubr.bf16.mxu0 0
        %1929 = vmatmul.mubr.bf16.gmra.mrb[0].mxu0 %v500
        %v1930 = vpop.f32.mrb[0].mxu0
        %v1931 = vadd.f32 %v1786, %v1930
        %v1932 = vpop.f32.mrb[0].mxu0
        %v1933 = vpop.f32.mrb[0].mxu0
        %v1934 = vadd.f32 %v1789, %v1933
        %v1935 = vpop.f32.mrb[0].mxu0
        %1936 = vmatprep.mubr.bf16.mxu0 0
        %1937 = vmatmul.mubr.bf16.gmra.mrb[0].mxu0 %v502
        %v1938 = vpop.f32.mrb[0].mxu0
        %v1939 = vadd.f32 %v1794, %v1938
        %v1940 = vpop.f32.mrb[0].mxu0
        %v1941 = vpop.f32.mrb[0].mxu0
        %v1942 = vadd.f32 %v1797, %v1941
        %v1943 = vpop.f32.mrb[0].mxu0
        %1944 = vmatprep.mubr.bf16.mxu0 0
        %1945 = vmatmul.mubr.bf16.gmra.mrb[0].mxu0 %v504
        %v1946 = vpop.f32.mrb[0].mxu0
        %v1947 = vadd.f32 %v1802, %v1946
        %v1948 = vpop.f32.mrb[0].mxu0
        %v1949 = vpop.f32.mrb[0].mxu0
        %v1950 = vadd.f32 %v1805, %v1949
        %v1951 = vpop.f32.mrb[0].mxu0
        %1952 = vmatprep.mubr.bf16.mxu0 0
        %1953 = vmatmul.mubr.bf16.gmra.mrb[0].mxu0 %v506
        %v1954 = vpop.f32.mrb[0].mxu0
        %v1955 = vadd.f32 %v1810, %v1954
        %v1956 = vpop.f32.mrb[0].mxu0
        %v1957 = vpop.f32.mrb[0].mxu0
        %v1958 = vadd.f32 %v1813, %v1957
        %v1959 = vpop.f32.mrb[0].mxu0
        %1960 = vmatprep.mubr.bf16.mxu0 0
        %1961 = vmatmul.mubr.bf16.gmra.mrb[0].mxu0 %v508
        %v1962 = vpop.f32.mrb[0].mxu0
        %v1963 = vadd.f32 %v1818, %v1962
        %v1964 = vpop.f32.mrb[0].mxu0
        %v1965 = vpop.f32.mrb[0].mxu0
        %v1966 = vadd.f32 %v1821, %v1965
        %v1967 = vpop.f32.mrb[0].mxu0
        %1968 = vmatprep.mubr.bf16.mxu0 0
        %1969 = vmatmul.mubr.bf16.gmra.mrb[0].mxu0 %v510
        %v1970 = vpop.f32.mrb[0].mxu0
        %v1971 = vadd.f32 %v1826, %v1970
        %v1972 = vpop.f32.mrb[0].mxu0
        %v1973 = vpop.f32.mrb[0].mxu0
        %v1974 = vadd.f32 %v1829, %v1973
        %v1975 = vpop.f32.mrb[0].mxu0
        %1976 = vmatprep.mubr.bf16.mxu0 0
        %1977 = vmatmul.mubr.bf16.gmra.mrb[0].mxu0 %v512
        %v1978 = vpop.f32.mrb[0].mxu0
        %v1979 = vadd.f32 %v1834, %v1978
        %v1980 = vpop.f32.mrb[0].mxu0
        %v1981 = vpop.f32.mrb[0].mxu0
        %v1982 = vadd.f32 %v1837, %v1981
        %v1983 = vpop.f32.mrb[0].mxu0
        %1984 = vmatprep.mubr.bf16.mxu0 0
        %1985 = vmatmul.mubr.bf16.gmra.mrb[0].mxu0 %v514
        %v1986 = vpop.f32.mrb[0].mxu0
        %v1987 = vadd.f32 %v1842, %v1986
        %v1988 = vpop.f32.mrb[0].mxu0
        %v1989 = vpop.f32.mrb[0].mxu0
        %v1990 = vadd.f32 %v1845, %v1989
        %v1991 = vpop.f32.mrb[0].mxu0
        %1992 = vmatprep.mubr.bf16.mxu0 0
        %1993 = vmatmul.mubr.bf16.gmra.mrb[0].mxu0 %v516
        %v1994 = vpop.f32.mrb[0].mxu0
        %v1995 = vadd.f32 %v1850, %v1994
        %v1996 = vpop.f32.mrb[0].mxu0
        %v1997 = vpop.f32.mrb[0].mxu0
        %v1998 = vadd.f32 %v1853, %v1997
        %v1999 = vpop.f32.mrb[0].mxu0
        %2000 = vmatprep.mubr.bf16.mxu0 0
        %2001 = vmatmul.mubr.bf16.gmra.mrb[0].mxu0 %v518
        %v2002 = vpop.f32.mrb[0].mxu0
        %v2003 = vadd.f32 %v1858, %v2002
        %v2004 = vpop.f32.mrb[0].mxu0
        %v2005 = vpop.f32.mrb[0].mxu0
        %v2006 = vadd.f32 %v1861, %v2005
        %v2007 = vpop.f32.mrb[0].mxu0
        %2008 = vmatprep.mubr.bf16.mxu0 0
        %2009 = vmatmul.mubr.bf16.gmra.mrb[0].mxu0 %v520
        %v2010 = vpop.f32.mrb[0].mxu0
        %v2011 = vadd.f32 %v1866, %v2010
        %v2012 = vpop.f32.mrb[0].mxu0
        %v2013 = vpop.f32.mrb[0].mxu0
        %v2014 = vadd.f32 %v1869, %v2013
        %v2015 = vpop.f32.mrb[0].mxu0
        %2016 = vmatprep.mubr.bf16.mxu0 0
        %2017 = vmatmul.mubr.bf16.gmra.mrb[0].mxu0 %v608
        %v2018 = vpop.f32.mrb[0].mxu0
        %v2019 = vadd.f32 %v1874, %v2018
        %v2020 = vpop.f32.mrb[0].mxu0
        %v2021 = vpop.f32.mrb[0].mxu0
        %v2022 = vadd.f32 %v1877, %v2021
        %v2023 = vpop.f32.mrb[0].mxu0
        %2024 = vmatprep.mubr.bf16.mxu0 0
        %2025 = vmatmul.mubr.bf16.gmra.mrb[0].mxu0 %v1553
        %v2026 = vpop.f32.mrb[0].mxu0
        %v2027 = vadd.f32 %v1882, %v2026
        %v2028 = vpop.f32.mrb[0].mxu0
        %v2029 = vpop.f32.mrb[0].mxu0
        %v2030 = vadd.f32 %v1885, %v2029
        %v2031 = vpop.f32.mrb[0].mxu0
        %2032 = vmatprep.mubr.bf16.mxu0 0
        %2033 = vmatmul.mubr.bf16.gmra.mrb[0].mxu0 %v1555
        %v2034 = vpop.f32.mrb[0].mxu0
        %v2035 = vadd.f32 %v1890, %v2034
        %v2036 = vpop.f32.mrb[0].mxu0
        %v2037 = vpop.f32.mrb[0].mxu0
        %v2038 = vadd.f32 %v1893, %v2037
        %v2039 = vpop.f32.mrb[0].mxu0
        %2040 = vdwg.mxu0
        %v2041 = vadd.f32 %v1420, %v1931
        %v2042 = vadd.f32 %v1423, %v1934
        %v2043 = vadd.f32 %v1428, %v1939
        %v2044 = vadd.f32 %v1431, %v1942
        %v2045 = vadd.f32 %v1436, %v1947
        %v2046 = vadd.f32 %v1439, %v1950
        %v2047 = vadd.f32 %v1444, %v1955
        %v2048 = vadd.f32 %v1447, %v1958
        %v2049 = vadd.f32 %v1452, %v1963
        %v2050 = vadd.f32 %v1455, %v1966
        %v2051 = vadd.f32 %v1460, %v1971
        %v2052 = vadd.f32 %v1463, %v1974
        %v2053 = vadd.f32 %v1468, %v1979
        %v2054 = vadd.f32 %v1471, %v1982
        %v2055 = vadd.f32 %v1476, %v1987
        %v2056 = vadd.f32 %v1479, %v1990
        %v2057 = vadd.f32 %v1484, %v1995
        %v2058 = vadd.f32 %v1487, %v1998
        %v2059 = vadd.f32 %v1492, %v2003
        %v2060 = vadd.f32 %v1495, %v2006
        %v2061 = vadd.f32 %v1500, %v2011
        %v2062 = vadd.f32 %v1503, %v2014
        %v2063 = vadd.f32 %v1508, %v2019
        %v2064 = vadd.f32 %v1511, %v2022
        %v2065 = vadd.f32 %v1516, %v2027
        %v2066 = vadd.f32 %v1519, %v2030
        %v2067 = vadd.f32 %v1524, %v2035
        %v2068 = vadd.f32 %v1527, %v2038
        %v2069 = vpack.c.bf16 %v2042, %v2041
        %v2070 = vpack.c.bf16 %v2044, %v2043
        %v2071 = vpack.c.bf16 %v2046, %v2045
        %v2072 = vpack.c.bf16 %v2048, %v2047
        %v2073 = vpack.c.bf16 %v2050, %v2049
        %v2074 = vpack.c.bf16 %v2052, %v2051
        %v2075 = vpack.c.bf16 %v2054, %v2053
        %v2076 = vpack.c.bf16 %v2056, %v2055
        %v2077 = vpack.c.bf16 %v2058, %v2057
        %v2078 = vpack.c.bf16 %v2060, %v2059
        %v2079 = vpack.c.bf16 %v2062, %v2061
        %v2080 = vpack.c.bf16 %v2064, %v2063
        %v2081 = vpack.c.bf16 %v2066, %v2065
        %v2082 = vpack.c.bf16 %v2068, %v2067
        %v2097 = vunpack.c.l.b16 %v2069
        %v2098 = vunpack.c.h.b16 %v2069
        %v2099 = vunpack.c.l.b16 %v2070
        %v2100 = vunpack.c.h.b16 %v2070
        %v2101 = vunpack.c.l.b16 %v2071
        %v2102 = vunpack.c.h.b16 %v2071
        %v2103 = vunpack.c.l.b16 %v2072
        %v2104 = vunpack.c.h.b16 %v2072
        %v2105 = vunpack.c.l.b16 %v2073
        %v2106 = vunpack.c.h.b16 %v2073
        %v2107 = vunpack.c.l.b16 %v2074
        %v2108 = vunpack.c.h.b16 %v2074
        %v2109 = vunpack.c.l.b16 %v2075
        %v2110 = vunpack.c.h.b16 %v2075
        %v2111 = vunpack.c.l.b16 %v2076
        %v2112 = vunpack.c.h.b16 %v2076
        %v2113 = vunpack.c.l.b16 %v2077
        %v2114 = vunpack.c.h.b16 %v2077
        %v2115 = vunpack.c.l.b16 %v2078
        %v2116 = vunpack.c.h.b16 %v2078
        %v2117 = vunpack.c.l.b16 %v2079
        %v2118 = vunpack.c.h.b16 %v2079
        %v2119 = vunpack.c.l.b16 %v2080
        %v2120 = vunpack.c.h.b16 %v2080
        %v2121 = vunpack.c.l.b16 %v2081
        %v2122 = vunpack.c.h.b16 %v2081
        %v2123 = vunpack.c.l.b16 %v2082
        %v2124 = vunpack.c.h.b16 %v2082
        %v2125 = vpack.c.b16 %v2097, %v2097
        %v2126 = vpack.c.b16 %v2098, %v2098
        %v2127 = vpack.c.b16 %v2099, %v2099
        %v2128 = vpack.c.b16 %v2100, %v2100
        %v2129 = vpack.c.b16 %v2101, %v2101
        %v2130 = vpack.c.b16 %v2102, %v2102
        %v2131 = vpack.c.b16 %v2103, %v2103
        %v2132 = vpack.c.b16 %v2104, %v2104
        %v2133 = vpack.c.b16 %v2105, %v2105
        %v2134 = vpack.c.b16 %v2106, %v2106
        %v2135 = vpack.c.b16 %v2107, %v2107
        %v2136 = vpack.c.b16 %v2108, %v2108
        %v2137 = vpack.c.b16 %v2109, %v2109
        %v2138 = vpack.c.b16 %v2110, %v2110
        %v2139 = vpack.c.b16 %v2111, %v2111
        %v2140 = vpack.c.b16 %v2112, %v2112
        %v2141 = vpack.c.b16 %v2113, %v2113
        %v2142 = vpack.c.b16 %v2114, %v2114
        %v2143 = vpack.c.b16 %v2115, %v2115
        %v2144 = vpack.c.b16 %v2116, %v2116
        %v2145 = vpack.c.b16 %v2117, %v2117
        %v2146 = vpack.c.b16 %v2118, %v2118
        %v2147 = vpack.c.b16 %v2119, %v2119
        %v2148 = vpack.c.b16 %v2120, %v2120
        %v2149 = vpack.c.b16 %v2121, %v2121
        %v2150 = vpack.c.b16 %v2122, %v2122
        %v2151 = vpack.c.b16 %v2123, %v2123
        %v2152 = vpack.c.b16 %v2124, %v2124
        %2181 = vst [vmem:[%s223] sm:$0xf] %v2125
        %2182 = vst [vmem:[%s223 + $0x4] sm:$0xf] %v2126
        %2183 = vst [vmem:[%s223 + $0x8] sm:$0xf] %v2127
        %2184 = vst [vmem:[%s223 + $0xc] sm:$0xf] %v2128
        %2185 = vst [vmem:[%s223 + $0x10] sm:$0xf] %v2129
        %2186 = vst [vmem:[%s223 + $0x14] sm:$0xf] %v2130
        %2187 = vst [vmem:[%s223 + $0x18] sm:$0xf] %v2131
        %2188 = vst [vmem:[%s223 + $0x1c] sm:$0xf] %v2132
        %2189 = vst [vmem:[%s223 + $0x20] sm:$0xf] %v2133
        %2190 = vst [vmem:[%s223 + $0x24] sm:$0xf] %v2134
        %2191 = vst [vmem:[%s223 + $0x28] sm:$0xf] %v2135
        %2192 = vst [vmem:[%s223 + $0x2c] sm:$0xf] %v2136
        %2193 = vst [vmem:[%s223 + $0x30] sm:$0xf] %v2137
        %2194 = vst [vmem:[%s223 + $0x34] sm:$0xf] %v2138
        %2195 = vst [vmem:[%s223 + $0x38] sm:$0xf] %v2139
        %2196 = vst [vmem:[%s223 + $0x3c] sm:$0xf] %v2140
        %2197 = vst [vmem:[%s223 + $0x40] sm:$0xf] %v2141
        %2198 = vst [vmem:[%s223 + $0x44] sm:$0xf] %v2142
        %2199 = vst [vmem:[%s223 + $0x48] sm:$0xf] %v2143
        %2200 = vst [vmem:[%s223 + $0x4c] sm:$0xf] %v2144
        %2201 = vst [vmem:[%s223 + $0x50] sm:$0xf] %v2145
        %2202 = vst [vmem:[%s223 + $0x54] sm:$0xf] %v2146
        %2203 = vst [vmem:[%s223 + $0x58] sm:$0xf] %v2147
        %2204 = vst [vmem:[%s223 + $0x5c] sm:$0xf] %v2148
        %2205 = vst [vmem:[%s223 + $0x60] sm:$0xf] %v2149
        %2206 = vst [vmem:[%s223 + $0x64] sm:$0xf] %v2150
        %2207 = vst [vmem:[%s223 + $0x68] sm:$0xf] %v2151
        %2208 = vst [vmem:[%s223 + $0x6c] sm:$0xf] %v2152
        %v2209 = vlaneseq
        %v2210 = vshrl.u32 %v2209, 7
        %v2211 = vadd.s32 %v2210, 8
        %v2212 = vadd.s32 %v2210, 16
        %v2213 = vadd.s32 %v2210, 24
        %v2214 = vadd.s32 %v2210, 32
        %v2215 = vadd.s32 %v2210, 40
        %v2216 = vadd.s32 %v2210, 48
        %v2217 = vadd.s32 %v2210, 56
        %v2218 = vadd.s32 %v2210, 64
        %v2219 = vadd.s32 %v2210, 72
        %v2220 = vadd.s32 %v2210, 80
        %v2221 = vadd.s32 %v2210, 88
        %v2222 = vadd.s32 %v2210, 96
        %v2223 = vadd.s32 %v2210, 104
        %v2224 = vadd.s32 %v2210, 112
        %v2225 = vadd.s32 %v2210, 120
        %v2226 = vadd.s32 %v2210, 128
        %v2227 = vadd.s32 %v2210, 136
        %v2228 = vadd.s32 %v2210, 144
        %v2229 = vadd.s32 %v2210, 152
        %v2230 = vadd.s32 %v2210, 160
        %v2231 = vadd.s32 %v2210, 168
        %v2232 = vadd.s32 %v2210, 176
        %v2233 = vadd.s32 %v2210, 184
        %v2234 = vadd.s32 %v2210, 192
        %v2235 = vadd.s32 %v2210, 200
        %v2236 = vadd.s32 %v2210, 208
        %v2237 = vadd.s32 %v2210, 216
        %vm2238 = vcmp.lt.s32.totalorder %v2210, 0
        %v2239 = vsub.s32 0, %v2210
        %v2240 = vsel %vm2238, %v2239, %v2210
        %v2241 = vshrl.u32 %v2240, 4
        %v2242 = vand.u32 %v2240, 15
        %v2243 = vsub.s32 0, %v2242
        %v2244 = vsel %vm2238, %v2243, %v2242
        %vm2245 = vcmp.lt.s32.totalorder %v2211, 0
        %v2246 = vsub.s32 0, %v2211
        %v2247 = vsel %vm2245, %v2246, %v2211
        %v2248 = vshrl.u32 %v2247, 4
        %v2249 = vand.u32 %v2247, 15
        %v2250 = vsub.s32 0, %v2249
        %v2251 = vsel %vm2245, %v2250, %v2249
        %vm2252 = vcmp.lt.s32.totalorder %v2212, 0
        %v2253 = vsub.s32 0, %v2212
        %v2254 = vsel %vm2252, %v2253, %v2212
        %v2255 = vshrl.u32 %v2254, 4
        %v2256 = vand.u32 %v2254, 15
        %v2257 = vsub.s32 0, %v2256
        %v2258 = vsel %vm2252, %v2257, %v2256
        %vm2259 = vcmp.lt.s32.totalorder %v2213, 0
        %v2260 = vsub.s32 0, %v2213
        %v2261 = vsel %vm2259, %v2260, %v2213
        %v2262 = vshrl.u32 %v2261, 4
        %v2263 = vand.u32 %v2261, 15
        %v2264 = vsub.s32 0, %v2263
        %v2265 = vsel %vm2259, %v2264, %v2263
        %vm2266 = vcmp.lt.s32.totalorder %v2214, 0
        %v2267 = vsub.s32 0, %v2214
        %v2268 = vsel %vm2266, %v2267, %v2214
        %v2269 = vshrl.u32 %v2268, 4
        %v2270 = vand.u32 %v2268, 15
        %v2271 = vsub.s32 0, %v2270
        %v2272 = vsel %vm2266, %v2271, %v2270
        %vm2273 = vcmp.lt.s32.totalorder %v2215, 0
        %v2274 = vsub.s32 0, %v2215
        %v2275 = vsel %vm2273, %v2274, %v2215
        %v2276 = vshrl.u32 %v2275, 4
        %v2277 = vand.u32 %v2275, 15
        %v2278 = vsub.s32 0, %v2277
        %v2279 = vsel %vm2273, %v2278, %v2277
        %vm2280 = vcmp.lt.s32.totalorder %v2216, 0
        %v2281 = vsub.s32 0, %v2216
        %v2282 = vsel %vm2280, %v2281, %v2216
        %v2283 = vshrl.u32 %v2282, 4
        %v2284 = vand.u32 %v2282, 15
        %v2285 = vsub.s32 0, %v2284
        %v2286 = vsel %vm2280, %v2285, %v2284
        %vm2287 = vcmp.lt.s32.totalorder %v2217, 0
        %v2288 = vsub.s32 0, %v2217
        %v2289 = vsel %vm2287, %v2288, %v2217
        %v2290 = vshrl.u32 %v2289, 4
        %v2291 = vand.u32 %v2289, 15
        %v2292 = vsub.s32 0, %v2291
        %v2293 = vsel %vm2287, %v2292, %v2291
        %vm2294 = vcmp.lt.s32.totalorder %v2218, 0
        %v2295 = vsub.s32 0, %v2218
        %v2296 = vsel %vm2294, %v2295, %v2218
        %v2297 = vshrl.u32 %v2296, 4
        %v2298 = vand.u32 %v2296, 15
        %v2299 = vsub.s32 0, %v2298
        %v2300 = vsel %vm2294, %v2299, %v2298
        %vm2301 = vcmp.lt.s32.totalorder %v2219, 0
        %v2302 = vsub.s32 0, %v2219
        %v2303 = vsel %vm2301, %v2302, %v2219
        %v2304 = vshrl.u32 %v2303, 4
        %v2305 = vand.u32 %v2303, 15
        %v2306 = vsub.s32 0, %v2305
        %v2307 = vsel %vm2301, %v2306, %v2305
        %vm2308 = vcmp.lt.s32.totalorder %v2220, 0
        %v2309 = vsub.s32 0, %v2220
        %v2310 = vsel %vm2308, %v2309, %v2220
        %v2311 = vshrl.u32 %v2310, 4
        %v2312 = vand.u32 %v2310, 15
        %v2313 = vsub.s32 0, %v2312
        %v2314 = vsel %vm2308, %v2313, %v2312
        %vm2315 = vcmp.lt.s32.totalorder %v2221, 0
        %v2316 = vsub.s32 0, %v2221
        %v2317 = vsel %vm2315, %v2316, %v2221
        %v2318 = vshrl.u32 %v2317, 4
        %v2319 = vand.u32 %v2317, 15
        %v2320 = vsub.s32 0, %v2319
        %v2321 = vsel %vm2315, %v2320, %v2319
        %vm2322 = vcmp.lt.s32.totalorder %v2222, 0
        %v2323 = vsub.s32 0, %v2222
        %v2324 = vsel %vm2322, %v2323, %v2222
        %v2325 = vshrl.u32 %v2324, 4
        %v2326 = vand.u32 %v2324, 15
        %v2327 = vsub.s32 0, %v2326
        %v2328 = vsel %vm2322, %v2327, %v2326
        %vm2329 = vcmp.lt.s32.totalorder %v2223, 0
        %v2330 = vsub.s32 0, %v2223
        %v2331 = vsel %vm2329, %v2330, %v2223
        %v2332 = vshrl.u32 %v2331, 4
        %v2333 = vand.u32 %v2331, 15
        %v2334 = vsub.s32 0, %v2333
        %v2335 = vsel %vm2329, %v2334, %v2333
        %vm2336 = vcmp.lt.s32.totalorder %v2224, 0
        %v2337 = vsub.s32 0, %v2224
        %v2338 = vsel %vm2336, %v2337, %v2224
        %v2339 = vshrl.u32 %v2338, 4
        %v2340 = vand.u32 %v2338, 15
        %v2341 = vsub.s32 0, %v2340
        %v2342 = vsel %vm2336, %v2341, %v2340
        %vm2343 = vcmp.lt.s32.totalorder %v2225, 0
        %v2344 = vsub.s32 0, %v2225
        %v2345 = vsel %vm2343, %v2344, %v2225
        %v2346 = vshrl.u32 %v2345, 4
        %v2347 = vand.u32 %v2345, 15
        %v2348 = vsub.s32 0, %v2347
        %v2349 = vsel %vm2343, %v2348, %v2347
        %vm2350 = vcmp.lt.s32.totalorder %v2226, 0
        %v2351 = vsub.s32 0, %v2226
        %v2352 = vsel %vm2350, %v2351, %v2226
        %v2353 = vshrl.u32 %v2352, 4
        %v2354 = vand.u32 %v2352, 15
        %v2355 = vsub.s32 0, %v2354
        %v2356 = vsel %vm2350, %v2355, %v2354
        %vm2357 = vcmp.lt.s32.totalorder %v2227, 0
        %v2358 = vsub.s32 0, %v2227
        %v2359 = vsel %vm2357, %v2358, %v2227
        %v2360 = vshrl.u32 %v2359, 4
        %v2361 = vand.u32 %v2359, 15
        %v2362 = vsub.s32 0, %v2361
        %v2363 = vsel %vm2357, %v2362, %v2361
        %vm2364 = vcmp.lt.s32.totalorder %v2228, 0
        %v2365 = vsub.s32 0, %v2228
        %v2366 = vsel %vm2364, %v2365, %v2228
        %v2367 = vshrl.u32 %v2366, 4
        %v2368 = vand.u32 %v2366, 15
        %v2369 = vsub.s32 0, %v2368
        %v2370 = vsel %vm2364, %v2369, %v2368
        %vm2371 = vcmp.lt.s32.totalorder %v2229, 0
        %v2372 = vsub.s32 0, %v2229
        %v2373 = vsel %vm2371, %v2372, %v2229
        %v2374 = vshrl.u32 %v2373, 4
        %v2375 = vand.u32 %v2373, 15
        %v2376 = vsub.s32 0, %v2375
        %v2377 = vsel %vm2371, %v2376, %v2375
        %vm2378 = vcmp.lt.s32.totalorder %v2230, 0
        %v2379 = vsub.s32 0, %v2230
        %v2380 = vsel %vm2378, %v2379, %v2230
        %v2381 = vshrl.u32 %v2380, 4
        %v2382 = vand.u32 %v2380, 15
        %v2383 = vsub.s32 0, %v2382
        %v2384 = vsel %vm2378, %v2383, %v2382
        %vm2385 = vcmp.lt.s32.totalorder %v2231, 0
        %v2386 = vsub.s32 0, %v2231
        %v2387 = vsel %vm2385, %v2386, %v2231
        %v2388 = vshrl.u32 %v2387, 4
        %v2389 = vand.u32 %v2387, 15
        %v2390 = vsub.s32 0, %v2389
        %v2391 = vsel %vm2385, %v2390, %v2389
        %vm2392 = vcmp.lt.s32.totalorder %v2232, 0
        %v2393 = vsub.s32 0, %v2232
        %v2394 = vsel %vm2392, %v2393, %v2232
        %v2395 = vshrl.u32 %v2394, 4
        %v2396 = vand.u32 %v2394, 15
        %v2397 = vsub.s32 0, %v2396
        %v2398 = vsel %vm2392, %v2397, %v2396
        %vm2399 = vcmp.lt.s32.totalorder %v2233, 0
        %v2400 = vsub.s32 0, %v2233
        %v2401 = vsel %vm2399, %v2400, %v2233
        %v2402 = vshrl.u32 %v2401, 4
        %v2403 = vand.u32 %v2401, 15
        %v2404 = vsub.s32 0, %v2403
        %v2405 = vsel %vm2399, %v2404, %v2403
        %vm2406 = vcmp.lt.s32.totalorder %v2234, 0
        %v2407 = vsub.s32 0, %v2234
        %v2408 = vsel %vm2406, %v2407, %v2234
        %v2409 = vshrl.u32 %v2408, 4
        %v2410 = vand.u32 %v2408, 15
        %v2411 = vsub.s32 0, %v2410
        %v2412 = vsel %vm2406, %v2411, %v2410
        %vm2413 = vcmp.lt.s32.totalorder %v2235, 0
        %v2414 = vsub.s32 0, %v2235
        %v2415 = vsel %vm2413, %v2414, %v2235
        %v2416 = vshrl.u32 %v2415, 4
        %v2417 = vand.u32 %v2415, 15
        %v2418 = vsub.s32 0, %v2417
        %v2419 = vsel %vm2413, %v2418, %v2417
        %vm2420 = vcmp.lt.s32.totalorder %v2236, 0
        %v2421 = vsub.s32 0, %v2236
        %v2422 = vsel %vm2420, %v2421, %v2236
        %v2423 = vshrl.u32 %v2422, 4
        %v2424 = vand.u32 %v2422, 15
        %v2425 = vsub.s32 0, %v2424
        %v2426 = vsel %vm2420, %v2425, %v2424
        %vm2427 = vcmp.lt.s32.totalorder %v2237, 0
        %v2428 = vsub.s32 0, %v2237
        %v2429 = vsel %vm2427, %v2428, %v2237
        %v2430 = vshrl.u32 %v2429, 4
        %v2431 = vand.u32 %v2429, 15
        %v2432 = vsub.s32 0, %v2431
        %v2433 = vsel %vm2427, %v2432, %v2431
        %vm2434 = vcmp.ne.s32.totalorder %v2244, 0
        %vm2435 = vcmp.ne.s32.totalorder %v2251, 0
        %vm2436 = vcmp.ne.s32.totalorder %v2258, 0
        %vm2437 = vcmp.ne.s32.totalorder %v2265, 0
        %vm2438 = vcmp.ne.s32.totalorder %v2272, 0
        %vm2439 = vcmp.ne.s32.totalorder %v2279, 0
        %vm2440 = vcmp.ne.s32.totalorder %v2286, 0
        %vm2441 = vcmp.ne.s32.totalorder %v2293, 0
        %vm2442 = vcmp.ne.s32.totalorder %v2300, 0
        %vm2443 = vcmp.ne.s32.totalorder %v2307, 0
        %vm2444 = vcmp.ne.s32.totalorder %v2314, 0
        %vm2445 = vcmp.ne.s32.totalorder %v2321, 0
        %vm2446 = vcmp.ne.s32.totalorder %v2328, 0
        %vm2447 = vcmp.ne.s32.totalorder %v2335, 0
        %vm2448 = vcmp.ne.s32.totalorder %v2342, 0
        %vm2449 = vcmp.ne.s32.totalorder %v2349, 0
        %vm2450 = vcmp.ne.s32.totalorder %v2356, 0
        %vm2451 = vcmp.ne.s32.totalorder %v2363, 0
        %vm2452 = vcmp.ne.s32.totalorder %v2370, 0
        %vm2453 = vcmp.ne.s32.totalorder %v2377, 0
        %vm2454 = vcmp.ne.s32.totalorder %v2384, 0
        %vm2455 = vcmp.ne.s32.totalorder %v2391, 0
        %vm2456 = vcmp.ne.s32.totalorder %v2398, 0
        %vm2457 = vcmp.ne.s32.totalorder %v2405, 0
        %vm2458 = vcmp.ne.s32.totalorder %v2412, 0
        %vm2459 = vcmp.ne.s32.totalorder %v2419, 0
        %vm2460 = vcmp.ne.s32.totalorder %v2426, 0
        %vm2461 = vcmp.ne.s32.totalorder %v2433, 0
        %vm2462 = vcmp.lt.s32.totalorder %v2244, 0
        %vm2463 = vcmp.lt.s32.totalorder %v2251, 0
        %vm2464 = vcmp.lt.s32.totalorder %v2258, 0
        %vm2465 = vcmp.lt.s32.totalorder %v2265, 0
        %vm2466 = vcmp.lt.s32.totalorder %v2272, 0
        %vm2467 = vcmp.lt.s32.totalorder %v2279, 0
        %vm2468 = vcmp.lt.s32.totalorder %v2286, 0
        %vm2469 = vcmp.lt.s32.totalorder %v2293, 0
        %vm2470 = vcmp.lt.s32.totalorder %v2300, 0
        %vm2471 = vcmp.lt.s32.totalorder %v2307, 0
        %vm2472 = vcmp.lt.s32.totalorder %v2314, 0
        %vm2473 = vcmp.lt.s32.totalorder %v2321, 0
        %vm2474 = vcmp.lt.s32.totalorder %v2328, 0
        %vm2475 = vcmp.lt.s32.totalorder %v2335, 0
        %vm2476 = vcmp.lt.s32.totalorder %v2342, 0
        %vm2477 = vcmp.lt.s32.totalorder %v2349, 0
        %vm2478 = vcmp.lt.s32.totalorder %v2356, 0
        %vm2479 = vcmp.lt.s32.totalorder %v2363, 0
        %vm2480 = vcmp.lt.s32.totalorder %v2370, 0
        %vm2481 = vcmp.lt.s32.totalorder %v2377, 0
        %vm2482 = vcmp.lt.s32.totalorder %v2384, 0
        %vm2483 = vcmp.lt.s32.totalorder %v2391, 0
        %vm2484 = vcmp.lt.s32.totalorder %v2398, 0
        %vm2485 = vcmp.lt.s32.totalorder %v2405, 0
        %vm2486 = vcmp.lt.s32.totalorder %v2412, 0
        %vm2487 = vcmp.lt.s32.totalorder %v2419, 0
        %vm2488 = vcmp.lt.s32.totalorder %v2426, 0
        %vm2489 = vcmp.lt.s32.totalorder %v2433, 0
        %vm2490 = vmand %vm2462, %vm2434
        %vm2491 = vmand %vm2463, %vm2435
        %vm2492 = vmand %vm2464, %vm2436
        %vm2493 = vmand %vm2465, %vm2437
        %vm2494 = vmand %vm2466, %vm2438
        %vm2495 = vmand %vm2467, %vm2439
        %vm2496 = vmand %vm2468, %vm2440
        %vm2497 = vmand %vm2469, %vm2441
        %vm2498 = vmand %vm2470, %vm2442
        %vm2499 = vmand %vm2471, %vm2443
        %vm2500 = vmand %vm2472, %vm2444
        %vm2501 = vmand %vm2473, %vm2445
        %vm2502 = vmand %vm2474, %vm2446
        %vm2503 = vmand %vm2475, %vm2447
        %vm2504 = vmand %vm2476, %vm2448
        %vm2505 = vmand %vm2477, %vm2449
        %vm2506 = vmand %vm2478, %vm2450
        %vm2507 = vmand %vm2479, %vm2451
        %vm2508 = vmand %vm2480, %vm2452
        %vm2509 = vmand %vm2481, %vm2453
        %vm2510 = vmand %vm2482, %vm2454
        %vm2511 = vmand %vm2483, %vm2455
        %vm2512 = vmand %vm2484, %vm2456
        %vm2513 = vmand %vm2485, %vm2457
        %vm2514 = vmand %vm2486, %vm2458
        %vm2515 = vmand %vm2487, %vm2459
        %vm2516 = vmand %vm2488, %vm2460
        %vm2517 = vmand %vm2489, %vm2461
        %v2518 = vadd.s32 %v2244, 16
        %v2519 = vadd.s32 %v2251, 16
        %v2520 = vadd.s32 %v2258, 16
        %v2521 = vadd.s32 %v2265, 16
        %v2522 = vadd.s32 %v2272, 16
        %v2523 = vadd.s32 %v2279, 16
        %v2524 = vadd.s32 %v2286, 16
        %v2525 = vadd.s32 %v2293, 16
        %v2526 = vadd.s32 %v2300, 16
        %v2527 = vadd.s32 %v2307, 16
        %v2528 = vadd.s32 %v2314, 16
        %v2529 = vadd.s32 %v2321, 16
        %v2530 = vadd.s32 %v2328, 16
        %v2531 = vadd.s32 %v2335, 16
        %v2532 = vadd.s32 %v2342, 16
        %v2533 = vadd.s32 %v2349, 16
        %v2534 = vadd.s32 %v2356, 16
        %v2535 = vadd.s32 %v2363, 16
        %v2536 = vadd.s32 %v2370, 16
        %v2537 = vadd.s32 %v2377, 16
        %v2538 = vadd.s32 %v2384, 16
        %v2539 = vadd.s32 %v2391, 16
        %v2540 = vadd.s32 %v2398, 16
        %v2541 = vadd.s32 %v2405, 16
        %v2542 = vadd.s32 %v2412, 16
        %v2543 = vadd.s32 %v2419, 16
        %v2544 = vadd.s32 %v2426, 16
        %v2545 = vadd.s32 %v2433, 16
        %v2546 = vsel %vm2490, %v2518, %v2244
        %v2547 = vsel %vm2491, %v2519, %v2251
        %v2548 = vsel %vm2492, %v2520, %v2258
        %v2549 = vsel %vm2493, %v2521, %v2265
        %v2550 = vsel %vm2494, %v2522, %v2272
        %v2551 = vsel %vm2495, %v2523, %v2279
        %v2552 = vsel %vm2496, %v2524, %v2286
        %v2553 = vsel %vm2497, %v2525, %v2293
        %v2554 = vsel %vm2498, %v2526, %v2300
        %v2555 = vsel %vm2499, %v2527, %v2307
        %v2556 = vsel %vm2500, %v2528, %v2314
        %v2557 = vsel %vm2501, %v2529, %v2321
        %v2558 = vsel %vm2502, %v2530, %v2328
        %v2559 = vsel %vm2503, %v2531, %v2335
        %v2560 = vsel %vm2504, %v2532, %v2342
        %v2561 = vsel %vm2505, %v2533, %v2349
        %v2562 = vsel %vm2506, %v2534, %v2356
        %v2563 = vsel %vm2507, %v2535, %v2363
        %v2564 = vsel %vm2508, %v2536, %v2370
        %v2565 = vsel %vm2509, %v2537, %v2377
        %v2566 = vsel %vm2510, %v2538, %v2384
        %v2567 = vsel %vm2511, %v2539, %v2391
        %v2568 = vsel %vm2512, %v2540, %v2398
        %v2569 = vsel %vm2513, %v2541, %v2405
        %v2570 = vsel %vm2514, %v2542, %v2412
        %v2571 = vsel %vm2515, %v2543, %v2419
        %v2572 = vsel %vm2516, %v2544, %v2426
        %v2573 = vsel %vm2517, %v2545, %v2433
        %vm2574 = vcmp.lt.s32.totalorder %v2546, 14
        %vm2575 = vcmp.lt.s32.totalorder %v2547, 14
        %vm2576 = vcmp.lt.s32.totalorder %v2548, 14
        %vm2577 = vcmp.lt.s32.totalorder %v2549, 14
        %vm2578 = vcmp.lt.s32.totalorder %v2550, 14
        %vm2579 = vcmp.lt.s32.totalorder %v2551, 14
        %vm2580 = vcmp.lt.s32.totalorder %v2552, 14
        %vm2581 = vcmp.lt.s32.totalorder %v2553, 14
        %vm2582 = vcmp.lt.s32.totalorder %v2554, 14
        %vm2583 = vcmp.lt.s32.totalorder %v2555, 14
        %vm2584 = vcmp.lt.s32.totalorder %v2556, 14
        %vm2585 = vcmp.lt.s32.totalorder %v2557, 14
        %vm2586 = vcmp.lt.s32.totalorder %v2558, 14
        %vm2587 = vcmp.lt.s32.totalorder %v2559, 14
        %vm2588 = vcmp.lt.s32.totalorder %v2560, 14
        %vm2589 = vcmp.lt.s32.totalorder %v2561, 14
        %vm2590 = vcmp.lt.s32.totalorder %v2562, 14
        %vm2591 = vcmp.lt.s32.totalorder %v2563, 14
        %vm2592 = vcmp.lt.s32.totalorder %v2564, 14
        %vm2593 = vcmp.lt.s32.totalorder %v2565, 14
        %vm2594 = vcmp.lt.s32.totalorder %v2566, 14
        %vm2595 = vcmp.lt.s32.totalorder %v2567, 14
        %vm2596 = vcmp.lt.s32.totalorder %v2568, 14
        %vm2597 = vcmp.lt.s32.totalorder %v2569, 14
        %vm2598 = vcmp.lt.s32.totalorder %v2570, 14
        %vm2599 = vcmp.lt.s32.totalorder %v2571, 14
        %vm2600 = vcmp.lt.s32.totalorder %v2572, 14
        %vm2601 = vcmp.lt.s32.totalorder %v2573, 14
        %v2602 = vsel %vm2574, 1, 0
        %v2603 = vsel %vm2575, 1, 0
        %v2604 = vsel %vm2576, 1, 0
        %v2605 = vsel %vm2577, 1, 0
        %v2606 = vsel %vm2578, 1, 0
        %v2607 = vsel %vm2579, 1, 0
        %v2608 = vsel %vm2580, 1, 0
        %v2609 = vsel %vm2581, 1, 0
        %v2610 = vsel %vm2582, 1, 0
        %v2611 = vsel %vm2583, 1, 0
        %v2612 = vsel %vm2584, 1, 0
        %v2613 = vsel %vm2585, 1, 0
        %v2614 = vsel %vm2586, 1, 0
        %v2615 = vsel %vm2587, 1, 0
        %v2616 = vsel %vm2588, 1, 0
        %v2617 = vsel %vm2589, 1, 0
        %v2618 = vsel %vm2590, 1, 0
        %v2619 = vsel %vm2591, 1, 0
        %v2620 = vsel %vm2592, 1, 0
        %v2621 = vsel %vm2593, 1, 0
        %v2622 = vsel %vm2594, 1, 0
        %v2623 = vsel %vm2595, 1, 0
        %v2624 = vsel %vm2596, 1, 0
        %v2625 = vsel %vm2597, 1, 0
        %v2626 = vsel %vm2598, 1, 0
        %v2627 = vsel %vm2599, 1, 0
        %v2628 = vsel %vm2600, 1, 0
        %v2629 = vsel %vm2601, 1, 0
        %vm2630 = vcmp.eq.s32.totalorder %v2602, 1
        %vm2631 = vcmp.eq.s32.totalorder %v2603, 1
        %vm2632 = vcmp.eq.s32.totalorder %v2604, 1
        %vm2633 = vcmp.eq.s32.totalorder %v2605, 1
        %vm2634 = vcmp.eq.s32.totalorder %v2606, 1
        %vm2635 = vcmp.eq.s32.totalorder %v2607, 1
        %vm2636 = vcmp.eq.s32.totalorder %v2608, 1
        %vm2637 = vcmp.eq.s32.totalorder %v2609, 1
        %vm2638 = vcmp.eq.s32.totalorder %v2610, 1
        %vm2639 = vcmp.eq.s32.totalorder %v2611, 1
        %vm2640 = vcmp.eq.s32.totalorder %v2612, 1
        %vm2641 = vcmp.eq.s32.totalorder %v2613, 1
        %vm2642 = vcmp.eq.s32.totalorder %v2614, 1
        %vm2643 = vcmp.eq.s32.totalorder %v2615, 1
        %vm2644 = vcmp.eq.s32.totalorder %v2616, 1
        %vm2645 = vcmp.eq.s32.totalorder %v2617, 1
        %vm2646 = vcmp.eq.s32.totalorder %v2618, 1
        %vm2647 = vcmp.eq.s32.totalorder %v2619, 1
        %vm2648 = vcmp.eq.s32.totalorder %v2620, 1
        %vm2649 = vcmp.eq.s32.totalorder %v2621, 1
        %vm2650 = vcmp.eq.s32.totalorder %v2622, 1
        %vm2651 = vcmp.eq.s32.totalorder %v2623, 1
        %vm2652 = vcmp.eq.s32.totalorder %v2624, 1
        %vm2653 = vcmp.eq.s32.totalorder %v2625, 1
        %vm2654 = vcmp.eq.s32.totalorder %v2626, 1
        %vm2655 = vcmp.eq.s32.totalorder %v2627, 1
        %vm2656 = vcmp.eq.s32.totalorder %v2628, 1
        %vm2657 = vcmp.eq.s32.totalorder %v2629, 1
        %v2658 = vsel %vm2630, %v2041, 0.0
        %v2659 = vsel %vm2631, %v2042, 0.0
        %v2660 = vsel %vm2632, %v2043, 0.0
        %v2661 = vsel %vm2633, %v2044, 0.0
        %v2662 = vsel %vm2634, %v2045, 0.0
        %v2663 = vsel %vm2635, %v2046, 0.0
        %v2664 = vsel %vm2636, %v2047, 0.0
        %v2665 = vsel %vm2637, %v2048, 0.0
        %v2666 = vsel %vm2638, %v2049, 0.0
        %v2667 = vsel %vm2639, %v2050, 0.0
        %v2668 = vsel %vm2640, %v2051, 0.0
        %v2669 = vsel %vm2641, %v2052, 0.0
        %v2670 = vsel %vm2642, %v2053, 0.0
        %v2671 = vsel %vm2643, %v2054, 0.0
        %v2672 = vsel %vm2644, %v2055, 0.0
        %v2673 = vsel %vm2645, %v2056, 0.0
        %v2674 = vsel %vm2646, %v2057, 0.0
        %v2675 = vsel %vm2647, %v2058, 0.0
        %v2676 = vsel %vm2648, %v2059, 0.0
        %v2677 = vsel %vm2649, %v2060, 0.0
        %v2678 = vsel %vm2650, %v2061, 0.0
        %v2679 = vsel %vm2651, %v2062, 0.0
        %v2680 = vsel %vm2652, %v2063, 0.0
        %v2681 = vsel %vm2653, %v2064, 0.0
        %v2682 = vsel %vm2654, %v2065, 0.0
        %v2683 = vsel %vm2655, %v2066, 0.0
        %v2684 = vsel %vm2656, %v2067, 0.0
        %v2685 = vsel %vm2657, %v2068, 0.0
        %v2686 = vadd.f32 %v2658, %v2659
        %v2687 = vadd.f32 %v2686, %v2660
        %v2688 = vadd.f32 %v2687, %v2661
        %v2689 = vadd.f32 %v2688, %v2662
        %v2690 = vadd.f32 %v2689, %v2663
        %v2691 = vadd.f32 %v2690, %v2664
        %v2692 = vadd.f32 %v2691, %v2665
        %v2693 = vadd.f32 %v2692, %v2666
        %v2694 = vadd.f32 %v2693, %v2667
        %v2695 = vadd.f32 %v2694, %v2668
        %v2696 = vadd.f32 %v2695, %v2669
        %v2697 = vadd.f32 %v2696, %v2670
        %v2698 = vadd.f32 %v2697, %v2671
        %v2699 = vadd.f32 %v2698, %v2672
        %v2700 = vadd.f32 %v2699, %v2673
        %v2701 = vadd.f32 %v2700, %v2674
        %v2702 = vadd.f32 %v2701, %v2675
        %v2703 = vadd.f32 %v2702, %v2676
        %v2704 = vadd.f32 %v2703, %v2677
        %v2705 = vadd.f32 %v2704, %v2678
        %v2706 = vadd.f32 %v2705, %v2679
        %v2707 = vadd.f32 %v2706, %v2680
        %v2708 = vadd.f32 %v2707, %v2681
        %v2709 = vadd.f32 %v2708, %v2682
        %v2710 = vadd.f32 %v2709, %v2683
        %v2711 = vadd.f32 %v2710, %v2684
        %v2712 = vadd.f32 %v2711, %v2685
        %v2713 = vrot.slane %v2712, 4
        %v2714 = vadd.f32 %v2712, %v2713
        %v2715 = vrot.slane %v2714, 2
        %v2716 = vadd.f32 %v2714, %v2715
        %v2717 = vrot.slane %v2716, 1
        %v2718 = vadd.f32 %v2716, %v2717
        %v2719 = vmul.f32 %v2658, %v2658
        %v2720 = vmul.f32 %v2659, %v2659
        %v2721 = vmul.f32 %v2660, %v2660
        %v2722 = vmul.f32 %v2661, %v2661
        %v2723 = vmul.f32 %v2662, %v2662
        %v2724 = vmul.f32 %v2663, %v2663
        %v2725 = vmul.f32 %v2664, %v2664
        %v2726 = vmul.f32 %v2665, %v2665
        %v2727 = vmul.f32 %v2666, %v2666
        %v2728 = vmul.f32 %v2667, %v2667
        %v2729 = vmul.f32 %v2668, %v2668
        %v2730 = vmul.f32 %v2669, %v2669
        %v2731 = vmul.f32 %v2670, %v2670
        %v2732 = vmul.f32 %v2671, %v2671
        %v2733 = vmul.f32 %v2672, %v2672
        %v2734 = vmul.f32 %v2673, %v2673
        %v2735 = vmul.f32 %v2674, %v2674
        %v2736 = vmul.f32 %v2675, %v2675
        %v2737 = vmul.f32 %v2676, %v2676
        %v2738 = vmul.f32 %v2677, %v2677
        %v2739 = vmul.f32 %v2678, %v2678
        %v2740 = vmul.f32 %v2679, %v2679
        %v2741 = vmul.f32 %v2680, %v2680
        %v2742 = vmul.f32 %v2681, %v2681
        %v2743 = vmul.f32 %v2682, %v2682
        %v2744 = vmul.f32 %v2683, %v2683
        %v2745 = vmul.f32 %v2684, %v2684
        %v2746 = vmul.f32 %v2685, %v2685
        %v2747 = vadd.f32 %v2719, %v2720
        %v2748 = vadd.f32 %v2747, %v2721
        %v2749 = vadd.f32 %v2748, %v2722
        %v2750 = vadd.f32 %v2749, %v2723
        %v2751 = vadd.f32 %v2750, %v2724
        %v2752 = vadd.f32 %v2751, %v2725
        %v2753 = vadd.f32 %v2752, %v2726
        %v2754 = vadd.f32 %v2753, %v2727
        %v2755 = vadd.f32 %v2754, %v2728
        %v2756 = vadd.f32 %v2755, %v2729
        %v2757 = vadd.f32 %v2756, %v2730
        %v2758 = vadd.f32 %v2757, %v2731
        %v2759 = vadd.f32 %v2758, %v2732
        %v2760 = vadd.f32 %v2759, %v2733
        %v2761 = vadd.f32 %v2760, %v2734
        %v2762 = vadd.f32 %v2761, %v2735
        %v2763 = vadd.f32 %v2762, %v2736
        %v2764 = vadd.f32 %v2763, %v2737
        %v2765 = vadd.f32 %v2764, %v2738
        %v2766 = vadd.f32 %v2765, %v2739
        %v2767 = vadd.f32 %v2766, %v2740
        %v2768 = vadd.f32 %v2767, %v2741
        %v2769 = vadd.f32 %v2768, %v2742
        %v2770 = vadd.f32 %v2769, %v2743
        %v2771 = vadd.f32 %v2770, %v2744
        %v2772 = vadd.f32 %v2771, %v2745
        %v2773 = vadd.f32 %v2772, %v2746
        %v2774 = vrot.slane %v2773, 4
        %v2775 = vadd.f32 %v2773, %v2774
        %v2776 = vrot.slane %v2775, 2
        %v2777 = vadd.f32 %v2775, %v2776
        %v2778 = vrot.slane %v2777, 1
        %v2779 = vadd.f32 %v2777, %v2778
        %vm2780 = vcmask 1040384
        %v2781 = vsel %vm2780, %v2718, %v2779
        %2782 = vst [vmem:[%s230] sm:$0x3] %v2781
        %s2783 = sand.u32 %s94, 1
        %s2784 = scalar_lea.sflag [#allocation4], %s2783
        %s2785 = sand.u32 %s94, 1
        %s2786 = smul.addr %s2785, 112
        %s2787 = scalar_lea.vmem [#allocation7], %s2786
        %s2788 = sand.u32 %s122, 1
        %s2789 = scalar_lea.sflag [#allocation9], %s2788
        %s2790 = sand.u32 %s122, 1
        %s2791 = smul.addr %s2790, 2
        %s2792 = scalar_lea.vmem [#allocation8], %s2791
        // Predicated region
        $region37: #{encoder_block_forward.3} parent=27 // pred_check
          %p2793 = pneg %p104
        $region38: #{encoder_block_forward.3} parent=27 // pred_check_branch
          %2795 = sbr.rel (%p2793) target = $region40
        $region39: #{encoder_block_forward.3} parent=27 // pred_region
          %s2796 = smul.u32 28, %s30
          %s2797 = ssub.s32 29, %s2796
          %p2798 = scmp.lt.s32.totalorder %s2797, 28
          %s2799 = scalar_select %p2798, %s2797, 28
          %s2800 = smul.u32 64, %s2799
          %s2802 = ssub.s32 1792, %s2800
          %2803 = vsyncadd %s2784, %s2802
          %p2804 = scmp.ne.s32.totalorder 0, %s2800
          %s2805 = smul.addr %s29, 29
          %s2806 = sadd.s32 %s2796, %s2805
          %s2807 = smul.addr %s2806, 64
          %s2808 = scalar_lea.hbm %s2, %s2807
          %s2809 = smul.u32 4, %s2799
          %s2810 = sshll.u32 %s2787, 4
          %s2811 = int_to_ptr.vmem [resolvable:$true] %s2810
          %s2812 = sshll.u32 %s2809, 4
          %2816 = dma.vmem_to_hbm [thread:$0]  (%p2804), %s2811, %s2812, %s2808, %s2784, 64, 64, 4
        $region40: #{encoder_block_forward.3} parent=27 // pred_fallthru
          _
        // Predicated region
        $region41: #{encoder_block_forward.3} parent=27 // pred_check
          %p2817 = pneg %p132
        $region42: #{encoder_block_forward.3} parent=27 // pred_check_branch
          %2819 = sbr.rel (%p2817) target = $region44
        $region43: #{encoder_block_forward.3} parent=27 // pred_region
          %s2821 = ssub.s32 32, 32
          %2822 = vsyncadd %s2789, %s2821
          %s2823 = sadd.s32 %s30, %s29
          %s2824 = smul.addr %s2823, 32
          %s2825 = scalar_lea.hbm %s3, %s2824
          %s2827 = sshll.u32 %s2792, 4
          %s2828 = int_to_ptr.vmem [resolvable:$true] %s2827
          %2830 = dma.vmem_to_hbm [thread:$0]  %s2828, 32, %s2825, %s2789
        $region44: #{encoder_block_forward.3} parent=27 // pred_fallthru
          _
      $region28: #{encoder_block_forward.3} parent=5 // pred_fallthru
        _
      %p2831 = scmp.le.s32.totalorder 2, %s20
      // Predicated region
      $region45: #{encoder_block_forward.3} parent=5 // pred_check
        %p2832 = pneg %p2831
      $region46: #{encoder_block_forward.3} parent=5 // pred_check_branch
        %2834 = sbr.rel (%p2832) target = $region48
      $region47: #{encoder_block_forward.3} parent=5 // pred_region
        %s2835 = ssub.s32 %s20, 2
        // Predicated region
        $region49: #{encoder_block_forward.3} parent=47 // pred_check
          %p2836 = pneg %p110
        $region50: #{encoder_block_forward.3} parent=47 // pred_check_branch
          %2838 = sbr.rel (%p2836) target = $region52
        $region51: #{encoder_block_forward.3} parent=47 // pred_region
          %s2839 = sand.u32 %s95, 1
          %s2840 = scalar_lea.sflag [#allocation4], %s2839
          %s2841 = sand.u32 %s95, 1
          %s2842 = smul.addr %s2841, 112
          %s2843 = scalar_lea.vmem [#allocation7], %s2842
          %2844 = dma.done %s2840, 1792
        $region52: #{encoder_block_forward.3} parent=47 // pred_fallthru
          _
        // Predicated region
        $region53: #{encoder_block_forward.3} parent=47 // pred_check
          %p2845 = pneg %p138
        $region54: #{encoder_block_forward.3} parent=47 // pred_check_branch
          %2847 = sbr.rel (%p2845) target = $region56
        $region55: #{encoder_block_forward.3} parent=47 // pred_region
          %s2848 = sand.u32 %s123, 1
          %s2849 = scalar_lea.sflag [#allocation9], %s2848
          %s2850 = sand.u32 %s123, 1
          %s2851 = smul.addr %s2850, 2
          %s2852 = scalar_lea.vmem [#allocation8], %s2851
          %2853 = dma.done %s2849, 32
        $region56: #{encoder_block_forward.3} parent=47 // pred_fallthru
          _
      $region48: #{encoder_block_forward.3} parent=5 // pred_fallthru
        _
    $region6: #{encoder_block_forward.3} parent=1 // loop_footer
      %s24 = sadd.s32 1, %s20
    $region7: #{encoder_block_forward.3} parent=1 // loop_footer_branch
      %19 = sbr.rel target = $region3
    $region8: #{encoder_block_forward.3} parent=1 // loop_exit
      _
    %2854 = vsyncpa [#allocation3], 1
    %s2855 = scalar_lea.sflag [#allocation3], 1
    %2856 = vsyncpa %s2855, 1
    %2857 = vsyncpa [#allocation6], 1
    %2858 = vsyncpa [#allocation4], 1
    %s2859 = scalar_lea.sflag [#allocation4], 1
    %2860 = vsyncpa %s2859, 1
    %2861 = vsyncpa [#allocation9], 1
    %s2862 = scalar_lea.sflag [#allocation9], 1
    %2863 = vsyncpa %s2862, 1

// kernel: encoder_block_forward.4
$region0: #{encoder_block_forward.4}
  #allocation0 [shape = 'u32[]', space=smem, size = 0x4, offset = 0x4, fixed_abs, tag = 'smem constant byte address 0x4 - core index']
  #allocation1 [shape = 'u32[144,128]{1,0:T(1,128)}', space=vmem, size = 0x12000, scoped, tag = 'internal scratch']
  %s0 = inlined_call_operand.hbm [shape: bf16[2,232,128], index: 0, kind: input, shape index: {}]
  %s1 = inlined_call_operand.hbm [shape: f32[1,128], index: 1, kind: input, shape index: {}]
  %s2 = inlined_call_operand.hbm [shape: f32[1,128], index: 2, kind: input, shape index: {}]
  %s3 = inlined_call_operand.hbm [shape: bf16[3,384,128], index: 3, kind: input, shape index: {}]
  %s4 = inlined_call_operand.hbm [shape: f32[2,6,6,128], index: 4, kind: output, shape index: {0}]
  %s5 = inlined_call_operand.hbm [shape: f32[2,6,6,128], index: 5, kind: output, shape index: {1}]
  %s6 = inlined_call_operand.hbm [shape: f32[2,1,2,128], index: 6, kind: output, shape index: {2}]
  %7 = xla_tuple %s4, %s5, %s6
  %s8 = sld [smem:[#allocation0]]
  $region81: #{encoder_block_forward.4} parent=0
    _
  %s10 = ssub.s32 1, %s8
  %s11 = scalar_select 0, %s10, %s8
  $region1: #{encoder_block_forward.4} parent=0
    #allocation2 [shape = 'u8[118784]{0}', space=vmem, size = 0x1d000, scoped, tag = 'input window, operand 0']
    #allocation3 [shape = 's32[2]{0}', space=sflag, size = 0x8, scoped, tag = 'scoped memory for encoder_block_forward.4']
    #allocation4 [shape = 's32[2]{0}', space=sflag, size = 0x8, scoped, tag = 'scoped memory for encoder_block_forward.4']
    #allocation5 [shape = 'u8[512]{0}', space=vmem, size = 0x400, scoped, tag = 'input window, operand 1, single buffered']
    #allocation6 [shape = 's32[1]{0}', space=sflag, size = 0x4, scoped, tag = 'scoped memory for encoder_block_forward.4']
    #allocation7 [shape = 'u8[512]{0}', space=vmem, size = 0x400, scoped, tag = 'input window, operand 2, single buffered']
    #allocation8 [shape = 'u8[294912]{0}', space=vmem, size = 0x48000, scoped, tag = 'input window, operand 3, single buffered']
    #allocation9 [shape = 's32[1]{0}', space=sflag, size = 0x4, scoped, tag = 'scoped memory for encoder_block_forward.4']
    #allocation10 [shape = 'u8[49152]{0}', space=vmem, size = 0xc000, scoped, tag = 'output window, operand 0']
    #allocation11 [shape = 'u8[49152]{0}', space=vmem, size = 0xc000, scoped, tag = 'output window, operand 1']
    #allocation12 [shape = 's32[2]{0}', space=sflag, size = 0x8, scoped, tag = 'scoped memory for encoder_block_forward.4']
    #allocation13 [shape = 'u8[2048]{0}', space=vmem, size = 0x800, scoped, tag = 'output window, operand 2']
    %12 = vsyncpa [#allocation3], 0
    %s13 = scalar_lea.sflag [#allocation3], 1
    %14 = vsyncpa %s13, 0
    %15 = vsyncpa [#allocation6], 0
    %16 = vsyncpa [#allocation9], 0
    %17 = vsyncpa [#allocation4], 0
    %s18 = scalar_lea.sflag [#allocation4], 1
    %19 = vsyncpa %s18, 0
    %20 = vsyncpa [#allocation12], 0
    %s21 = scalar_lea.sflag [#allocation12], 1
    %22 = vsyncpa %s21, 0
    loop: start=0, step=1, limit=4
    $region2: #{encoder_block_forward.4} parent=1 // loop_pre_header
      _
    $region3: #{encoder_block_forward.4} parent=1 // loop_header
      %s24 = sphi 0, %s28
      %p25 = scmp.ge.s32.totalorder %s24, 4
      %s31 = sphi 0, %s43
      %s32 = sphi 0, %s39
      %s33 = sphi 0, %s31
      %s34 = sphi 0, %s32
      %s35 = sphi 0, %s33
      %s36 = sphi 0, %s34
      %s46 = sphi 0, %s48
      %s49 = sphi 0, %s46
      %s50 = sphi 0, %s49
      %s66 = sphi 0, %s50
      %s70 = sphi 0, %s70
      %s72 = sphi 0, %s70
      %s73 = sphi 0, %s72
      %s87 = sphi 0, %s73
      %s91 = sphi 0, %s91
      %s93 = sphi 0, %s91
      %s94 = sphi 0, %s93
      %s108 = sphi 0, %s94
      %s112 = sphi 0, %s112
      %s114 = sphi 0, %s112
      %s115 = sphi 0, %s114
      %s129 = sphi 0, %s115
      %s137 = sphi 0, %s139
      %s140 = sphi 0, %s137
      %s141 = sphi 0, %s140
      %s157 = sphi 0, %s141
      %s165 = sphi 0, %s167
      %s168 = sphi 0, %s165
      %s169 = sphi 0, %s168
      %s185 = sphi 0, %s169
      %s193 = sphi 0, %s195
      %s196 = sphi 0, %s193
      %s197 = sphi 0, %s196
      %s213 = sphi 0, %s197
    $region4: #{encoder_block_forward.4} parent=1 // loop_header_branch
      %27 = sbr.rel (%p25) target = $region8
    $region5: #{encoder_block_forward.4} parent=1 // loop_body
      %s29 = ssub.s32 %s24, 1
      %s30 = ssub.s32 %s24, 2
      %s37 = sadd.s32 1, %s32
      %p38 = scmp.ge.s32.totalorder %s37, 1
      %s39 = scalar_select %p38, 0, %s37
      %s40 = sadd.s32 1, %s31
      %s41 = scalar_select %p38, %s40, %s31
      %p42 = scmp.ge.s32.totalorder %s41, 2
      %s43 = scalar_select %p42, 0, %s41
      %s44 = ssub.s32 %s31, %s43
      %p45 = scmp.eq.s32.totalorder %s44, 0
      %s47 = sadd.s32 %s46, 1
      %s48 = scalar_select %p45, %s46, %s47
      %p51 = pneg %p45
      %p52 = scmp.eq.s32.totalorder %s24, 1
      %p53 = por %p51, %p52
      %p54 = scmp.ne.s32.totalorder %s46, %s49
      %p55 = scmp.eq.s32.totalorder %s24, 0
      %p56 = por %p54, %p55
      %p57 = scmp.ne.s32.totalorder %s46, %s49
      %p58 = scmp.eq.s32.totalorder %s29, 1
      %p59 = por %p57, %p58
      %p60 = scmp.ne.s32.totalorder %s49, %s50
      %p61 = scmp.eq.s32.totalorder %s29, 0
      %p62 = por %p60, %p61
      %p63 = scmp.ne.s32.totalorder %s49, %s50
      %p64 = scmp.eq.s32.totalorder %s30, 1
      %p65 = por %p63, %p64
      %p67 = scmp.ne.s32.totalorder %s50, %s66
      %p68 = scmp.eq.s32.totalorder %s30, 0
      %p69 = por %p67, %p68
      %s71 = sadd.s32 %s70, 1
      %p74 = scmp.eq.s32.totalorder %s24, 1
      %p75 = scmp.ne.s32.totalorder %s70, %s72
      %p76 = scmp.eq.s32.totalorder %s24, 0
      %p77 = por %p75, %p76
      %p78 = scmp.ne.s32.totalorder %s70, %s72
      %p79 = scmp.eq.s32.totalorder %s29, 1
      %p80 = por %p78, %p79
      %p81 = scmp.ne.s32.totalorder %s72, %s73
      %p82 = scmp.eq.s32.totalorder %s29, 0
      %p83 = por %p81, %p82
      %p84 = scmp.ne.s32.totalorder %s72, %s73
      %p85 = scmp.eq.s32.totalorder %s30, 1
      %p86 = por %p84, %p85
      %p88 = scmp.ne.s32.totalorder %s73, %s87
      %p89 = scmp.eq.s32.totalorder %s30, 0
      %p90 = por %p88, %p89
      %s92 = sadd.s32 %s91, 1
      %p95 = scmp.eq.s32.totalorder %s24, 1
      %p96 = scmp.ne.s32.totalorder %s91, %s93
      %p97 = scmp.eq.s32.totalorder %s24, 0
      %p98 = por %p96, %p97
      %p99 = scmp.ne.s32.totalorder %s91, %s93
      %p100 = scmp.eq.s32.totalorder %s29, 1
      %p101 = por %p99, %p100
      %p102 = scmp.ne.s32.totalorder %s93, %s94
      %p103 = scmp.eq.s32.totalorder %s29, 0
      %p104 = por %p102, %p103
      %p105 = scmp.ne.s32.totalorder %s93, %s94
      %p106 = scmp.eq.s32.totalorder %s30, 1
      %p107 = por %p105, %p106
      %p109 = scmp.ne.s32.totalorder %s94, %s108
      %p110 = scmp.eq.s32.totalorder %s30, 0
      %p111 = por %p109, %p110
      %s113 = sadd.s32 %s112, 1
      %p116 = scmp.eq.s32.totalorder %s24, 1
      %p117 = scmp.ne.s32.totalorder %s112, %s114
      %p118 = scmp.eq.s32.totalorder %s24, 0
      %p119 = por %p117, %p118
      %p120 = scmp.ne.s32.totalorder %s112, %s114
      %p121 = scmp.eq.s32.totalorder %s29, 1
      %p122 = por %p120, %p121
      %p123 = scmp.ne.s32.totalorder %s114, %s115
      %p124 = scmp.eq.s32.totalorder %s29, 0
      %p125 = por %p123, %p124
      %p126 = scmp.ne.s32.totalorder %s114, %s115
      %p127 = scmp.eq.s32.totalorder %s30, 1
      %p128 = por %p126, %p127
      %p130 = scmp.ne.s32.totalorder %s115, %s129
      %p131 = scmp.eq.s32.totalorder %s30, 0
      %p132 = por %p130, %p131
      %s133 = ssub.s32 %s31, %s43
      %s134 = ssub.s32 %s32, %s39
      %s135 = sor.u32 %s133, %s134
      %p136 = scmp.eq.s32.totalorder %s135, 0
      %s138 = sadd.s32 %s137, 1
      %s139 = scalar_select %p136, %s137, %s138
      %p142 = pneg %p136
      %p143 = scmp.eq.s32.totalorder %s24, 1
      %p144 = por %p142, %p143
      %p145 = scmp.ne.s32.totalorder %s137, %s140
      %p146 = scmp.eq.s32.totalorder %s24, 0
      %p147 = por %p145, %p146
      %p148 = scmp.ne.s32.totalorder %s137, %s140
      %p149 = scmp.eq.s32.totalorder %s29, 1
      %p150 = por %p148, %p149
      %p151 = scmp.ne.s32.totalorder %s140, %s141
      %p152 = scmp.eq.s32.totalorder %s29, 0
      %p153 = por %p151, %p152
      %p154 = scmp.ne.s32.totalorder %s140, %s141
      %p155 = scmp.eq.s32.totalorder %s30, 1
      %p156 = por %p154, %p155
      %p158 = scmp.ne.s32.totalorder %s141, %s157
      %p159 = scmp.eq.s32.totalorder %s30, 0
      %p160 = por %p158, %p159
      %s161 = ssub.s32 %s31, %s43
      %s162 = ssub.s32 %s32, %s39
      %s163 = sor.u32 %s161, %s162
      %p164 = scmp.eq.s32.totalorder %s163, 0
      %s166 = sadd.s32 %s165, 1
      %s167 = scalar_select %p164, %s165, %s166
      %p170 = pneg %p164
      %p171 = scmp.eq.s32.totalorder %s24, 1
      %p172 = por %p170, %p171
      %p173 = scmp.ne.s32.totalorder %s165, %s168
      %p174 = scmp.eq.s32.totalorder %s24, 0
      %p175 = por %p173, %p174
      %p176 = scmp.ne.s32.totalorder %s165, %s168
      %p177 = scmp.eq.s32.totalorder %s29, 1
      %p178 = por %p176, %p177
      %p179 = scmp.ne.s32.totalorder %s168, %s169
      %p180 = scmp.eq.s32.totalorder %s29, 0
      %p181 = por %p179, %p180
      %p182 = scmp.ne.s32.totalorder %s168, %s169
      %p183 = scmp.eq.s32.totalorder %s30, 1
      %p184 = por %p182, %p183
      %p186 = scmp.ne.s32.totalorder %s169, %s185
      %p187 = scmp.eq.s32.totalorder %s30, 0
      %p188 = por %p186, %p187
      %s189 = ssub.s32 %s31, %s43
      %s190 = ssub.s32 %s32, %s39
      %s191 = sor.u32 %s189, %s190
      %p192 = scmp.eq.s32.totalorder %s191, 0
      %s194 = sadd.s32 %s193, 1
      %s195 = scalar_select %p192, %s193, %s194
      %p198 = pneg %p192
      %p199 = scmp.eq.s32.totalorder %s24, 1
      %p200 = por %p198, %p199
      %p201 = scmp.ne.s32.totalorder %s193, %s196
      %p202 = scmp.eq.s32.totalorder %s24, 0
      %p203 = por %p201, %p202
      %p204 = scmp.ne.s32.totalorder %s193, %s196
      %p205 = scmp.eq.s32.totalorder %s29, 1
      %p206 = por %p204, %p205
      %p207 = scmp.ne.s32.totalorder %s196, %s197
      %p208 = scmp.eq.s32.totalorder %s29, 0
      %p209 = por %p207, %p208
      %p210 = scmp.ne.s32.totalorder %s196, %s197
      %p211 = scmp.eq.s32.totalorder %s30, 1
      %p212 = por %p210, %p211
      %p214 = scmp.ne.s32.totalorder %s197, %s213
      %p215 = scmp.eq.s32.totalorder %s30, 0
      %p216 = por %p214, %p215
      %p217 = scmp.le.s32.totalorder 1, %s24
      %p218 = scmp.lt.s32.totalorder %s24, 3
      %p219 = pnand %p217, %p218
      %p220 = pneg %p219
      // Predicated region
      $region9: #{encoder_block_forward.4} parent=5 // pred_check
        _
      $region10: #{encoder_block_forward.4} parent=5 // pred_check_branch
        %222 = sbr.rel (%p219) target = $region12
      $region11: #{encoder_block_forward.4} parent=5 // pred_region
        %s223 = ssub.s32 %s24, 1
        // Predicated region
        $region13: #{encoder_block_forward.4} parent=11 // pred_check
          %p224 = pneg %p83
        $region14: #{encoder_block_forward.4} parent=11 // pred_check_branch
          %226 = sbr.rel (%p224) target = $region16
        $region15: #{encoder_block_forward.4} parent=11 // pred_region
          %s228 = ssub.s32 16, 16
          %229 = vsyncadd [#allocation6], %s228
          %s231 = sshll.u32 [#allocation5], 4
          %s232 = int_to_ptr.vmem [resolvable:$true] %s231
          %234 = dma.hbm_to_vmem [thread:$0]  %s1, 16, %s232, [#allocation6]
        $region16: #{encoder_block_forward.4} parent=11 // pred_fallthru
          _
        // Predicated region
        $region17: #{encoder_block_forward.4} parent=11 // pred_check
          %p235 = pneg %p104
        $region18: #{encoder_block_forward.4} parent=11 // pred_check_branch
          %237 = sbr.rel (%p235) target = $region20
        $region19: #{encoder_block_forward.4} parent=11 // pred_region
          %s239 = ssub.s32 16, 16
          %240 = vsyncadd [#allocation6], %s239
          %s242 = sshll.u32 [#allocation7], 4
          %s243 = int_to_ptr.vmem [resolvable:$true] %s242
          %245 = dma.hbm_to_vmem [thread:$0]  %s2, 16, %s243, [#allocation6]
        $region20: #{encoder_block_forward.4} parent=11 // pred_fallthru
          _
        // Predicated region
        $region21: #{encoder_block_forward.4} parent=11 // pred_check
          %p246 = pneg %p125
        $region22: #{encoder_block_forward.4} parent=11 // pred_check_branch
          %248 = sbr.rel (%p246) target = $region24
        $region23: #{encoder_block_forward.4} parent=11 // pred_region
          %s250 = ssub.s32 9216, 9216
          %251 = vsyncadd [#allocation9], %s250
          %s252 = sshll.u32 [#allocation8], 4
          %s253 = int_to_ptr.vmem [resolvable:$true] %s252
          %258 = dma.hbm_to_vmem [thread:$0]  %s3, 9216, %s253, [#allocation9], 64, 64, 4
        $region24: #{encoder_block_forward.4} parent=11 // pred_fallthru
          _
      $region12: #{encoder_block_forward.4} parent=5 // pred_fallthru
        _
      %p259 = scmp.lt.s32.totalorder %s24, 2
      // Predicated region
      $region25: #{encoder_block_forward.4} parent=5 // pred_check
        %p260 = pneg %p259
      $region26: #{encoder_block_forward.4} parent=5 // pred_check_branch
        %262 = sbr.rel (%p260) target = $region28
      $region27: #{encoder_block_forward.4} parent=5 // pred_region
        // Predicated region
        $region29: #{encoder_block_forward.4} parent=27 // pred_check
          %p263 = pneg %p56
        $region30: #{encoder_block_forward.4} parent=27 // pred_check_branch
          %265 = sbr.rel (%p263) target = $region32
        $region31: #{encoder_block_forward.4} parent=27 // pred_region
          %s266 = sand.u32 %s46, 1
          %s267 = scalar_lea.sflag [#allocation3], %s266
          %s268 = sand.u32 %s46, 1
          %s269 = smul.addr %s268, 116
          %s270 = scalar_lea.vmem [#allocation2], %s269
          %s272 = ssub.s32 1856, 1856
          %273 = vsyncadd %s267, %s272
          %s274 = smul.addr %s31, 29
          %s275 = smul.addr %s274, 64
          %s276 = scalar_lea.hbm %s0, %s275
          %s277 = sshll.u32 %s270, 4
          %s278 = int_to_ptr.vmem [resolvable:$true] %s277
          %283 = dma.hbm_to_vmem [thread:$0]  %s276, 1856, %s278, %s267, 64, 64, 4
        $region32: #{encoder_block_forward.4} parent=27 // pred_fallthru
          _
      $region28: #{encoder_block_forward.4} parent=5 // pred_fallthru
        _
      %p284 = scmp.le.s32.totalorder 1, %s24
      %p285 = scmp.lt.s32.totalorder %s24, 3
      %p286 = pnand %p284, %p285
      %p287 = pneg %p286
      // Predicated region
      $region33: #{encoder_block_forward.4} parent=5 // pred_check
        _
      $region34: #{encoder_block_forward.4} parent=5 // pred_check_branch
        %289 = sbr.rel (%p286) target = $region36
      $region35: #{encoder_block_forward.4} parent=5 // pred_region
        %s290 = ssub.s32 %s24, 1
        %s291 = sand.u32 %s49, 1
        %s292 = scalar_lea.sflag [#allocation3], %s291
        %s293 = sand.u32 %s49, 1
        %s294 = smul.addr %s293, 116
        %s295 = scalar_lea.vmem [#allocation2], %s294
        // Predicated region
        $region37: #{encoder_block_forward.4} parent=35 // pred_check
          %p296 = pneg %p62
        $region38: #{encoder_block_forward.4} parent=35 // pred_check_branch
          %298 = sbr.rel (%p296) target = $region40
        $region39: #{encoder_block_forward.4} parent=35 // pred_region
          %299 = dma.done %s292, 1856
        $region40: #{encoder_block_forward.4} parent=35 // pred_fallthru
          _
        // Predicated region
        $region41: #{encoder_block_forward.4} parent=35 // pred_check
          %p300 = pneg %p83
        $region42: #{encoder_block_forward.4} parent=35 // pred_check_branch
          %302 = sbr.rel (%p300) target = $region44
        $region43: #{encoder_block_forward.4} parent=35 // pred_region
          %303 = dma.done [#allocation6], 16
        $region44: #{encoder_block_forward.4} parent=35 // pred_fallthru
          _
        // Predicated region
        $region45: #{encoder_block_forward.4} parent=35 // pred_check
          %p304 = pneg %p104
        $region46: #{encoder_block_forward.4} parent=35 // pred_check_branch
          %306 = sbr.rel (%p304) target = $region48
        $region47: #{encoder_block_forward.4} parent=35 // pred_region
          %307 = dma.done [#allocation6], 16
        $region48: #{encoder_block_forward.4} parent=35 // pred_fallthru
          _
        // Predicated region
        $region49: #{encoder_block_forward.4} parent=35 // pred_check
          %p308 = pneg %p125
        $region50: #{encoder_block_forward.4} parent=35 // pred_check_branch
          %310 = sbr.rel (%p308) target = $region52
        $region51: #{encoder_block_forward.4} parent=35 // pred_region
          %311 = dma.done [#allocation9], 9216
        $region52: #{encoder_block_forward.4} parent=35 // pred_fallthru
          _
        %s312 = sand.u32 %s49, 1
        %s313 = scalar_lea.sflag [#allocation3], %s312
        %s314 = sand.u32 %s49, 1
        %s315 = smul.addr %s314, 116
        %s316 = scalar_lea.vmem [#allocation2], %s315
        %p317 = pneg %p62
        %p318 = pneg %p59
        %p319 = pneg %p83
        %p320 = pneg %p80
        %p321 = pneg %p104
        %p322 = pneg %p101
        %p323 = pneg %p125
        %p324 = pneg %p122
        %p325 = pneg %p153
        %p326 = pneg %p150
        %s327 = sand.u32 %s140, 1
        %s328 = scalar_lea.sflag [#allocation4], %s327
        %s329 = sand.u32 %s140, 1
        %s330 = smul.addr %s329, 48
        %s331 = scalar_lea.vmem [#allocation10], %s330
        %p332 = pneg %p181
        %p333 = pneg %p178
        %s334 = sand.u32 %s29, 1
        %s335 = scalar_lea.sflag [#allocation12], %s334
        %s336 = sand.u32 %s168, 1
        %s337 = smul.addr %s336, 48
        %s338 = scalar_lea.vmem [#allocation11], %s337
        %p339 = pneg %p209
        %p340 = pneg %p206
        %s341 = sand.u32 %s29, 1
        %s342 = scalar_lea.sflag [#allocation12], %s341
        %s343 = sand.u32 %s196, 1
        %s344 = smul.addr %s343, 2
        %s345 = scalar_lea.vmem [#allocation13], %s344
        %s346 = smul.u32 6, %s34
        %s347 = smul.u32 6, %s34
        %s349 = smul.u32 %s34, 192
        %s350 = sshra.s32 %s349, 3
        %s351 = sand.u32 %s349, 7
        %s352 = smul.addr %s350, 4
        %s353 = scalar_lea.vmem %s295, %s352 [#allocation2]
        %v354 = vld [vmem:[%s353] sm:$0xf]
        %v355 = vld [vmem:[%s353 + $0x4] sm:$0xf]
        %v356 = vld [vmem:[%s353 + $0x8] sm:$0xf]
        %v357 = vld [vmem:[%s353 + $0xc] sm:$0xf]
        %v358 = vld [vmem:[%s353 + $0x10] sm:$0xf]
        %v359 = vld [vmem:[%s353 + $0x14] sm:$0xf]
        %v360 = vld [vmem:[%s353 + $0x18] sm:$0xf]
        %v361 = vld [vmem:[%s353 + $0x1c] sm:$0xf]
        %v362 = vld [vmem:[%s353 + $0x20] sm:$0xf]
        %v363 = vld [vmem:[%s353 + $0x24] sm:$0xf]
        %v364 = vld [vmem:[%s353 + $0x28] sm:$0xf]
        %v365 = vld [vmem:[%s353 + $0x2c] sm:$0xf]
        %v366 = vld [vmem:[%s353 + $0x30] sm:$0xf]
        %v367 = vld [vmem:[%s353 + $0x34] sm:$0xf]
        %v368 = vld [vmem:[%s353 + $0x38] sm:$0xf]
        %v369 = vld [vmem:[%s353 + $0x3c] sm:$0xf]
        %v370 = vld [vmem:[%s353 + $0x40] sm:$0xf]
        %v371 = vld [vmem:[%s353 + $0x44] sm:$0xf]
        %v372 = vld [vmem:[%s353 + $0x48] sm:$0xf]
        %v373 = vld [vmem:[%s353 + $0x4c] sm:$0xf]
        %v374 = vld [vmem:[%s353 + $0x50] sm:$0xf]
        %v375 = vld [vmem:[%s353 + $0x54] sm:$0xf]
        %v376 = vld [vmem:[%s353 + $0x58] sm:$0xf]
        %v377 = vld [vmem:[%s353 + $0x5c] sm:$0xf]
        %v378 = vld [vmem:[%s353 + $0x60] sm:$0xf]
        %v379 = vld [vmem:[%s353 + $0x64] sm:$0xf]
        %v380 = vld [vmem:[%s353 + $0x68] sm:$0xf]
        %v381 = vld [vmem:[%s353 + $0x6c] sm:$0xf]
        %v382 = vld [vmem:[%s353 + $0x70] sm:$0xf]
        %v383 = vunpack.c.l.bf16 %v354
        %v384 = vunpack.c.l.bf16 %v355
        %v385 = vunpack.c.l.bf16 %v356
        %v386 = vunpack.c.l.bf16 %v357
        %v387 = vunpack.c.l.bf16 %v358
        %v388 = vunpack.c.l.bf16 %v359
        %v389 = vunpack.c.l.bf16 %v360
        %v390 = vunpack.c.l.bf16 %v361
        %v391 = vunpack.c.l.bf16 %v362
        %v392 = vunpack.c.l.bf16 %v363
        %v393 = vunpack.c.l.bf16 %v364
        %v394 = vunpack.c.l.bf16 %v365
        %v395 = vunpack.c.l.bf16 %v366
        %v396 = vunpack.c.l.bf16 %v367
        %v397 = vunpack.c.l.bf16 %v368
        %v398 = vunpack.c.l.bf16 %v369
        %v399 = vunpack.c.l.bf16 %v370
        %v400 = vunpack.c.l.bf16 %v371
        %v401 = vunpack.c.l.bf16 %v372
        %v402 = vunpack.c.l.bf16 %v373
        %v403 = vunpack.c.l.bf16 %v374
        %v404 = vunpack.c.l.bf16 %v375
        %v405 = vunpack.c.l.bf16 %v376
        %v406 = vunpack.c.l.bf16 %v377
        %v407 = vunpack.c.l.bf16 %v378
        %v408 = vunpack.c.l.bf16 %v379
        %v409 = vunpack.c.l.bf16 %v380
        %v410 = vunpack.c.l.bf16 %v381
        %v411 = vunpack.c.l.bf16 %v382
        %v412 = vld [vmem:[#allocation5] sm:$0x1]
        %v414 = vlaneseq
        %v415 = vshrl.u32 %v414, 7
        %v416 = vsub.s32 0, %v415
        %v417 = vrot.slane %v412, %v416
        %v419 = vmul.f32 %v383, %v417
        %v420 = vmul.f32 %v384, %v417
        %v421 = vmul.f32 %v385, %v417
        %v422 = vmul.f32 %v386, %v417
        %v423 = vmul.f32 %v387, %v417
        %v424 = vmul.f32 %v388, %v417
        %v425 = vmul.f32 %v389, %v417
        %v426 = vmul.f32 %v390, %v417
        %v427 = vmul.f32 %v391, %v417
        %v428 = vmul.f32 %v392, %v417
        %v429 = vmul.f32 %v393, %v417
        %v430 = vmul.f32 %v394, %v417
        %v431 = vmul.f32 %v395, %v417
        %v432 = vmul.f32 %v396, %v417
        %v433 = vmul.f32 %v397, %v417
        %v434 = vmul.f32 %v398, %v417
        %v435 = vmul.f32 %v399, %v417
        %v436 = vmul.f32 %v400, %v417
        %v437 = vmul.f32 %v401, %v417
        %v438 = vmul.f32 %v402, %v417
        %v439 = vmul.f32 %v403, %v417
        %v440 = vmul.f32 %v404, %v417
        %v441 = vmul.f32 %v405, %v417
        %v442 = vmul.f32 %v406, %v417
        %v443 = vmul.f32 %v407, %v417
        %v444 = vmul.f32 %v408, %v417
        %v445 = vmul.f32 %v409, %v417
        %v446 = vmul.f32 %v410, %v417
        %v447 = vmul.f32 %v411, %v417
        %v448 = vld [vmem:[#allocation7] sm:$0x1]
        %v450 = vlaneseq
        %v451 = vshrl.u32 %v450, 7
        %v452 = vsub.s32 0, %v451
        %v453 = vrot.slane %v448, %v452
        %v455 = vadd.f32 %v419, %v453
        %v456 = vadd.f32 %v420, %v453
        %v457 = vadd.f32 %v421, %v453
        %v458 = vadd.f32 %v422, %v453
        %v459 = vadd.f32 %v423, %v453
        %v460 = vadd.f32 %v424, %v453
        %v461 = vadd.f32 %v425, %v453
        %v462 = vadd.f32 %v426, %v453
        %v463 = vadd.f32 %v427, %v453
        %v464 = vadd.f32 %v428, %v453
        %v465 = vadd.f32 %v429, %v453
        %v466 = vadd.f32 %v430, %v453
        %v467 = vadd.f32 %v431, %v453
        %v468 = vadd.f32 %v432, %v453
        %v469 = vadd.f32 %v433, %v453
        %v470 = vadd.f32 %v434, %v453
        %v471 = vadd.f32 %v435, %v453
        %v472 = vadd.f32 %v436, %v453
        %v473 = vadd.f32 %v437, %v453
        %v474 = vadd.f32 %v438, %v453
        %v475 = vadd.f32 %v439, %v453
        %v476 = vadd.f32 %v440, %v453
        %v477 = vadd.f32 %v441, %v453
        %v478 = vadd.f32 %v442, %v453
        %v479 = vadd.f32 %v443, %v453
        %v480 = vadd.f32 %v444, %v453
        %v481 = vadd.f32 %v445, %v453
        %v482 = vadd.f32 %v446, %v453
        %v483 = vadd.f32 %v447, %v453
        %v484 = vmax.f32 %v455, 0.0
        %v485 = vmax.f32 %v456, 0.0
        %v486 = vmax.f32 %v457, 0.0
        %v487 = vmax.f32 %v458, 0.0
        %v488 = vmax.f32 %v459, 0.0
        %v489 = vmax.f32 %v460, 0.0
        %v490 = vmax.f32 %v461, 0.0
        %v491 = vmax.f32 %v462, 0.0
        %v492 = vmax.f32 %v463, 0.0
        %v493 = vmax.f32 %v464, 0.0
        %v494 = vmax.f32 %v465, 0.0
        %v495 = vmax.f32 %v466, 0.0
        %v496 = vmax.f32 %v467, 0.0
        %v497 = vmax.f32 %v468, 0.0
        %v498 = vmax.f32 %v469, 0.0
        %v499 = vmax.f32 %v470, 0.0
        %v500 = vmax.f32 %v471, 0.0
        %v501 = vmax.f32 %v472, 0.0
        %v502 = vmax.f32 %v473, 0.0
        %v503 = vmax.f32 %v474, 0.0
        %v504 = vmax.f32 %v475, 0.0
        %v505 = vmax.f32 %v476, 0.0
        %v506 = vmax.f32 %v477, 0.0
        %v507 = vmax.f32 %v478, 0.0
        %v508 = vmax.f32 %v479, 0.0
        %v509 = vmax.f32 %v480, 0.0
        %v510 = vmax.f32 %v481, 0.0
        %v511 = vmax.f32 %v482, 0.0
        %v512 = vmax.f32 %v483, 0.0
        %v513 = vpack.c.bf16 %v485, %v484
        %v514 = vpack.c.bf16 %v487, %v486
        %v515 = vpack.c.bf16 %v489, %v488
        %v516 = vpack.c.bf16 %v491, %v490
        %v517 = vpack.c.bf16 %v493, %v492
        %v518 = vpack.c.bf16 %v495, %v494
        %v519 = vpack.c.bf16 %v497, %v496
        %v520 = vpack.c.bf16 %v499, %v498
        %v521 = vpack.c.bf16 %v501, %v500
        %v522 = vpack.c.bf16 %v503, %v502
        %v523 = vpack.c.bf16 %v505, %v504
        %v524 = vpack.c.bf16 %v507, %v506
        %v525 = vpack.c.bf16 %v509, %v508
        %v526 = vpack.c.bf16 %v511, %v510
        %v527 = vpack.c.bf16 %v512, %v512
        %vm528 = vsmask.f32 7424
        %v530 = vshrl.u32 %v513, 16
        %v532 = vshll.u32 %v513, 16
        %v534 = vrot.slane %v532, 1
        %v535 = vor.u32 %v530, %v534
        %v537 = vshll.u32 %v514, 16
        %v539 = vrot.slane %v537, 1
        %v540 = vsel %vm528, %v535, %v539
        %v541 = vshrl.u32 %v514, 16
        %v543 = vor.u32 %v541, %v539
        %v545 = vshll.u32 %v515, 16
        %v547 = vrot.slane %v545, 1
        %v548 = vsel %vm528, %v543, %v547
        %v549 = vshrl.u32 %v515, 16
        %v551 = vor.u32 %v549, %v547
        %v553 = vshll.u32 %v516, 16
        %v555 = vrot.slane %v553, 1
        %v556 = vsel %vm528, %v551, %v555
        %v557 = vshrl.u32 %v516, 16
        %v559 = vor.u32 %v557, %v555
        %v561 = vshll.u32 %v517, 16
        %v563 = vrot.slane %v561, 1
        %v564 = vsel %vm528, %v559, %v563
        %v565 = vshrl.u32 %v517, 16
        %v567 = vor.u32 %v565, %v563
        %v569 = vshll.u32 %v518, 16
        %v571 = vrot.slane %v569, 1
        %v572 = vsel %vm528, %v567, %v571
        %v573 = vshrl.u32 %v518, 16
        %v575 = vor.u32 %v573, %v571
        %v577 = vshll.u32 %v519, 16
        %v579 = vrot.slane %v577, 1
        %v580 = vsel %vm528, %v575, %v579
        %v581 = vshrl.u32 %v519, 16
        %v583 = vor.u32 %v581, %v579
        %v585 = vshll.u32 %v520, 16
        %v587 = vrot.slane %v585, 1
        %v588 = vsel %vm528, %v583, %v587
        %v589 = vshrl.u32 %v520, 16
        %v591 = vor.u32 %v589, %v587
        %v593 = vshll.u32 %v521, 16
        %v595 = vrot.slane %v593, 1
        %v596 = vsel %vm528, %v591, %v595
        %v597 = vshrl.u32 %v521, 16
        %v599 = vor.u32 %v597, %v595
        %v601 = vshll.u32 %v522, 16
        %v603 = vrot.slane %v601, 1
        %v604 = vsel %vm528, %v599, %v603
        %v605 = vshrl.u32 %v522, 16
        %v607 = vor.u32 %v605, %v603
        %v609 = vshll.u32 %v523, 16
        %v611 = vrot.slane %v609, 1
        %v612 = vsel %vm528, %v607, %v611
        %v613 = vshrl.u32 %v523, 16
        %v615 = vor.u32 %v613, %v611
        %v617 = vshll.u32 %v524, 16
        %v619 = vrot.slane %v617, 1
        %v620 = vsel %vm528, %v615, %v619
        %v621 = vshrl.u32 %v524, 16
        %v623 = vor.u32 %v621, %v619
        %v625 = vshll.u32 %v525, 16
        %v627 = vrot.slane %v625, 1
        %v628 = vsel %vm528, %v623, %v627
        %vm654 = vcmask 1046528
        %v655 = vrot.slane %v513, 1
        %v656 = vrot.slane %v514, 1
        %v657 = vsel %vm654, %v655, %v656
        %v658 = vrot.slane %v515, 1
        %v659 = vsel %vm654, %v656, %v658
        %v660 = vrot.slane %v516, 1
        %v661 = vsel %vm654, %v658, %v660
        %v662 = vrot.slane %v517, 1
        %v663 = vsel %vm654, %v660, %v662
        %v664 = vrot.slane %v518, 1
        %v665 = vsel %vm654, %v662, %v664
        %v666 = vrot.slane %v519, 1
        %v667 = vsel %vm654, %v664, %v666
        %v668 = vrot.slane %v520, 1
        %v669 = vsel %vm654, %v666, %v668
        %v670 = vrot.slane %v521, 1
        %v671 = vsel %vm654, %v668, %v670
        %v672 = vrot.slane %v522, 1
        %v673 = vsel %vm654, %v670, %v672
        %v674 = vrot.slane %v523, 1
        %v675 = vsel %vm654, %v672, %v674
        %v676 = vrot.slane %v524, 1
        %v677 = vsel %vm654, %v674, %v676
        %v678 = vrot.slane %v525, 1
        %v679 = vsel %vm654, %v676, %v678
        %v692 = vld [vmem:[#allocation8] sm:$0xf]
        %v693 = vld [vmem:[#allocation8 + $0x4] sm:$0xf]
        %v694 = vld [vmem:[#allocation8 + $0x8] sm:$0xf]
        %v695 = vld [vmem:[#allocation8 + $0xc] sm:$0xf]
        %v696 = vld [vmem:[#allocation8 + $0x10] sm:$0xf]
        %v697 = vld [vmem:[#allocation8 + $0x14] sm:$0xf]
        %v698 = vld [vmem:[#allocation8 + $0x18] sm:$0xf]
        %v699 = vld [vmem:[#allocation8 + $0x1c] sm:$0xf]
        %v700 = vld [vmem:[#allocation8 + $0x20] sm:$0xf]
        %v701 = vld [vmem:[#allocation8 + $0x24] sm:$0xf]
        %v702 = vld [vmem:[#allocation8 + $0x28] sm:$0xf]
        %v703 = vld [vmem:[#allocation8 + $0x2c] sm:$0xf]
        %v704 = vld [vmem:[#allocation8 + $0x30] sm:$0xf]
        %v705 = vld [vmem:[#allocation8 + $0x34] sm:$0xf]
        %v706 = vld [vmem:[#allocation8 + $0x38] sm:$0xf]
        %v707 = vld [vmem:[#allocation8 + $0x3c] sm:$0xf]
        %v708 = vld [vmem:[#allocation8 + $0x40] sm:$0xf]
        %v709 = vld [vmem:[#allocation8 + $0x44] sm:$0xf]
        %v710 = vld [vmem:[#allocation8 + $0x48] sm:$0xf]
        %v711 = vld [vmem:[#allocation8 + $0x4c] sm:$0xf]
        %v712 = vld [vmem:[#allocation8 + $0x50] sm:$0xf]
        %v713 = vld [vmem:[#allocation8 + $0x54] sm:$0xf]
        %v714 = vld [vmem:[#allocation8 + $0x58] sm:$0xf]
        %v715 = vld [vmem:[#allocation8 + $0x5c] sm:$0xf]
        %v716 = vld [vmem:[#allocation8 + $0x60] sm:$0xf]
        %v717 = vld [vmem:[#allocation8 + $0x64] sm:$0xf]
        %v718 = vld [vmem:[#allocation8 + $0x68] sm:$0xf]
        %v719 = vld [vmem:[#allocation8 + $0x6c] sm:$0xf]
        %v720 = vld [vmem:[#allocation8 + $0x70] sm:$0xf]
        %v721 = vld [vmem:[#allocation8 + $0x74] sm:$0xf]
        %v722 = vld [vmem:[#allocation8 + $0x78] sm:$0xf]
        %v723 = vld [vmem:[#allocation8 + $0x7c] sm:$0xf]
        %v724 = vld [vmem:[#allocation8 + $0x80] sm:$0xf]
        %v725 = vld [vmem:[#allocation8 + $0x84] sm:$0xf]
        %v726 = vld [vmem:[#allocation8 + $0x88] sm:$0xf]
        %v727 = vld [vmem:[#allocation8 + $0x8c] sm:$0xf]
        %v728 = vld [vmem:[#allocation8 + $0x90] sm:$0xf]
        %v729 = vld [vmem:[#allocation8 + $0x94] sm:$0xf]
        %v730 = vld [vmem:[#allocation8 + $0x98] sm:$0xf]
        %v731 = vld [vmem:[#allocation8 + $0x9c] sm:$0xf]
        %v732 = vld [vmem:[#allocation8 + $0xa0] sm:$0xf]
        %v733 = vld [vmem:[#allocation8 + $0xa4] sm:$0xf]
        %v734 = vld [vmem:[#allocation8 + $0xa8] sm:$0xf]
        %v735 = vld [vmem:[#allocation8 + $0xac] sm:$0xf]
        %v736 = vld [vmem:[#allocation8 + $0xb0] sm:$0xf]
        %v737 = vld [vmem:[#allocation8 + $0xb4] sm:$0xf]
        %v738 = vld [vmem:[#allocation8 + $0xb8] sm:$0xf]
        %v739 = vld [vmem:[#allocation8 + $0xbc] sm:$0xf]
        %v740 = vshrl.u32 %v525, 16
        %v742 = vor.u32 %v740, %v627
        %v744 = vshll.u32 %v526, 16
        %v746 = vrot.slane %v744, 1
        %v747 = vsel %vm528, %v742, %v746
        %v750 = vrot.slane %v526, 1
        %v751 = vsel %vm654, %v678, %v750
        %s753 = scalar_lea.vmem [#allocation8], 192
        %v754 = vld [vmem:[%s753] sm:$0xf]
        %v755 = vld [vmem:[%s753 + $0x4] sm:$0xf]
        %v756 = vld [vmem:[%s753 + $0x8] sm:$0xf]
        %v757 = vld [vmem:[%s753 + $0xc] sm:$0xf]
        %v758 = vld [vmem:[%s753 + $0x10] sm:$0xf]
        %v759 = vld [vmem:[%s753 + $0x14] sm:$0xf]
        %v760 = vld [vmem:[%s753 + $0x18] sm:$0xf]
        %v761 = vld [vmem:[%s753 + $0x1c] sm:$0xf]
        %v762 = vld [vmem:[%s753 + $0x20] sm:$0xf]
        %v763 = vld [vmem:[%s753 + $0x24] sm:$0xf]
        %v764 = vld [vmem:[%s753 + $0x28] sm:$0xf]
        %v765 = vld [vmem:[%s753 + $0x2c] sm:$0xf]
        %v766 = vld [vmem:[%s753 + $0x30] sm:$0xf]
        %v767 = vld [vmem:[%s753 + $0x34] sm:$0xf]
        %v768 = vld [vmem:[%s753 + $0x38] sm:$0xf]
        %v769 = vld [vmem:[%s753 + $0x3c] sm:$0xf]
        %v770 = vld [vmem:[%s753 + $0x40] sm:$0xf]
        %v771 = vld [vmem:[%s753 + $0x44] sm:$0xf]
        %v772 = vld [vmem:[%s753 + $0x48] sm:$0xf]
        %v773 = vld [vmem:[%s753 + $0x4c] sm:$0xf]
        %v774 = vld [vmem:[%s753 + $0x50] sm:$0xf]
        %v775 = vld [vmem:[%s753 + $0x54] sm:$0xf]
        %v776 = vld [vmem:[%s753 + $0x58] sm:$0xf]
        %v777 = vld [vmem:[%s753 + $0x5c] sm:$0xf]
        %v778 = vld [vmem:[%s753 + $0x60] sm:$0xf]
        %v779 = vld [vmem:[%s753 + $0x64] sm:$0xf]
        %v780 = vld [vmem:[%s753 + $0x68] sm:$0xf]
        %v781 = vld [vmem:[%s753 + $0x6c] sm:$0xf]
        %v782 = vld [vmem:[%s753 + $0x70] sm:$0xf]
        %v783 = vld [vmem:[%s753 + $0x74] sm:$0xf]
        %v784 = vld [vmem:[%s753 + $0x78] sm:$0xf]
        %v785 = vld [vmem:[%s753 + $0x7c] sm:$0xf]
        %v786 = vld [vmem:[%s753 + $0x80] sm:$0xf]
        %v787 = vld [vmem:[%s753 + $0x84] sm:$0xf]
        %v788 = vld [vmem:[%s753 + $0x88] sm:$0xf]
        %v789 = vld [vmem:[%s753 + $0x8c] sm:$0xf]
        %v790 = vld [vmem:[%s753 + $0x90] sm:$0xf]
        %v791 = vld [vmem:[%s753 + $0x94] sm:$0xf]
        %v792 = vld [vmem:[%s753 + $0x98] sm:$0xf]
        %v793 = vld [vmem:[%s753 + $0x9c] sm:$0xf]
        %v794 = vld [vmem:[%s753 + $0xa0] sm:$0xf]
        %v795 = vld [vmem:[%s753 + $0xa4] sm:$0xf]
        %v796 = vld [vmem:[%s753 + $0xa8] sm:$0xf]
        %v797 = vld [vmem:[%s753 + $0xac] sm:$0xf]
        %v798 = vld [vmem:[%s753 + $0xb0] sm:$0xf]
        %v799 = vld [vmem:[%s753 + $0xb4] sm:$0xf]
        %v800 = vld [vmem:[%s753 + $0xb8] sm:$0xf]
        %v801 = vld [vmem:[%s753 + $0xbc] sm:$0xf]
        %v850 = vunpack.c.l.b16 %v754
        %v851 = vunpack.c.l.b16 %v755
        %v852 = vunpack.c.l.b16 %v756
        %v853 = vunpack.c.l.b16 %v757
        %v854 = vunpack.c.l.b16 %v758
        %v855 = vunpack.c.l.b16 %v759
        %v856 = vunpack.c.l.b16 %v760
        %v857 = vunpack.c.l.b16 %v761
        %v858 = vunpack.c.l.b16 %v762
        %v859 = vunpack.c.l.b16 %v763
        %v860 = vunpack.c.l.b16 %v764
        %v861 = vunpack.c.l.b16 %v765
        %v862 = vunpack.c.l.b16 %v766
        %v863 = vunpack.c.l.b16 %v767
        %v864 = vunpack.c.l.b16 %v768
        %v865 = vunpack.c.l.b16 %v769
        %v866 = vunpack.c.l.b16 %v770
        %v867 = vunpack.c.l.b16 %v771
        %v868 = vunpack.c.l.b16 %v772
        %v869 = vunpack.c.l.b16 %v773
        %v870 = vunpack.c.l.b16 %v774
        %v871 = vunpack.c.l.b16 %v775
        %v872 = vunpack.c.l.b16 %v776
        %v873 = vunpack.c.l.b16 %v777
        %v874 = vunpack.c.l.b16 %v778
        %v875 = vunpack.c.l.b16 %v779
        %v876 = vunpack.c.l.b16 %v780
        %v877 = vunpack.c.l.b16 %v781
        %v878 = vunpack.c.l.b16 %v782
        %v879 = vunpack.c.l.b16 %v783
        %v880 = vunpack.c.l.b16 %v784
        %v881 = vunpack.c.l.b16 %v785
        %v882 = vunpack.c.l.b16 %v786
        %v883 = vunpack.c.l.b16 %v787
        %v884 = vunpack.c.l.b16 %v788
        %v885 = vunpack.c.l.b16 %v789
        %v886 = vunpack.c.l.b16 %v790
        %v887 = vunpack.c.l.b16 %v791
        %v888 = vunpack.c.l.b16 %v792
        %v889 = vunpack.c.l.b16 %v793
        %v890 = vunpack.c.l.b16 %v794
        %v891 = vunpack.c.l.b16 %v795
        %v892 = vunpack.c.l.b16 %v796
        %v893 = vunpack.c.l.b16 %v797
        %v894 = vunpack.c.l.b16 %v798
        %v895 = vunpack.c.l.b16 %v799
        %v896 = vunpack.c.l.b16 %v800
        %v897 = vunpack.c.l.b16 %v801
        %v898 = vpack.c.b16 %v851, %v850
        %v899 = vpack.c.b16 %v853, %v852
        %v900 = vpack.c.b16 %v855, %v854
        %v901 = vpack.c.b16 %v857, %v856
        %v902 = vpack.c.b16 %v859, %v858
        %v903 = vpack.c.b16 %v861, %v860
        %v904 = vpack.c.b16 %v863, %v862
        %v905 = vpack.c.b16 %v865, %v864
        %v906 = vpack.c.b16 %v867, %v866
        %v907 = vpack.c.b16 %v869, %v868
        %v908 = vpack.c.b16 %v871, %v870
        %v909 = vpack.c.b16 %v873, %v872
        %v910 = vpack.c.b16 %v875, %v874
        %v911 = vpack.c.b16 %v877, %v876
        %v912 = vpack.c.b16 %v879, %v878
        %v913 = vpack.c.b16 %v881, %v880
        %v914 = vpack.c.b16 %v883, %v882
        %v915 = vpack.c.b16 %v885, %v884
        %v916 = vpack.c.b16 %v887, %v886
        %v917 = vpack.c.b16 %v889, %v888
        %v918 = vpack.c.b16 %v891, %v890
        %v919 = vpack.c.b16 %v893, %v892
        %v920 = vpack.c.b16 %v895, %v894
        %v921 = vpack.c.b16 %v897, %v896
        %946 = vmatprep.subr.bf16.mxu0 0
        %947 = vmatpush1.bf16.msra.mxu0 %v898
        %948 = vmatprep.subr.bf16.mxu0 0
        %949 = vmatpush1.bf16.msra.mxu0 %v899
        %950 = vmatprep.subr.bf16.mxu0 0
        %951 = vmatpush1.bf16.msra.mxu0 %v900
        %952 = vmatprep.subr.bf16.mxu0 0
        %953 = vmatpush1.bf16.msra.mxu0 %v901
        %954 = vmatprep.subr.bf16.mxu0 0
        %955 = vmatpush1.bf16.msra.mxu0 %v902
        %956 = vmatprep.subr.bf16.mxu0 0
        %957 = vmatpush1.bf16.msra.mxu0 %v903
        %958 = vmatprep.subr.bf16.mxu0 0
        %959 = vmatpush1.bf16.msra.mxu0 %v904
        %960 = vmatprep.subr.bf16.mxu0 0
        %961 = vmatpush1.bf16.msra.mxu0 %v905
        %962 = vmatprep.subr.bf16.mxu0 0
        %963 = vmatpush1.bf16.msra.mxu0 %v906
        %964 = vmatprep.subr.bf16.mxu0 0
        %965 = vmatpush1.bf16.msra.mxu0 %v907
        %966 = vmatprep.subr.bf16.mxu0 0
        %967 = vmatpush1.bf16.msra.mxu0 %v908
        %968 = vmatprep.subr.bf16.mxu0 0
        %969 = vmatpush1.bf16.msra.mxu0 %v909
        %970 = vmatprep.subr.bf16.mxu0 0
        %971 = vmatpush1.bf16.msra.mxu0 %v910
        %972 = vmatprep.subr.bf16.mxu0 0
        %973 = vmatpush1.bf16.msra.mxu0 %v911
        %974 = vmatprep.subr.bf16.mxu0 0
        %975 = vmatpush1.bf16.msra.mxu0 %v912
        %976 = vmatprep.subr.bf16.mxu0 0
        %977 = vmatpush1.bf16.msra.mxu0 %v913
        %978 = vmatprep.mubr.bf16.mxu0 %v548
        %979 = vmatmul.mubr.bf16.gmra.mrb[0].mxu0 %v514
        %v980 = vpop.f32.mrb[0].mxu0
        %v981 = vadd.f32 0.0, %v980
        %v982 = vpop.f32.mrb[0].mxu0
        %v983 = vpop.f32.mrb[0].mxu0
        %v984 = vadd.f32 0.0, %v983
        %v985 = vpop.f32.mrb[0].mxu0
        %986 = vmatprep.mubr.bf16.mxu0 %v556
        %987 = vmatmul.mubr.bf16.gmra.mrb[0].mxu0 %v515
        %v988 = vpop.f32.mrb[0].mxu0
        %v989 = vadd.f32 0.0, %v988
        %v990 = vpop.f32.mrb[0].mxu0
        %v991 = vpop.f32.mrb[0].mxu0
        %v992 = vadd.f32 0.0, %v991
        %v993 = vpop.f32.mrb[0].mxu0
        %994 = vmatprep.mubr.bf16.mxu0 %v564
        %995 = vmatmul.mubr.bf16.gmra.mrb[0].mxu0 %v516
        %v996 = vpop.f32.mrb[0].mxu0
        %v997 = vadd.f32 0.0, %v996
        %v998 = vpop.f32.mrb[0].mxu0
        %v999 = vpop.f32.mrb[0].mxu0
        %v1000 = vadd.f32 0.0, %v999
        %v1001 = vpop.f32.mrb[0].mxu0
        %1002 = vmatprep.mubr.bf16.mxu0 %v572
        %1003 = vmatmul.mubr.bf16.gmra.mrb[0].mxu0 %v517
        %v1004 = vpop.f32.mrb[0].mxu0
        %v1005 = vadd.f32 0.0, %v1004
        %v1006 = vpop.f32.mrb[0].mxu0
        %v1007 = vpop.f32.mrb[0].mxu0
        %v1008 = vadd.f32 0.0, %v1007
        %v1009 = vpop.f32.mrb[0].mxu0
        %1010 = vmatprep.mubr.bf16.mxu0 %v580
        %1011 = vmatmul.mubr.bf16.gmra.mrb[0].mxu0 %v518
        %v1012 = vpop.f32.mrb[0].mxu0
        %v1013 = vadd.f32 0.0, %v1012
        %v1014 = vpop.f32.mrb[0].mxu0
        %v1015 = vpop.f32.mrb[0].mxu0
        %v1016 = vadd.f32 0.0, %v1015
        %v1017 = vpop.f32.mrb[0].mxu0
        %1018 = vmatprep.mubr.bf16.mxu0 %v588
        %1019 = vmatmul.mubr.bf16.gmra.mrb[0].mxu0 %v519
        %v1020 = vpop.f32.mrb[0].mxu0
        %v1021 = vadd.f32 0.0, %v1020
        %v1022 = vpop.f32.mrb[0].mxu0
        %v1023 = vpop.f32.mrb[0].mxu0
        %v1024 = vadd.f32 0.0, %v1023
        %v1025 = vpop.f32.mrb[0].mxu0
        %1026 = vmatprep.mubr.bf16.mxu0 %v596
        %1027 = vmatmul.mubr.bf16.gmra.mrb[0].mxu0 %v520
        %v1028 = vpop.f32.mrb[0].mxu0
        %v1029 = vadd.f32 0.0, %v1028
        %v1030 = vpop.f32.mrb[0].mxu0
        %v1031 = vpop.f32.mrb[0].mxu0
        %v1032 = vadd.f32 0.0, %v1031
        %v1033 = vpop.f32.mrb[0].mxu0
        %1034 = vmatprep.mubr.bf16.mxu0 %v604
        %1035 = vmatmul.mubr.bf16.gmra.mrb[0].mxu0 %v521
        %v1036 = vpop.f32.mrb[0].mxu0
        %v1037 = vadd.f32 0.0, %v1036
        %v1038 = vpop.f32.mrb[0].mxu0
        %v1039 = vpop.f32.mrb[0].mxu0
        %v1040 = vadd.f32 0.0, %v1039
        %v1041 = vpop.f32.mrb[0].mxu0
        %1042 = vmatprep.mubr.bf16.mxu0 %v612
        %1043 = vmatmul.mubr.bf16.gmra.mrb[0].mxu0 %v522
        %v1044 = vpop.f32.mrb[0].mxu0
        %v1045 = vadd.f32 0.0, %v1044
        %v1046 = vpop.f32.mrb[0].mxu0
        %v1047 = vpop.f32.mrb[0].mxu0
        %v1048 = vadd.f32 0.0, %v1047
        %v1049 = vpop.f32.mrb[0].mxu0
        %1050 = vmatprep.mubr.bf16.mxu0 %v620
        %1051 = vmatmul.mubr.bf16.gmra.mrb[0].mxu0 %v523
        %v1052 = vpop.f32.mrb[0].mxu0
        %v1053 = vadd.f32 0.0, %v1052
        %v1054 = vpop.f32.mrb[0].mxu0
        %v1055 = vpop.f32.mrb[0].mxu0
        %v1056 = vadd.f32 0.0, %v1055
        %v1057 = vpop.f32.mrb[0].mxu0
        %1058 = vmatprep.mubr.bf16.mxu0 %v628
        %1059 = vmatmul.mubr.bf16.gmra.mrb[0].mxu0 %v524
        %v1060 = vpop.f32.mrb[0].mxu0
        %v1061 = vadd.f32 0.0, %v1060
        %v1062 = vpop.f32.mrb[0].mxu0
        %v1063 = vpop.f32.mrb[0].mxu0
        %v1064 = vadd.f32 0.0, %v1063
        %v1065 = vpop.f32.mrb[0].mxu0
        %1066 = vmatprep.mubr.bf16.mxu0 %v747
        %1067 = vmatmul.mubr.bf16.gmra.mrb[0].mxu0 %v525
        %v1068 = vpop.f32.mrb[0].mxu0
        %v1069 = vadd.f32 0.0, %v1068
        %v1070 = vpop.f32.mrb[0].mxu0
        %v1071 = vpop.f32.mrb[0].mxu0
        %v1072 = vadd.f32 0.0, %v1071
        %v1073 = vpop.f32.mrb[0].mxu0
        %1074 = vdwg.mxu0
        %1075 = vmatprep.subr.bf16.mxu0 0
        %1076 = vmatpush1.bf16.msra.mxu0 %v914
        %1077 = vmatprep.subr.bf16.mxu0 0
        %1078 = vmatpush1.bf16.msra.mxu0 %v915
        %1079 = vmatprep.subr.bf16.mxu0 0
        %1080 = vmatpush1.bf16.msra.mxu0 %v916
        %1081 = vmatprep.subr.bf16.mxu0 0
        %1082 = vmatpush1.bf16.msra.mxu0 %v917
        %1083 = vmatprep.subr.bf16.mxu0 0
        %1084 = vmatpush1.bf16.msra.mxu0 %v918
        %1085 = vmatprep.subr.bf16.mxu0 0
        %1086 = vmatpush1.bf16.msra.mxu0 %v919
        %1087 = vmatprep.subr.bf16.mxu0 0
        %1088 = vmatpush1.bf16.msra.mxu0 %v920
        %1089 = vmatprep.subr.bf16.mxu0 0
        %1090 = vmatpush1.bf16.msra.mxu0 %v921
        %1091 = vmatprep.subr.bf16.mxu0 0
        %1092 = vmatpush1.bf16.msra.mxu0 0
        %1093 = vmatprep.subr.bf16.mxu0 0
        %1094 = vmatpush1.bf16.msra.mxu0 0
        %1095 = vmatprep.subr.bf16.mxu0 0
        %1096 = vmatpush1.bf16.msra.mxu0 0
        %1097 = vmatprep.subr.bf16.mxu0 0
        %1098 = vmatpush1.bf16.msra.mxu0 0
        %1099 = vmatprep.subr.bf16.mxu0 0
        %1100 = vmatpush1.bf16.msra.mxu0 0
        %1101 = vmatprep.subr.bf16.mxu0 0
        %1102 = vmatpush1.bf16.msra.mxu0 0
        %1103 = vmatprep.subr.bf16.mxu0 0
        %1104 = vmatpush1.bf16.msra.mxu0 0
        %1105 = vmatprep.subr.bf16.mxu0 0
        %1106 = vmatpush1.bf16.msra.mxu0 0
        %1107 = vmatprep.mubr.bf16.mxu0 0
        %1108 = vmatmul.mubr.bf16.gmra.mrb[0].mxu0 %v659
        %v1109 = vpop.f32.mrb[0].mxu0
        %v1110 = vadd.f32 %v981, %v1109
        %v1111 = vpop.f32.mrb[0].mxu0
        %v1112 = vpop.f32.mrb[0].mxu0
        %v1113 = vadd.f32 %v984, %v1112
        %v1114 = vpop.f32.mrb[0].mxu0
        %1115 = vmatprep.mubr.bf16.mxu0 0
        %1116 = vmatmul.mubr.bf16.gmra.mrb[0].mxu0 %v661
        %v1117 = vpop.f32.mrb[0].mxu0
        %v1118 = vadd.f32 %v989, %v1117
        %v1119 = vpop.f32.mrb[0].mxu0
        %v1120 = vpop.f32.mrb[0].mxu0
        %v1121 = vadd.f32 %v992, %v1120
        %v1122 = vpop.f32.mrb[0].mxu0
        %1123 = vmatprep.mubr.bf16.mxu0 0
        %1124 = vmatmul.mubr.bf16.gmra.mrb[0].mxu0 %v663
        %v1125 = vpop.f32.mrb[0].mxu0
        %v1126 = vadd.f32 %v997, %v1125
        %v1127 = vpop.f32.mrb[0].mxu0
        %v1128 = vpop.f32.mrb[0].mxu0
        %v1129 = vadd.f32 %v1000, %v1128
        %v1130 = vpop.f32.mrb[0].mxu0
        %1131 = vmatprep.mubr.bf16.mxu0 0
        %1132 = vmatmul.mubr.bf16.gmra.mrb[0].mxu0 %v665
        %v1133 = vpop.f32.mrb[0].mxu0
        %v1134 = vadd.f32 %v1005, %v1133
        %v1135 = vpop.f32.mrb[0].mxu0
        %v1136 = vpop.f32.mrb[0].mxu0
        %v1137 = vadd.f32 %v1008, %v1136
        %v1138 = vpop.f32.mrb[0].mxu0
        %1139 = vmatprep.mubr.bf16.mxu0 0
        %1140 = vmatmul.mubr.bf16.gmra.mrb[0].mxu0 %v667
        %v1141 = vpop.f32.mrb[0].mxu0
        %v1142 = vadd.f32 %v1013, %v1141
        %v1143 = vpop.f32.mrb[0].mxu0
        %v1144 = vpop.f32.mrb[0].mxu0
        %v1145 = vadd.f32 %v1016, %v1144
        %v1146 = vpop.f32.mrb[0].mxu0
        %1147 = vmatprep.mubr.bf16.mxu0 0
        %1148 = vmatmul.mubr.bf16.gmra.mrb[0].mxu0 %v669
        %v1149 = vpop.f32.mrb[0].mxu0
        %v1150 = vadd.f32 %v1021, %v1149
        %v1151 = vpop.f32.mrb[0].mxu0
        %v1152 = vpop.f32.mrb[0].mxu0
        %v1153 = vadd.f32 %v1024, %v1152
        %v1154 = vpop.f32.mrb[0].mxu0
        %1155 = vmatprep.mubr.bf16.mxu0 0
        %1156 = vmatmul.mubr.bf16.gmra.mrb[0].mxu0 %v671
        %v1157 = vpop.f32.mrb[0].mxu0
        %v1158 = vadd.f32 %v1029, %v1157
        %v1159 = vpop.f32.mrb[0].mxu0
        %v1160 = vpop.f32.mrb[0].mxu0
        %v1161 = vadd.f32 %v1032, %v1160
        %v1162 = vpop.f32.mrb[0].mxu0
        %1163 = vmatprep.mubr.bf16.mxu0 0
        %1164 = vmatmul.mubr.bf16.gmra.mrb[0].mxu0 %v673
        %v1165 = vpop.f32.mrb[0].mxu0
        %v1166 = vadd.f32 %v1037, %v1165
        %v1167 = vpop.f32.mrb[0].mxu0
        %v1168 = vpop.f32.mrb[0].mxu0
        %v1169 = vadd.f32 %v1040, %v1168
        %v1170 = vpop.f32.mrb[0].mxu0
        %1171 = vmatprep.mubr.bf16.mxu0 0
        %1172 = vmatmul.mubr.bf16.gmra.mrb[0].mxu0 %v675
        %v1173 = vpop.f32.mrb[0].mxu0
        %v1174 = vadd.f32 %v1045, %v1173
        %v1175 = vpop.f32.mrb[0].mxu0
        %v1176 = vpop.f32.mrb[0].mxu0
        %v1177 = vadd.f32 %v1048, %v1176
        %v1178 = vpop.f32.mrb[0].mxu0
        %1179 = vmatprep.mubr.bf16.mxu0 0
        %1180 = vmatmul.mubr.bf16.gmra.mrb[0].mxu0 %v677
        %v1181 = vpop.f32.mrb[0].mxu0
        %v1182 = vadd.f32 %v1053, %v1181
        %v1183 = vpop.f32.mrb[0].mxu0
        %v1184 = vpop.f32.mrb[0].mxu0
        %v1185 = vadd.f32 %v1056, %v1184
        %v1186 = vpop.f32.mrb[0].mxu0
        %1187 = vmatprep.mubr.bf16.mxu0 0
        %1188 = vmatmul.mubr.bf16.gmra.mrb[0].mxu0 %v679
        %v1189 = vpop.f32.mrb[0].mxu0
        %v1190 = vadd.f32 %v1061, %v1189
        %v1191 = vpop.f32.mrb[0].mxu0
        %v1192 = vpop.f32.mrb[0].mxu0
        %v1193 = vadd.f32 %v1064, %v1192
        %v1194 = vpop.f32.mrb[0].mxu0
        %1195 = vmatprep.mubr.bf16.mxu0 0
        %1196 = vmatmul.mubr.bf16.gmra.mrb[0].mxu0 %v751
        %v1197 = vpop.f32.mrb[0].mxu0
        %v1198 = vadd.f32 %v1069, %v1197
        %v1199 = vpop.f32.mrb[0].mxu0
        %v1200 = vpop.f32.mrb[0].mxu0
        %v1201 = vadd.f32 %v1072, %v1200
        %v1202 = vpop.f32.mrb[0].mxu0
        %1203 = vdwg.mxu0
        %v1252 = vunpack.c.l.b16 %v692
        %v1253 = vunpack.c.l.b16 %v693
        %v1254 = vunpack.c.l.b16 %v694
        %v1255 = vunpack.c.l.b16 %v695
        %v1256 = vunpack.c.l.b16 %v696
        %v1257 = vunpack.c.l.b16 %v697
        %v1258 = vunpack.c.l.b16 %v698
        %v1259 = vunpack.c.l.b16 %v699
        %v1260 = vunpack.c.l.b16 %v700
        %v1261 = vunpack.c.l.b16 %v701
        %v1262 = vunpack.c.l.b16 %v702
        %v1263 = vunpack.c.l.b16 %v703
        %v1264 = vunpack.c.l.b16 %v704
        %v1265 = vunpack.c.l.b16 %v705
        %v1266 = vunpack.c.l.b16 %v706
        %v1267 = vunpack.c.l.b16 %v707
        %v1268 = vunpack.c.l.b16 %v708
        %v1269 = vunpack.c.l.b16 %v709
        %v1270 = vunpack.c.l.b16 %v710
        %v1271 = vunpack.c.l.b16 %v711
        %v1272 = vunpack.c.l.b16 %v712
        %v1273 = vunpack.c.l.b16 %v713
        %v1274 = vunpack.c.l.b16 %v714
        %v1275 = vunpack.c.l.b16 %v715
        %v1276 = vunpack.c.l.b16 %v716
        %v1277 = vunpack.c.l.b16 %v717
        %v1278 = vunpack.c.l.b16 %v718
        %v1279 = vunpack.c.l.b16 %v719
        %v1280 = vunpack.c.l.b16 %v720
        %v1281 = vunpack.c.l.b16 %v721
        %v1282 = vunpack.c.l.b16 %v722
        %v1283 = vunpack.c.l.b16 %v723
        %v1284 = vunpack.c.l.b16 %v724
        %v1285 = vunpack.c.l.b16 %v725
        %v1286 = vunpack.c.l.b16 %v726
        %v1287 = vunpack.c.l.b16 %v727
        %v1288 = vunpack.c.l.b16 %v728
        %v1289 = vunpack.c.l.b16 %v729
        %v1290 = vunpack.c.l.b16 %v730
        %v1291 = vunpack.c.l.b16 %v731
        %v1292 = vunpack.c.l.b16 %v732
        %v1293 = vunpack.c.l.b16 %v733
        %v1294 = vunpack.c.l.b16 %v734
        %v1295 = vunpack.c.l.b16 %v735
        %v1296 = vunpack.c.l.b16 %v736
        %v1297 = vunpack.c.l.b16 %v737
        %v1298 = vunpack.c.l.b16 %v738
        %v1299 = vunpack.c.l.b16 %v739
        %v1300 = vpack.c.b16 %v1253, %v1252
        %v1301 = vpack.c.b16 %v1255, %v1254
        %v1302 = vpack.c.b16 %v1257, %v1256
        %v1303 = vpack.c.b16 %v1259, %v1258
        %v1304 = vpack.c.b16 %v1261, %v1260
        %v1305 = vpack.c.b16 %v1263, %v1262
        %v1306 = vpack.c.b16 %v1265, %v1264
        %v1307 = vpack.c.b16 %v1267, %v1266
        %v1308 = vpack.c.b16 %v1269, %v1268
        %v1309 = vpack.c.b16 %v1271, %v1270
        %v1310 = vpack.c.b16 %v1273, %v1272
        %v1311 = vpack.c.b16 %v1275, %v1274
        %v1312 = vpack.c.b16 %v1277, %v1276
        %v1313 = vpack.c.b16 %v1279, %v1278
        %v1314 = vpack.c.b16 %v1281, %v1280
        %v1315 = vpack.c.b16 %v1283, %v1282
        %v1316 = vpack.c.b16 %v1285, %v1284
        %v1317 = vpack.c.b16 %v1287, %v1286
        %v1318 = vpack.c.b16 %v1289, %v1288
        %v1319 = vpack.c.b16 %v1291, %v1290
        %v1320 = vpack.c.b16 %v1293, %v1292
        %v1321 = vpack.c.b16 %v1295, %v1294
        %v1322 = vpack.c.b16 %v1297, %v1296
        %v1323 = vpack.c.b16 %v1299, %v1298
        %1348 = vmatprep.subr.bf16.mxu0 0
        %1349 = vmatpush1.bf16.msra.mxu0 %v1300
        %1350 = vmatprep.subr.bf16.mxu0 0
        %1351 = vmatpush1.bf16.msra.mxu0 %v1301
        %1352 = vmatprep.subr.bf16.mxu0 0
        %1353 = vmatpush1.bf16.msra.mxu0 %v1302
        %1354 = vmatprep.subr.bf16.mxu0 0
        %1355 = vmatpush1.bf16.msra.mxu0 %v1303
        %1356 = vmatprep.subr.bf16.mxu0 0
        %1357 = vmatpush1.bf16.msra.mxu0 %v1304
        %1358 = vmatprep.subr.bf16.mxu0 0
        %1359 = vmatpush1.bf16.msra.mxu0 %v1305
        %1360 = vmatprep.subr.bf16.mxu0 0
        %1361 = vmatpush1.bf16.msra.mxu0 %v1306
        %1362 = vmatprep.subr.bf16.mxu0 0
        %1363 = vmatpush1.bf16.msra.mxu0 %v1307
        %1364 = vmatprep.subr.bf16.mxu0 0
        %1365 = vmatpush1.bf16.msra.mxu0 %v1308
        %1366 = vmatprep.subr.bf16.mxu0 0
        %1367 = vmatpush1.bf16.msra.mxu0 %v1309
        %1368 = vmatprep.subr.bf16.mxu0 0
        %1369 = vmatpush1.bf16.msra.mxu0 %v1310
        %1370 = vmatprep.subr.bf16.mxu0 0
        %1371 = vmatpush1.bf16.msra.mxu0 %v1311
        %1372 = vmatprep.subr.bf16.mxu0 0
        %1373 = vmatpush1.bf16.msra.mxu0 %v1312
        %1374 = vmatprep.subr.bf16.mxu0 0
        %1375 = vmatpush1.bf16.msra.mxu0 %v1313
        %1376 = vmatprep.subr.bf16.mxu0 0
        %1377 = vmatpush1.bf16.msra.mxu0 %v1314
        %1378 = vmatprep.subr.bf16.mxu0 0
        %1379 = vmatpush1.bf16.msra.mxu0 %v1315
        %1380 = vmatprep.mubr.bf16.mxu0 %v540
        %1381 = vmatmul.mubr.bf16.gmra.mrb[0].mxu0 %v513
        %v1382 = vpop.f32.mrb[0].mxu0
        %v1383 = vadd.f32 %v1110, %v1382
        %v1384 = vpop.f32.mrb[0].mxu0
        %v1385 = vpop.f32.mrb[0].mxu0
        %v1386 = vadd.f32 %v1113, %v1385
        %v1387 = vpop.f32.mrb[0].mxu0
        %1388 = vmatprep.mubr.bf16.mxu0 %v548
        %1389 = vmatmul.mubr.bf16.gmra.mrb[0].mxu0 %v514
        %v1390 = vpop.f32.mrb[0].mxu0
        %v1391 = vadd.f32 %v1118, %v1390
        %v1392 = vpop.f32.mrb[0].mxu0
        %v1393 = vpop.f32.mrb[0].mxu0
        %v1394 = vadd.f32 %v1121, %v1393
        %v1395 = vpop.f32.mrb[0].mxu0
        %1396 = vmatprep.mubr.bf16.mxu0 %v556
        %1397 = vmatmul.mubr.bf16.gmra.mrb[0].mxu0 %v515
        %v1398 = vpop.f32.mrb[0].mxu0
        %v1399 = vadd.f32 %v1126, %v1398
        %v1400 = vpop.f32.mrb[0].mxu0
        %v1401 = vpop.f32.mrb[0].mxu0
        %v1402 = vadd.f32 %v1129, %v1401
        %v1403 = vpop.f32.mrb[0].mxu0
        %1404 = vmatprep.mubr.bf16.mxu0 %v564
        %1405 = vmatmul.mubr.bf16.gmra.mrb[0].mxu0 %v516
        %v1406 = vpop.f32.mrb[0].mxu0
        %v1407 = vadd.f32 %v1134, %v1406
        %v1408 = vpop.f32.mrb[0].mxu0
        %v1409 = vpop.f32.mrb[0].mxu0
        %v1410 = vadd.f32 %v1137, %v1409
        %v1411 = vpop.f32.mrb[0].mxu0
        %1412 = vmatprep.mubr.bf16.mxu0 %v572
        %1413 = vmatmul.mubr.bf16.gmra.mrb[0].mxu0 %v517
        %v1414 = vpop.f32.mrb[0].mxu0
        %v1415 = vadd.f32 %v1142, %v1414
        %v1416 = vpop.f32.mrb[0].mxu0
        %v1417 = vpop.f32.mrb[0].mxu0
        %v1418 = vadd.f32 %v1145, %v1417
        %v1419 = vpop.f32.mrb[0].mxu0
        %1420 = vmatprep.mubr.bf16.mxu0 %v580
        %1421 = vmatmul.mubr.bf16.gmra.mrb[0].mxu0 %v518
        %v1422 = vpop.f32.mrb[0].mxu0
        %v1423 = vadd.f32 %v1150, %v1422
        %v1424 = vpop.f32.mrb[0].mxu0
        %v1425 = vpop.f32.mrb[0].mxu0
        %v1426 = vadd.f32 %v1153, %v1425
        %v1427 = vpop.f32.mrb[0].mxu0
        %1428 = vmatprep.mubr.bf16.mxu0 %v588
        %1429 = vmatmul.mubr.bf16.gmra.mrb[0].mxu0 %v519
        %v1430 = vpop.f32.mrb[0].mxu0
        %v1431 = vadd.f32 %v1158, %v1430
        %v1432 = vpop.f32.mrb[0].mxu0
        %v1433 = vpop.f32.mrb[0].mxu0
        %v1434 = vadd.f32 %v1161, %v1433
        %v1435 = vpop.f32.mrb[0].mxu0
        %1436 = vmatprep.mubr.bf16.mxu0 %v596
        %1437 = vmatmul.mubr.bf16.gmra.mrb[0].mxu0 %v520
        %v1438 = vpop.f32.mrb[0].mxu0
        %v1439 = vadd.f32 %v1166, %v1438
        %v1440 = vpop.f32.mrb[0].mxu0
        %v1441 = vpop.f32.mrb[0].mxu0
        %v1442 = vadd.f32 %v1169, %v1441
        %v1443 = vpop.f32.mrb[0].mxu0
        %1444 = vmatprep.mubr.bf16.mxu0 %v604
        %1445 = vmatmul.mubr.bf16.gmra.mrb[0].mxu0 %v521
        %v1446 = vpop.f32.mrb[0].mxu0
        %v1447 = vadd.f32 %v1174, %v1446
        %v1448 = vpop.f32.mrb[0].mxu0
        %v1449 = vpop.f32.mrb[0].mxu0
        %v1450 = vadd.f32 %v1177, %v1449
        %v1451 = vpop.f32.mrb[0].mxu0
        %1452 = vmatprep.mubr.bf16.mxu0 %v612
        %1453 = vmatmul.mubr.bf16.gmra.mrb[0].mxu0 %v522
        %v1454 = vpop.f32.mrb[0].mxu0
        %v1455 = vadd.f32 %v1182, %v1454
        %v1456 = vpop.f32.mrb[0].mxu0
        %v1457 = vpop.f32.mrb[0].mxu0
        %v1458 = vadd.f32 %v1185, %v1457
        %v1459 = vpop.f32.mrb[0].mxu0
        %1460 = vmatprep.mubr.bf16.mxu0 %v620
        %1461 = vmatmul.mubr.bf16.gmra.mrb[0].mxu0 %v523
        %v1462 = vpop.f32.mrb[0].mxu0
        %v1463 = vadd.f32 %v1190, %v1462
        %v1464 = vpop.f32.mrb[0].mxu0
        %v1465 = vpop.f32.mrb[0].mxu0
        %v1466 = vadd.f32 %v1193, %v1465
        %v1467 = vpop.f32.mrb[0].mxu0
        %1468 = vmatprep.mubr.bf16.mxu0 %v628
        %1469 = vmatmul.mubr.bf16.gmra.mrb[0].mxu0 %v524
        %v1470 = vpop.f32.mrb[0].mxu0
        %v1471 = vadd.f32 %v1198, %v1470
        %v1472 = vpop.f32.mrb[0].mxu0
        %v1473 = vpop.f32.mrb[0].mxu0
        %v1474 = vadd.f32 %v1201, %v1473
        %v1475 = vpop.f32.mrb[0].mxu0
        %1476 = vdwg.mxu0
        %1477 = vmatprep.subr.bf16.mxu0 0
        %1478 = vmatpush1.bf16.msra.mxu0 %v1316
        %1479 = vmatprep.subr.bf16.mxu0 0
        %1480 = vmatpush1.bf16.msra.mxu0 %v1317
        %1481 = vmatprep.subr.bf16.mxu0 0
        %1482 = vmatpush1.bf16.msra.mxu0 %v1318
        %1483 = vmatprep.subr.bf16.mxu0 0
        %1484 = vmatpush1.bf16.msra.mxu0 %v1319
        %1485 = vmatprep.subr.bf16.mxu0 0
        %1486 = vmatpush1.bf16.msra.mxu0 %v1320
        %1487 = vmatprep.subr.bf16.mxu0 0
        %1488 = vmatpush1.bf16.msra.mxu0 %v1321
        %1489 = vmatprep.subr.bf16.mxu0 0
        %1490 = vmatpush1.bf16.msra.mxu0 %v1322
        %1491 = vmatprep.subr.bf16.mxu0 0
        %1492 = vmatpush1.bf16.msra.mxu0 %v1323
        %1493 = vmatprep.subr.bf16.mxu0 0
        %1494 = vmatpush1.bf16.msra.mxu0 0
        %1495 = vmatprep.subr.bf16.mxu0 0
        %1496 = vmatpush1.bf16.msra.mxu0 0
        %1497 = vmatprep.subr.bf16.mxu0 0
        %1498 = vmatpush1.bf16.msra.mxu0 0
        %1499 = vmatprep.subr.bf16.mxu0 0
        %1500 = vmatpush1.bf16.msra.mxu0 0
        %1501 = vmatprep.subr.bf16.mxu0 0
        %1502 = vmatpush1.bf16.msra.mxu0 0
        %1503 = vmatprep.subr.bf16.mxu0 0
        %1504 = vmatpush1.bf16.msra.mxu0 0
        %1505 = vmatprep.subr.bf16.mxu0 0
        %1506 = vmatpush1.bf16.msra.mxu0 0
        %1507 = vmatprep.subr.bf16.mxu0 0
        %1508 = vmatpush1.bf16.msra.mxu0 0
        %1509 = vmatprep.mubr.bf16.mxu0 0
        %1510 = vmatmul.mubr.bf16.gmra.mrb[0].mxu0 %v657
        %v1511 = vpop.f32.mrb[0].mxu0
        %v1512 = vadd.f32 %v1383, %v1511
        %v1513 = vpop.f32.mrb[0].mxu0
        %v1514 = vpop.f32.mrb[0].mxu0
        %v1515 = vadd.f32 %v1386, %v1514
        %v1516 = vpop.f32.mrb[0].mxu0
        %1517 = vmatprep.mubr.bf16.mxu0 0
        %1518 = vmatmul.mubr.bf16.gmra.mrb[0].mxu0 %v659
        %v1519 = vpop.f32.mrb[0].mxu0
        %v1520 = vadd.f32 %v1391, %v1519
        %v1521 = vpop.f32.mrb[0].mxu0
        %v1522 = vpop.f32.mrb[0].mxu0
        %v1523 = vadd.f32 %v1394, %v1522
        %v1524 = vpop.f32.mrb[0].mxu0
        %1525 = vmatprep.mubr.bf16.mxu0 0
        %1526 = vmatmul.mubr.bf16.gmra.mrb[0].mxu0 %v661
        %v1527 = vpop.f32.mrb[0].mxu0
        %v1528 = vadd.f32 %v1399, %v1527
        %v1529 = vpop.f32.mrb[0].mxu0
        %v1530 = vpop.f32.mrb[0].mxu0
        %v1531 = vadd.f32 %v1402, %v1530
        %v1532 = vpop.f32.mrb[0].mxu0
        %1533 = vmatprep.mubr.bf16.mxu0 0
        %1534 = vmatmul.mubr.bf16.gmra.mrb[0].mxu0 %v663
        %v1535 = vpop.f32.mrb[0].mxu0
        %v1536 = vadd.f32 %v1407, %v1535
        %v1537 = vpop.f32.mrb[0].mxu0
        %v1538 = vpop.f32.mrb[0].mxu0
        %v1539 = vadd.f32 %v1410, %v1538
        %v1540 = vpop.f32.mrb[0].mxu0
        %1541 = vmatprep.mubr.bf16.mxu0 0
        %1542 = vmatmul.mubr.bf16.gmra.mrb[0].mxu0 %v665
        %v1543 = vpop.f32.mrb[0].mxu0
        %v1544 = vadd.f32 %v1415, %v1543
        %v1545 = vpop.f32.mrb[0].mxu0
        %v1546 = vpop.f32.mrb[0].mxu0
        %v1547 = vadd.f32 %v1418, %v1546
        %v1548 = vpop.f32.mrb[0].mxu0
        %1549 = vmatprep.mubr.bf16.mxu0 0
        %1550 = vmatmul.mubr.bf16.gmra.mrb[0].mxu0 %v667
        %v1551 = vpop.f32.mrb[0].mxu0
        %v1552 = vadd.f32 %v1423, %v1551
        %v1553 = vpop.f32.mrb[0].mxu0
        %v1554 = vpop.f32.mrb[0].mxu0
        %v1555 = vadd.f32 %v1426, %v1554
        %v1556 = vpop.f32.mrb[0].mxu0
        %1557 = vmatprep.mubr.bf16.mxu0 0
        %1558 = vmatmul.mubr.bf16.gmra.mrb[0].mxu0 %v669
        %v1559 = vpop.f32.mrb[0].mxu0
        %v1560 = vadd.f32 %v1431, %v1559
        %v1561 = vpop.f32.mrb[0].mxu0
        %v1562 = vpop.f32.mrb[0].mxu0
        %v1563 = vadd.f32 %v1434, %v1562
        %v1564 = vpop.f32.mrb[0].mxu0
        %1565 = vmatprep.mubr.bf16.mxu0 0
        %1566 = vmatmul.mubr.bf16.gmra.mrb[0].mxu0 %v671
        %v1567 = vpop.f32.mrb[0].mxu0
        %v1568 = vadd.f32 %v1439, %v1567
        %v1569 = vpop.f32.mrb[0].mxu0
        %v1570 = vpop.f32.mrb[0].mxu0
        %v1571 = vadd.f32 %v1442, %v1570
        %v1572 = vpop.f32.mrb[0].mxu0
        %1573 = vmatprep.mubr.bf16.mxu0 0
        %1574 = vmatmul.mubr.bf16.gmra.mrb[0].mxu0 %v673
        %v1575 = vpop.f32.mrb[0].mxu0
        %v1576 = vadd.f32 %v1447, %v1575
        %v1577 = vpop.f32.mrb[0].mxu0
        %v1578 = vpop.f32.mrb[0].mxu0
        %v1579 = vadd.f32 %v1450, %v1578
        %v1580 = vpop.f32.mrb[0].mxu0
        %1581 = vmatprep.mubr.bf16.mxu0 0
        %1582 = vmatmul.mubr.bf16.gmra.mrb[0].mxu0 %v675
        %v1583 = vpop.f32.mrb[0].mxu0
        %v1584 = vadd.f32 %v1455, %v1583
        %v1585 = vpop.f32.mrb[0].mxu0
        %v1586 = vpop.f32.mrb[0].mxu0
        %v1587 = vadd.f32 %v1458, %v1586
        %v1588 = vpop.f32.mrb[0].mxu0
        %1589 = vmatprep.mubr.bf16.mxu0 0
        %1590 = vmatmul.mubr.bf16.gmra.mrb[0].mxu0 %v677
        %v1591 = vpop.f32.mrb[0].mxu0
        %v1592 = vadd.f32 %v1463, %v1591
        %v1593 = vpop.f32.mrb[0].mxu0
        %v1594 = vpop.f32.mrb[0].mxu0
        %v1595 = vadd.f32 %v1466, %v1594
        %v1596 = vpop.f32.mrb[0].mxu0
        %1597 = vmatprep.mubr.bf16.mxu0 0
        %1598 = vmatmul.mubr.bf16.gmra.mrb[0].mxu0 %v679
        %v1599 = vpop.f32.mrb[0].mxu0
        %v1600 = vadd.f32 %v1471, %v1599
        %v1601 = vpop.f32.mrb[0].mxu0
        %v1602 = vpop.f32.mrb[0].mxu0
        %v1603 = vadd.f32 %v1474, %v1602
        %v1604 = vpop.f32.mrb[0].mxu0
        %1605 = vdwg.mxu0
        %v1606 = vshrl.u32 %v526, 16
        %v1608 = vor.u32 %v1606, %v746
        %v1610 = vshll.u32 %v527, 16
        %v1612 = vrot.slane %v1610, 1
        %v1613 = vsel %vm528, %v1608, %v1612
        %v1616 = vrot.slane %v527, 1
        %v1617 = vsel %vm654, %v750, %v1616
        %s1619 = scalar_lea.vmem [#allocation8], 384
        %v1620 = vld [vmem:[%s1619] sm:$0xf]
        %v1621 = vld [vmem:[%s1619 + $0x4] sm:$0xf]
        %v1622 = vld [vmem:[%s1619 + $0x8] sm:$0xf]
        %v1623 = vld [vmem:[%s1619 + $0xc] sm:$0xf]
        %v1624 = vld [vmem:[%s1619 + $0x10] sm:$0xf]
        %v1625 = vld [vmem:[%s1619 + $0x14] sm:$0xf]
        %v1626 = vld [vmem:[%s1619 + $0x18] sm:$0xf]
        %v1627 = vld [vmem:[%s1619 + $0x1c] sm:$0xf]
        %v1628 = vld [vmem:[%s1619 + $0x20] sm:$0xf]
        %v1629 = vld [vmem:[%s1619 + $0x24] sm:$0xf]
        %v1630 = vld [vmem:[%s1619 + $0x28] sm:$0xf]
        %v1631 = vld [vmem:[%s1619 + $0x2c] sm:$0xf]
        %v1632 = vld [vmem:[%s1619 + $0x30] sm:$0xf]
        %v1633 = vld [vmem:[%s1619 + $0x34] sm:$0xf]
        %v1634 = vld [vmem:[%s1619 + $0x38] sm:$0xf]
        %v1635 = vld [vmem:[%s1619 + $0x3c] sm:$0xf]
        %v1636 = vld [vmem:[%s1619 + $0x40] sm:$0xf]
        %v1637 = vld [vmem:[%s1619 + $0x44] sm:$0xf]
        %v1638 = vld [vmem:[%s1619 + $0x48] sm:$0xf]
        %v1639 = vld [vmem:[%s1619 + $0x4c] sm:$0xf]
        %v1640 = vld [vmem:[%s1619 + $0x50] sm:$0xf]
        %v1641 = vld [vmem:[%s1619 + $0x54] sm:$0xf]
        %v1642 = vld [vmem:[%s1619 + $0x58] sm:$0xf]
        %v1643 = vld [vmem:[%s1619 + $0x5c] sm:$0xf]
        %v1644 = vld [vmem:[%s1619 + $0x60] sm:$0xf]
        %v1645 = vld [vmem:[%s1619 + $0x64] sm:$0xf]
        %v1646 = vld [vmem:[%s1619 + $0x68] sm:$0xf]
        %v1647 = vld [vmem:[%s1619 + $0x6c] sm:$0xf]
        %v1648 = vld [vmem:[%s1619 + $0x70] sm:$0xf]
        %v1649 = vld [vmem:[%s1619 + $0x74] sm:$0xf]
        %v1650 = vld [vmem:[%s1619 + $0x78] sm:$0xf]
        %v1651 = vld [vmem:[%s1619 + $0x7c] sm:$0xf]
        %v1652 = vld [vmem:[%s1619 + $0x80] sm:$0xf]
        %v1653 = vld [vmem:[%s1619 + $0x84] sm:$0xf]
        %v1654 = vld [vmem:[%s1619 + $0x88] sm:$0xf]
        %v1655 = vld [vmem:[%s1619 + $0x8c] sm:$0xf]
        %v1656 = vld [vmem:[%s1619 + $0x90] sm:$0xf]
        %v1657 = vld [vmem:[%s1619 + $0x94] sm:$0xf]
        %v1658 = vld [vmem:[%s1619 + $0x98] sm:$0xf]
        %v1659 = vld [vmem:[%s1619 + $0x9c] sm:$0xf]
        %v1660 = vld [vmem:[%s1619 + $0xa0] sm:$0xf]
        %v1661 = vld [vmem:[%s1619 + $0xa4] sm:$0xf]
        %v1662 = vld [vmem:[%s1619 + $0xa8] sm:$0xf]
        %v1663 = vld [vmem:[%s1619 + $0xac] sm:$0xf]
        %v1664 = vld [vmem:[%s1619 + $0xb0] sm:$0xf]
        %v1665 = vld [vmem:[%s1619 + $0xb4] sm:$0xf]
        %v1666 = vld [vmem:[%s1619 + $0xb8] sm:$0xf]
        %v1667 = vld [vmem:[%s1619 + $0xbc] sm:$0xf]
        %v1716 = vunpack.c.l.b16 %v1620
        %v1717 = vunpack.c.l.b16 %v1621
        %v1718 = vunpack.c.l.b16 %v1622
        %v1719 = vunpack.c.l.b16 %v1623
        %v1720 = vunpack.c.l.b16 %v1624
        %v1721 = vunpack.c.l.b16 %v1625
        %v1722 = vunpack.c.l.b16 %v1626
        %v1723 = vunpack.c.l.b16 %v1627
        %v1724 = vunpack.c.l.b16 %v1628
        %v1725 = vunpack.c.l.b16 %v1629
        %v1726 = vunpack.c.l.b16 %v1630
        %v1727 = vunpack.c.l.b16 %v1631
        %v1728 = vunpack.c.l.b16 %v1632
        %v1729 = vunpack.c.l.b16 %v1633
        %v1730 = vunpack.c.l.b16 %v1634
        %v1731 = vunpack.c.l.b16 %v1635
        %v1732 = vunpack.c.l.b16 %v1636
        %v1733 = vunpack.c.l.b16 %v1637
        %v1734 = vunpack.c.l.b16 %v1638
        %v1735 = vunpack.c.l.b16 %v1639
        %v1736 = vunpack.c.l.b16 %v1640
        %v1737 = vunpack.c.l.b16 %v1641
        %v1738 = vunpack.c.l.b16 %v1642
        %v1739 = vunpack.c.l.b16 %v1643
        %v1740 = vunpack.c.l.b16 %v1644
        %v1741 = vunpack.c.l.b16 %v1645
        %v1742 = vunpack.c.l.b16 %v1646
        %v1743 = vunpack.c.l.b16 %v1647
        %v1744 = vunpack.c.l.b16 %v1648
        %v1745 = vunpack.c.l.b16 %v1649
        %v1746 = vunpack.c.l.b16 %v1650
        %v1747 = vunpack.c.l.b16 %v1651
        %v1748 = vunpack.c.l.b16 %v1652
        %v1749 = vunpack.c.l.b16 %v1653
        %v1750 = vunpack.c.l.b16 %v1654
        %v1751 = vunpack.c.l.b16 %v1655
        %v1752 = vunpack.c.l.b16 %v1656
        %v1753 = vunpack.c.l.b16 %v1657
        %v1754 = vunpack.c.l.b16 %v1658
        %v1755 = vunpack.c.l.b16 %v1659
        %v1756 = vunpack.c.l.b16 %v1660
        %v1757 = vunpack.c.l.b16 %v1661
        %v1758 = vunpack.c.l.b16 %v1662
        %v1759 = vunpack.c.l.b16 %v1663
        %v1760 = vunpack.c.l.b16 %v1664
        %v1761 = vunpack.c.l.b16 %v1665
        %v1762 = vunpack.c.l.b16 %v1666
        %v1763 = vunpack.c.l.b16 %v1667
        %v1764 = vpack.c.b16 %v1717, %v1716
        %v1765 = vpack.c.b16 %v1719, %v1718
        %v1766 = vpack.c.b16 %v1721, %v1720
        %v1767 = vpack.c.b16 %v1723, %v1722
        %v1768 = vpack.c.b16 %v1725, %v1724
        %v1769 = vpack.c.b16 %v1727, %v1726
        %v1770 = vpack.c.b16 %v1729, %v1728
        %v1771 = vpack.c.b16 %v1731, %v1730
        %v1772 = vpack.c.b16 %v1733, %v1732
        %v1773 = vpack.c.b16 %v1735, %v1734
        %v1774 = vpack.c.b16 %v1737, %v1736
        %v1775 = vpack.c.b16 %v1739, %v1738
        %v1776 = vpack.c.b16 %v1741, %v1740
        %v1777 = vpack.c.b16 %v1743, %v1742
        %v1778 = vpack.c.b16 %v1745, %v1744
        %v1779 = vpack.c.b16 %v1747, %v1746
        %v1780 = vpack.c.b16 %v1749, %v1748
        %v1781 = vpack.c.b16 %v1751, %v1750
        %v1782 = vpack.c.b16 %v1753, %v1752
        %v1783 = vpack.c.b16 %v1755, %v1754
        %v1784 = vpack.c.b16 %v1757, %v1756
        %v1785 = vpack.c.b16 %v1759, %v1758
        %v1786 = vpack.c.b16 %v1761, %v1760
        %v1787 = vpack.c.b16 %v1763, %v1762
        %1812 = vmatprep.subr.bf16.mxu0 0
        %1813 = vmatpush1.bf16.msra.mxu0 %v1764
        %1814 = vmatprep.subr.bf16.mxu0 0
        %1815 = vmatpush1.bf16.msra.mxu0 %v1765
        %1816 = vmatprep.subr.bf16.mxu0 0
        %1817 = vmatpush1.bf16.msra.mxu0 %v1766
        %1818 = vmatprep.subr.bf16.mxu0 0
        %1819 = vmatpush1.bf16.msra.mxu0 %v1767
        %1820 = vmatprep.subr.bf16.mxu0 0
        %1821 = vmatpush1.bf16.msra.mxu0 %v1768
        %1822 = vmatprep.subr.bf16.mxu0 0
        %1823 = vmatpush1.bf16.msra.mxu0 %v1769
        %1824 = vmatprep.subr.bf16.mxu0 0
        %1825 = vmatpush1.bf16.msra.mxu0 %v1770
        %1826 = vmatprep.subr.bf16.mxu0 0
        %1827 = vmatpush1.bf16.msra.mxu0 %v1771
        %1828 = vmatprep.subr.bf16.mxu0 0
        %1829 = vmatpush1.bf16.msra.mxu0 %v1772
        %1830 = vmatprep.subr.bf16.mxu0 0
        %1831 = vmatpush1.bf16.msra.mxu0 %v1773
        %1832 = vmatprep.subr.bf16.mxu0 0
        %1833 = vmatpush1.bf16.msra.mxu0 %v1774
        %1834 = vmatprep.subr.bf16.mxu0 0
        %1835 = vmatpush1.bf16.msra.mxu0 %v1775
        %1836 = vmatprep.subr.bf16.mxu0 0
        %1837 = vmatpush1.bf16.msra.mxu0 %v1776
        %1838 = vmatprep.subr.bf16.mxu0 0
        %1839 = vmatpush1.bf16.msra.mxu0 %v1777
        %1840 = vmatprep.subr.bf16.mxu0 0
        %1841 = vmatpush1.bf16.msra.mxu0 %v1778
        %1842 = vmatprep.subr.bf16.mxu0 0
        %1843 = vmatpush1.bf16.msra.mxu0 %v1779
        %1844 = vmatprep.mubr.bf16.mxu0 %v556
        %1845 = vmatmul.mubr.bf16.gmra.mrb[0].mxu0 %v515
        %v1846 = vpop.f32.mrb[0].mxu0
        %v1847 = vadd.f32 0.0, %v1846
        %v1848 = vpop.f32.mrb[0].mxu0
        %v1849 = vpop.f32.mrb[0].mxu0
        %v1850 = vadd.f32 0.0, %v1849
        %v1851 = vpop.f32.mrb[0].mxu0
        %1852 = vmatprep.mubr.bf16.mxu0 %v564
        %1853 = vmatmul.mubr.bf16.gmra.mrb[0].mxu0 %v516
        %v1854 = vpop.f32.mrb[0].mxu0
        %v1855 = vadd.f32 0.0, %v1854
        %v1856 = vpop.f32.mrb[0].mxu0
        %v1857 = vpop.f32.mrb[0].mxu0
        %v1858 = vadd.f32 0.0, %v1857
        %v1859 = vpop.f32.mrb[0].mxu0
        %1860 = vmatprep.mubr.bf16.mxu0 %v572
        %1861 = vmatmul.mubr.bf16.gmra.mrb[0].mxu0 %v517
        %v1862 = vpop.f32.mrb[0].mxu0
        %v1863 = vadd.f32 0.0, %v1862
        %v1864 = vpop.f32.mrb[0].mxu0
        %v1865 = vpop.f32.mrb[0].mxu0
        %v1866 = vadd.f32 0.0, %v1865
        %v1867 = vpop.f32.mrb[0].mxu0
        %1868 = vmatprep.mubr.bf16.mxu0 %v580
        %1869 = vmatmul.mubr.bf16.gmra.mrb[0].mxu0 %v518
        %v1870 = vpop.f32.mrb[0].mxu0
        %v1871 = vadd.f32 0.0, %v1870
        %v1872 = vpop.f32.mrb[0].mxu0
        %v1873 = vpop.f32.mrb[0].mxu0
        %v1874 = vadd.f32 0.0, %v1873
        %v1875 = vpop.f32.mrb[0].mxu0
        %1876 = vmatprep.mubr.bf16.mxu0 %v588
        %1877 = vmatmul.mubr.bf16.gmra.mrb[0].mxu0 %v519
        %v1878 = vpop.f32.mrb[0].mxu0
        %v1879 = vadd.f32 0.0, %v1878
        %v1880 = vpop.f32.mrb[0].mxu0
        %v1881 = vpop.f32.mrb[0].mxu0
        %v1882 = vadd.f32 0.0, %v1881
        %v1883 = vpop.f32.mrb[0].mxu0
        %1884 = vmatprep.mubr.bf16.mxu0 %v596
        %1885 = vmatmul.mubr.bf16.gmra.mrb[0].mxu0 %v520
        %v1886 = vpop.f32.mrb[0].mxu0
        %v1887 = vadd.f32 0.0, %v1886
        %v1888 = vpop.f32.mrb[0].mxu0
        %v1889 = vpop.f32.mrb[0].mxu0
        %v1890 = vadd.f32 0.0, %v1889
        %v1891 = vpop.f32.mrb[0].mxu0
        %1892 = vmatprep.mubr.bf16.mxu0 %v604
        %1893 = vmatmul.mubr.bf16.gmra.mrb[0].mxu0 %v521
        %v1894 = vpop.f32.mrb[0].mxu0
        %v1895 = vadd.f32 0.0, %v1894
        %v1896 = vpop.f32.mrb[0].mxu0
        %v1897 = vpop.f32.mrb[0].mxu0
        %v1898 = vadd.f32 0.0, %v1897
        %v1899 = vpop.f32.mrb[0].mxu0
        %1900 = vmatprep.mubr.bf16.mxu0 %v612
        %1901 = vmatmul.mubr.bf16.gmra.mrb[0].mxu0 %v522
        %v1902 = vpop.f32.mrb[0].mxu0
        %v1903 = vadd.f32 0.0, %v1902
        %v1904 = vpop.f32.mrb[0].mxu0
        %v1905 = vpop.f32.mrb[0].mxu0
        %v1906 = vadd.f32 0.0, %v1905
        %v1907 = vpop.f32.mrb[0].mxu0
        %1908 = vmatprep.mubr.bf16.mxu0 %v620
        %1909 = vmatmul.mubr.bf16.gmra.mrb[0].mxu0 %v523
        %v1910 = vpop.f32.mrb[0].mxu0
        %v1911 = vadd.f32 0.0, %v1910
        %v1912 = vpop.f32.mrb[0].mxu0
        %v1913 = vpop.f32.mrb[0].mxu0
        %v1914 = vadd.f32 0.0, %v1913
        %v1915 = vpop.f32.mrb[0].mxu0
        %1916 = vmatprep.mubr.bf16.mxu0 %v628
        %1917 = vmatmul.mubr.bf16.gmra.mrb[0].mxu0 %v524
        %v1918 = vpop.f32.mrb[0].mxu0
        %v1919 = vadd.f32 0.0, %v1918
        %v1920 = vpop.f32.mrb[0].mxu0
        %v1921 = vpop.f32.mrb[0].mxu0
        %v1922 = vadd.f32 0.0, %v1921
        %v1923 = vpop.f32.mrb[0].mxu0
        %1924 = vmatprep.mubr.bf16.mxu0 %v747
        %1925 = vmatmul.mubr.bf16.gmra.mrb[0].mxu0 %v525
        %v1926 = vpop.f32.mrb[0].mxu0
        %v1927 = vadd.f32 0.0, %v1926
        %v1928 = vpop.f32.mrb[0].mxu0
        %v1929 = vpop.f32.mrb[0].mxu0
        %v1930 = vadd.f32 0.0, %v1929
        %v1931 = vpop.f32.mrb[0].mxu0
        %1932 = vmatprep.mubr.bf16.mxu0 %v1613
        %1933 = vmatmul.mubr.bf16.gmra.mrb[0].mxu0 %v526
        %v1934 = vpop.f32.mrb[0].mxu0
        %v1935 = vadd.f32 0.0, %v1934
        %v1936 = vpop.f32.mrb[0].mxu0
        %v1937 = vpop.f32.mrb[0].mxu0
        %v1938 = vadd.f32 0.0, %v1937
        %v1939 = vpop.f32.mrb[0].mxu0
        %1940 = vdwg.mxu0
        %1941 = vmatprep.subr.bf16.mxu0 0
        %1942 = vmatpush1.bf16.msra.mxu0 %v1780
        %1943 = vmatprep.subr.bf16.mxu0 0
        %1944 = vmatpush1.bf16.msra.mxu0 %v1781
        %1945 = vmatprep.subr.bf16.mxu0 0
        %1946 = vmatpush1.bf16.msra.mxu0 %v1782
        %1947 = vmatprep.subr.bf16.mxu0 0
        %1948 = vmatpush1.bf16.msra.mxu0 %v1783
        %1949 = vmatprep.subr.bf16.mxu0 0
        %1950 = vmatpush1.bf16.msra.mxu0 %v1784
        %1951 = vmatprep.subr.bf16.mxu0 0
        %1952 = vmatpush1.bf16.msra.mxu0 %v1785
        %1953 = vmatprep.subr.bf16.mxu0 0
        %1954 = vmatpush1.bf16.msra.mxu0 %v1786
        %1955 = vmatprep.subr.bf16.mxu0 0
        %1956 = vmatpush1.bf16.msra.mxu0 %v1787
        %1957 = vmatprep.subr.bf16.mxu0 0
        %1958 = vmatpush1.bf16.msra.mxu0 0
        %1959 = vmatprep.subr.bf16.mxu0 0
        %1960 = vmatpush1.bf16.msra.mxu0 0
        %1961 = vmatprep.subr.bf16.mxu0 0
        %1962 = vmatpush1.bf16.msra.mxu0 0
        %1963 = vmatprep.subr.bf16.mxu0 0
        %1964 = vmatpush1.bf16.msra.mxu0 0
        %1965 = vmatprep.subr.bf16.mxu0 0
        %1966 = vmatpush1.bf16.msra.mxu0 0
        %1967 = vmatprep.subr.bf16.mxu0 0
        %1968 = vmatpush1.bf16.msra.mxu0 0
        %1969 = vmatprep.subr.bf16.mxu0 0
        %1970 = vmatpush1.bf16.msra.mxu0 0
        %1971 = vmatprep.subr.bf16.mxu0 0
        %1972 = vmatpush1.bf16.msra.mxu0 0
        %1973 = vmatprep.mubr.bf16.mxu0 0
        %1974 = vmatmul.mubr.bf16.gmra.mrb[0].mxu0 %v661
        %v1975 = vpop.f32.mrb[0].mxu0
        %v1976 = vadd.f32 %v1847, %v1975
        %v1977 = vpop.f32.mrb[0].mxu0
        %v1978 = vpop.f32.mrb[0].mxu0
        %v1979 = vadd.f32 %v1850, %v1978
        %v1980 = vpop.f32.mrb[0].mxu0
        %1981 = vmatprep.mubr.bf16.mxu0 0
        %1982 = vmatmul.mubr.bf16.gmra.mrb[0].mxu0 %v663
        %v1983 = vpop.f32.mrb[0].mxu0
        %v1984 = vadd.f32 %v1855, %v1983
        %v1985 = vpop.f32.mrb[0].mxu0
        %v1986 = vpop.f32.mrb[0].mxu0
        %v1987 = vadd.f32 %v1858, %v1986
        %v1988 = vpop.f32.mrb[0].mxu0
        %1989 = vmatprep.mubr.bf16.mxu0 0
        %1990 = vmatmul.mubr.bf16.gmra.mrb[0].mxu0 %v665
        %v1991 = vpop.f32.mrb[0].mxu0
        %v1992 = vadd.f32 %v1863, %v1991
        %v1993 = vpop.f32.mrb[0].mxu0
        %v1994 = vpop.f32.mrb[0].mxu0
        %v1995 = vadd.f32 %v1866, %v1994
        %v1996 = vpop.f32.mrb[0].mxu0
        %1997 = vmatprep.mubr.bf16.mxu0 0
        %1998 = vmatmul.mubr.bf16.gmra.mrb[0].mxu0 %v667
        %v1999 = vpop.f32.mrb[0].mxu0
        %v2000 = vadd.f32 %v1871, %v1999
        %v2001 = vpop.f32.mrb[0].mxu0
        %v2002 = vpop.f32.mrb[0].mxu0
        %v2003 = vadd.f32 %v1874, %v2002
        %v2004 = vpop.f32.mrb[0].mxu0
        %2005 = vmatprep.mubr.bf16.mxu0 0
        %2006 = vmatmul.mubr.bf16.gmra.mrb[0].mxu0 %v669
        %v2007 = vpop.f32.mrb[0].mxu0
        %v2008 = vadd.f32 %v1879, %v2007
        %v2009 = vpop.f32.mrb[0].mxu0
        %v2010 = vpop.f32.mrb[0].mxu0
        %v2011 = vadd.f32 %v1882, %v2010
        %v2012 = vpop.f32.mrb[0].mxu0
        %2013 = vmatprep.mubr.bf16.mxu0 0
        %2014 = vmatmul.mubr.bf16.gmra.mrb[0].mxu0 %v671
        %v2015 = vpop.f32.mrb[0].mxu0
        %v2016 = vadd.f32 %v1887, %v2015
        %v2017 = vpop.f32.mrb[0].mxu0
        %v2018 = vpop.f32.mrb[0].mxu0
        %v2019 = vadd.f32 %v1890, %v2018
        %v2020 = vpop.f32.mrb[0].mxu0
        %2021 = vmatprep.mubr.bf16.mxu0 0
        %2022 = vmatmul.mubr.bf16.gmra.mrb[0].mxu0 %v673
        %v2023 = vpop.f32.mrb[0].mxu0
        %v2024 = vadd.f32 %v1895, %v2023
        %v2025 = vpop.f32.mrb[0].mxu0
        %v2026 = vpop.f32.mrb[0].mxu0
        %v2027 = vadd.f32 %v1898, %v2026
        %v2028 = vpop.f32.mrb[0].mxu0
        %2029 = vmatprep.mubr.bf16.mxu0 0
        %2030 = vmatmul.mubr.bf16.gmra.mrb[0].mxu0 %v675
        %v2031 = vpop.f32.mrb[0].mxu0
        %v2032 = vadd.f32 %v1903, %v2031
        %v2033 = vpop.f32.mrb[0].mxu0
        %v2034 = vpop.f32.mrb[0].mxu0
        %v2035 = vadd.f32 %v1906, %v2034
        %v2036 = vpop.f32.mrb[0].mxu0
        %2037 = vmatprep.mubr.bf16.mxu0 0
        %2038 = vmatmul.mubr.bf16.gmra.mrb[0].mxu0 %v677
        %v2039 = vpop.f32.mrb[0].mxu0
        %v2040 = vadd.f32 %v1911, %v2039
        %v2041 = vpop.f32.mrb[0].mxu0
        %v2042 = vpop.f32.mrb[0].mxu0
        %v2043 = vadd.f32 %v1914, %v2042
        %v2044 = vpop.f32.mrb[0].mxu0
        %2045 = vmatprep.mubr.bf16.mxu0 0
        %2046 = vmatmul.mubr.bf16.gmra.mrb[0].mxu0 %v679
        %v2047 = vpop.f32.mrb[0].mxu0
        %v2048 = vadd.f32 %v1919, %v2047
        %v2049 = vpop.f32.mrb[0].mxu0
        %v2050 = vpop.f32.mrb[0].mxu0
        %v2051 = vadd.f32 %v1922, %v2050
        %v2052 = vpop.f32.mrb[0].mxu0
        %2053 = vmatprep.mubr.bf16.mxu0 0
        %2054 = vmatmul.mubr.bf16.gmra.mrb[0].mxu0 %v751
        %v2055 = vpop.f32.mrb[0].mxu0
        %v2056 = vadd.f32 %v1927, %v2055
        %v2057 = vpop.f32.mrb[0].mxu0
        %v2058 = vpop.f32.mrb[0].mxu0
        %v2059 = vadd.f32 %v1930, %v2058
        %v2060 = vpop.f32.mrb[0].mxu0
        %2061 = vmatprep.mubr.bf16.mxu0 0
        %2062 = vmatmul.mubr.bf16.gmra.mrb[0].mxu0 %v1617
        %v2063 = vpop.f32.mrb[0].mxu0
        %v2064 = vadd.f32 %v1935, %v2063
        %v2065 = vpop.f32.mrb[0].mxu0
        %v2066 = vpop.f32.mrb[0].mxu0
        %v2067 = vadd.f32 %v1938, %v2066
        %v2068 = vpop.f32.mrb[0].mxu0
        %2069 = vdwg.mxu0
        %v2070 = vadd.f32 %v1512, %v1976
        %v2071 = vadd.f32 %v1515, %v1979
        %v2072 = vadd.f32 %v1520, %v1984
        %v2073 = vadd.f32 %v1523, %v1987
        %v2074 = vadd.f32 %v1528, %v1992
        %v2075 = vadd.f32 %v1531, %v1995
        %v2076 = vadd.f32 %v1536, %v2000
        %v2077 = vadd.f32 %v1539, %v2003
        %v2078 = vadd.f32 %v1544, %v2008
        %v2079 = vadd.f32 %v1547, %v2011
        %v2080 = vadd.f32 %v1552, %v2016
        %v2081 = vadd.f32 %v1555, %v2019
        %v2082 = vadd.f32 %v1560, %v2024
        %v2083 = vadd.f32 %v1563, %v2027
        %v2084 = vadd.f32 %v1568, %v2032
        %v2085 = vadd.f32 %v1571, %v2035
        %v2086 = vadd.f32 %v1576, %v2040
        %v2087 = vadd.f32 %v1579, %v2043
        %v2088 = vadd.f32 %v1584, %v2048
        %v2089 = vadd.f32 %v1587, %v2051
        %v2090 = vadd.f32 %v1592, %v2056
        %v2091 = vadd.f32 %v1595, %v2059
        %v2092 = vadd.f32 %v1600, %v2064
        %v2093 = vadd.f32 %v1603, %v2067
        %v2094 = vlaneseq
        %v2095 = vshrl.u32 %v2094, 7
        %v2096 = vadd.s32 %v2095, 8
        %v2097 = vadd.s32 %v2095, 16
        %v2098 = vadd.s32 %v2095, 24
        %v2099 = vadd.s32 %v2095, 32
        %v2100 = vadd.s32 %v2095, 40
        %v2101 = vadd.s32 %v2095, 48
        %v2102 = vadd.s32 %v2095, 56
        %v2103 = vadd.s32 %v2095, 64
        %v2104 = vadd.s32 %v2095, 72
        %v2105 = vadd.s32 %v2095, 80
        %v2106 = vadd.s32 %v2095, 88
        %v2107 = vadd.s32 %v2095, 96
        %v2108 = vadd.s32 %v2095, 104
        %v2109 = vadd.s32 %v2095, 112
        %v2110 = vadd.s32 %v2095, 120
        %v2111 = vadd.s32 %v2095, 128
        %v2112 = vadd.s32 %v2095, 136
        %v2113 = vadd.s32 %v2095, 144
        %v2114 = vadd.s32 %v2095, 152
        %v2115 = vadd.s32 %v2095, 160
        %v2116 = vadd.s32 %v2095, 168
        %v2117 = vadd.s32 %v2095, 176
        %v2118 = vadd.s32 %v2095, 184
        %vm2119 = vcmp.lt.s32.totalorder %v2095, 0
        %v2120 = vsub.s32 0, %v2095
        %v2121 = vsel %vm2119, %v2120, %v2095
        %v2122 = vshrl.u32 %v2121, 4
        %v2123 = vand.u32 %v2121, 15
        %v2124 = vsub.s32 0, %v2123
        %v2125 = vsel %vm2119, %v2124, %v2123
        %vm2126 = vcmp.lt.s32.totalorder %v2096, 0
        %v2127 = vsub.s32 0, %v2096
        %v2128 = vsel %vm2126, %v2127, %v2096
        %v2129 = vshrl.u32 %v2128, 4
        %v2130 = vand.u32 %v2128, 15
        %v2131 = vsub.s32 0, %v2130
        %v2132 = vsel %vm2126, %v2131, %v2130
        %vm2133 = vcmp.lt.s32.totalorder %v2097, 0
        %v2134 = vsub.s32 0, %v2097
        %v2135 = vsel %vm2133, %v2134, %v2097
        %v2136 = vshrl.u32 %v2135, 4
        %v2137 = vand.u32 %v2135, 15
        %v2138 = vsub.s32 0, %v2137
        %v2139 = vsel %vm2133, %v2138, %v2137
        %vm2140 = vcmp.lt.s32.totalorder %v2098, 0
        %v2141 = vsub.s32 0, %v2098
        %v2142 = vsel %vm2140, %v2141, %v2098
        %v2143 = vshrl.u32 %v2142, 4
        %v2144 = vand.u32 %v2142, 15
        %v2145 = vsub.s32 0, %v2144
        %v2146 = vsel %vm2140, %v2145, %v2144
        %vm2147 = vcmp.lt.s32.totalorder %v2099, 0
        %v2148 = vsub.s32 0, %v2099
        %v2149 = vsel %vm2147, %v2148, %v2099
        %v2150 = vshrl.u32 %v2149, 4
        %v2151 = vand.u32 %v2149, 15
        %v2152 = vsub.s32 0, %v2151
        %v2153 = vsel %vm2147, %v2152, %v2151
        %vm2154 = vcmp.lt.s32.totalorder %v2100, 0
        %v2155 = vsub.s32 0, %v2100
        %v2156 = vsel %vm2154, %v2155, %v2100
        %v2157 = vshrl.u32 %v2156, 4
        %v2158 = vand.u32 %v2156, 15
        %v2159 = vsub.s32 0, %v2158
        %v2160 = vsel %vm2154, %v2159, %v2158
        %vm2161 = vcmp.lt.s32.totalorder %v2101, 0
        %v2162 = vsub.s32 0, %v2101
        %v2163 = vsel %vm2161, %v2162, %v2101
        %v2164 = vshrl.u32 %v2163, 4
        %v2165 = vand.u32 %v2163, 15
        %v2166 = vsub.s32 0, %v2165
        %v2167 = vsel %vm2161, %v2166, %v2165
        %vm2168 = vcmp.lt.s32.totalorder %v2102, 0
        %v2169 = vsub.s32 0, %v2102
        %v2170 = vsel %vm2168, %v2169, %v2102
        %v2171 = vshrl.u32 %v2170, 4
        %v2172 = vand.u32 %v2170, 15
        %v2173 = vsub.s32 0, %v2172
        %v2174 = vsel %vm2168, %v2173, %v2172
        %vm2175 = vcmp.lt.s32.totalorder %v2103, 0
        %v2176 = vsub.s32 0, %v2103
        %v2177 = vsel %vm2175, %v2176, %v2103
        %v2178 = vshrl.u32 %v2177, 4
        %v2179 = vand.u32 %v2177, 15
        %v2180 = vsub.s32 0, %v2179
        %v2181 = vsel %vm2175, %v2180, %v2179
        %vm2182 = vcmp.lt.s32.totalorder %v2104, 0
        %v2183 = vsub.s32 0, %v2104
        %v2184 = vsel %vm2182, %v2183, %v2104
        %v2185 = vshrl.u32 %v2184, 4
        %v2186 = vand.u32 %v2184, 15
        %v2187 = vsub.s32 0, %v2186
        %v2188 = vsel %vm2182, %v2187, %v2186
        %vm2189 = vcmp.lt.s32.totalorder %v2105, 0
        %v2190 = vsub.s32 0, %v2105
        %v2191 = vsel %vm2189, %v2190, %v2105
        %v2192 = vshrl.u32 %v2191, 4
        %v2193 = vand.u32 %v2191, 15
        %v2194 = vsub.s32 0, %v2193
        %v2195 = vsel %vm2189, %v2194, %v2193
        %vm2196 = vcmp.lt.s32.totalorder %v2106, 0
        %v2197 = vsub.s32 0, %v2106
        %v2198 = vsel %vm2196, %v2197, %v2106
        %v2199 = vshrl.u32 %v2198, 4
        %v2200 = vand.u32 %v2198, 15
        %v2201 = vsub.s32 0, %v2200
        %v2202 = vsel %vm2196, %v2201, %v2200
        %vm2203 = vcmp.lt.s32.totalorder %v2107, 0
        %v2204 = vsub.s32 0, %v2107
        %v2205 = vsel %vm2203, %v2204, %v2107
        %v2206 = vshrl.u32 %v2205, 4
        %v2207 = vand.u32 %v2205, 15
        %v2208 = vsub.s32 0, %v2207
        %v2209 = vsel %vm2203, %v2208, %v2207
        %vm2210 = vcmp.lt.s32.totalorder %v2108, 0
        %v2211 = vsub.s32 0, %v2108
        %v2212 = vsel %vm2210, %v2211, %v2108
        %v2213 = vshrl.u32 %v2212, 4
        %v2214 = vand.u32 %v2212, 15
        %v2215 = vsub.s32 0, %v2214
        %v2216 = vsel %vm2210, %v2215, %v2214
        %vm2217 = vcmp.lt.s32.totalorder %v2109, 0
        %v2218 = vsub.s32 0, %v2109
        %v2219 = vsel %vm2217, %v2218, %v2109
        %v2220 = vshrl.u32 %v2219, 4
        %v2221 = vand.u32 %v2219, 15
        %v2222 = vsub.s32 0, %v2221
        %v2223 = vsel %vm2217, %v2222, %v2221
        %vm2224 = vcmp.lt.s32.totalorder %v2110, 0
        %v2225 = vsub.s32 0, %v2110
        %v2226 = vsel %vm2224, %v2225, %v2110
        %v2227 = vshrl.u32 %v2226, 4
        %v2228 = vand.u32 %v2226, 15
        %v2229 = vsub.s32 0, %v2228
        %v2230 = vsel %vm2224, %v2229, %v2228
        %vm2231 = vcmp.lt.s32.totalorder %v2111, 0
        %v2232 = vsub.s32 0, %v2111
        %v2233 = vsel %vm2231, %v2232, %v2111
        %v2234 = vshrl.u32 %v2233, 4
        %v2235 = vand.u32 %v2233, 15
        %v2236 = vsub.s32 0, %v2235
        %v2237 = vsel %vm2231, %v2236, %v2235
        %vm2238 = vcmp.lt.s32.totalorder %v2112, 0
        %v2239 = vsub.s32 0, %v2112
        %v2240 = vsel %vm2238, %v2239, %v2112
        %v2241 = vshrl.u32 %v2240, 4
        %v2242 = vand.u32 %v2240, 15
        %v2243 = vsub.s32 0, %v2242
        %v2244 = vsel %vm2238, %v2243, %v2242
        %vm2245 = vcmp.lt.s32.totalorder %v2113, 0
        %v2246 = vsub.s32 0, %v2113
        %v2247 = vsel %vm2245, %v2246, %v2113
        %v2248 = vshrl.u32 %v2247, 4
        %v2249 = vand.u32 %v2247, 15
        %v2250 = vsub.s32 0, %v2249
        %v2251 = vsel %vm2245, %v2250, %v2249
        %vm2252 = vcmp.lt.s32.totalorder %v2114, 0
        %v2253 = vsub.s32 0, %v2114
        %v2254 = vsel %vm2252, %v2253, %v2114
        %v2255 = vshrl.u32 %v2254, 4
        %v2256 = vand.u32 %v2254, 15
        %v2257 = vsub.s32 0, %v2256
        %v2258 = vsel %vm2252, %v2257, %v2256
        %vm2259 = vcmp.lt.s32.totalorder %v2115, 0
        %v2260 = vsub.s32 0, %v2115
        %v2261 = vsel %vm2259, %v2260, %v2115
        %v2262 = vshrl.u32 %v2261, 4
        %v2263 = vand.u32 %v2261, 15
        %v2264 = vsub.s32 0, %v2263
        %v2265 = vsel %vm2259, %v2264, %v2263
        %vm2266 = vcmp.lt.s32.totalorder %v2116, 0
        %v2267 = vsub.s32 0, %v2116
        %v2268 = vsel %vm2266, %v2267, %v2116
        %v2269 = vshrl.u32 %v2268, 4
        %v2270 = vand.u32 %v2268, 15
        %v2271 = vsub.s32 0, %v2270
        %v2272 = vsel %vm2266, %v2271, %v2270
        %vm2273 = vcmp.lt.s32.totalorder %v2117, 0
        %v2274 = vsub.s32 0, %v2117
        %v2275 = vsel %vm2273, %v2274, %v2117
        %v2276 = vshrl.u32 %v2275, 4
        %v2277 = vand.u32 %v2275, 15
        %v2278 = vsub.s32 0, %v2277
        %v2279 = vsel %vm2273, %v2278, %v2277
        %vm2280 = vcmp.lt.s32.totalorder %v2118, 0
        %v2281 = vsub.s32 0, %v2118
        %v2282 = vsel %vm2280, %v2281, %v2118
        %v2283 = vshrl.u32 %v2282, 4
        %v2284 = vand.u32 %v2282, 15
        %v2285 = vsub.s32 0, %v2284
        %v2286 = vsel %vm2280, %v2285, %v2284
        %vm2287 = vcmp.ne.s32.totalorder %v2125, 0
        %vm2288 = vcmp.ne.s32.totalorder %v2132, 0
        %vm2289 = vcmp.ne.s32.totalorder %v2139, 0
        %vm2290 = vcmp.ne.s32.totalorder %v2146, 0
        %vm2291 = vcmp.ne.s32.totalorder %v2153, 0
        %vm2292 = vcmp.ne.s32.totalorder %v2160, 0
        %vm2293 = vcmp.ne.s32.totalorder %v2167, 0
        %vm2294 = vcmp.ne.s32.totalorder %v2174, 0
        %vm2295 = vcmp.ne.s32.totalorder %v2181, 0
        %vm2296 = vcmp.ne.s32.totalorder %v2188, 0
        %vm2297 = vcmp.ne.s32.totalorder %v2195, 0
        %vm2298 = vcmp.ne.s32.totalorder %v2202, 0
        %vm2299 = vcmp.ne.s32.totalorder %v2209, 0
        %vm2300 = vcmp.ne.s32.totalorder %v2216, 0
        %vm2301 = vcmp.ne.s32.totalorder %v2223, 0
        %vm2302 = vcmp.ne.s32.totalorder %v2230, 0
        %vm2303 = vcmp.ne.s32.totalorder %v2237, 0
        %vm2304 = vcmp.ne.s32.totalorder %v2244, 0
        %vm2305 = vcmp.ne.s32.totalorder %v2251, 0
        %vm2306 = vcmp.ne.s32.totalorder %v2258, 0
        %vm2307 = vcmp.ne.s32.totalorder %v2265, 0
        %vm2308 = vcmp.ne.s32.totalorder %v2272, 0
        %vm2309 = vcmp.ne.s32.totalorder %v2279, 0
        %vm2310 = vcmp.ne.s32.totalorder %v2286, 0
        %vm2311 = vcmp.lt.s32.totalorder %v2125, 0
        %vm2312 = vcmp.lt.s32.totalorder %v2132, 0
        %vm2313 = vcmp.lt.s32.totalorder %v2139, 0
        %vm2314 = vcmp.lt.s32.totalorder %v2146, 0
        %vm2315 = vcmp.lt.s32.totalorder %v2153, 0
        %vm2316 = vcmp.lt.s32.totalorder %v2160, 0
        %vm2317 = vcmp.lt.s32.totalorder %v2167, 0
        %vm2318 = vcmp.lt.s32.totalorder %v2174, 0
        %vm2319 = vcmp.lt.s32.totalorder %v2181, 0
        %vm2320 = vcmp.lt.s32.totalorder %v2188, 0
        %vm2321 = vcmp.lt.s32.totalorder %v2195, 0
        %vm2322 = vcmp.lt.s32.totalorder %v2202, 0
        %vm2323 = vcmp.lt.s32.totalorder %v2209, 0
        %vm2324 = vcmp.lt.s32.totalorder %v2216, 0
        %vm2325 = vcmp.lt.s32.totalorder %v2223, 0
        %vm2326 = vcmp.lt.s32.totalorder %v2230, 0
        %vm2327 = vcmp.lt.s32.totalorder %v2237, 0
        %vm2328 = vcmp.lt.s32.totalorder %v2244, 0
        %vm2329 = vcmp.lt.s32.totalorder %v2251, 0
        %vm2330 = vcmp.lt.s32.totalorder %v2258, 0
        %vm2331 = vcmp.lt.s32.totalorder %v2265, 0
        %vm2332 = vcmp.lt.s32.totalorder %v2272, 0
        %vm2333 = vcmp.lt.s32.totalorder %v2279, 0
        %vm2334 = vcmp.lt.s32.totalorder %v2286, 0
        %vm2335 = vmand %vm2311, %vm2287
        %vm2336 = vmand %vm2312, %vm2288
        %vm2337 = vmand %vm2313, %vm2289
        %vm2338 = vmand %vm2314, %vm2290
        %vm2339 = vmand %vm2315, %vm2291
        %vm2340 = vmand %vm2316, %vm2292
        %vm2341 = vmand %vm2317, %vm2293
        %vm2342 = vmand %vm2318, %vm2294
        %vm2343 = vmand %vm2319, %vm2295
        %vm2344 = vmand %vm2320, %vm2296
        %vm2345 = vmand %vm2321, %vm2297
        %vm2346 = vmand %vm2322, %vm2298
        %vm2347 = vmand %vm2323, %vm2299
        %vm2348 = vmand %vm2324, %vm2300
        %vm2349 = vmand %vm2325, %vm2301
        %vm2350 = vmand %vm2326, %vm2302
        %vm2351 = vmand %vm2327, %vm2303
        %vm2352 = vmand %vm2328, %vm2304
        %vm2353 = vmand %vm2329, %vm2305
        %vm2354 = vmand %vm2330, %vm2306
        %vm2355 = vmand %vm2331, %vm2307
        %vm2356 = vmand %vm2332, %vm2308
        %vm2357 = vmand %vm2333, %vm2309
        %vm2358 = vmand %vm2334, %vm2310
        %v2359 = vadd.s32 %v2125, 16
        %v2360 = vadd.s32 %v2132, 16
        %v2361 = vadd.s32 %v2139, 16
        %v2362 = vadd.s32 %v2146, 16
        %v2363 = vadd.s32 %v2153, 16
        %v2364 = vadd.s32 %v2160, 16
        %v2365 = vadd.s32 %v2167, 16
        %v2366 = vadd.s32 %v2174, 16
        %v2367 = vadd.s32 %v2181, 16
        %v2368 = vadd.s32 %v2188, 16
        %v2369 = vadd.s32 %v2195, 16
        %v2370 = vadd.s32 %v2202, 16
        %v2371 = vadd.s32 %v2209, 16
        %v2372 = vadd.s32 %v2216, 16
        %v2373 = vadd.s32 %v2223, 16
        %v2374 = vadd.s32 %v2230, 16
        %v2375 = vadd.s32 %v2237, 16
        %v2376 = vadd.s32 %v2244, 16
        %v2377 = vadd.s32 %v2251, 16
        %v2378 = vadd.s32 %v2258, 16
        %v2379 = vadd.s32 %v2265, 16
        %v2380 = vadd.s32 %v2272, 16
        %v2381 = vadd.s32 %v2279, 16
        %v2382 = vadd.s32 %v2286, 16
        %v2383 = vsel %vm2335, %v2359, %v2125
        %v2384 = vsel %vm2336, %v2360, %v2132
        %v2385 = vsel %vm2337, %v2361, %v2139
        %v2386 = vsel %vm2338, %v2362, %v2146
        %v2387 = vsel %vm2339, %v2363, %v2153
        %v2388 = vsel %vm2340, %v2364, %v2160
        %v2389 = vsel %vm2341, %v2365, %v2167
        %v2390 = vsel %vm2342, %v2366, %v2174
        %v2391 = vsel %vm2343, %v2367, %v2181
        %v2392 = vsel %vm2344, %v2368, %v2188
        %v2393 = vsel %vm2345, %v2369, %v2195
        %v2394 = vsel %vm2346, %v2370, %v2202
        %v2395 = vsel %vm2347, %v2371, %v2209
        %v2396 = vsel %vm2348, %v2372, %v2216
        %v2397 = vsel %vm2349, %v2373, %v2223
        %v2398 = vsel %vm2350, %v2374, %v2230
        %v2399 = vsel %vm2351, %v2375, %v2237
        %v2400 = vsel %vm2352, %v2376, %v2244
        %v2401 = vsel %vm2353, %v2377, %v2251
        %v2402 = vsel %vm2354, %v2378, %v2258
        %v2403 = vsel %vm2355, %v2379, %v2265
        %v2404 = vsel %vm2356, %v2380, %v2272
        %v2405 = vsel %vm2357, %v2381, %v2279
        %v2406 = vsel %vm2358, %v2382, %v2286
        %vm2407 = vcmp.lt.s32.totalorder %v2383, 12
        %vm2408 = vcmp.lt.s32.totalorder %v2384, 12
        %vm2409 = vcmp.lt.s32.totalorder %v2385, 12
        %vm2410 = vcmp.lt.s32.totalorder %v2386, 12
        %vm2411 = vcmp.lt.s32.totalorder %v2387, 12
        %vm2412 = vcmp.lt.s32.totalorder %v2388, 12
        %vm2413 = vcmp.lt.s32.totalorder %v2389, 12
        %vm2414 = vcmp.lt.s32.totalorder %v2390, 12
        %vm2415 = vcmp.lt.s32.totalorder %v2391, 12
        %vm2416 = vcmp.lt.s32.totalorder %v2392, 12
        %vm2417 = vcmp.lt.s32.totalorder %v2393, 12
        %vm2418 = vcmp.lt.s32.totalorder %v2394, 12
        %vm2419 = vcmp.lt.s32.totalorder %v2395, 12
        %vm2420 = vcmp.lt.s32.totalorder %v2396, 12
        %vm2421 = vcmp.lt.s32.totalorder %v2397, 12
        %vm2422 = vcmp.lt.s32.totalorder %v2398, 12
        %vm2423 = vcmp.lt.s32.totalorder %v2399, 12
        %vm2424 = vcmp.lt.s32.totalorder %v2400, 12
        %vm2425 = vcmp.lt.s32.totalorder %v2401, 12
        %vm2426 = vcmp.lt.s32.totalorder %v2402, 12
        %vm2427 = vcmp.lt.s32.totalorder %v2403, 12
        %vm2428 = vcmp.lt.s32.totalorder %v2404, 12
        %vm2429 = vcmp.lt.s32.totalorder %v2405, 12
        %vm2430 = vcmp.lt.s32.totalorder %v2406, 12
        %v2431 = vsel %vm2407, 1, 0
        %v2432 = vsel %vm2408, 1, 0
        %v2433 = vsel %vm2409, 1, 0
        %v2434 = vsel %vm2410, 1, 0
        %v2435 = vsel %vm2411, 1, 0
        %v2436 = vsel %vm2412, 1, 0
        %v2437 = vsel %vm2413, 1, 0
        %v2438 = vsel %vm2414, 1, 0
        %v2439 = vsel %vm2415, 1, 0
        %v2440 = vsel %vm2416, 1, 0
        %v2441 = vsel %vm2417, 1, 0
        %v2442 = vsel %vm2418, 1, 0
        %v2443 = vsel %vm2419, 1, 0
        %v2444 = vsel %vm2420, 1, 0
        %v2445 = vsel %vm2421, 1, 0
        %v2446 = vsel %vm2422, 1, 0
        %v2447 = vsel %vm2423, 1, 0
        %v2448 = vsel %vm2424, 1, 0
        %v2449 = vsel %vm2425, 1, 0
        %v2450 = vsel %vm2426, 1, 0
        %v2451 = vsel %vm2427, 1, 0
        %v2452 = vsel %vm2428, 1, 0
        %v2453 = vsel %vm2429, 1, 0
        %v2454 = vsel %vm2430, 1, 0
        %vm2455 = vcmp.eq.s32.totalorder %v2431, 1
        %vm2456 = vcmp.eq.s32.totalorder %v2432, 1
        %vm2457 = vcmp.eq.s32.totalorder %v2433, 1
        %vm2458 = vcmp.eq.s32.totalorder %v2434, 1
        %vm2459 = vcmp.eq.s32.totalorder %v2435, 1
        %vm2460 = vcmp.eq.s32.totalorder %v2436, 1
        %vm2461 = vcmp.eq.s32.totalorder %v2437, 1
        %vm2462 = vcmp.eq.s32.totalorder %v2438, 1
        %vm2463 = vcmp.eq.s32.totalorder %v2439, 1
        %vm2464 = vcmp.eq.s32.totalorder %v2440, 1
        %vm2465 = vcmp.eq.s32.totalorder %v2441, 1
        %vm2466 = vcmp.eq.s32.totalorder %v2442, 1
        %vm2467 = vcmp.eq.s32.totalorder %v2443, 1
        %vm2468 = vcmp.eq.s32.totalorder %v2444, 1
        %vm2469 = vcmp.eq.s32.totalorder %v2445, 1
        %vm2470 = vcmp.eq.s32.totalorder %v2446, 1
        %vm2471 = vcmp.eq.s32.totalorder %v2447, 1
        %vm2472 = vcmp.eq.s32.totalorder %v2448, 1
        %vm2473 = vcmp.eq.s32.totalorder %v2449, 1
        %vm2474 = vcmp.eq.s32.totalorder %v2450, 1
        %vm2475 = vcmp.eq.s32.totalorder %v2451, 1
        %vm2476 = vcmp.eq.s32.totalorder %v2452, 1
        %vm2477 = vcmp.eq.s32.totalorder %v2453, 1
        %vm2478 = vcmp.eq.s32.totalorder %v2454, 1
        %v2479 = vsel %vm2455, %v2070, 0.0
        %v2480 = vsel %vm2456, %v2071, 0.0
        %v2481 = vsel %vm2457, %v2072, 0.0
        %v2482 = vsel %vm2458, %v2073, 0.0
        %v2483 = vsel %vm2459, %v2074, 0.0
        %v2484 = vsel %vm2460, %v2075, 0.0
        %v2485 = vsel %vm2461, %v2076, 0.0
        %v2486 = vsel %vm2462, %v2077, 0.0
        %v2487 = vsel %vm2463, %v2078, 0.0
        %v2488 = vsel %vm2464, %v2079, 0.0
        %v2489 = vsel %vm2465, %v2080, 0.0
        %v2490 = vsel %vm2466, %v2081, 0.0
        %v2491 = vsel %vm2467, %v2082, 0.0
        %v2492 = vsel %vm2468, %v2083, 0.0
        %v2493 = vsel %vm2469, %v2084, 0.0
        %v2494 = vsel %vm2470, %v2085, 0.0
        %v2495 = vsel %vm2471, %v2086, 0.0
        %v2496 = vsel %vm2472, %v2087, 0.0
        %v2497 = vsel %vm2473, %v2088, 0.0
        %v2498 = vsel %vm2474, %v2089, 0.0
        %v2499 = vsel %vm2475, %v2090, 0.0
        %v2500 = vsel %vm2476, %v2091, 0.0
        %v2501 = vsel %vm2477, %v2092, 0.0
        %v2502 = vsel %vm2478, %v2093, 0.0
        %v2503 = vadd.f32 %v2479, %v2480
        %v2504 = vadd.f32 %v2503, %v2481
        %v2505 = vadd.f32 %v2504, %v2482
        %v2506 = vadd.f32 %v2505, %v2483
        %v2507 = vadd.f32 %v2506, %v2484
        %v2508 = vadd.f32 %v2507, %v2485
        %v2509 = vadd.f32 %v2508, %v2486
        %v2510 = vadd.f32 %v2509, %v2487
        %v2511 = vadd.f32 %v2510, %v2488
        %v2512 = vadd.f32 %v2511, %v2489
        %v2513 = vadd.f32 %v2512, %v2490
        %v2514 = vadd.f32 %v2513, %v2491
        %v2515 = vadd.f32 %v2514, %v2492
        %v2516 = vadd.f32 %v2515, %v2493
        %v2517 = vadd.f32 %v2516, %v2494
        %v2518 = vadd.f32 %v2517, %v2495
        %v2519 = vadd.f32 %v2518, %v2496
        %v2520 = vadd.f32 %v2519, %v2497
        %v2521 = vadd.f32 %v2520, %v2498
        %v2522 = vadd.f32 %v2521, %v2499
        %v2523 = vadd.f32 %v2522, %v2500
        %v2524 = vadd.f32 %v2523, %v2501
        %v2525 = vadd.f32 %v2524, %v2502
        %v2526 = vrot.slane %v2525, 4
        %v2527 = vadd.f32 %v2525, %v2526
        %v2528 = vrot.slane %v2527, 2
        %v2529 = vadd.f32 %v2527, %v2528
        %v2530 = vrot.slane %v2529, 1
        %v2531 = vadd.f32 %v2529, %v2530
        %v2532 = vmul.f32 %v2479, %v2479
        %v2533 = vmul.f32 %v2480, %v2480
        %v2534 = vmul.f32 %v2481, %v2481
        %v2535 = vmul.f32 %v2482, %v2482
        %v2536 = vmul.f32 %v2483, %v2483
        %v2537 = vmul.f32 %v2484, %v2484
        %v2538 = vmul.f32 %v2485, %v2485
        %v2539 = vmul.f32 %v2486, %v2486
        %v2540 = vmul.f32 %v2487, %v2487
        %v2541 = vmul.f32 %v2488, %v2488
        %v2542 = vmul.f32 %v2489, %v2489
        %v2543 = vmul.f32 %v2490, %v2490
        %v2544 = vmul.f32 %v2491, %v2491
        %v2545 = vmul.f32 %v2492, %v2492
        %v2546 = vmul.f32 %v2493, %v2493
        %v2547 = vmul.f32 %v2494, %v2494
        %v2548 = vmul.f32 %v2495, %v2495
        %v2549 = vmul.f32 %v2496, %v2496
        %v2550 = vmul.f32 %v2497, %v2497
        %v2551 = vmul.f32 %v2498, %v2498
        %v2552 = vmul.f32 %v2499, %v2499
        %v2553 = vmul.f32 %v2500, %v2500
        %v2554 = vmul.f32 %v2501, %v2501
        %v2555 = vmul.f32 %v2502, %v2502
        %v2556 = vadd.f32 %v2532, %v2533
        %v2557 = vadd.f32 %v2556, %v2534
        %v2558 = vadd.f32 %v2557, %v2535
        %v2559 = vadd.f32 %v2558, %v2536
        %v2560 = vadd.f32 %v2559, %v2537
        %v2561 = vadd.f32 %v2560, %v2538
        %v2562 = vadd.f32 %v2561, %v2539
        %v2563 = vadd.f32 %v2562, %v2540
        %v2564 = vadd.f32 %v2563, %v2541
        %v2565 = vadd.f32 %v2564, %v2542
        %v2566 = vadd.f32 %v2565, %v2543
        %v2567 = vadd.f32 %v2566, %v2544
        %v2568 = vadd.f32 %v2567, %v2545
        %v2569 = vadd.f32 %v2568, %v2546
        %v2570 = vadd.f32 %v2569, %v2547
        %v2571 = vadd.f32 %v2570, %v2548
        %v2572 = vadd.f32 %v2571, %v2549
        %v2573 = vadd.f32 %v2572, %v2550
        %v2574 = vadd.f32 %v2573, %v2551
        %v2575 = vadd.f32 %v2574, %v2552
        %v2576 = vadd.f32 %v2575, %v2553
        %v2577 = vadd.f32 %v2576, %v2554
        %v2578 = vadd.f32 %v2577, %v2555
        %v2579 = vrot.slane %v2578, 4
        %v2580 = vadd.f32 %v2578, %v2579
        %v2581 = vrot.slane %v2580, 2
        %v2582 = vadd.f32 %v2580, %v2581
        %v2583 = vrot.slane %v2582, 1
        %v2584 = vadd.f32 %v2582, %v2583
        %vm2585 = vcmask 1040384
        %v2586 = vsel %vm2585, %v2531, %v2584
        %2587 = vst [vmem:[%s345] sm:$0x3] %v2586
        %v2612 = vcombine.high %v2070, %v2070
        %v2614 = vunpack.c.l.s4 1983009808
        %v2615 = vunpack.c.0.s8 %v2614
        %v2616 = vlaneseq
        %v2617 = vshrl.u32 %v2616, 7
        %v2618 = vsub.s32 %v2615, %v2617
        %v2619 = vrot.slane %v2070, %v2618
        %v2621 = vunpack.c.l.s4 1983009808
        %v2622 = vunpack.c.0.s8 %v2621
        %v2623 = vlaneseq
        %v2624 = vshrl.u32 %v2623, 7
        %v2625 = vsub.s32 %v2622, %v2624
        %v2626 = vrot.slane %v2612, %v2625
        %v2627 = vcombine.high %v2619, %v2619
        %v2628 = vcombine.high %v2626, %v2626
        %v2630 = vunpack.c.l.s4 1983009808
        %v2631 = vunpack.c.0.s8 %v2630
        %v2632 = vlaneseq
        %v2633 = vshrl.u32 %v2632, 7
        %v2634 = vsub.s32 %v2631, %v2633
        %v2635 = vrot.slane %v2071, %v2634
        %v2636 = vcombine.high %v2635, %v2635
        %v2637 = vcombine.high %v2072, %v2072
        %v2639 = vunpack.c.l.s4 1983009808
        %v2640 = vunpack.c.0.s8 %v2639
        %v2641 = vlaneseq
        %v2642 = vshrl.u32 %v2641, 7
        %v2643 = vsub.s32 %v2640, %v2642
        %v2644 = vrot.slane %v2072, %v2643
        %v2646 = vunpack.c.l.s4 1983009808
        %v2647 = vunpack.c.0.s8 %v2646
        %v2648 = vlaneseq
        %v2649 = vshrl.u32 %v2648, 7
        %v2650 = vsub.s32 %v2647, %v2649
        %v2651 = vrot.slane %v2637, %v2650
        %v2652 = vcombine.high %v2644, %v2644
        %v2653 = vcombine.high %v2651, %v2651
        %v2655 = vunpack.c.l.s4 1983009808
        %v2656 = vunpack.c.0.s8 %v2655
        %v2657 = vlaneseq
        %v2658 = vshrl.u32 %v2657, 7
        %v2659 = vsub.s32 %v2656, %v2658
        %v2660 = vrot.slane %v2073, %v2659
        %v2661 = vcombine.high %v2660, %v2660
        %v2662 = vcombine.high %v2074, %v2074
        %v2664 = vunpack.c.l.s4 1983009808
        %v2665 = vunpack.c.0.s8 %v2664
        %v2666 = vlaneseq
        %v2667 = vshrl.u32 %v2666, 7
        %v2668 = vsub.s32 %v2665, %v2667
        %v2669 = vrot.slane %v2074, %v2668
        %v2671 = vunpack.c.l.s4 1983009808
        %v2672 = vunpack.c.0.s8 %v2671
        %v2673 = vlaneseq
        %v2674 = vshrl.u32 %v2673, 7
        %v2675 = vsub.s32 %v2672, %v2674
        %v2676 = vrot.slane %v2662, %v2675
        %v2677 = vcombine.high %v2669, %v2669
        %v2678 = vcombine.high %v2676, %v2676
        %v2680 = vunpack.c.l.s4 1983009808
        %v2681 = vunpack.c.0.s8 %v2680
        %v2682 = vlaneseq
        %v2683 = vshrl.u32 %v2682, 7
        %v2684 = vsub.s32 %v2681, %v2683
        %v2685 = vrot.slane %v2075, %v2684
        %v2686 = vcombine.high %v2685, %v2685
        %v2687 = vcombine.high %v2076, %v2076
        %v2689 = vunpack.c.l.s4 1983009808
        %v2690 = vunpack.c.0.s8 %v2689
        %v2691 = vlaneseq
        %v2692 = vshrl.u32 %v2691, 7
        %v2693 = vsub.s32 %v2690, %v2692
        %v2694 = vrot.slane %v2076, %v2693
        %v2696 = vunpack.c.l.s4 1983009808
        %v2697 = vunpack.c.0.s8 %v2696
        %v2698 = vlaneseq
        %v2699 = vshrl.u32 %v2698, 7
        %v2700 = vsub.s32 %v2697, %v2699
        %v2701 = vrot.slane %v2687, %v2700
        %v2702 = vcombine.high %v2694, %v2694
        %v2703 = vcombine.high %v2701, %v2701
        %v2705 = vunpack.c.l.s4 1983009808
        %v2706 = vunpack.c.0.s8 %v2705
        %v2707 = vlaneseq
        %v2708 = vshrl.u32 %v2707, 7
        %v2709 = vsub.s32 %v2706, %v2708
        %v2710 = vrot.slane %v2077, %v2709
        %v2711 = vcombine.high %v2710, %v2710
        %v2712 = vcombine.high %v2078, %v2078
        %v2714 = vunpack.c.l.s4 1983009808
        %v2715 = vunpack.c.0.s8 %v2714
        %v2716 = vlaneseq
        %v2717 = vshrl.u32 %v2716, 7
        %v2718 = vsub.s32 %v2715, %v2717
        %v2719 = vrot.slane %v2078, %v2718
        %v2721 = vunpack.c.l.s4 1983009808
        %v2722 = vunpack.c.0.s8 %v2721
        %v2723 = vlaneseq
        %v2724 = vshrl.u32 %v2723, 7
        %v2725 = vsub.s32 %v2722, %v2724
        %v2726 = vrot.slane %v2712, %v2725
        %v2727 = vcombine.high %v2719, %v2719
        %v2728 = vcombine.high %v2726, %v2726
        %v2730 = vunpack.c.l.s4 1983009808
        %v2731 = vunpack.c.0.s8 %v2730
        %v2732 = vlaneseq
        %v2733 = vshrl.u32 %v2732, 7
        %v2734 = vsub.s32 %v2731, %v2733
        %v2735 = vrot.slane %v2079, %v2734
        %v2736 = vcombine.high %v2735, %v2735
        %v2737 = vcombine.high %v2080, %v2080
        %v2739 = vunpack.c.l.s4 1983009808
        %v2740 = vunpack.c.0.s8 %v2739
        %v2741 = vlaneseq
        %v2742 = vshrl.u32 %v2741, 7
        %v2743 = vsub.s32 %v2740, %v2742
        %v2744 = vrot.slane %v2080, %v2743
        %v2746 = vunpack.c.l.s4 1983009808
        %v2747 = vunpack.c.0.s8 %v2746
        %v2748 = vlaneseq
        %v2749 = vshrl.u32 %v2748, 7
        %v2750 = vsub.s32 %v2747, %v2749
        %v2751 = vrot.slane %v2737, %v2750
        %v2752 = vcombine.high %v2744, %v2744
        %v2753 = vcombine.high %v2751, %v2751
        %v2755 = vunpack.c.l.s4 1983009808
        %v2756 = vunpack.c.0.s8 %v2755
        %v2757 = vlaneseq
        %v2758 = vshrl.u32 %v2757, 7
        %v2759 = vsub.s32 %v2756, %v2758
        %v2760 = vrot.slane %v2081, %v2759
        %v2761 = vcombine.high %v2760, %v2760
        %v2762 = vcombine.high %v2082, %v2082
        %v2764 = vunpack.c.l.s4 1983009808
        %v2765 = vunpack.c.0.s8 %v2764
        %v2766 = vlaneseq
        %v2767 = vshrl.u32 %v2766, 7
        %v2768 = vsub.s32 %v2765, %v2767
        %v2769 = vrot.slane %v2082, %v2768
        %v2771 = vunpack.c.l.s4 1983009808
        %v2772 = vunpack.c.0.s8 %v2771
        %v2773 = vlaneseq
        %v2774 = vshrl.u32 %v2773, 7
        %v2775 = vsub.s32 %v2772, %v2774
        %v2776 = vrot.slane %v2762, %v2775
        %v2777 = vcombine.high %v2769, %v2769
        %v2778 = vcombine.high %v2776, %v2776
        %v2780 = vunpack.c.l.s4 1983009808
        %v2781 = vunpack.c.0.s8 %v2780
        %v2782 = vlaneseq
        %v2783 = vshrl.u32 %v2782, 7
        %v2784 = vsub.s32 %v2781, %v2783
        %v2785 = vrot.slane %v2083, %v2784
        %v2786 = vcombine.high %v2785, %v2785
        %v2787 = vcombine.high %v2084, %v2084
        %v2789 = vunpack.c.l.s4 1983009808
        %v2790 = vunpack.c.0.s8 %v2789
        %v2791 = vlaneseq
        %v2792 = vshrl.u32 %v2791, 7
        %v2793 = vsub.s32 %v2790, %v2792
        %v2794 = vrot.slane %v2084, %v2793
        %v2796 = vunpack.c.l.s4 1983009808
        %v2797 = vunpack.c.0.s8 %v2796
        %v2798 = vlaneseq
        %v2799 = vshrl.u32 %v2798, 7
        %v2800 = vsub.s32 %v2797, %v2799
        %v2801 = vrot.slane %v2787, %v2800
        %v2802 = vcombine.high %v2794, %v2794
        %v2803 = vcombine.high %v2801, %v2801
        %v2805 = vunpack.c.l.s4 1983009808
        %v2806 = vunpack.c.0.s8 %v2805
        %v2807 = vlaneseq
        %v2808 = vshrl.u32 %v2807, 7
        %v2809 = vsub.s32 %v2806, %v2808
        %v2810 = vrot.slane %v2085, %v2809
        %v2811 = vcombine.high %v2810, %v2810
        %v2812 = vcombine.high %v2086, %v2086
        %v2814 = vunpack.c.l.s4 1983009808
        %v2815 = vunpack.c.0.s8 %v2814
        %v2816 = vlaneseq
        %v2817 = vshrl.u32 %v2816, 7
        %v2818 = vsub.s32 %v2815, %v2817
        %v2819 = vrot.slane %v2086, %v2818
        %v2821 = vunpack.c.l.s4 1983009808
        %v2822 = vunpack.c.0.s8 %v2821
        %v2823 = vlaneseq
        %v2824 = vshrl.u32 %v2823, 7
        %v2825 = vsub.s32 %v2822, %v2824
        %v2826 = vrot.slane %v2812, %v2825
        %v2827 = vcombine.high %v2819, %v2819
        %v2828 = vcombine.high %v2826, %v2826
        %v2830 = vunpack.c.l.s4 1983009808
        %v2831 = vunpack.c.0.s8 %v2830
        %v2832 = vlaneseq
        %v2833 = vshrl.u32 %v2832, 7
        %v2834 = vsub.s32 %v2831, %v2833
        %v2835 = vrot.slane %v2087, %v2834
        %v2836 = vcombine.high %v2835, %v2835
        %v2837 = vcombine.high %v2088, %v2088
        %v2839 = vunpack.c.l.s4 1983009808
        %v2840 = vunpack.c.0.s8 %v2839
        %v2841 = vlaneseq
        %v2842 = vshrl.u32 %v2841, 7
        %v2843 = vsub.s32 %v2840, %v2842
        %v2844 = vrot.slane %v2088, %v2843
        %v2846 = vunpack.c.l.s4 1983009808
        %v2847 = vunpack.c.0.s8 %v2846
        %v2848 = vlaneseq
        %v2849 = vshrl.u32 %v2848, 7
        %v2850 = vsub.s32 %v2847, %v2849
        %v2851 = vrot.slane %v2837, %v2850
        %v2852 = vcombine.high %v2844, %v2844
        %v2853 = vcombine.high %v2851, %v2851
        %v2855 = vunpack.c.l.s4 1983009808
        %v2856 = vunpack.c.0.s8 %v2855
        %v2857 = vlaneseq
        %v2858 = vshrl.u32 %v2857, 7
        %v2859 = vsub.s32 %v2856, %v2858
        %v2860 = vrot.slane %v2089, %v2859
        %v2861 = vcombine.high %v2860, %v2860
        %v2862 = vcombine.high %v2090, %v2090
        %v2864 = vunpack.c.l.s4 1983009808
        %v2865 = vunpack.c.0.s8 %v2864
        %v2866 = vlaneseq
        %v2867 = vshrl.u32 %v2866, 7
        %v2868 = vsub.s32 %v2865, %v2867
        %v2869 = vrot.slane %v2090, %v2868
        %v2871 = vunpack.c.l.s4 1983009808
        %v2872 = vunpack.c.0.s8 %v2871
        %v2873 = vlaneseq
        %v2874 = vshrl.u32 %v2873, 7
        %v2875 = vsub.s32 %v2872, %v2874
        %v2876 = vrot.slane %v2862, %v2875
        %v2877 = vcombine.high %v2869, %v2869
        %v2878 = vcombine.high %v2876, %v2876
        %v2880 = vunpack.c.l.s4 1983009808
        %v2881 = vunpack.c.0.s8 %v2880
        %v2882 = vlaneseq
        %v2883 = vshrl.u32 %v2882, 7
        %v2884 = vsub.s32 %v2881, %v2883
        %v2885 = vrot.slane %v2091, %v2884
        %v2886 = vcombine.high %v2885, %v2885
        %v2887 = vcombine.high %v2092, %v2092
        %v2889 = vunpack.c.l.s4 1983009808
        %v2890 = vunpack.c.0.s8 %v2889
        %v2891 = vlaneseq
        %v2892 = vshrl.u32 %v2891, 7
        %v2893 = vsub.s32 %v2890, %v2892
        %v2894 = vrot.slane %v2092, %v2893
        %v2896 = vunpack.c.l.s4 1983009808
        %v2897 = vunpack.c.0.s8 %v2896
        %v2898 = vlaneseq
        %v2899 = vshrl.u32 %v2898, 7
        %v2900 = vsub.s32 %v2897, %v2899
        %v2901 = vrot.slane %v2887, %v2900
        %v2902 = vcombine.high %v2894, %v2894
        %v2903 = vcombine.high %v2901, %v2901
        %v2905 = vunpack.c.l.s4 1983009808
        %v2906 = vunpack.c.0.s8 %v2905
        %v2907 = vlaneseq
        %v2908 = vshrl.u32 %v2907, 7
        %v2909 = vsub.s32 %v2906, %v2908
        %v2910 = vrot.slane %v2093, %v2909
        %v2911 = vcombine.high %v2910, %v2910
        %vm2984 = vcmask 1041408
        %v2985 = vsel %vm2984, %v2619, -inf
        %v2986 = vrot.slane %v2985, 4
        %v2987 = vmax.f32 %v2985, %v2986
        %v2988 = vrot.slane %v2987, 2
        %v2989 = vmax.f32 %v2987, %v2988
        %v2990 = vrot.slane %v2989, 1
        %v2991 = vmax.f32 %v2989, %v2990
        %v2992 = vsel %vm2984, %v2627, -inf
        %v2993 = vrot.slane %v2992, 4
        %v2994 = vmax.f32 %v2992, %v2993
        %v2995 = vrot.slane %v2994, 2
        %v2996 = vmax.f32 %v2994, %v2995
        %v2997 = vrot.slane %v2996, 1
        %v2998 = vmax.f32 %v2996, %v2997
        %v2999 = vsel %vm2984, %v2626, -inf
        %v3000 = vrot.slane %v2999, 4
        %v3001 = vmax.f32 %v2999, %v3000
        %v3002 = vrot.slane %v3001, 2
        %v3003 = vmax.f32 %v3001, %v3002
        %v3004 = vrot.slane %v3003, 1
        %v3005 = vmax.f32 %v3003, %v3004
        %v3006 = vsel %vm2984, %v2628, -inf
        %v3007 = vrot.slane %v3006, 4
        %v3008 = vmax.f32 %v3006, %v3007
        %v3009 = vrot.slane %v3008, 2
        %v3010 = vmax.f32 %v3008, %v3009
        %v3011 = vrot.slane %v3010, 1
        %v3012 = vmax.f32 %v3010, %v3011
        %v3013 = vsel %vm2984, %v2635, -inf
        %v3014 = vrot.slane %v3013, 4
        %v3015 = vmax.f32 %v3013, %v3014
        %v3016 = vrot.slane %v3015, 2
        %v3017 = vmax.f32 %v3015, %v3016
        %v3018 = vrot.slane %v3017, 1
        %v3019 = vmax.f32 %v3017, %v3018
        %v3020 = vsel %vm2984, %v2636, -inf
        %v3021 = vrot.slane %v3020, 4
        %v3022 = vmax.f32 %v3020, %v3021
        %v3023 = vrot.slane %v3022, 2
        %v3024 = vmax.f32 %v3022, %v3023
        %v3025 = vrot.slane %v3024, 1
        %v3026 = vmax.f32 %v3024, %v3025
        %v3027 = vsel %vm2984, %v2644, -inf
        %v3028 = vrot.slane %v3027, 4
        %v3029 = vmax.f32 %v3027, %v3028
        %v3030 = vrot.slane %v3029, 2
        %v3031 = vmax.f32 %v3029, %v3030
        %v3032 = vrot.slane %v3031, 1
        %v3033 = vmax.f32 %v3031, %v3032
        %v3034 = vsel %vm2984, %v2652, -inf
        %v3035 = vrot.slane %v3034, 4
        %v3036 = vmax.f32 %v3034, %v3035
        %v3037 = vrot.slane %v3036, 2
        %v3038 = vmax.f32 %v3036, %v3037
        %v3039 = vrot.slane %v3038, 1
        %v3040 = vmax.f32 %v3038, %v3039
        %v3041 = vsel %vm2984, %v2651, -inf
        %v3042 = vrot.slane %v3041, 4
        %v3043 = vmax.f32 %v3041, %v3042
        %v3044 = vrot.slane %v3043, 2
        %v3045 = vmax.f32 %v3043, %v3044
        %v3046 = vrot.slane %v3045, 1
        %v3047 = vmax.f32 %v3045, %v3046
        %v3048 = vsel %vm2984, %v2653, -inf
        %v3049 = vrot.slane %v3048, 4
        %v3050 = vmax.f32 %v3048, %v3049
        %v3051 = vrot.slane %v3050, 2
        %v3052 = vmax.f32 %v3050, %v3051
        %v3053 = vrot.slane %v3052, 1
        %v3054 = vmax.f32 %v3052, %v3053
        %v3055 = vsel %vm2984, %v2660, -inf
        %v3056 = vrot.slane %v3055, 4
        %v3057 = vmax.f32 %v3055, %v3056
        %v3058 = vrot.slane %v3057, 2
        %v3059 = vmax.f32 %v3057, %v3058
        %v3060 = vrot.slane %v3059, 1
        %v3061 = vmax.f32 %v3059, %v3060
        %v3062 = vsel %vm2984, %v2661, -inf
        %v3063 = vrot.slane %v3062, 4
        %v3064 = vmax.f32 %v3062, %v3063
        %v3065 = vrot.slane %v3064, 2
        %v3066 = vmax.f32 %v3064, %v3065
        %v3067 = vrot.slane %v3066, 1
        %v3068 = vmax.f32 %v3066, %v3067
        %v3069 = vsel %vm2984, %v2669, -inf
        %v3070 = vrot.slane %v3069, 4
        %v3071 = vmax.f32 %v3069, %v3070
        %v3072 = vrot.slane %v3071, 2
        %v3073 = vmax.f32 %v3071, %v3072
        %v3074 = vrot.slane %v3073, 1
        %v3075 = vmax.f32 %v3073, %v3074
        %v3076 = vsel %vm2984, %v2677, -inf
        %v3077 = vrot.slane %v3076, 4
        %v3078 = vmax.f32 %v3076, %v3077
        %v3079 = vrot.slane %v3078, 2
        %v3080 = vmax.f32 %v3078, %v3079
        %v3081 = vrot.slane %v3080, 1
        %v3082 = vmax.f32 %v3080, %v3081
        %v3083 = vsel %vm2984, %v2676, -inf
        %v3084 = vrot.slane %v3083, 4
        %v3085 = vmax.f32 %v3083, %v3084
        %v3086 = vrot.slane %v3085, 2
        %v3087 = vmax.f32 %v3085, %v3086
        %v3088 = vrot.slane %v3087, 1
        %v3089 = vmax.f32 %v3087, %v3088
        %v3090 = vsel %vm2984, %v2678, -inf
        %v3091 = vrot.slane %v3090, 4
        %v3092 = vmax.f32 %v3090, %v3091
        %v3093 = vrot.slane %v3092, 2
        %v3094 = vmax.f32 %v3092, %v3093
        %v3095 = vrot.slane %v3094, 1
        %v3096 = vmax.f32 %v3094, %v3095
        %v3097 = vsel %vm2984, %v2685, -inf
        %v3098 = vrot.slane %v3097, 4
        %v3099 = vmax.f32 %v3097, %v3098
        %v3100 = vrot.slane %v3099, 2
        %v3101 = vmax.f32 %v3099, %v3100
        %v3102 = vrot.slane %v3101, 1
        %v3103 = vmax.f32 %v3101, %v3102
        %v3104 = vsel %vm2984, %v2686, -inf
        %v3105 = vrot.slane %v3104, 4
        %v3106 = vmax.f32 %v3104, %v3105
        %v3107 = vrot.slane %v3106, 2
        %v3108 = vmax.f32 %v3106, %v3107
        %v3109 = vrot.slane %v3108, 1
        %v3110 = vmax.f32 %v3108, %v3109
        %v3111 = vsel %vm2984, %v2694, -inf
        %v3112 = vrot.slane %v3111, 4
        %v3113 = vmax.f32 %v3111, %v3112
        %v3114 = vrot.slane %v3113, 2
        %v3115 = vmax.f32 %v3113, %v3114
        %v3116 = vrot.slane %v3115, 1
        %v3117 = vmax.f32 %v3115, %v3116
        %v3118 = vsel %vm2984, %v2702, -inf
        %v3119 = vrot.slane %v3118, 4
        %v3120 = vmax.f32 %v3118, %v3119
        %v3121 = vrot.slane %v3120, 2
        %v3122 = vmax.f32 %v3120, %v3121
        %v3123 = vrot.slane %v3122, 1
        %v3124 = vmax.f32 %v3122, %v3123
        %v3125 = vsel %vm2984, %v2701, -inf
        %v3126 = vrot.slane %v3125, 4
        %v3127 = vmax.f32 %v3125, %v3126
        %v3128 = vrot.slane %v3127, 2
        %v3129 = vmax.f32 %v3127, %v3128
        %v3130 = vrot.slane %v3129, 1
        %v3131 = vmax.f32 %v3129, %v3130
        %v3132 = vsel %vm2984, %v2703, -inf
        %v3133 = vrot.slane %v3132, 4
        %v3134 = vmax.f32 %v3132, %v3133
        %v3135 = vrot.slane %v3134, 2
        %v3136 = vmax.f32 %v3134, %v3135
        %v3137 = vrot.slane %v3136, 1
        %v3138 = vmax.f32 %v3136, %v3137
        %v3139 = vsel %vm2984, %v2710, -inf
        %v3140 = vrot.slane %v3139, 4
        %v3141 = vmax.f32 %v3139, %v3140
        %v3142 = vrot.slane %v3141, 2
        %v3143 = vmax.f32 %v3141, %v3142
        %v3144 = vrot.slane %v3143, 1
        %v3145 = vmax.f32 %v3143, %v3144
        %v3146 = vsel %vm2984, %v2711, -inf
        %v3147 = vrot.slane %v3146, 4
        %v3148 = vmax.f32 %v3146, %v3147
        %v3149 = vrot.slane %v3148, 2
        %v3150 = vmax.f32 %v3148, %v3149
        %v3151 = vrot.slane %v3150, 1
        %v3152 = vmax.f32 %v3150, %v3151
        %v3153 = vsel %vm2984, %v2719, -inf
        %v3154 = vrot.slane %v3153, 4
        %v3155 = vmax.f32 %v3153, %v3154
        %v3156 = vrot.slane %v3155, 2
        %v3157 = vmax.f32 %v3155, %v3156
        %v3158 = vrot.slane %v3157, 1
        %v3159 = vmax.f32 %v3157, %v3158
        %v3160 = vsel %vm2984, %v2727, -inf
        %v3161 = vrot.slane %v3160, 4
        %v3162 = vmax.f32 %v3160, %v3161
        %v3163 = vrot.slane %v3162, 2
        %v3164 = vmax.f32 %v3162, %v3163
        %v3165 = vrot.slane %v3164, 1
        %v3166 = vmax.f32 %v3164, %v3165
        %v3167 = vsel %vm2984, %v2726, -inf
        %v3168 = vrot.slane %v3167, 4
        %v3169 = vmax.f32 %v3167, %v3168
        %v3170 = vrot.slane %v3169, 2
        %v3171 = vmax.f32 %v3169, %v3170
        %v3172 = vrot.slane %v3171, 1
        %v3173 = vmax.f32 %v3171, %v3172
        %v3174 = vsel %vm2984, %v2728, -inf
        %v3175 = vrot.slane %v3174, 4
        %v3176 = vmax.f32 %v3174, %v3175
        %v3177 = vrot.slane %v3176, 2
        %v3178 = vmax.f32 %v3176, %v3177
        %v3179 = vrot.slane %v3178, 1
        %v3180 = vmax.f32 %v3178, %v3179
        %v3181 = vsel %vm2984, %v2735, -inf
        %v3182 = vrot.slane %v3181, 4
        %v3183 = vmax.f32 %v3181, %v3182
        %v3184 = vrot.slane %v3183, 2
        %v3185 = vmax.f32 %v3183, %v3184
        %v3186 = vrot.slane %v3185, 1
        %v3187 = vmax.f32 %v3185, %v3186
        %v3188 = vsel %vm2984, %v2736, -inf
        %v3189 = vrot.slane %v3188, 4
        %v3190 = vmax.f32 %v3188, %v3189
        %v3191 = vrot.slane %v3190, 2
        %v3192 = vmax.f32 %v3190, %v3191
        %v3193 = vrot.slane %v3192, 1
        %v3194 = vmax.f32 %v3192, %v3193
        %v3195 = vsel %vm2984, %v2744, -inf
        %v3196 = vrot.slane %v3195, 4
        %v3197 = vmax.f32 %v3195, %v3196
        %v3198 = vrot.slane %v3197, 2
        %v3199 = vmax.f32 %v3197, %v3198
        %v3200 = vrot.slane %v3199, 1
        %v3201 = vmax.f32 %v3199, %v3200
        %v3202 = vsel %vm2984, %v2752, -inf
        %v3203 = vrot.slane %v3202, 4
        %v3204 = vmax.f32 %v3202, %v3203
        %v3205 = vrot.slane %v3204, 2
        %v3206 = vmax.f32 %v3204, %v3205
        %v3207 = vrot.slane %v3206, 1
        %v3208 = vmax.f32 %v3206, %v3207
        %v3209 = vsel %vm2984, %v2751, -inf
        %v3210 = vrot.slane %v3209, 4
        %v3211 = vmax.f32 %v3209, %v3210
        %v3212 = vrot.slane %v3211, 2
        %v3213 = vmax.f32 %v3211, %v3212
        %v3214 = vrot.slane %v3213, 1
        %v3215 = vmax.f32 %v3213, %v3214
        %v3216 = vsel %vm2984, %v2753, -inf
        %v3217 = vrot.slane %v3216, 4
        %v3218 = vmax.f32 %v3216, %v3217
        %v3219 = vrot.slane %v3218, 2
        %v3220 = vmax.f32 %v3218, %v3219
        %v3221 = vrot.slane %v3220, 1
        %v3222 = vmax.f32 %v3220, %v3221
        %v3223 = vsel %vm2984, %v2760, -inf
        %v3224 = vrot.slane %v3223, 4
        %v3225 = vmax.f32 %v3223, %v3224
        %v3226 = vrot.slane %v3225, 2
        %v3227 = vmax.f32 %v3225, %v3226
        %v3228 = vrot.slane %v3227, 1
        %v3229 = vmax.f32 %v3227, %v3228
        %v3230 = vsel %vm2984, %v2761, -inf
        %v3231 = vrot.slane %v3230, 4
        %v3232 = vmax.f32 %v3230, %v3231
        %v3233 = vrot.slane %v3232, 2
        %v3234 = vmax.f32 %v3232, %v3233
        %v3235 = vrot.slane %v3234, 1
        %v3236 = vmax.f32 %v3234, %v3235
        %v3237 = vsel %vm2984, %v2769, -inf
        %v3238 = vrot.slane %v3237, 4
        %v3239 = vmax.f32 %v3237, %v3238
        %v3240 = vrot.slane %v3239, 2
        %v3241 = vmax.f32 %v3239, %v3240
        %v3242 = vrot.slane %v3241, 1
        %v3243 = vmax.f32 %v3241, %v3242
        %v3244 = vsel %vm2984, %v2777, -inf
        %v3245 = vrot.slane %v3244, 4
        %v3246 = vmax.f32 %v3244, %v3245
        %v3247 = vrot.slane %v3246, 2
        %v3248 = vmax.f32 %v3246, %v3247
        %v3249 = vrot.slane %v3248, 1
        %v3250 = vmax.f32 %v3248, %v3249
        %v3251 = vsel %vm2984, %v2776, -inf
        %v3252 = vrot.slane %v3251, 4
        %v3253 = vmax.f32 %v3251, %v3252
        %v3254 = vrot.slane %v3253, 2
        %v3255 = vmax.f32 %v3253, %v3254
        %v3256 = vrot.slane %v3255, 1
        %v3257 = vmax.f32 %v3255, %v3256
        %v3258 = vsel %vm2984, %v2778, -inf
        %v3259 = vrot.slane %v3258, 4
        %v3260 = vmax.f32 %v3258, %v3259
        %v3261 = vrot.slane %v3260, 2
        %v3262 = vmax.f32 %v3260, %v3261
        %v3263 = vrot.slane %v3262, 1
        %v3264 = vmax.f32 %v3262, %v3263
        %v3265 = vsel %vm2984, %v2785, -inf
        %v3266 = vrot.slane %v3265, 4
        %v3267 = vmax.f32 %v3265, %v3266
        %v3268 = vrot.slane %v3267, 2
        %v3269 = vmax.f32 %v3267, %v3268
        %v3270 = vrot.slane %v3269, 1
        %v3271 = vmax.f32 %v3269, %v3270
        %v3272 = vsel %vm2984, %v2786, -inf
        %v3273 = vrot.slane %v3272, 4
        %v3274 = vmax.f32 %v3272, %v3273
        %v3275 = vrot.slane %v3274, 2
        %v3276 = vmax.f32 %v3274, %v3275
        %v3277 = vrot.slane %v3276, 1
        %v3278 = vmax.f32 %v3276, %v3277
        %v3279 = vsel %vm2984, %v2794, -inf
        %v3280 = vrot.slane %v3279, 4
        %v3281 = vmax.f32 %v3279, %v3280
        %v3282 = vrot.slane %v3281, 2
        %v3283 = vmax.f32 %v3281, %v3282
        %v3284 = vrot.slane %v3283, 1
        %v3285 = vmax.f32 %v3283, %v3284
        %v3286 = vsel %vm2984, %v2802, -inf
        %v3287 = vrot.slane %v3286, 4
        %v3288 = vmax.f32 %v3286, %v3287
        %v3289 = vrot.slane %v3288, 2
        %v3290 = vmax.f32 %v3288, %v3289
        %v3291 = vrot.slane %v3290, 1
        %v3292 = vmax.f32 %v3290, %v3291
        %v3293 = vsel %vm2984, %v2801, -inf
        %v3294 = vrot.slane %v3293, 4
        %v3295 = vmax.f32 %v3293, %v3294
        %v3296 = vrot.slane %v3295, 2
        %v3297 = vmax.f32 %v3295, %v3296
        %v3298 = vrot.slane %v3297, 1
        %v3299 = vmax.f32 %v3297, %v3298
        %v3300 = vsel %vm2984, %v2803, -inf
        %v3301 = vrot.slane %v3300, 4
        %v3302 = vmax.f32 %v3300, %v3301
        %v3303 = vrot.slane %v3302, 2
        %v3304 = vmax.f32 %v3302, %v3303
        %v3305 = vrot.slane %v3304, 1
        %v3306 = vmax.f32 %v3304, %v3305
        %v3307 = vsel %vm2984, %v2810, -inf
        %v3308 = vrot.slane %v3307, 4
        %v3309 = vmax.f32 %v3307, %v3308
        %v3310 = vrot.slane %v3309, 2
        %v3311 = vmax.f32 %v3309, %v3310
        %v3312 = vrot.slane %v3311, 1
        %v3313 = vmax.f32 %v3311, %v3312
        %v3314 = vsel %vm2984, %v2811, -inf
        %v3315 = vrot.slane %v3314, 4
        %v3316 = vmax.f32 %v3314, %v3315
        %v3317 = vrot.slane %v3316, 2
        %v3318 = vmax.f32 %v3316, %v3317
        %v3319 = vrot.slane %v3318, 1
        %v3320 = vmax.f32 %v3318, %v3319
        %v3321 = vsel %vm2984, %v2819, -inf
        %v3322 = vrot.slane %v3321, 4
        %v3323 = vmax.f32 %v3321, %v3322
        %v3324 = vrot.slane %v3323, 2
        %v3325 = vmax.f32 %v3323, %v3324
        %v3326 = vrot.slane %v3325, 1
        %v3327 = vmax.f32 %v3325, %v3326
        %v3328 = vsel %vm2984, %v2827, -inf
        %v3329 = vrot.slane %v3328, 4
        %v3330 = vmax.f32 %v3328, %v3329
        %v3331 = vrot.slane %v3330, 2
        %v3332 = vmax.f32 %v3330, %v3331
        %v3333 = vrot.slane %v3332, 1
        %v3334 = vmax.f32 %v3332, %v3333
        %v3335 = vsel %vm2984, %v2826, -inf
        %v3336 = vrot.slane %v3335, 4
        %v3337 = vmax.f32 %v3335, %v3336
        %v3338 = vrot.slane %v3337, 2
        %v3339 = vmax.f32 %v3337, %v3338
        %v3340 = vrot.slane %v3339, 1
        %v3341 = vmax.f32 %v3339, %v3340
        %v3342 = vsel %vm2984, %v2828, -inf
        %v3343 = vrot.slane %v3342, 4
        %v3344 = vmax.f32 %v3342, %v3343
        %v3345 = vrot.slane %v3344, 2
        %v3346 = vmax.f32 %v3344, %v3345
        %v3347 = vrot.slane %v3346, 1
        %v3348 = vmax.f32 %v3346, %v3347
        %v3349 = vsel %vm2984, %v2835, -inf
        %v3350 = vrot.slane %v3349, 4
        %v3351 = vmax.f32 %v3349, %v3350
        %v3352 = vrot.slane %v3351, 2
        %v3353 = vmax.f32 %v3351, %v3352
        %v3354 = vrot.slane %v3353, 1
        %v3355 = vmax.f32 %v3353, %v3354
        %v3356 = vsel %vm2984, %v2836, -inf
        %v3357 = vrot.slane %v3356, 4
        %v3358 = vmax.f32 %v3356, %v3357
        %v3359 = vrot.slane %v3358, 2
        %v3360 = vmax.f32 %v3358, %v3359
        %v3361 = vrot.slane %v3360, 1
        %v3362 = vmax.f32 %v3360, %v3361
        %v3363 = vsel %vm2984, %v2844, -inf
        %v3364 = vrot.slane %v3363, 4
        %v3365 = vmax.f32 %v3363, %v3364
        %v3366 = vrot.slane %v3365, 2
        %v3367 = vmax.f32 %v3365, %v3366
        %v3368 = vrot.slane %v3367, 1
        %v3369 = vmax.f32 %v3367, %v3368
        %v3370 = vsel %vm2984, %v2852, -inf
        %v3371 = vrot.slane %v3370, 4
        %v3372 = vmax.f32 %v3370, %v3371
        %v3373 = vrot.slane %v3372, 2
        %v3374 = vmax.f32 %v3372, %v3373
        %v3375 = vrot.slane %v3374, 1
        %v3376 = vmax.f32 %v3374, %v3375
        %v3377 = vsel %vm2984, %v2851, -inf
        %v3378 = vrot.slane %v3377, 4
        %v3379 = vmax.f32 %v3377, %v3378
        %v3380 = vrot.slane %v3379, 2
        %v3381 = vmax.f32 %v3379, %v3380
        %v3382 = vrot.slane %v3381, 1
        %v3383 = vmax.f32 %v3381, %v3382
        %v3384 = vsel %vm2984, %v2853, -inf
        %v3385 = vrot.slane %v3384, 4
        %v3386 = vmax.f32 %v3384, %v3385
        %v3387 = vrot.slane %v3386, 2
        %v3388 = vmax.f32 %v3386, %v3387
        %v3389 = vrot.slane %v3388, 1
        %v3390 = vmax.f32 %v3388, %v3389
        %v3391 = vsel %vm2984, %v2860, -inf
        %v3392 = vrot.slane %v3391, 4
        %v3393 = vmax.f32 %v3391, %v3392
        %v3394 = vrot.slane %v3393, 2
        %v3395 = vmax.f32 %v3393, %v3394
        %v3396 = vrot.slane %v3395, 1
        %v3397 = vmax.f32 %v3395, %v3396
        %v3398 = vsel %vm2984, %v2861, -inf
        %v3399 = vrot.slane %v3398, 4
        %v3400 = vmax.f32 %v3398, %v3399
        %v3401 = vrot.slane %v3400, 2
        %v3402 = vmax.f32 %v3400, %v3401
        %v3403 = vrot.slane %v3402, 1
        %v3404 = vmax.f32 %v3402, %v3403
        %v3405 = vsel %vm2984, %v2869, -inf
        %v3406 = vrot.slane %v3405, 4
        %v3407 = vmax.f32 %v3405, %v3406
        %v3408 = vrot.slane %v3407, 2
        %v3409 = vmax.f32 %v3407, %v3408
        %v3410 = vrot.slane %v3409, 1
        %v3411 = vmax.f32 %v3409, %v3410
        %v3412 = vsel %vm2984, %v2877, -inf
        %v3413 = vrot.slane %v3412, 4
        %v3414 = vmax.f32 %v3412, %v3413
        %v3415 = vrot.slane %v3414, 2
        %v3416 = vmax.f32 %v3414, %v3415
        %v3417 = vrot.slane %v3416, 1
        %v3418 = vmax.f32 %v3416, %v3417
        %v3419 = vsel %vm2984, %v2876, -inf
        %v3420 = vrot.slane %v3419, 4
        %v3421 = vmax.f32 %v3419, %v3420
        %v3422 = vrot.slane %v3421, 2
        %v3423 = vmax.f32 %v3421, %v3422
        %v3424 = vrot.slane %v3423, 1
        %v3425 = vmax.f32 %v3423, %v3424
        %v3426 = vsel %vm2984, %v2878, -inf
        %v3427 = vrot.slane %v3426, 4
        %v3428 = vmax.f32 %v3426, %v3427
        %v3429 = vrot.slane %v3428, 2
        %v3430 = vmax.f32 %v3428, %v3429
        %v3431 = vrot.slane %v3430, 1
        %v3432 = vmax.f32 %v3430, %v3431
        %v3433 = vsel %vm2984, %v2885, -inf
        %v3434 = vrot.slane %v3433, 4
        %v3435 = vmax.f32 %v3433, %v3434
        %v3436 = vrot.slane %v3435, 2
        %v3437 = vmax.f32 %v3435, %v3436
        %v3438 = vrot.slane %v3437, 1
        %v3439 = vmax.f32 %v3437, %v3438
        %v3440 = vsel %vm2984, %v2886, -inf
        %v3441 = vrot.slane %v3440, 4
        %v3442 = vmax.f32 %v3440, %v3441
        %v3443 = vrot.slane %v3442, 2
        %v3444 = vmax.f32 %v3442, %v3443
        %v3445 = vrot.slane %v3444, 1
        %v3446 = vmax.f32 %v3444, %v3445
        %v3447 = vsel %vm2984, %v2894, -inf
        %v3448 = vrot.slane %v3447, 4
        %v3449 = vmax.f32 %v3447, %v3448
        %v3450 = vrot.slane %v3449, 2
        %v3451 = vmax.f32 %v3449, %v3450
        %v3452 = vrot.slane %v3451, 1
        %v3453 = vmax.f32 %v3451, %v3452
        %v3454 = vsel %vm2984, %v2902, -inf
        %v3455 = vrot.slane %v3454, 4
        %v3456 = vmax.f32 %v3454, %v3455
        %v3457 = vrot.slane %v3456, 2
        %v3458 = vmax.f32 %v3456, %v3457
        %v3459 = vrot.slane %v3458, 1
        %v3460 = vmax.f32 %v3458, %v3459
        %v3461 = vsel %vm2984, %v2901, -inf
        %v3462 = vrot.slane %v3461, 4
        %v3463 = vmax.f32 %v3461, %v3462
        %v3464 = vrot.slane %v3463, 2
        %v3465 = vmax.f32 %v3463, %v3464
        %v3466 = vrot.slane %v3465, 1
        %v3467 = vmax.f32 %v3465, %v3466
        %v3468 = vsel %vm2984, %v2903, -inf
        %v3469 = vrot.slane %v3468, 4
        %v3470 = vmax.f32 %v3468, %v3469
        %v3471 = vrot.slane %v3470, 2
        %v3472 = vmax.f32 %v3470, %v3471
        %v3473 = vrot.slane %v3472, 1
        %v3474 = vmax.f32 %v3472, %v3473
        %v3475 = vsel %vm2984, %v2910, -inf
        %v3476 = vrot.slane %v3475, 4
        %v3477 = vmax.f32 %v3475, %v3476
        %v3478 = vrot.slane %v3477, 2
        %v3479 = vmax.f32 %v3477, %v3478
        %v3480 = vrot.slane %v3479, 1
        %v3481 = vmax.f32 %v3479, %v3480
        %v3482 = vsel %vm2984, %v2911, -inf
        %v3483 = vrot.slane %v3482, 4
        %v3484 = vmax.f32 %v3482, %v3483
        %v3485 = vrot.slane %v3484, 2
        %v3486 = vmax.f32 %v3484, %v3485
        %v3487 = vrot.slane %v3486, 1
        %v3488 = vmax.f32 %v3486, %v3487
        %v3489 = vsel %vm2984, %v2619, inf
        %v3490 = vrot.slane %v3489, 4
        %v3491 = vmin.f32 %v3489, %v3490
        %v3492 = vrot.slane %v3491, 2
        %v3493 = vmin.f32 %v3491, %v3492
        %v3494 = vrot.slane %v3493, 1
        %v3495 = vmin.f32 %v3493, %v3494
        %v3496 = vsel %vm2984, %v2627, inf
        %v3497 = vrot.slane %v3496, 4
        %v3498 = vmin.f32 %v3496, %v3497
        %v3499 = vrot.slane %v3498, 2
        %v3500 = vmin.f32 %v3498, %v3499
        %v3501 = vrot.slane %v3500, 1
        %v3502 = vmin.f32 %v3500, %v3501
        %v3503 = vsel %vm2984, %v2626, inf
        %v3504 = vrot.slane %v3503, 4
        %v3505 = vmin.f32 %v3503, %v3504
        %v3506 = vrot.slane %v3505, 2
        %v3507 = vmin.f32 %v3505, %v3506
        %v3508 = vrot.slane %v3507, 1
        %v3509 = vmin.f32 %v3507, %v3508
        %v3510 = vsel %vm2984, %v2628, inf
        %v3511 = vrot.slane %v3510, 4
        %v3512 = vmin.f32 %v3510, %v3511
        %v3513 = vrot.slane %v3512, 2
        %v3514 = vmin.f32 %v3512, %v3513
        %v3515 = vrot.slane %v3514, 1
        %v3516 = vmin.f32 %v3514, %v3515
        %v3517 = vsel %vm2984, %v2635, inf
        %v3518 = vrot.slane %v3517, 4
        %v3519 = vmin.f32 %v3517, %v3518
        %v3520 = vrot.slane %v3519, 2
        %v3521 = vmin.f32 %v3519, %v3520
        %v3522 = vrot.slane %v3521, 1
        %v3523 = vmin.f32 %v3521, %v3522
        %v3524 = vsel %vm2984, %v2636, inf
        %v3525 = vrot.slane %v3524, 4
        %v3526 = vmin.f32 %v3524, %v3525
        %v3527 = vrot.slane %v3526, 2
        %v3528 = vmin.f32 %v3526, %v3527
        %v3529 = vrot.slane %v3528, 1
        %v3530 = vmin.f32 %v3528, %v3529
        %v3531 = vsel %vm2984, %v2644, inf
        %v3532 = vrot.slane %v3531, 4
        %v3533 = vmin.f32 %v3531, %v3532
        %v3534 = vrot.slane %v3533, 2
        %v3535 = vmin.f32 %v3533, %v3534
        %v3536 = vrot.slane %v3535, 1
        %v3537 = vmin.f32 %v3535, %v3536
        %v3538 = vsel %vm2984, %v2652, inf
        %v3539 = vrot.slane %v3538, 4
        %v3540 = vmin.f32 %v3538, %v3539
        %v3541 = vrot.slane %v3540, 2
        %v3542 = vmin.f32 %v3540, %v3541
        %v3543 = vrot.slane %v3542, 1
        %v3544 = vmin.f32 %v3542, %v3543
        %v3545 = vsel %vm2984, %v2651, inf
        %v3546 = vrot.slane %v3545, 4
        %v3547 = vmin.f32 %v3545, %v3546
        %v3548 = vrot.slane %v3547, 2
        %v3549 = vmin.f32 %v3547, %v3548
        %v3550 = vrot.slane %v3549, 1
        %v3551 = vmin.f32 %v3549, %v3550
        %v3552 = vsel %vm2984, %v2653, inf
        %v3553 = vrot.slane %v3552, 4
        %v3554 = vmin.f32 %v3552, %v3553
        %v3555 = vrot.slane %v3554, 2
        %v3556 = vmin.f32 %v3554, %v3555
        %v3557 = vrot.slane %v3556, 1
        %v3558 = vmin.f32 %v3556, %v3557
        %v3559 = vsel %vm2984, %v2660, inf
        %v3560 = vrot.slane %v3559, 4
        %v3561 = vmin.f32 %v3559, %v3560
        %v3562 = vrot.slane %v3561, 2
        %v3563 = vmin.f32 %v3561, %v3562
        %v3564 = vrot.slane %v3563, 1
        %v3565 = vmin.f32 %v3563, %v3564
        %v3566 = vsel %vm2984, %v2661, inf
        %v3567 = vrot.slane %v3566, 4
        %v3568 = vmin.f32 %v3566, %v3567
        %v3569 = vrot.slane %v3568, 2
        %v3570 = vmin.f32 %v3568, %v3569
        %v3571 = vrot.slane %v3570, 1
        %v3572 = vmin.f32 %v3570, %v3571
        %v3573 = vsel %vm2984, %v2669, inf
        %v3574 = vrot.slane %v3573, 4
        %v3575 = vmin.f32 %v3573, %v3574
        %v3576 = vrot.slane %v3575, 2
        %v3577 = vmin.f32 %v3575, %v3576
        %v3578 = vrot.slane %v3577, 1
        %v3579 = vmin.f32 %v3577, %v3578
        %v3580 = vsel %vm2984, %v2677, inf
        %v3581 = vrot.slane %v3580, 4
        %v3582 = vmin.f32 %v3580, %v3581
        %v3583 = vrot.slane %v3582, 2
        %v3584 = vmin.f32 %v3582, %v3583
        %v3585 = vrot.slane %v3584, 1
        %v3586 = vmin.f32 %v3584, %v3585
        %v3587 = vsel %vm2984, %v2676, inf
        %v3588 = vrot.slane %v3587, 4
        %v3589 = vmin.f32 %v3587, %v3588
        %v3590 = vrot.slane %v3589, 2
        %v3591 = vmin.f32 %v3589, %v3590
        %v3592 = vrot.slane %v3591, 1
        %v3593 = vmin.f32 %v3591, %v3592
        %v3594 = vsel %vm2984, %v2678, inf
        %v3595 = vrot.slane %v3594, 4
        %v3596 = vmin.f32 %v3594, %v3595
        %v3597 = vrot.slane %v3596, 2
        %v3598 = vmin.f32 %v3596, %v3597
        %v3599 = vrot.slane %v3598, 1
        %v3600 = vmin.f32 %v3598, %v3599
        %v3601 = vsel %vm2984, %v2685, inf
        %v3602 = vrot.slane %v3601, 4
        %v3603 = vmin.f32 %v3601, %v3602
        %v3604 = vrot.slane %v3603, 2
        %v3605 = vmin.f32 %v3603, %v3604
        %v3606 = vrot.slane %v3605, 1
        %v3607 = vmin.f32 %v3605, %v3606
        %v3608 = vsel %vm2984, %v2686, inf
        %v3609 = vrot.slane %v3608, 4
        %v3610 = vmin.f32 %v3608, %v3609
        %v3611 = vrot.slane %v3610, 2
        %v3612 = vmin.f32 %v3610, %v3611
        %v3613 = vrot.slane %v3612, 1
        %v3614 = vmin.f32 %v3612, %v3613
        %v3615 = vsel %vm2984, %v2694, inf
        %v3616 = vrot.slane %v3615, 4
        %v3617 = vmin.f32 %v3615, %v3616
        %v3618 = vrot.slane %v3617, 2
        %v3619 = vmin.f32 %v3617, %v3618
        %v3620 = vrot.slane %v3619, 1
        %v3621 = vmin.f32 %v3619, %v3620
        %v3622 = vsel %vm2984, %v2702, inf
        %v3623 = vrot.slane %v3622, 4
        %v3624 = vmin.f32 %v3622, %v3623
        %v3625 = vrot.slane %v3624, 2
        %v3626 = vmin.f32 %v3624, %v3625
        %v3627 = vrot.slane %v3626, 1
        %v3628 = vmin.f32 %v3626, %v3627
        %v3629 = vsel %vm2984, %v2701, inf
        %v3630 = vrot.slane %v3629, 4
        %v3631 = vmin.f32 %v3629, %v3630
        %v3632 = vrot.slane %v3631, 2
        %v3633 = vmin.f32 %v3631, %v3632
        %v3634 = vrot.slane %v3633, 1
        %v3635 = vmin.f32 %v3633, %v3634
        %v3636 = vsel %vm2984, %v2703, inf
        %v3637 = vrot.slane %v3636, 4
        %v3638 = vmin.f32 %v3636, %v3637
        %v3639 = vrot.slane %v3638, 2
        %v3640 = vmin.f32 %v3638, %v3639
        %v3641 = vrot.slane %v3640, 1
        %v3642 = vmin.f32 %v3640, %v3641
        %v3643 = vsel %vm2984, %v2710, inf
        %v3644 = vrot.slane %v3643, 4
        %v3645 = vmin.f32 %v3643, %v3644
        %v3646 = vrot.slane %v3645, 2
        %v3647 = vmin.f32 %v3645, %v3646
        %v3648 = vrot.slane %v3647, 1
        %v3649 = vmin.f32 %v3647, %v3648
        %v3650 = vsel %vm2984, %v2711, inf
        %v3651 = vrot.slane %v3650, 4
        %v3652 = vmin.f32 %v3650, %v3651
        %v3653 = vrot.slane %v3652, 2
        %v3654 = vmin.f32 %v3652, %v3653
        %v3655 = vrot.slane %v3654, 1
        %v3656 = vmin.f32 %v3654, %v3655
        %v3657 = vsel %vm2984, %v2719, inf
        %v3658 = vrot.slane %v3657, 4
        %v3659 = vmin.f32 %v3657, %v3658
        %v3660 = vrot.slane %v3659, 2
        %v3661 = vmin.f32 %v3659, %v3660
        %v3662 = vrot.slane %v3661, 1
        %v3663 = vmin.f32 %v3661, %v3662
        %v3664 = vsel %vm2984, %v2727, inf
        %v3665 = vrot.slane %v3664, 4
        %v3666 = vmin.f32 %v3664, %v3665
        %v3667 = vrot.slane %v3666, 2
        %v3668 = vmin.f32 %v3666, %v3667
        %v3669 = vrot.slane %v3668, 1
        %v3670 = vmin.f32 %v3668, %v3669
        %v3671 = vsel %vm2984, %v2726, inf
        %v3672 = vrot.slane %v3671, 4
        %v3673 = vmin.f32 %v3671, %v3672
        %v3674 = vrot.slane %v3673, 2
        %v3675 = vmin.f32 %v3673, %v3674
        %v3676 = vrot.slane %v3675, 1
        %v3677 = vmin.f32 %v3675, %v3676
        %v3678 = vsel %vm2984, %v2728, inf
        %v3679 = vrot.slane %v3678, 4
        %v3680 = vmin.f32 %v3678, %v3679
        %v3681 = vrot.slane %v3680, 2
        %v3682 = vmin.f32 %v3680, %v3681
        %v3683 = vrot.slane %v3682, 1
        %v3684 = vmin.f32 %v3682, %v3683
        %v3685 = vsel %vm2984, %v2735, inf
        %v3686 = vrot.slane %v3685, 4
        %v3687 = vmin.f32 %v3685, %v3686
        %v3688 = vrot.slane %v3687, 2
        %v3689 = vmin.f32 %v3687, %v3688
        %v3690 = vrot.slane %v3689, 1
        %v3691 = vmin.f32 %v3689, %v3690
        %v3692 = vsel %vm2984, %v2736, inf
        %v3693 = vrot.slane %v3692, 4
        %v3694 = vmin.f32 %v3692, %v3693
        %v3695 = vrot.slane %v3694, 2
        %v3696 = vmin.f32 %v3694, %v3695
        %v3697 = vrot.slane %v3696, 1
        %v3698 = vmin.f32 %v3696, %v3697
        %v3699 = vsel %vm2984, %v2744, inf
        %v3700 = vrot.slane %v3699, 4
        %v3701 = vmin.f32 %v3699, %v3700
        %v3702 = vrot.slane %v3701, 2
        %v3703 = vmin.f32 %v3701, %v3702
        %v3704 = vrot.slane %v3703, 1
        %v3705 = vmin.f32 %v3703, %v3704
        %v3706 = vsel %vm2984, %v2752, inf
        %v3707 = vrot.slane %v3706, 4
        %v3708 = vmin.f32 %v3706, %v3707
        %v3709 = vrot.slane %v3708, 2
        %v3710 = vmin.f32 %v3708, %v3709
        %v3711 = vrot.slane %v3710, 1
        %v3712 = vmin.f32 %v3710, %v3711
        %v3713 = vsel %vm2984, %v2751, inf
        %v3714 = vrot.slane %v3713, 4
        %v3715 = vmin.f32 %v3713, %v3714
        %v3716 = vrot.slane %v3715, 2
        %v3717 = vmin.f32 %v3715, %v3716
        %v3718 = vrot.slane %v3717, 1
        %v3719 = vmin.f32 %v3717, %v3718
        %v3720 = vsel %vm2984, %v2753, inf
        %v3721 = vrot.slane %v3720, 4
        %v3722 = vmin.f32 %v3720, %v3721
        %v3723 = vrot.slane %v3722, 2
        %v3724 = vmin.f32 %v3722, %v3723
        %v3725 = vrot.slane %v3724, 1
        %v3726 = vmin.f32 %v3724, %v3725
        %v3727 = vsel %vm2984, %v2760, inf
        %v3728 = vrot.slane %v3727, 4
        %v3729 = vmin.f32 %v3727, %v3728
        %v3730 = vrot.slane %v3729, 2
        %v3731 = vmin.f32 %v3729, %v3730
        %v3732 = vrot.slane %v3731, 1
        %v3733 = vmin.f32 %v3731, %v3732
        %v3734 = vsel %vm2984, %v2761, inf
        %v3735 = vrot.slane %v3734, 4
        %v3736 = vmin.f32 %v3734, %v3735
        %v3737 = vrot.slane %v3736, 2
        %v3738 = vmin.f32 %v3736, %v3737
        %v3739 = vrot.slane %v3738, 1
        %v3740 = vmin.f32 %v3738, %v3739
        %v3741 = vsel %vm2984, %v2769, inf
        %v3742 = vrot.slane %v3741, 4
        %v3743 = vmin.f32 %v3741, %v3742
        %v3744 = vrot.slane %v3743, 2
        %v3745 = vmin.f32 %v3743, %v3744
        %v3746 = vrot.slane %v3745, 1
        %v3747 = vmin.f32 %v3745, %v3746
        %v3748 = vsel %vm2984, %v2777, inf
        %v3749 = vrot.slane %v3748, 4
        %v3750 = vmin.f32 %v3748, %v3749
        %v3751 = vrot.slane %v3750, 2
        %v3752 = vmin.f32 %v3750, %v3751
        %v3753 = vrot.slane %v3752, 1
        %v3754 = vmin.f32 %v3752, %v3753
        %v3755 = vsel %vm2984, %v2776, inf
        %v3756 = vrot.slane %v3755, 4
        %v3757 = vmin.f32 %v3755, %v3756
        %v3758 = vrot.slane %v3757, 2
        %v3759 = vmin.f32 %v3757, %v3758
        %v3760 = vrot.slane %v3759, 1
        %v3761 = vmin.f32 %v3759, %v3760
        %v3762 = vsel %vm2984, %v2778, inf
        %v3763 = vrot.slane %v3762, 4
        %v3764 = vmin.f32 %v3762, %v3763
        %v3765 = vrot.slane %v3764, 2
        %v3766 = vmin.f32 %v3764, %v3765
        %v3767 = vrot.slane %v3766, 1
        %v3768 = vmin.f32 %v3766, %v3767
        %v3769 = vsel %vm2984, %v2785, inf
        %v3770 = vrot.slane %v3769, 4
        %v3771 = vmin.f32 %v3769, %v3770
        %v3772 = vrot.slane %v3771, 2
        %v3773 = vmin.f32 %v3771, %v3772
        %v3774 = vrot.slane %v3773, 1
        %v3775 = vmin.f32 %v3773, %v3774
        %v3776 = vsel %vm2984, %v2786, inf
        %v3777 = vrot.slane %v3776, 4
        %v3778 = vmin.f32 %v3776, %v3777
        %v3779 = vrot.slane %v3778, 2
        %v3780 = vmin.f32 %v3778, %v3779
        %v3781 = vrot.slane %v3780, 1
        %v3782 = vmin.f32 %v3780, %v3781
        %v3783 = vsel %vm2984, %v2794, inf
        %v3784 = vrot.slane %v3783, 4
        %v3785 = vmin.f32 %v3783, %v3784
        %v3786 = vrot.slane %v3785, 2
        %v3787 = vmin.f32 %v3785, %v3786
        %v3788 = vrot.slane %v3787, 1
        %v3789 = vmin.f32 %v3787, %v3788
        %v3790 = vsel %vm2984, %v2802, inf
        %v3791 = vrot.slane %v3790, 4
        %v3792 = vmin.f32 %v3790, %v3791
        %v3793 = vrot.slane %v3792, 2
        %v3794 = vmin.f32 %v3792, %v3793
        %v3795 = vrot.slane %v3794, 1
        %v3796 = vmin.f32 %v3794, %v3795
        %v3797 = vsel %vm2984, %v2801, inf
        %v3798 = vrot.slane %v3797, 4
        %v3799 = vmin.f32 %v3797, %v3798
        %v3800 = vrot.slane %v3799, 2
        %v3801 = vmin.f32 %v3799, %v3800
        %v3802 = vrot.slane %v3801, 1
        %v3803 = vmin.f32 %v3801, %v3802
        %v3804 = vsel %vm2984, %v2803, inf
        %v3805 = vrot.slane %v3804, 4
        %v3806 = vmin.f32 %v3804, %v3805
        %v3807 = vrot.slane %v3806, 2
        %v3808 = vmin.f32 %v3806, %v3807
        %v3809 = vrot.slane %v3808, 1
        %v3810 = vmin.f32 %v3808, %v3809
        %v3811 = vsel %vm2984, %v2810, inf
        %v3812 = vrot.slane %v3811, 4
        %v3813 = vmin.f32 %v3811, %v3812
        %v3814 = vrot.slane %v3813, 2
        %v3815 = vmin.f32 %v3813, %v3814
        %v3816 = vrot.slane %v3815, 1
        %v3817 = vmin.f32 %v3815, %v3816
        %v3818 = vsel %vm2984, %v2811, inf
        %v3819 = vrot.slane %v3818, 4
        %v3820 = vmin.f32 %v3818, %v3819
        %v3821 = vrot.slane %v3820, 2
        %v3822 = vmin.f32 %v3820, %v3821
        %v3823 = vrot.slane %v3822, 1
        %v3824 = vmin.f32 %v3822, %v3823
        %v3825 = vsel %vm2984, %v2819, inf
        %v3826 = vrot.slane %v3825, 4
        %v3827 = vmin.f32 %v3825, %v3826
        %v3828 = vrot.slane %v3827, 2
        %v3829 = vmin.f32 %v3827, %v3828
        %v3830 = vrot.slane %v3829, 1
        %v3831 = vmin.f32 %v3829, %v3830
        %v3832 = vsel %vm2984, %v2827, inf
        %v3833 = vrot.slane %v3832, 4
        %v3834 = vmin.f32 %v3832, %v3833
        %v3835 = vrot.slane %v3834, 2
        %v3836 = vmin.f32 %v3834, %v3835
        %v3837 = vrot.slane %v3836, 1
        %v3838 = vmin.f32 %v3836, %v3837
        %v3839 = vsel %vm2984, %v2826, inf
        %v3840 = vrot.slane %v3839, 4
        %v3841 = vmin.f32 %v3839, %v3840
        %v3842 = vrot.slane %v3841, 2
        %v3843 = vmin.f32 %v3841, %v3842
        %v3844 = vrot.slane %v3843, 1
        %v3845 = vmin.f32 %v3843, %v3844
        %v3846 = vsel %vm2984, %v2828, inf
        %v3847 = vrot.slane %v3846, 4
        %v3848 = vmin.f32 %v3846, %v3847
        %v3849 = vrot.slane %v3848, 2
        %v3850 = vmin.f32 %v3848, %v3849
        %v3851 = vrot.slane %v3850, 1
        %v3852 = vmin.f32 %v3850, %v3851
        %v3853 = vsel %vm2984, %v2835, inf
        %v3854 = vrot.slane %v3853, 4
        %v3855 = vmin.f32 %v3853, %v3854
        %v3856 = vrot.slane %v3855, 2
        %v3857 = vmin.f32 %v3855, %v3856
        %v3858 = vrot.slane %v3857, 1
        %v3859 = vmin.f32 %v3857, %v3858
        %v3860 = vsel %vm2984, %v2836, inf
        %v3861 = vrot.slane %v3860, 4
        %v3862 = vmin.f32 %v3860, %v3861
        %v3863 = vrot.slane %v3862, 2
        %v3864 = vmin.f32 %v3862, %v3863
        %v3865 = vrot.slane %v3864, 1
        %v3866 = vmin.f32 %v3864, %v3865
        %v3867 = vsel %vm2984, %v2844, inf
        %v3868 = vrot.slane %v3867, 4
        %v3869 = vmin.f32 %v3867, %v3868
        %v3870 = vrot.slane %v3869, 2
        %v3871 = vmin.f32 %v3869, %v3870
        %v3872 = vrot.slane %v3871, 1
        %v3873 = vmin.f32 %v3871, %v3872
        %v3874 = vsel %vm2984, %v2852, inf
        %v3875 = vrot.slane %v3874, 4
        %v3876 = vmin.f32 %v3874, %v3875
        %v3877 = vrot.slane %v3876, 2
        %v3878 = vmin.f32 %v3876, %v3877
        %v3879 = vrot.slane %v3878, 1
        %v3880 = vmin.f32 %v3878, %v3879
        %v3881 = vsel %vm2984, %v2851, inf
        %v3882 = vrot.slane %v3881, 4
        %v3883 = vmin.f32 %v3881, %v3882
        %v3884 = vrot.slane %v3883, 2
        %v3885 = vmin.f32 %v3883, %v3884
        %v3886 = vrot.slane %v3885, 1
        %v3887 = vmin.f32 %v3885, %v3886
        %v3888 = vsel %vm2984, %v2853, inf
        %v3889 = vrot.slane %v3888, 4
        %v3890 = vmin.f32 %v3888, %v3889
        %v3891 = vrot.slane %v3890, 2
        %v3892 = vmin.f32 %v3890, %v3891
        %v3893 = vrot.slane %v3892, 1
        %v3894 = vmin.f32 %v3892, %v3893
        %v3895 = vsel %vm2984, %v2860, inf
        %v3896 = vrot.slane %v3895, 4
        %v3897 = vmin.f32 %v3895, %v3896
        %v3898 = vrot.slane %v3897, 2
        %v3899 = vmin.f32 %v3897, %v3898
        %v3900 = vrot.slane %v3899, 1
        %v3901 = vmin.f32 %v3899, %v3900
        %v3902 = vsel %vm2984, %v2861, inf
        %v3903 = vrot.slane %v3902, 4
        %v3904 = vmin.f32 %v3902, %v3903
        %v3905 = vrot.slane %v3904, 2
        %v3906 = vmin.f32 %v3904, %v3905
        %v3907 = vrot.slane %v3906, 1
        %v3908 = vmin.f32 %v3906, %v3907
        %v3909 = vsel %vm2984, %v2869, inf
        %v3910 = vrot.slane %v3909, 4
        %v3911 = vmin.f32 %v3909, %v3910
        %v3912 = vrot.slane %v3911, 2
        %v3913 = vmin.f32 %v3911, %v3912
        %v3914 = vrot.slane %v3913, 1
        %v3915 = vmin.f32 %v3913, %v3914
        %v3916 = vsel %vm2984, %v2877, inf
        %v3917 = vrot.slane %v3916, 4
        %v3918 = vmin.f32 %v3916, %v3917
        %v3919 = vrot.slane %v3918, 2
        %v3920 = vmin.f32 %v3918, %v3919
        %v3921 = vrot.slane %v3920, 1
        %v3922 = vmin.f32 %v3920, %v3921
        %v3923 = vsel %vm2984, %v2876, inf
        %v3924 = vrot.slane %v3923, 4
        %v3925 = vmin.f32 %v3923, %v3924
        %v3926 = vrot.slane %v3925, 2
        %v3927 = vmin.f32 %v3925, %v3926
        %v3928 = vrot.slane %v3927, 1
        %v3929 = vmin.f32 %v3927, %v3928
        %v3930 = vsel %vm2984, %v2878, inf
        %v3931 = vrot.slane %v3930, 4
        %v3932 = vmin.f32 %v3930, %v3931
        %v3933 = vrot.slane %v3932, 2
        %v3934 = vmin.f32 %v3932, %v3933
        %v3935 = vrot.slane %v3934, 1
        %v3936 = vmin.f32 %v3934, %v3935
        %v3937 = vsel %vm2984, %v2885, inf
        %v3938 = vrot.slane %v3937, 4
        %v3939 = vmin.f32 %v3937, %v3938
        %v3940 = vrot.slane %v3939, 2
        %v3941 = vmin.f32 %v3939, %v3940
        %v3942 = vrot.slane %v3941, 1
        %v3943 = vmin.f32 %v3941, %v3942
        %v3944 = vsel %vm2984, %v2886, inf
        %v3945 = vrot.slane %v3944, 4
        %v3946 = vmin.f32 %v3944, %v3945
        %v3947 = vrot.slane %v3946, 2
        %v3948 = vmin.f32 %v3946, %v3947
        %v3949 = vrot.slane %v3948, 1
        %v3950 = vmin.f32 %v3948, %v3949
        %v3951 = vsel %vm2984, %v2894, inf
        %v3952 = vrot.slane %v3951, 4
        %v3953 = vmin.f32 %v3951, %v3952
        %v3954 = vrot.slane %v3953, 2
        %v3955 = vmin.f32 %v3953, %v3954
        %v3956 = vrot.slane %v3955, 1
        %v3957 = vmin.f32 %v3955, %v3956
        %v3958 = vsel %vm2984, %v2902, inf
        %v3959 = vrot.slane %v3958, 4
        %v3960 = vmin.f32 %v3958, %v3959
        %v3961 = vrot.slane %v3960, 2
        %v3962 = vmin.f32 %v3960, %v3961
        %v3963 = vrot.slane %v3962, 1
        %v3964 = vmin.f32 %v3962, %v3963
        %v3965 = vsel %vm2984, %v2901, inf
        %v3966 = vrot.slane %v3965, 4
        %v3967 = vmin.f32 %v3965, %v3966
        %v3968 = vrot.slane %v3967, 2
        %v3969 = vmin.f32 %v3967, %v3968
        %v3970 = vrot.slane %v3969, 1
        %v3971 = vmin.f32 %v3969, %v3970
        %v3972 = vsel %vm2984, %v2903, inf
        %v3973 = vrot.slane %v3972, 4
        %v3974 = vmin.f32 %v3972, %v3973
        %v3975 = vrot.slane %v3974, 2
        %v3976 = vmin.f32 %v3974, %v3975
        %v3977 = vrot.slane %v3976, 1
        %v3978 = vmin.f32 %v3976, %v3977
        %v3979 = vsel %vm2984, %v2910, inf
        %v3980 = vrot.slane %v3979, 4
        %v3981 = vmin.f32 %v3979, %v3980
        %v3982 = vrot.slane %v3981, 2
        %v3983 = vmin.f32 %v3981, %v3982
        %v3984 = vrot.slane %v3983, 1
        %v3985 = vmin.f32 %v3983, %v3984
        %v3986 = vsel %vm2984, %v2911, inf
        %v3987 = vrot.slane %v3986, 4
        %v3988 = vmin.f32 %v3986, %v3987
        %v3989 = vrot.slane %v3988, 2
        %v3990 = vmin.f32 %v3988, %v3989
        %v3991 = vrot.slane %v3990, 1
        %v3992 = vmin.f32 %v3990, %v3991
        %v3993 = vmax.f32 %v2991, %v3033
        %v3994 = vmax.f32 %v2998, %v3040
        %v3995 = vmax.f32 %v3005, %v3047
        %v3996 = vmax.f32 %v3012, %v3054
        %v3997 = vmax.f32 %v3019, %v3061
        %v3998 = vmax.f32 %v3026, %v3068
        %v3999 = vmax.f32 %v3075, %v3117
        %v4000 = vmax.f32 %v3082, %v3124
        %v4001 = vmax.f32 %v3089, %v3131
        %v4002 = vmax.f32 %v3096, %v3138
        %v4003 = vmax.f32 %v3103, %v3145
        %v4004 = vmax.f32 %v3110, %v3152
        %v4005 = vmax.f32 %v3159, %v3201
        %v4006 = vmax.f32 %v3166, %v3208
        %v4007 = vmax.f32 %v3173, %v3215
        %v4008 = vmax.f32 %v3180, %v3222
        %v4009 = vmax.f32 %v3187, %v3229
        %v4010 = vmax.f32 %v3194, %v3236
        %v4011 = vmax.f32 %v3243, %v3285
        %v4012 = vmax.f32 %v3250, %v3292
        %v4013 = vmax.f32 %v3257, %v3299
        %v4014 = vmax.f32 %v3264, %v3306
        %v4015 = vmax.f32 %v3271, %v3313
        %v4016 = vmax.f32 %v3278, %v3320
        %v4017 = vmax.f32 %v3327, %v3369
        %v4018 = vmax.f32 %v3334, %v3376
        %v4019 = vmax.f32 %v3341, %v3383
        %v4020 = vmax.f32 %v3348, %v3390
        %v4021 = vmax.f32 %v3355, %v3397
        %v4022 = vmax.f32 %v3362, %v3404
        %v4023 = vmax.f32 %v3411, %v3453
        %v4024 = vmax.f32 %v3418, %v3460
        %v4025 = vmax.f32 %v3425, %v3467
        %v4026 = vmax.f32 %v3432, %v3474
        %v4027 = vmax.f32 %v3439, %v3481
        %v4028 = vmax.f32 %v3446, %v3488
        %vm4065 = vcmask 1041409
        %v4066 = vsel %vm4065, %v3994, %v3993
        %vm4067 = vcmask 1042434
        %v4068 = vsel %vm4067, %v3995, %v4066
        %vm4069 = vcmask 1043459
        %v4070 = vsel %vm4069, %v3996, %v4068
        %vm4071 = vcmask 1044484
        %v4072 = vsel %vm4071, %v3997, %v4070
        %vm4073 = vcmask 1045509
        %v4074 = vsel %vm4073, %v3998, %v4072
        %v4075 = vsel %vm4065, %v4000, %v3999
        %v4076 = vsel %vm4067, %v4001, %v4075
        %v4077 = vsel %vm4069, %v4002, %v4076
        %v4078 = vsel %vm4071, %v4003, %v4077
        %v4079 = vsel %vm4073, %v4004, %v4078
        %v4080 = vsel %vm4065, %v4006, %v4005
        %v4081 = vsel %vm4067, %v4007, %v4080
        %v4082 = vsel %vm4069, %v4008, %v4081
        %v4083 = vsel %vm4071, %v4009, %v4082
        %v4084 = vsel %vm4073, %v4010, %v4083
        %v4085 = vsel %vm4065, %v4012, %v4011
        %v4086 = vsel %vm4067, %v4013, %v4085
        %v4087 = vsel %vm4069, %v4014, %v4086
        %v4088 = vsel %vm4071, %v4015, %v4087
        %v4089 = vsel %vm4073, %v4016, %v4088
        %v4090 = vsel %vm4065, %v4018, %v4017
        %v4091 = vsel %vm4067, %v4019, %v4090
        %v4092 = vsel %vm4069, %v4020, %v4091
        %v4093 = vsel %vm4071, %v4021, %v4092
        %v4094 = vsel %vm4073, %v4022, %v4093
        %v4095 = vsel %vm4065, %v4024, %v4023
        %v4096 = vsel %vm4067, %v4025, %v4095
        %v4097 = vsel %vm4069, %v4026, %v4096
        %v4098 = vsel %vm4071, %v4027, %v4097
        %v4099 = vsel %vm4073, %v4028, %v4098
        %4106 = vst [vmem:[%s331] sm:$0x3f] %v4074
        %4107 = vst [vmem:[%s331 + $0x8] sm:$0x3f] %v4079
        %4108 = vst [vmem:[%s331 + $0x10] sm:$0x3f] %v4084
        %4109 = vst [vmem:[%s331 + $0x18] sm:$0x3f] %v4089
        %4110 = vst [vmem:[%s331 + $0x20] sm:$0x3f] %v4094
        %4111 = vst [vmem:[%s331 + $0x28] sm:$0x3f] %v4099
        %v4112 = vmin.f32 %v3495, %v3537
        %v4113 = vmin.f32 %v3502, %v3544
        %v4114 = vmin.f32 %v3509, %v3551
        %v4115 = vmin.f32 %v3516, %v3558
        %v4116 = vmin.f32 %v3523, %v3565
        %v4117 = vmin.f32 %v3530, %v3572
        %v4118 = vmin.f32 %v3579, %v3621
        %v4119 = vmin.f32 %v3586, %v3628
        %v4120 = vmin.f32 %v3593, %v3635
        %v4121 = vmin.f32 %v3600, %v3642
        %v4122 = vmin.f32 %v3607, %v3649
        %v4123 = vmin.f32 %v3614, %v3656
        %v4124 = vmin.f32 %v3663, %v3705
        %v4125 = vmin.f32 %v3670, %v3712
        %v4126 = vmin.f32 %v3677, %v3719
        %v4127 = vmin.f32 %v3684, %v3726
        %v4128 = vmin.f32 %v3691, %v3733
        %v4129 = vmin.f32 %v3698, %v3740
        %v4130 = vmin.f32 %v3747, %v3789
        %v4131 = vmin.f32 %v3754, %v3796
        %v4132 = vmin.f32 %v3761, %v3803
        %v4133 = vmin.f32 %v3768, %v3810
        %v4134 = vmin.f32 %v3775, %v3817
        %v4135 = vmin.f32 %v3782, %v3824
        %v4136 = vmin.f32 %v3831, %v3873
        %v4137 = vmin.f32 %v3838, %v3880
        %v4138 = vmin.f32 %v3845, %v3887
        %v4139 = vmin.f32 %v3852, %v3894
        %v4140 = vmin.f32 %v3859, %v3901
        %v4141 = vmin.f32 %v3866, %v3908
        %v4142 = vmin.f32 %v3915, %v3957
        %v4143 = vmin.f32 %v3922, %v3964
        %v4144 = vmin.f32 %v3929, %v3971
        %v4145 = vmin.f32 %v3936, %v3978
        %v4146 = vmin.f32 %v3943, %v3985
        %v4147 = vmin.f32 %v3950, %v3992
        %v4184 = vsel %vm4065, %v4113, %v4112
        %v4185 = vsel %vm4067, %v4114, %v4184
        %v4186 = vsel %vm4069, %v4115, %v4185
        %v4187 = vsel %vm4071, %v4116, %v4186
        %v4188 = vsel %vm4073, %v4117, %v4187
        %v4189 = vsel %vm4065, %v4119, %v4118
        %v4190 = vsel %vm4067, %v4120, %v4189
        %v4191 = vsel %vm4069, %v4121, %v4190
        %v4192 = vsel %vm4071, %v4122, %v4191
        %v4193 = vsel %vm4073, %v4123, %v4192
        %v4194 = vsel %vm4065, %v4125, %v4124
        %v4195 = vsel %vm4067, %v4126, %v4194
        %v4196 = vsel %vm4069, %v4127, %v4195
        %v4197 = vsel %vm4071, %v4128, %v4196
        %v4198 = vsel %vm4073, %v4129, %v4197
        %v4199 = vsel %vm4065, %v4131, %v4130
        %v4200 = vsel %vm4067, %v4132, %v4199
        %v4201 = vsel %vm4069, %v4133, %v4200
        %v4202 = vsel %vm4071, %v4134, %v4201
        %v4203 = vsel %vm4073, %v4135, %v4202
        %v4204 = vsel %vm4065, %v4137, %v4136
        %v4205 = vsel %vm4067, %v4138, %v4204
        %v4206 = vsel %vm4069, %v4139, %v4205
        %v4207 = vsel %vm4071, %v4140, %v4206
        %v4208 = vsel %vm4073, %v4141, %v4207
        %v4209 = vsel %vm4065, %v4143, %v4142
        %v4210 = vsel %vm4067, %v4144, %v4209
        %v4211 = vsel %vm4069, %v4145, %v4210
        %v4212 = vsel %vm4071, %v4146, %v4211
        %v4213 = vsel %vm4073, %v4147, %v4212
        %4220 = vst [vmem:[%s338] sm:$0x3f] %v4188
        %4221 = vst [vmem:[%s338 + $0x8] sm:$0x3f] %v4193
        %4222 = vst [vmem:[%s338 + $0x10] sm:$0x3f] %v4198
        %4223 = vst [vmem:[%s338 + $0x18] sm:$0x3f] %v4203
        %4224 = vst [vmem:[%s338 + $0x20] sm:$0x3f] %v4208
        %4225 = vst [vmem:[%s338 + $0x28] sm:$0x3f] %v4213
        %s4226 = sand.u32 %s140, 1
        %s4227 = scalar_lea.sflag [#allocation4], %s4226
        %s4228 = sand.u32 %s140, 1
        %s4229 = smul.addr %s4228, 48
        %s4230 = scalar_lea.vmem [#allocation10], %s4229
        %s4231 = sand.u32 %s29, 1
        %s4232 = scalar_lea.sflag [#allocation12], %s4231
        %s4233 = sand.u32 %s168, 1
        %s4234 = smul.addr %s4233, 48
        %s4235 = scalar_lea.vmem [#allocation11], %s4234
        %s4236 = sand.u32 %s29, 1
        %s4237 = scalar_lea.sflag [#allocation12], %s4236
        %s4238 = sand.u32 %s196, 1
        %s4239 = smul.addr %s4238, 2
        %s4240 = scalar_lea.vmem [#allocation13], %s4239
        // Predicated region
        $region53: #{encoder_block_forward.4} parent=35 // pred_check
          %p4241 = pneg %p150
        $region54: #{encoder_block_forward.4} parent=35 // pred_check_branch
          %4243 = sbr.rel (%p4241) target = $region56
        $region55: #{encoder_block_forward.4} parent=35 // pred_region
          %s4244 = smul.u32 6, %s34
          %s4246 = ssub.s32 768, 768
          %4247 = vsyncadd %s4227, %s4246
          %s4248 = smul.addr %s33, 6
          %s4249 = sadd.s32 %s4244, %s4248
          %s4250 = smul.addr %s4249, 128
          %s4251 = scalar_lea.hbm %s4, %s4250
          %s4252 = sshll.u32 %s4230, 4
          %s4253 = int_to_ptr.vmem [resolvable:$true] %s4252
          %4258 = dma.vmem_to_hbm [thread:$0]  %s4253, 768, %s4251, %s4227, 128, 128, 8
        $region56: #{encoder_block_forward.4} parent=35 // pred_fallthru
          _
        // Predicated region
        $region57: #{encoder_block_forward.4} parent=35 // pred_check
          %p4259 = pneg %p178
        $region58: #{encoder_block_forward.4} parent=35 // pred_check_branch
          %4261 = sbr.rel (%p4259) target = $region60
        $region59: #{encoder_block_forward.4} parent=35 // pred_region
          %s4262 = smul.u32 6, %s34
          %s4264 = ssub.s32 768, 768
          %4265 = vsyncadd %s4232, %s4264
          %s4266 = smul.addr %s33, 6
          %s4267 = sadd.s32 %s4262, %s4266
          %s4268 = smul.addr %s4267, 128
          %s4269 = scalar_lea.hbm %s5, %s4268
          %s4270 = sshll.u32 %s4235, 4
          %s4271 = int_to_ptr.vmem [resolvable:$true] %s4270
          %4276 = dma.vmem_to_hbm [thread:$0]  %s4271, 768, %s4269, %s4232, 128, 128, 8
        $region60: #{encoder_block_forward.4} parent=35 // pred_fallthru
          _
        // Predicated region
        $region61: #{encoder_block_forward.4} parent=35 // pred_check
          %p4277 = pneg %p206
        $region62: #{encoder_block_forward.4} parent=35 // pred_check_branch
          %4279 = sbr.rel (%p4277) target = $region64
        $region63: #{encoder_block_forward.4} parent=35 // pred_region
          %s4281 = ssub.s32 32, 32
          %4282 = vsyncadd %s4237, %s4281
          %s4283 = sadd.s32 %s34, %s33
          %s4284 = smul.addr %s4283, 32
          %s4285 = scalar_lea.hbm %s6, %s4284
          %s4287 = sshll.u32 %s4240, 4
          %s4288 = int_to_ptr.vmem [resolvable:$true] %s4287
          %4290 = dma.vmem_to_hbm [thread:$0]  %s4288, 32, %s4285, %s4237
        $region64: #{encoder_block_forward.4} parent=35 // pred_fallthru
          _
      $region36: #{encoder_block_forward.4} parent=5 // pred_fallthru
        _
      %p4291 = scmp.le.s32.totalorder 2, %s24
      // Predicated region
      $region65: #{encoder_block_forward.4} parent=5 // pred_check
        %p4292 = pneg %p4291
      $region66: #{encoder_block_forward.4} parent=5 // pred_check_branch
        %4294 = sbr.rel (%p4292) target = $region68
      $region67: #{encoder_block_forward.4} parent=5 // pred_region
        %s4295 = ssub.s32 %s24, 2
        // Predicated region
        $region69: #{encoder_block_forward.4} parent=67 // pred_check
          %p4296 = pneg %p156
        $region70: #{encoder_block_forward.4} parent=67 // pred_check_branch
          %4298 = sbr.rel (%p4296) target = $region72
        $region71: #{encoder_block_forward.4} parent=67 // pred_region
          %s4299 = sand.u32 %s141, 1
          %s4300 = scalar_lea.sflag [#allocation4], %s4299
          %s4301 = sand.u32 %s141, 1
          %s4302 = smul.addr %s4301, 48
          %s4303 = scalar_lea.vmem [#allocation10], %s4302
          %4304 = dma.done %s4300, 768
        $region72: #{encoder_block_forward.4} parent=67 // pred_fallthru
          _
        // Predicated region
        $region73: #{encoder_block_forward.4} parent=67 // pred_check
          %p4305 = pneg %p184
        $region74: #{encoder_block_forward.4} parent=67 // pred_check_branch
          %4307 = sbr.rel (%p4305) target = $region76
        $region75: #{encoder_block_forward.4} parent=67 // pred_region
          %s4308 = sand.u32 %s30, 1
          %s4309 = scalar_lea.sflag [#allocation12], %s4308
          %s4310 = sand.u32 %s169, 1
          %s4311 = smul.addr %s4310, 48
          %s4312 = scalar_lea.vmem [#allocation11], %s4311
          %4313 = dma.done %s4309, 768
        $region76: #{encoder_block_forward.4} parent=67 // pred_fallthru
          _
        // Predicated region
        $region77: #{encoder_block_forward.4} parent=67 // pred_check
          %p4314 = pneg %p212
        $region78: #{encoder_block_forward.4} parent=67 // pred_check_branch
          %4316 = sbr.rel (%p4314) target = $region80
        $region79: #{encoder_block_forward.4} parent=67 // pred_region
          %s4317 = sand.u32 %s30, 1
          %s4318 = scalar_lea.sflag [#allocation12], %s4317
          %s4319 = sand.u32 %s197, 1
          %s4320 = smul.addr %s4319, 2
          %s4321 = scalar_lea.vmem [#allocation13], %s4320
          %4322 = dma.done %s4318, 32
        $region80: #{encoder_block_forward.4} parent=67 // pred_fallthru
          _
      $region68: #{encoder_block_forward.4} parent=5 // pred_fallthru
        _
    $region6: #{encoder_block_forward.4} parent=1 // loop_footer
      %s28 = sadd.s32 1, %s24
    $region7: #{encoder_block_forward.4} parent=1 // loop_footer_branch
      %23 = sbr.rel target = $region3
    $region8: #{encoder_block_forward.4} parent=1 // loop_exit
      _
    %4323 = vsyncpa [#allocation3], 1
    %s4324 = scalar_lea.sflag [#allocation3], 1
    %4325 = vsyncpa %s4324, 1
    %4326 = vsyncpa [#allocation6], 1
    %4327 = vsyncpa [#allocation9], 1
    %4328 = vsyncpa [#allocation4], 1
    %s4329 = scalar_lea.sflag [#allocation4], 1
    %4330 = vsyncpa %s4329, 1
    %4331 = vsyncpa [#allocation12], 1
    %s4332 = scalar_lea.sflag [#allocation12], 1
    %4333 = vsyncpa %s4332, 1

</llo_original>
